<compile_context>
chip_gen: v5e
topology: v5e:2x2
jax: 0.10.0
libtpu: 0.0.40
codegen_flags: <defaults>
</compile_context>

<pallas_src>
import functools
import math

import jax
import jax.numpy as jnp
from jax import lax
from jax.experimental import pallas as pl
from jax.experimental.pallas import tpu as pltpu

HIDDEN = 32            # hidden_dim of scNet
NHEADS = 2             # nn.TransformerEncoderLayer(nhead=2)
HEAD_DIM = HIDDEN // NHEADS
FF_DIM = 2048          # TransformerEncoderLayer default dim_feedforward
LN_EPS = 1e-5
K_NEIGHBORS = 6


def _device_kind():
    try:
        return jax.devices()[0].device_kind.lower()
    except Exception:
        return ""


_KIND = _device_kind()
_IS_V7 = ("v7" in _KIND) or ("7x" in _KIND)
_IS_V6 = "v6" in _KIND
_IS_V5 = "v5" in _KIND

if _IS_V7:
    TILE_M = 128                       # 64 MiB VMEM: keep row tiles small
    VMEM_LIMIT = 48 * 1024 * 1024
elif _IS_V5 or _IS_V6:
    TILE_M = 256                       # 128 MiB VMEM: bigger tiles, fewer steps
    VMEM_LIMIT = 96 * 1024 * 1024
else:                                  # unknown device: conservative defaults
    TILE_M = 128
    VMEM_LIMIT = 32 * 1024 * 1024

# bf16 exp path exists on v6e/v7x EUP; keep f32 exp on v5e / unknown.
EXP_DTYPE = jnp.bfloat16 if (_IS_V6 or _IS_V7) else jnp.float32


def _round_up(x, m):
    return ((x + m - 1) // m) * m


def _resident(shape):
    """Grid-invariant (resident) full-array block."""
    nd = len(shape)
    return pl.BlockSpec(tuple(shape), lambda *_: (0,) * nd)


def _pick_tile(dim, prefer=512):
    for t in (prefer, 256, 128):
        if dim >= t and dim % t == 0:
            return t
    return dim


# ----------------------------------------------------------------------------
# Generic tiled NN matmul (lane-dense output tiles, bf16 or f32 operands)
# ----------------------------------------------------------------------------
def _matmul_nn_kernel(a_ref, b_ref, o_ref):
    o_ref[...] = jnp.dot(a_ref[...], b_ref[...],
                         preferred_element_type=jnp.float32)


def pallas_matmul_nn(a, b, operand_dtype=jnp.bfloat16, max_tile=512):
    """(M, K) @ (K, N) -> (M, N) f32, tiled over both output axes."""
    m, k = a.shape
    _, n = b.shape
    tm = _pick_tile(m, max_tile)
    tn = _pick_tile(n, max_tile)
    return pl.pallas_call(
        _matmul_nn_kernel,
        out_shape=jax.ShapeDtypeStruct((m, n), jnp.float32),
        grid=(m // tm, n // tn),
        in_specs=[pl.BlockSpec((tm, k), lambda i, j: (i, 0)),
                  pl.BlockSpec((k, tn), lambda i, j: (0, j))],
        out_specs=pl.BlockSpec((tm, tn), lambda i, j: (i, j)),
        compiler_params=pltpu.CompilerParams(
            dimension_semantics=("parallel", "parallel"),
            vmem_limit_bytes=VMEM_LIMIT),
    )(a.astype(operand_dtype), b.astype(operand_dtype))


# ----------------------------------------------------------------------------
# Kernel 0: XW = X @ W_gcn (shared by spatial + feature graph of one modality)
# ----------------------------------------------------------------------------
def _xw_kernel(x_ref, w_ref, o_ref):
    o_ref[...] = jnp.dot(x_ref[...], w_ref[...],
                         preferred_element_type=jnp.float32).astype(jnp.bfloat16)


def pallas_xw(x_bf16, w_bf16):
    n_pad, f = x_bf16.shape
    return pl.pallas_call(
        _xw_kernel,
        out_shape=jax.ShapeDtypeStruct((n_pad, HIDDEN), jnp.bfloat16),
        grid=(n_pad // TILE_M,),
        in_specs=[pl.BlockSpec((TILE_M, f), lambda i: (i, 0)),
                  pl.BlockSpec((f, HIDDEN), lambda i: (0, 0))],
        out_specs=pl.BlockSpec((TILE_M, HIDDEN), lambda i: (i, 0)),
        compiler_params=pltpu.CompilerParams(
            dimension_semantics=("parallel",),
            vmem_limit_bytes=VMEM_LIMIT),
    )(x_bf16, w_bf16)


# ----------------------------------------------------------------------------
# Kernel 1: GCN aggregate + ReLU + fused [q*scale | k | v@wo(h0) | v@wo(h1)]
# ----------------------------------------------------------------------------
def _gcn_qkv_kernel(ahat_ref, xw_ref, gcn_b_ref, w_qkvo_ref, b_qkvo_ref,
                    hq_ref, kt_ref, vwo_ref):
    # TODO(synk): at realistic N the dense Ahat stream (>99% zeros for a k=6
    # kNN graph) is HBM-bound; replace with a scalar-prefetch sparse-gather GCN.
    agg = jnp.dot(ahat_ref[...], xw_ref[...],
                  preferred_element_type=jnp.float32)           # bf16 MXU, f32 acc
    h = jnp.maximum(agg + gcn_b_ref[...], 0.0)                  # (TILE_M, 32) f32

    qkvo = jnp.dot(h.astype(jnp.bfloat16), w_qkvo_ref[...],
                   preferred_element_type=jnp.float32) + b_qkvo_ref[...]
    q = qkvo[:, 0:HIDDEN]                                       # already * scale
    k = qkvo[:, HIDDEN:2 * HIDDEN]

    hq_ref[...] = jnp.concatenate([h, q], axis=-1)              # f32 residual + q
    kt_all = jnp.transpose(k).astype(jnp.bfloat16)              # (32, TILE_M)
    for hh in range(NHEADS):
        kt_ref[hh] = kt_all[hh * HEAD_DIM:(hh + 1) * HEAD_DIM, :]
        lo = 2 * HIDDEN + hh * HIDDEN
        vwo_ref[hh] = qkvo[:, lo:lo + HIDDEN].astype(jnp.bfloat16)


# ----------------------------------------------------------------------------
# Kernel 2: self-attention + FFN + 2x LayerNorm + L2 normalize
# ----------------------------------------------------------------------------
def _layernorm(z, g, b):
    mu = jnp.mean(z, axis=-1, keepdims=True)
    var = jnp.mean((z - mu) ** 2, axis=-1, keepdims=True)
    return (z - mu) * lax.rsqrt(var + LN_EPS) * g + b            # rsqrt -> EUP


def _attn_ffn_kernel(hq_ref, kt_ref, vwo_ref, mask_ref, bo_ref,
                     ln1g_ref, ln1b_ref, ff1w_ref, ff1b_ref,
                     ff2w_ref, ff2b_ref, ln2g_ref, ln2b_ref, out_ref,
                     *, use_mask, exp_dtype):
    hq = hq_ref[...]                                             # (TILE_M, 64) f32
    h = hq[:, 0:HIDDEN]                                          # residual, f32
    q = hq[:, HIDDEN:2 * HIDDEN].astype(jnp.bfloat16)            # scaled q, bf16

    mask = mask_ref[...].astype(exp_dtype) if use_mask else None

    attn = jnp.zeros((h.shape[0], HIDDEN), jnp.float32)
    for hh in range(NHEADS):
        qh = q[:, hh * HEAD_DIM:(hh + 1) * HEAD_DIM]             # (TILE_M, 16) bf16
        kth = kt_ref[hh]                                         # (16, n_pad) bf16
        s = jnp.dot(qh, kth, preferred_element_type=jnp.float32)  # (TILE_M, n_pad)
        s = s - jnp.max(s, axis=-1, keepdims=True)
        e = jnp.exp(s.astype(exp_dtype))                         # bf16 EUP on v6e/v7x
        if use_mask:
            e = e * mask                                         # zero padded keys
        sum_e = jnp.sum(e, axis=-1, keepdims=True, dtype=jnp.float32)
        # deferred softmax normalization: scale the tiny (TILE_M, 32) context
        ctxo = jnp.dot(e.astype(jnp.bfloat16), vwo_ref[hh],
                       preferred_element_type=jnp.float32)       # e @ (V_h @ Wo_h)
        attn = attn + ctxo * pl.reciprocal(sum_e, approx=True)
    attn = attn + bo_ref[...]

    h1 = _layernorm(h + attn, ln1g_ref[...], ln1b_ref[...])

    ff = jnp.dot(h1.astype(jnp.bfloat16), ff1w_ref[...],
                 preferred_element_type=jnp.float32)
    ff = jnp.maximum(ff + ff1b_ref[...], 0.0).astype(jnp.bfloat16)  # bf16 intermediate
    ff = jnp.dot(ff, ff2w_ref[...],
                 preferred_element_type=jnp.float32) + ff2b_ref[...]

    h2 = _layernorm(h1 + ff, ln2g_ref[...], ln2b_ref[...])

    # F.normalize(p=2, dim=-1): x / max(||x||, 1e-12) == x * rsqrt(max(ssq, 1e-24))
    ssq = jnp.sum(h2 * h2, axis=-1, keepdims=True)
    out_ref[...] = h2 * lax.rsqrt(jnp.maximum(ssq, 1e-24))


# ----------------------------------------------------------------------------
# Encoder wrapper: 2 graphs sharing one encoder per pallas_call pair
# ----------------------------------------------------------------------------
def prep_encoder_params(params):
    """Fold softmax scale into wq/bq and Wo into wv/bv (per head); bf16 weights."""
    scale = 1.0 / math.sqrt(HEAD_DIM)
    wq = params["wq"] * scale
    bq = params["bq"] * scale
    wvo_parts, bvo_parts = [], []
    for hh in range(NHEADS):
        wo_h = params["wo"][hh * HEAD_DIM:(hh + 1) * HEAD_DIM, :]       # (16, 32)
        wvo_parts.append(params["wv"][:, hh * HEAD_DIM:(hh + 1) * HEAD_DIM] @ wo_h)
        bvo_parts.append(params["bv"][:, hh * HEAD_DIM:(hh + 1) * HEAD_DIM] @ wo_h)
    w_qkvo = jnp.concatenate([wq, params["wk"]] + wvo_parts, axis=1)    # (32, 128)
    b_qkvo = jnp.concatenate([bq, params["bk"]] + bvo_parts, axis=1)    # (1, 128)
    return {
        "gcn_w": params["gcn_w"].astype(jnp.bfloat16),
        "gcn_b": params["gcn_b"],
        "w_qkvo": w_qkvo.astype(jnp.bfloat16),
        "b_qkvo": b_qkvo,
        "bo": params["bo"],
        "ln1_g": params["ln1_g"], "ln1_b": params["ln1_b"],
        "ff1_w": params["ff1_w"].astype(jnp.bfloat16), "ff1_b": params["ff1_b"],
        "ff2_w": params["ff2_w"].astype(jnp.bfloat16), "ff2_b": params["ff2_b"],
        "ln2_g": params["ln2_g"], "ln2_b": params["ln2_b"],
    }


def run_encoder_pair(ahats_bf16, x_pad, prep, n_real):
    """Run GCNEncoder (+ final L2 normalize) on 2 graphs sharing one encoder.

    ahats_bf16: (2, n_pad, n_pad) bf16 normalized dense adjacencies.
    x_pad:      (n_pad, F) f32 node features (rows >= n_real are zero).
    Returns (2, n_pad, HIDDEN) f32 L2-normalized embeddings.
    """
    n_pad = x_pad.shape[0]
    tiles = n_pad // TILE_M

    xw = pallas_xw(x_pad.astype(jnp.bfloat16), prep["gcn_w"])    # (n_pad, 32) bf16

    # Kernel 1: GCN + ReLU + fused projections.
    hq, kt, vwo = pl.pallas_call(
        _gcn_qkv_kernel,
        out_shape=(
            jax.ShapeDtypeStruct((2, n_pad, 2 * HIDDEN), jnp.float32),     # [h|q]
            jax.ShapeDtypeStruct((2, NHEADS, HEAD_DIM, n_pad), jnp.bfloat16),  # K^T
            jax.ShapeDtypeStruct((2, NHEADS, n_pad, HIDDEN), jnp.bfloat16),    # V@Wo
        ),
        grid=(2, tiles),
        in_specs=[
            pl.BlockSpec((None, TILE_M, n_pad), lambda g, i: (g, i, 0)),   # Ahat
            pl.BlockSpec((n_pad, HIDDEN), lambda g, i: (0, 0)),            # XW
            _resident((1, HIDDEN)),                                         # gcn bias
            _resident((HIDDEN, 4 * HIDDEN)),                                # fused W
            _resident((1, 4 * HIDDEN)),                                     # fused b
        ],
        out_specs=(
            pl.BlockSpec((None, TILE_M, 2 * HIDDEN), lambda g, i: (g, i, 0)),
            pl.BlockSpec((None, NHEADS, HEAD_DIM, TILE_M), lambda g, i: (g, 0, 0, i)),
            pl.BlockSpec((None, NHEADS, TILE_M, HIDDEN), lambda g, i: (g, 0, i, 0)),
        ),
        compiler_params=pltpu.CompilerParams(
            dimension_semantics=("parallel", "parallel"),
            vmem_limit_bytes=VMEM_LIMIT),
    )(ahats_bf16, xw, prep["gcn_b"], prep["w_qkvo"], prep["b_qkvo"])

    use_mask = n_real < n_pad
    key_mask = (jnp.arange(n_pad) < n_real).astype(jnp.float32).reshape(1, n_pad)

    kern = functools.partial(_attn_ffn_kernel, use_mask=use_mask,
                             exp_dtype=EXP_DTYPE)

    # Kernel 2: attention over resident bf16 K^T / V@Wo per row tile, FFN, LN, L2.
    # TODO(synk): for very large N on v7x, stream K/V tiles with online softmax
    # (flash-style) so VMEM is O(tile) instead of O(n_pad).
    out = pl.pallas_call(
        kern,
        out_shape=jax.ShapeDtypeStruct((2, n_pad, HIDDEN), jnp.float32),
        grid=(2, tiles),
        in_specs=[
            pl.BlockSpec((None, TILE_M, 2 * HIDDEN), lambda g, i: (g, i, 0)),      # hq
            pl.BlockSpec((None, NHEADS, HEAD_DIM, n_pad), lambda g, i: (g, 0, 0, 0)),  # K^T
            pl.BlockSpec((None, NHEADS, n_pad, HIDDEN), lambda g, i: (g, 0, 0, 0)),    # V@Wo
            pl.BlockSpec((1, n_pad), lambda g, i: (0, 0)),                          # key mask
            _resident((1, HIDDEN)),        # bo
            _resident((1, HIDDEN)),        # ln1_g
            _resident((1, HIDDEN)),        # ln1_b
            _resident((HIDDEN, FF_DIM)),   # ff1_w (bf16)
            _resident((1, FF_DIM)),        # ff1_b
            _resident((FF_DIM, HIDDEN)),   # ff2_w (bf16)
            _resident((1, HIDDEN)),        # ff2_b
            _resident((1, HIDDEN)),        # ln2_g
            _resident((1, HIDDEN)),        # ln2_b
        ],
        out_specs=pl.BlockSpec((None, TILE_M, HIDDEN), lambda g, i: (g, i, 0)),
        compiler_params=pltpu.CompilerParams(
            dimension_semantics=("parallel", "parallel"),
            vmem_limit_bytes=VMEM_LIMIT),
    )(hq, kt, vwo, key_mask, prep["bo"], prep["ln1_g"], prep["ln1_b"],
      prep["ff1_w"], prep["ff1_b"], prep["ff2_w"], prep["ff2_b"],
      prep["ln2_g"], prep["ln2_b"])
    return out


# ----------------------------------------------------------------------------
# Graph construction (plain-JAX glue; dense N x N formulation)
# ----------------------------------------------------------------------------
# TODO(synk): k-NN selection, tie-breaking, min-max edge-weight normalization
# and the dense-adjacency scatter stay in plain JAX; for large N this should
# emit CSR neighbor lists feeding a scalar-prefetch sparse-gather GCN instead
# of a dense Ahat matmul.

def _l2_normalize(x, eps=1e-12):
    nrm = jnp.sqrt(jnp.sum(x * x, axis=1, keepdims=True))
    return x / jnp.maximum(nrm, eps)


def _pad_rows(x, n_pad):
    return jnp.pad(x, ((0, n_pad - x.shape[0]), (0, 0)))


def _cosine_sim(features, n_pad):
    """Pairwise cosine similarity via tiled Pallas NN matmul (f32 for kNN parity)."""
    n = features.shape[0]
    fn = _l2_normalize(_pad_rows(features.astype(jnp.float32), n_pad))
    sim = pallas_matmul_nn(fn, fn.T, operand_dtype=jnp.float32)
    return sim[:n, :n]


def _gcn_norm_dense(adj):
    """PyG gcn_norm with self loops on a dense adjacency A[dst, src]."""
    n = adj.shape[0]
    adj = adj + jnp.eye(n, dtype=adj.dtype)
    deg = jnp.sum(adj, axis=1)
    dis = lax.rsqrt(deg)
    return adj * dis[:, None] * dis[None, :]


def _dense_adjacency(neighbors, weights, n):
    """Edges i -> neighbors[i, j] with weight weights[i, j] => A[dst, src]."""
    k = neighbors.shape[1]
    src = jnp.repeat(jnp.arange(n), k)
    dst = neighbors.reshape(-1)
    adj = jnp.zeros((n, n), jnp.float32)
    return adj.at[dst, src].set(weights.reshape(-1))


def build_feature_graph_dense(features, n_pad, k=K_NEIGHBORS):
    """Cosine-similarity k-NN graph (build_feature_graph) -> normalized dense Ahat."""
    n = features.shape[0]
    sim = _cosine_sim(features, n_pad)                               # (N, N)
    sim_no_self = jnp.where(jnp.eye(n, dtype=bool), -jnp.inf, sim)
    _, nbr = lax.top_k(sim_no_self, k)                               # (N, k)
    w = jnp.take_along_axis(sim, nbr, axis=1)
    w = (w - jnp.min(w)) / (jnp.max(w) - jnp.min(w) + 1e-12)
    return _gcn_norm_dense(_dense_adjacency(nbr, w, n))


def build_spatial_graph_dense(positions, modality, n_pad, k=K_NEIGHBORS):
    """Spatial k-NN graph (build_graph): distance-ordered, similarity tie-break."""
    n = positions.shape[0]
    diff = positions[:, None, :] - positions[None, :, :]
    dist = jnp.sqrt(jnp.sum(diff * diff, axis=-1))                   # (N, N)
    sim = _cosine_sim(modality, n_pad)
    dist_excl = jnp.where(jnp.eye(n, dtype=bool), jnp.inf, dist)
    # composite key: distance ascending primary, similarity descending tie-break
    key = sim - dist_excl * 1e6
    _, nbr = lax.top_k(key, k)                                       # (N, k)
    d_sel = jnp.take_along_axis(dist, nbr, axis=1)
    w = 1.0 / (d_sel + 1e-12)
    w = (w - jnp.min(w)) / (jnp.max(w) - jnp.min(w) + 1e-12)
    return _gcn_norm_dense(_dense_adjacency(nbr, w, n))


# ----------------------------------------------------------------------------
# Parameters (deterministic synthetic init; shapes follow the module __init__)
# ----------------------------------------------------------------------------
def init_encoder_params(key, in_dim, hidden=HIDDEN, ff_dim=FF_DIM):
    ks = jax.random.split(key, 8)

    def w(kk, shape, fan_in):
        return jax.random.normal(kk, shape, jnp.float32) * (1.0 / (fan_in ** 0.5))

    return {
        "gcn_w": w(ks[0], (in_dim, hidden), in_dim),
        "gcn_b": jnp.zeros((1, hidden), jnp.float32),
        "wq": w(ks[1], (hidden, hidden), hidden),
        "wk": w(ks[2], (hidden, hidden), hidden),
        "wv": w(ks[3], (hidden, hidden), hidden),
        "bq": jnp.zeros((1, hidden), jnp.float32),
        "bk": jnp.zeros((1, hidden), jnp.float32),
        "bv": jnp.zeros((1, hidden), jnp.float32),
        "wo": w(ks[4], (hidden, hidden), hidden),
        "bo": jnp.zeros((1, hidden), jnp.float32),
        "ln1_g": jnp.ones((1, hidden), jnp.float32),
        "ln1_b": jnp.zeros((1, hidden), jnp.float32),
        "ff1_w": w(ks[5], (hidden, ff_dim), hidden),
        "ff1_b": jnp.zeros((1, ff_dim), jnp.float32),
        "ff2_w": w(ks[6], (ff_dim, hidden), ff_dim),
        "ff2_b": jnp.zeros((1, hidden), jnp.float32),
        "ln2_g": jnp.ones((1, hidden), jnp.float32),
        "ln2_b": jnp.zeros((1, hidden), jnp.float32),
    }


# ----------------------------------------------------------------------------
# scNet forward
# ----------------------------------------------------------------------------
@functools.partial(jax.jit, static_argnames=("k",))
def scnet_forward(modality1, modality2, position, params_atac, params_rna,
                  k=K_NEIGHBORS):
    n = modality1.shape[0]
    n_pad = _round_up(n, TILE_M)

    # Graph construction (matches build_graph / build_feature_graph semantics)
    ahat_atac = build_spatial_graph_dense(position, modality2, n_pad, k)
    ahat_rna = build_spatial_graph_dense(position, modality1, n_pad, k)
    ahat_atac_feat = build_feature_graph_dense(modality2, n_pad, k)
    ahat_rna_feat = build_feature_graph_dense(modality1, n_pad, k)

    def stack_pad(a, b):
        pad = ((0, n_pad - n), (0, n_pad - n))
        return jnp.stack([jnp.pad(a, pad), jnp.pad(b, pad)]).astype(jnp.bfloat16)

    ahats_atac = stack_pad(ahat_atac, ahat_atac_feat)   # (2, n_pad, n_pad) bf16
    ahats_rna = stack_pad(ahat_rna, ahat_rna_feat)

    prep_atac = prep_encoder_params(params_atac)
    prep_rna = prep_encoder_params(params_rna)

    x_atac = _pad_rows(modality2.astype(jnp.float32), n_pad)
    x_rna = _pad_rows(modality1.astype(jnp.float32), n_pad)

    # NOTE: the reference forward reuses gcn_encoder_atac / gcn_encoder_rna for
    # the feature graphs as well; that is exactly the pairing per call here.
    enc_atac_pair = run_encoder_pair(ahats_atac, x_atac, prep_atac, n)
    enc_rna_pair = run_encoder_pair(ahats_rna, x_rna, prep_rna, n)

    # similarity_matrix = enc_rna @ enc_atac.T (both already L2-normalized)
    sim = pallas_matmul_nn(enc_rna_pair[0], enc_atac_pair[0].T,
                           operand_dtype=jnp.bfloat16)[:n, :n]

    enc_atac = enc_atac_pair[0, :n]
    enc_rna = enc_rna_pair[0, :n]
    enc_atac_feat = enc_atac_pair[1, :n]
    enc_rna_feat = enc_rna_pair[1, :n]
    return enc_atac, enc_rna, enc_atac_feat, enc_rna_feat, sim


# ----------------------------------------------------------------------------
if __name__ == "__main__":
    key = jax.random.PRNGKey(0)
    k1, k2, k3, kp = jax.random.split(key, 4)

    N_CELLS = 64
    modality1 = jax.random.normal(k1, (N_CELLS, 50), jnp.float32)   # RNA
    modality2 = jax.random.normal(k2, (N_CELLS, 30), jnp.float32)   # ATAC
    position = jax.random.uniform(k3, (N_CELLS, 2), jnp.float32) * 10.0

    params_atac = init_encoder_params(jax.random.fold_in(kp, 0), 30)
    params_rna = init_encoder_params(jax.random.fold_in(kp, 1), 50)

    outs = scnet_forward(modality1, modality2, position, params_atac, params_rna)
    outs = jax.block_until_ready(outs)

    enc_atac, enc_rna, enc_atac_feat, enc_rna_feat, sim = outs
    assert enc_atac.shape == (N_CELLS, HIDDEN)
    assert enc_rna.shape == (N_CELLS, HIDDEN)
    assert enc_atac_feat.shape == (N_CELLS, HIDDEN)
    assert enc_rna_feat.shape == (N_CELLS, HIDDEN)
    assert sim.shape == (N_CELLS, N_CELLS)
    assert all(bool(jnp.all(jnp.isfinite(o))) for o in outs)
    # outputs are L2-normalized rows
    assert bool(jnp.allclose(jnp.linalg.norm(enc_rna, axis=-1), 1.0, atol=1e-2))
    assert bool(jnp.allclose(jnp.linalg.norm(enc_atac, axis=-1), 1.0, atol=1e-2))

    print("KERNEL_OK")
</pallas_src>

<mosaic_0001>
module attributes {stable_mosaic.version = 11 : i64} {
  func.func @_matmul_nn_kernel(%arg0: i32, %arg1: i32, %arg2: memref<128x50xf32, #tpu.memory_space<vmem>>, %arg3: memref<50x128xf32, #tpu.memory_space<vmem>>, %arg4: memref<128x128xf32, #tpu.memory_space<vmem>>) attributes {dimension_semantics = [#tpu.dimension_semantics<parallel>, #tpu.dimension_semantics<parallel>], iteration_bounds = array<i64: 1, 1>, scalar_prefetch = 0 : i64, scratch_operands = 0 : i64, tpu.core_type = #tpu.core_type<tc>, window_params = [{transform_indices = @transform_0, window_bounds = array<i64: 128, 50>}, {transform_indices = @transform_1, window_bounds = array<i64: 50, 128>}, {transform_indices = @transform_2, window_bounds = array<i64: 128, 128>}]} {
    %c0 = arith.constant 0 : index
    %c0_0 = arith.constant 0 : index
    %0 = vector.load %arg2[%c0, %c0_0] : memref<128x50xf32, #tpu.memory_space<vmem>>, vector<128x50xf32>
    %c0_1 = arith.constant 0 : index
    %c0_2 = arith.constant 0 : index
    %1 = vector.load %arg3[%c0_1, %c0_2] : memref<50x128xf32, #tpu.memory_space<vmem>>, vector<50x128xf32>
    %cst = arith.constant dense<0.000000e+00> : vector<128x128xf32>
    %2 = tpu.matmul %0, %1, %cst {dimension_numbers = #tpu.dot_dimension_numbers<[1], [0], [0], [1], [0, 0, 1, 1], [], []>} : vector<128x50xf32>, vector<50x128xf32>, vector<128x128xf32> -> vector<128x128xf32>
    %c0_3 = arith.constant 0 : index
    %c0_4 = arith.constant 0 : index
    %3 = vector.load %arg4[%c0_3, %c0_4] : memref<128x128xf32, #tpu.memory_space<vmem>>, vector<128x128xf32>
    tpu.vector_store %arg4[%c0_3, %c0_4], %2 {strides = array<i32>} : memref<128x128xf32, #tpu.memory_space<vmem>>, vector<128x128xf32>,
    return
  }
  func.func @transform_0(%arg0: i32, %arg1: i32) -> (i32, i32) {
    %c0_i32 = arith.constant 0 : i32
    %c0_i32_0 = arith.constant 0 : i32
    return %arg0, %c0_i32 : i32, i32
  }
  func.func @transform_1(%arg0: i32, %arg1: i32) -> (i32, i32) {
    %c0_i32 = arith.constant 0 : i32
    %c0_i32_0 = arith.constant 0 : i32
    return %c0_i32, %arg1 : i32, i32
  }
  func.func @transform_2(%arg0: i32, %arg1: i32) -> (i32, i32) {
    %c0_i32 = arith.constant 0 : i32
    return %arg0, %arg1 : i32, i32
  }
}

module attributes {stable_mosaic.version = 11 : i64} {
  func.func @_matmul_nn_kernel(%arg0: i32, %arg1: i32, %arg2: memref<128x30xf32, #tpu.memory_space<vmem>>, %arg3: memref<30x128xf32, #tpu.memory_space<vmem>>, %arg4: memref<128x128xf32, #tpu.memory_space<vmem>>) attributes {dimension_semantics = [#tpu.dimension_semantics<parallel>, #tpu.dimension_semantics<parallel>], iteration_bounds = array<i64: 1, 1>, scalar_prefetch = 0 : i64, scratch_operands = 0 : i64, tpu.core_type = #tpu.core_type<tc>, window_params = [{transform_indices = @transform_0, window_bounds = array<i64: 128, 30>}, {transform_indices = @transform_1, window_bounds = array<i64: 30, 128>}, {transform_indices = @transform_2, window_bounds = array<i64: 128, 128>}]} {
    %c0 = arith.constant 0 : index
    %c0_0 = arith.constant 0 : index
    %0 = vector.load %arg2[%c0, %c0_0] : memref<128x30xf32, #tpu.memory_space<vmem>>, vector<128x30xf32>
    %c0_1 = arith.constant 0 : index
    %c0_2 = arith.constant 0 : index
    %1 = vector.load %arg3[%c0_1, %c0_2] : memref<30x128xf32, #tpu.memory_space<vmem>>, vector<30x128xf32>
    %cst = arith.constant dense<0.000000e+00> : vector<128x128xf32>
    %2 = tpu.matmul %0, %1, %cst {dimension_numbers = #tpu.dot_dimension_numbers<[1], [0], [0], [1], [0, 0, 1, 1], [], []>} : vector<128x30xf32>, vector<30x128xf32>, vector<128x128xf32> -> vector<128x128xf32>
    %c0_3 = arith.constant 0 : index
    %c0_4 = arith.constant 0 : index
    %3 = vector.load %arg4[%c0_3, %c0_4] : memref<128x128xf32, #tpu.memory_space<vmem>>, vector<128x128xf32>
    tpu.vector_store %arg4[%c0_3, %c0_4], %2 {strides = array<i32>} : memref<128x128xf32, #tpu.memory_space<vmem>>, vector<128x128xf32>,
    return
  }
  func.func @transform_0(%arg0: i32, %arg1: i32) -> (i32, i32) {
    %c0_i32 = arith.constant 0 : i32
    %c0_i32_0 = arith.constant 0 : i32
    return %arg0, %c0_i32 : i32, i32
  }
  func.func @transform_1(%arg0: i32, %arg1: i32) -> (i32, i32) {
    %c0_i32 = arith.constant 0 : i32
    %c0_i32_0 = arith.constant 0 : i32
    return %c0_i32, %arg1 : i32, i32
  }
  func.func @transform_2(%arg0: i32, %arg1: i32) -> (i32, i32) {
    %c0_i32 = arith.constant 0 : i32
    return %arg0, %arg1 : i32, i32
  }
}

module attributes {stable_mosaic.version = 11 : i64} {
  func.func @_xw_kernel(%arg0: i32, %arg1: memref<128x50xbf16, #tpu.memory_space<vmem>>, %arg2: memref<50x32xbf16, #tpu.memory_space<vmem>>, %arg3: memref<128x32xbf16, #tpu.memory_space<vmem>>) attributes {dimension_semantics = [#tpu.dimension_semantics<parallel>], iteration_bounds = array<i64: 1>, scalar_prefetch = 0 : i64, scratch_operands = 0 : i64, tpu.core_type = #tpu.core_type<tc>, window_params = [{transform_indices = @transform_0, window_bounds = array<i64: 128, 50>}, {pipeline_mode = #tpu.pipeline_mode<synchronous>, transform_indices = @transform_1, window_bounds = array<i64: 50, 32>}, {transform_indices = @transform_2, window_bounds = array<i64: 128, 32>}]} {
    %c0 = arith.constant 0 : index
    %c0_0 = arith.constant 0 : index
    %0 = vector.load %arg1[%c0, %c0_0] : memref<128x50xbf16, #tpu.memory_space<vmem>>, vector<128x50xbf16>
    %c0_1 = arith.constant 0 : index
    %c0_2 = arith.constant 0 : index
    %1 = vector.load %arg2[%c0_1, %c0_2] : memref<50x32xbf16, #tpu.memory_space<vmem>>, vector<50x32xbf16>
    %cst = arith.constant dense<0.000000e+00> : vector<128x32xf32>
    %2 = tpu.matmul %0, %1, %cst {dimension_numbers = #tpu.dot_dimension_numbers<[1], [0], [0], [1], [0, 0, 1, 1], [], []>} : vector<128x50xbf16>, vector<50x32xbf16>, vector<128x32xf32> -> vector<128x32xf32>
    %3 = arith.truncf %2 : vector<128x32xf32> to vector<128x32xbf16>
    %c0_3 = arith.constant 0 : index
    %c0_4 = arith.constant 0 : index
    %4 = vector.load %arg3[%c0_3, %c0_4] : memref<128x32xbf16, #tpu.memory_space<vmem>>, vector<128x32xbf16>
    tpu.vector_store %arg3[%c0_3, %c0_4], %3 {strides = array<i32>} : memref<128x32xbf16, #tpu.memory_space<vmem>>, vector<128x32xbf16>,
    return
  }
  func.func @transform_0(%arg0: i32) -> (i32, i32) {
    %c0_i32 = arith.constant 0 : i32
    %c0_i32_0 = arith.constant 0 : i32
    return %arg0, %c0_i32 : i32, i32
  }
  func.func @transform_1(%arg0: i32) -> (i32, i32) {
    %c0_i32 = arith.constant 0 : i32
    %c0_i32_0 = arith.constant 0 : i32
    %c0_i32_1 = arith.constant 0 : i32
    return %c0_i32, %c0_i32_0 : i32, i32
  }
  func.func @transform_2(%arg0: i32) -> (i32, i32) {
    %c0_i32 = arith.constant 0 : i32
    %c0_i32_0 = arith.constant 0 : i32
    return %arg0, %c0_i32 : i32, i32
  }
}

module attributes {stable_mosaic.version = 11 : i64} {
  func.func @_gcn_qkv_kernel(%arg0: i32, %arg1: i32, %arg2: memref<1x128x128xbf16, #tpu.memory_space<vmem>>, %arg3: memref<128x32xbf16, #tpu.memory_space<vmem>>, %arg4: memref<1x32xf32, #tpu.memory_space<vmem>>, %arg5: memref<32x128xbf16, #tpu.memory_space<vmem>>, %arg6: memref<1x128xf32, #tpu.memory_space<vmem>>, %arg7: memref<1x128x64xf32, #tpu.memory_space<vmem>>, %arg8: memref<1x2x16x128xbf16, #tpu.memory_space<vmem>>, %arg9: memref<1x2x128x32xbf16, #tpu.memory_space<vmem>>) attributes {dimension_semantics = [#tpu.dimension_semantics<parallel>, #tpu.dimension_semantics<parallel>], iteration_bounds = array<i64: 2, 1>, scalar_prefetch = 0 : i64, scratch_operands = 0 : i64, tpu.core_type = #tpu.core_type<tc>, window_params = [{transform_indices = @transform_0, window_bounds = array<i64: 1, 128, 128>}, {pipeline_mode = #tpu.pipeline_mode<synchronous>, transform_indices = @transform_1, window_bounds = array<i64: 128, 32>}, {pipeline_mode = #tpu.pipeline_mode<synchronous>, transform_indices = @transform_2, window_bounds = array<i64: 1, 32>}, {pipeline_mode = #tpu.pipeline_mode<synchronous>, transform_indices = @transform_3, window_bounds = array<i64: 32, 128>}, {pipeline_mode = #tpu.pipeline_mode<synchronous>, transform_indices = @transform_4, window_bounds = array<i64: 1, 128>}, {transform_indices = @transform_5, window_bounds = array<i64: 1, 128, 64>}, {transform_indices = @transform_6, window_bounds = array<i64: 1, 2, 16, 128>}, {transform_indices = @transform_7, window_bounds = array<i64: 1, 2, 128, 32>}]} {
    %c0 = arith.constant 0 : index
    %c0_0 = arith.constant 0 : index
    %c0_1 = arith.constant 0 : index
    %0 = vector.load %arg2[%c0, %c0_0, %c0_1] : memref<1x128x128xbf16, #tpu.memory_space<vmem>>, vector<1x128x128xbf16>
    %1 = vector.shape_cast %0 : vector<1x128x128xbf16> to vector<128x128xbf16>
    %c0_2 = arith.constant 0 : index
    %c0_3 = arith.constant 0 : index
    %2 = vector.load %arg3[%c0_2, %c0_3] : memref<128x32xbf16, #tpu.memory_space<vmem>>, vector<128x32xbf16>
    %cst = arith.constant dense<0.000000e+00> : vector<128x32xf32>
    %3 = tpu.matmul %1, %2, %cst {dimension_numbers = #tpu.dot_dimension_numbers<[1], [0], [0], [1], [0, 0, 1, 1], [], []>} : vector<128x128xbf16>, vector<128x32xbf16>, vector<128x32xf32> -> vector<128x32xf32>
    %c0_4 = arith.constant 0 : index
    %c0_5 = arith.constant 0 : index
    %4 = vector.load %arg4[%c0_4, %c0_5] : memref<1x32xf32, #tpu.memory_space<vmem>>, vector<1x32xf32>
    %5 = vector.broadcast %4 : vector<1x32xf32> to vector<128x32xf32>
    %6 = arith.addf %3, %5 : vector<128x32xf32>
    %cst_6 = arith.constant 0.000000e+00 : f32
    %7 = vector.broadcast %cst_6 : f32 to vector<128x32xf32>
    %8 = arith.maximumf %6, %7 : vector<128x32xf32>
    %9 = arith.truncf %8 : vector<128x32xf32> to vector<128x32xbf16>
    %c0_7 = arith.constant 0 : index
    %c0_8 = arith.constant 0 : index
    %10 = vector.load %arg5[%c0_7, %c0_8] : memref<32x128xbf16, #tpu.memory_space<vmem>>, vector<32x128xbf16>
    %cst_9 = arith.constant dense<0.000000e+00> : vector<128x128xf32>
    %11 = tpu.matmul %9, %10, %cst_9 {dimension_numbers = #tpu.dot_dimension_numbers<[1], [0], [0], [1], [0, 0, 1, 1], [], []>} : vector<128x32xbf16>, vector<32x128xbf16>, vector<128x128xf32> -> vector<128x128xf32>
    %c0_10 = arith.constant 0 : index
    %c0_11 = arith.constant 0 : index
    %12 = vector.load %arg6[%c0_10, %c0_11] : memref<1x128xf32, #tpu.memory_space<vmem>>, vector<1x128xf32>
    %13 = vector.broadcast %12 : vector<1x128xf32> to vector<128x128xf32>
    %14 = arith.addf %11, %13 : vector<128x128xf32>
    %15 = vector.extract_strided_slice %14 {offsets = [0, 0], sizes = [128, 32], strides = [1, 1]} : vector<128x128xf32> to vector<128x32xf32>
    %16 = vector.extract_strided_slice %14 {offsets = [0, 32], sizes = [128, 32], strides = [1, 1]} : vector<128x128xf32> to vector<128x32xf32>
    %17 = tpu.concatenate %8, %15 in 1 : vector<128x32xf32>, vector<128x32xf32> -> vector<128x64xf32>
    %c0_12 = arith.constant 0 : index
    %c0_13 = arith.constant 0 : index
    %c0_14 = arith.constant 0 : index
    %18 = vector.load %arg7[%c0_12, %c0_13, %c0_14] : memref<1x128x64xf32, #tpu.memory_space<vmem>>, vector<1x128x64xf32>
    %19 = vector.shape_cast %18 : vector<1x128x64xf32> to vector<128x64xf32>
    %20 = vector.shape_cast %17 : vector<128x64xf32> to vector<1x128x64xf32>
    tpu.vector_store %arg7[%c0_12, %c0_13, %c0_14], %20 {strides = array<i32>} : memref<1x128x64xf32, #tpu.memory_space<vmem>>, vector<1x128x64xf32>,
    %21 = tpu.transpose %16, [1, 0] : vector<128x32xf32> -> vector<32x128xf32>
    %22 = arith.truncf %21 : vector<32x128xf32> to vector<32x128xbf16>
    %23 = vector.extract_strided_slice %22 {offsets = [0, 0], sizes = [16, 128], strides = [1, 1]} : vector<32x128xbf16> to vector<16x128xbf16>
    %c0_15 = arith.constant 0 : index
    %c0_16 = arith.constant 0 : index
    %c0_17 = arith.constant 0 : index
    %c0_18 = arith.constant 0 : index
    %24 = vector.load %arg8[%c0_15, %c0_16, %c0_17, %c0_18] : memref<1x2x16x128xbf16, #tpu.memory_space<vmem>>, vector<1x1x16x128xbf16>
    %25 = vector.shape_cast %24 : vector<1x1x16x128xbf16> to vector<16x128xbf16>
    %26 = vector.shape_cast %23 : vector<16x128xbf16> to vector<1x1x16x128xbf16>
    tpu.vector_store %arg8[%c0_15, %c0_16, %c0_17, %c0_18], %26 {strides = array<i32>} : memref<1x2x16x128xbf16, #tpu.memory_space<vmem>>, vector<1x1x16x128xbf16>,
    %27 = vector.extract_strided_slice %14 {offsets = [0, 64], sizes = [128, 32], strides = [1, 1]} : vector<128x128xf32> to vector<128x32xf32>
    %28 = arith.truncf %27 : vector<128x32xf32> to vector<128x32xbf16>
    %c0_19 = arith.constant 0 : index
    %c0_20 = arith.constant 0 : index
    %c0_21 = arith.constant 0 : index
    %c0_22 = arith.constant 0 : index
    %29 = vector.load %arg9[%c0_19, %c0_20, %c0_21, %c0_22] : memref<1x2x128x32xbf16, #tpu.memory_space<vmem>>, vector<1x1x128x32xbf16>
    %30 = vector.shape_cast %29 : vector<1x1x128x32xbf16> to vector<128x32xbf16>
    %31 = vector.shape_cast %28 : vector<128x32xbf16> to vector<1x1x128x32xbf16>
    tpu.vector_store %arg9[%c0_19, %c0_20, %c0_21, %c0_22], %31 {strides = array<i32>} : memref<1x2x128x32xbf16, #tpu.memory_space<vmem>>, vector<1x1x128x32xbf16>,
    %32 = vector.extract_strided_slice %22 {offsets = [16, 0], sizes = [16, 128], strides = [1, 1]} : vector<32x128xbf16> to vector<16x128xbf16>
    %c0_23 = arith.constant 0 : index
    %c1 = arith.constant 1 : index
    %c0_24 = arith.constant 0 : index
    %c0_25 = arith.constant 0 : index
    %33 = vector.load %arg8[%c0_23, %c1, %c0_24, %c0_25] : memref<1x2x16x128xbf16, #tpu.memory_space<vmem>>, vector<1x1x16x128xbf16>
    %34 = vector.shape_cast %33 : vector<1x1x16x128xbf16> to vector<16x128xbf16>
    %35 = vector.shape_cast %32 : vector<16x128xbf16> to vector<1x1x16x128xbf16>
    tpu.vector_store %arg8[%c0_23, %c1, %c0_24, %c0_25], %35 {strides = array<i32>} : memref<1x2x16x128xbf16, #tpu.memory_space<vmem>>, vector<1x1x16x128xbf16>,
    %36 = vector.extract_strided_slice %14 {offsets = [0, 96], sizes = [128, 32], strides = [1, 1]} : vector<128x128xf32> to vector<128x32xf32>
    %37 = arith.truncf %36 : vector<128x32xf32> to vector<128x32xbf16>
    %c0_26 = arith.constant 0 : index
    %c1_27 = arith.constant 1 : index
    %c0_28 = arith.constant 0 : index
    %c0_29 = arith.constant 0 : index
    %38 = vector.load %arg9[%c0_26, %c1_27, %c0_28, %c0_29] : memref<1x2x128x32xbf16, #tpu.memory_space<vmem>>, vector<1x1x128x32xbf16>
    %39 = vector.shape_cast %38 : vector<1x1x128x32xbf16> to vector<128x32xbf16>
    %40 = vector.shape_cast %37 : vector<128x32xbf16> to vector<1x1x128x32xbf16>
    tpu.vector_store %arg9[%c0_26, %c1_27, %c0_28, %c0_29], %40 {strides = array<i32>} : memref<1x2x128x32xbf16, #tpu.memory_space<vmem>>, vector<1x1x128x32xbf16>,
    return
  }
  func.func @transform_0(%arg0: i32, %arg1: i32) -> (i32, i32, i32) {
    %c0_i32 = arith.constant 0 : i32
    %c0_i32_0 = arith.constant 0 : i32
    return %arg0, %arg1, %c0_i32 : i32, i32, i32
  }
  func.func @transform_1(%arg0: i32, %arg1: i32) -> (i32, i32) {
    %c0_i32 = arith.constant 0 : i32
    %c0_i32_0 = arith.constant 0 : i32
    %c0_i32_1 = arith.constant 0 : i32
    return %c0_i32, %c0_i32_0 : i32, i32
  }
  func.func @transform_2(%arg0: i32, %arg1: i32) -> (i32, i32) {
    %c0_i32 = arith.constant 0 : i32
    %c0_i32_0 = arith.constant 0 : i32
    %c0_i32_1 = arith.constant 0 : i32
    return %c0_i32, %c0_i32_0 : i32, i32
  }
  func.func @transform_3(%arg0: i32, %arg1: i32) -> (i32, i32) {
    %c0_i32 = arith.constant 0 : i32
    %c0_i32_0 = arith.constant 0 : i32
    %c0_i32_1 = arith.constant 0 : i32
    return %c0_i32, %c0_i32_0 : i32, i32
  }
  func.func @transform_4(%arg0: i32, %arg1: i32) -> (i32, i32) {
    %c0_i32 = arith.constant 0 : i32
    %c0_i32_0 = arith.constant 0 : i32
    %c0_i32_1 = arith.constant 0 : i32
    return %c0_i32, %c0_i32_0 : i32, i32
  }
  func.func @transform_5(%arg0: i32, %arg1: i32) -> (i32, i32, i32) {
    %c0_i32 = arith.constant 0 : i32
    %c0_i32_0 = arith.constant 0 : i32
    return %arg0, %arg1, %c0_i32 : i32, i32, i32
  }
  func.func @transform_6(%arg0: i32, %arg1: i32) -> (i32, i32, i32, i32) {
    %c0_i32 = arith.constant 0 : i32
    %c0_i32_0 = arith.constant 0 : i32
    %c0_i32_1 = arith.constant 0 : i32
    return %arg0, %c0_i32, %c0_i32_0, %arg1 : i32, i32, i32, i32
  }
  func.func @transform_7(%arg0: i32, %arg1: i32) -> (i32, i32, i32, i32) {
    %c0_i32 = arith.constant 0 : i32
    %c0_i32_0 = arith.constant 0 : i32
    %c0_i32_1 = arith.constant 0 : i32
    return %arg0, %c0_i32, %arg1, %c0_i32_0 : i32, i32, i32, i32
  }
}

module attributes {stable_mosaic.version = 11 : i64} {
  func.func @_attn_ffn_kernel(%arg0: i32, %arg1: i32, %arg2: memref<1x128x64xf32, #tpu.memory_space<vmem>>, %arg3: memref<1x2x16x128xbf16, #tpu.memory_space<vmem>>, %arg4: memref<1x2x128x32xbf16, #tpu.memory_space<vmem>>, %arg5: memref<1x128xf32, #tpu.memory_space<vmem>>, %arg6: memref<1x32xf32, #tpu.memory_space<vmem>>, %arg7: memref<1x32xf32, #tpu.memory_space<vmem>>, %arg8: memref<1x32xf32, #tpu.memory_space<vmem>>, %arg9: memref<32x2048xbf16, #tpu.memory_space<vmem>>, %arg10: memref<1x2048xf32, #tpu.memory_space<vmem>>, %arg11: memref<2048x32xbf16, #tpu.memory_space<vmem>>, %arg12: memref<1x32xf32, #tpu.memory_space<vmem>>, %arg13: memref<1x32xf32, #tpu.memory_space<vmem>>, %arg14: memref<1x32xf32, #tpu.memory_space<vmem>>, %arg15: memref<1x128x32xf32, #tpu.memory_space<vmem>>) attributes {dimension_semantics = [#tpu.dimension_semantics<parallel>, #tpu.dimension_semantics<parallel>], iteration_bounds = array<i64: 2, 1>, scalar_prefetch = 0 : i64, scratch_operands = 0 : i64, tpu.core_type = #tpu.core_type<tc>, window_params = [{transform_indices = @transform_0, window_bounds = array<i64: 1, 128, 64>}, {transform_indices = @transform_1, window_bounds = array<i64: 1, 2, 16, 128>}, {transform_indices = @transform_2, window_bounds = array<i64: 1, 2, 128, 32>}, {pipeline_mode = #tpu.pipeline_mode<synchronous>, transform_indices = @transform_3, window_bounds = array<i64: 1, 128>}, {pipeline_mode = #tpu.pipeline_mode<synchronous>, transform_indices = @transform_4, window_bounds = array<i64: 1, 32>}, {pipeline_mode = #tpu.pipeline_mode<synchronous>, transform_indices = @transform_5, window_bounds = array<i64: 1, 32>}, {pipeline_mode = #tpu.pipeline_mode<synchronous>, transform_indices = @transform_6, window_bounds = array<i64: 1, 32>}, {pipeline_mode = #tpu.pipeline_mode<synchronous>, transform_indices = @transform_7, window_bounds = array<i64: 32, 2048>}, {pipeline_mode = #tpu.pipeline_mode<synchronous>, transform_indices = @transform_8, window_bounds = array<i64: 1, 2048>}, {pipeline_mode = #tpu.pipeline_mode<synchronous>, transform_indices = @transform_9, window_bounds = array<i64: 2048, 32>}, {pipeline_mode = #tpu.pipeline_mode<synchronous>, transform_indices = @transform_10, window_bounds = array<i64: 1, 32>}, {pipeline_mode = #tpu.pipeline_mode<synchronous>, transform_indices = @transform_11, window_bounds = array<i64: 1, 32>}, {pipeline_mode = #tpu.pipeline_mode<synchronous>, transform_indices = @transform_12, window_bounds = array<i64: 1, 32>}, {transform_indices = @transform_13, window_bounds = array<i64: 1, 128, 32>}]} {
    %c0 = arith.constant 0 : index
    %c0_0 = arith.constant 0 : index
    %c0_1 = arith.constant 0 : index
    %0 = vector.load %arg2[%c0, %c0_0, %c0_1] : memref<1x128x64xf32, #tpu.memory_space<vmem>>, vector<1x128x64xf32>
    %1 = vector.shape_cast %0 : vector<1x128x64xf32> to vector<128x64xf32>
    %2 = vector.extract_strided_slice %1 {offsets = [0, 0], sizes = [128, 32], strides = [1, 1]} : vector<128x64xf32> to vector<128x32xf32>
    %3 = vector.extract_strided_slice %1 {offsets = [0, 32], sizes = [128, 32], strides = [1, 1]} : vector<128x64xf32> to vector<128x32xf32>
    %4 = arith.truncf %3 : vector<128x32xf32> to vector<128x32xbf16>
    %c0_2 = arith.constant 0 : index
    %c0_3 = arith.constant 0 : index
    %5 = vector.load %arg5[%c0_2, %c0_3] : memref<1x128xf32, #tpu.memory_space<vmem>>, vector<1x128xf32>
    %cst = arith.constant 0.000000e+00 : f32
    %6 = vector.broadcast %cst : f32 to vector<128x32xf32>
    %7 = vector.extract_strided_slice %4 {offsets = [0, 0], sizes = [128, 16], strides = [1, 1]} : vector<128x32xbf16> to vector<128x16xbf16>
    %c0_4 = arith.constant 0 : index
    %c0_5 = arith.constant 0 : index
    %c0_6 = arith.constant 0 : index
    %c0_7 = arith.constant 0 : index
    %8 = vector.load %arg3[%c0_4, %c0_5, %c0_6, %c0_7] : memref<1x2x16x128xbf16, #tpu.memory_space<vmem>>, vector<1x1x16x128xbf16>
    %9 = vector.shape_cast %8 : vector<1x1x16x128xbf16> to vector<16x128xbf16>
    %cst_8 = arith.constant dense<0.000000e+00> : vector<128x128xf32>
    %10 = tpu.matmul %7, %9, %cst_8 {dimension_numbers = #tpu.dot_dimension_numbers<[1], [0], [0], [1], [0, 0, 1, 1], [], []>} : vector<128x16xbf16>, vector<16x128xbf16>, vector<128x128xf32> -> vector<128x128xf32>
    %cst_9 = arith.constant dense<0xFF800000> : vector<128xf32>
    %11 = vector.multi_reduction <maximumf>, %10, %cst_9 [1] : vector<128x128xf32> to vector<128xf32>
    %12 = vector.shape_cast %11 : vector<128xf32> to vector<128x1xf32>
    %13 = vector.broadcast %12 : vector<128x1xf32> to vector<128x128xf32>
    %14 = arith.subf %10, %13 : vector<128x128xf32>
    %15 = math.exp %14 : vector<128x128xf32>
    %16 = vector.broadcast %5 : vector<1x128xf32> to vector<128x128xf32>
    %17 = arith.mulf %15, %16 : vector<128x128xf32>
    %cst_10 = arith.constant dense<0.000000e+00> : vector<128xf32>
    %18 = vector.multi_reduction <add>, %17, %cst_10 [1] : vector<128x128xf32> to vector<128xf32>
    %19 = vector.shape_cast %18 : vector<128xf32> to vector<128x1xf32>
    %20 = arith.truncf %17 : vector<128x128xf32> to vector<128x128xbf16>
    %c0_11 = arith.constant 0 : index
    %c0_12 = arith.constant 0 : index
    %c0_13 = arith.constant 0 : index
    %c0_14 = arith.constant 0 : index
    %21 = vector.load %arg4[%c0_11, %c0_12, %c0_13, %c0_14] : memref<1x2x128x32xbf16, #tpu.memory_space<vmem>>, vector<1x1x128x32xbf16>
    %22 = vector.shape_cast %21 : vector<1x1x128x32xbf16> to vector<128x32xbf16>
    %cst_15 = arith.constant dense<0.000000e+00> : vector<128x32xf32>
    %23 = tpu.matmul %20, %22, %cst_15 {dimension_numbers = #tpu.dot_dimension_numbers<[1], [0], [0], [1], [0, 0, 1, 1], [], []>} : vector<128x128xbf16>, vector<128x32xbf16>, vector<128x32xf32> -> vector<128x32xf32>
    %24 = tpu.reciprocal %19 {approx = true} : vector<128x1xf32> -> vector<128x1xf32>
    %25 = vector.broadcast %24 : vector<128x1xf32> to vector<128x32xf32>
    %26 = arith.mulf %23, %25 : vector<128x32xf32>
    %27 = arith.addf %6, %26 : vector<128x32xf32>
    %28 = vector.extract_strided_slice %4 {offsets = [0, 16], sizes = [128, 16], strides = [1, 1]} : vector<128x32xbf16> to vector<128x16xbf16>
    %c0_16 = arith.constant 0 : index
    %c1 = arith.constant 1 : index
    %c0_17 = arith.constant 0 : index
    %c0_18 = arith.constant 0 : index
    %29 = vector.load %arg3[%c0_16, %c1, %c0_17, %c0_18] : memref<1x2x16x128xbf16, #tpu.memory_space<vmem>>, vector<1x1x16x128xbf16>
    %30 = vector.shape_cast %29 : vector<1x1x16x128xbf16> to vector<16x128xbf16>
    %cst_19 = arith.constant dense<0.000000e+00> : vector<128x128xf32>
    %31 = tpu.matmul %28, %30, %cst_19 {dimension_numbers = #tpu.dot_dimension_numbers<[1], [0], [0], [1], [0, 0, 1, 1], [], []>} : vector<128x16xbf16>, vector<16x128xbf16>, vector<128x128xf32> -> vector<128x128xf32>
    %cst_20 = arith.constant dense<0xFF800000> : vector<128xf32>
    %32 = vector.multi_reduction <maximumf>, %31, %cst_20 [1] : vector<128x128xf32> to vector<128xf32>
    %33 = vector.shape_cast %32 : vector<128xf32> to vector<128x1xf32>
    %34 = vector.broadcast %33 : vector<128x1xf32> to vector<128x128xf32>
    %35 = arith.subf %31, %34 : vector<128x128xf32>
    %36 = math.exp %35 : vector<128x128xf32>
    %37 = vector.broadcast %5 : vector<1x128xf32> to vector<128x128xf32>
    %38 = arith.mulf %36, %37 : vector<128x128xf32>
    %cst_21 = arith.constant dense<0.000000e+00> : vector<128xf32>
    %39 = vector.multi_reduction <add>, %38, %cst_21 [1] : vector<128x128xf32> to vector<128xf32>
    %40 = vector.shape_cast %39 : vector<128xf32> to vector<128x1xf32>
    %41 = arith.truncf %38 : vector<128x128xf32> to vector<128x128xbf16>
    %c0_22 = arith.constant 0 : index
    %c1_23 = arith.constant 1 : index
    %c0_24 = arith.constant 0 : index
    %c0_25 = arith.constant 0 : index
    %42 = vector.load %arg4[%c0_22, %c1_23, %c0_24, %c0_25] : memref<1x2x128x32xbf16, #tpu.memory_space<vmem>>, vector<1x1x128x32xbf16>
    %43 = vector.shape_cast %42 : vector<1x1x128x32xbf16> to vector<128x32xbf16>
    %cst_26 = arith.constant dense<0.000000e+00> : vector<128x32xf32>
    %44 = tpu.matmul %41, %43, %cst_26 {dimension_numbers = #tpu.dot_dimension_numbers<[1], [0], [0], [1], [0, 0, 1, 1], [], []>} : vector<128x128xbf16>, vector<128x32xbf16>, vector<128x32xf32> -> vector<128x32xf32>
    %45 = tpu.reciprocal %40 {approx = true} : vector<128x1xf32> -> vector<128x1xf32>
    %46 = vector.broadcast %45 : vector<128x1xf32> to vector<128x32xf32>
    %47 = arith.mulf %44, %46 : vector<128x32xf32>
    %48 = arith.addf %27, %47 : vector<128x32xf32>
    %c0_27 = arith.constant 0 : index
    %c0_28 = arith.constant 0 : index
    %49 = vector.load %arg6[%c0_27, %c0_28] : memref<1x32xf32, #tpu.memory_space<vmem>>, vector<1x32xf32>
    %50 = vector.broadcast %49 : vector<1x32xf32> to vector<128x32xf32>
    %51 = arith.addf %48, %50 : vector<128x32xf32>
    %52 = arith.addf %2, %51 : vector<128x32xf32>
    %c0_29 = arith.constant 0 : index
    %c0_30 = arith.constant 0 : index
    %53 = vector.load %arg7[%c0_29, %c0_30] : memref<1x32xf32, #tpu.memory_space<vmem>>, vector<1x32xf32>
    %c0_31 = arith.constant 0 : index
    %c0_32 = arith.constant 0 : index
    %54 = vector.load %arg8[%c0_31, %c0_32] : memref<1x32xf32, #tpu.memory_space<vmem>>, vector<1x32xf32>
    %cst_33 = arith.constant dense<0.000000e+00> : vector<128xf32>
    %55 = vector.multi_reduction <add>, %52, %cst_33 [1] : vector<128x32xf32> to vector<128xf32>
    %56 = vector.shape_cast %55 : vector<128xf32> to vector<128x1xf32>
    %cst_34 = arith.constant 3.200000e+01 : f32
    %57 = vector.broadcast %cst_34 : f32 to vector<128x1xf32>
    %58 = arith.divf %56, %57 : vector<128x1xf32>
    %59 = vector.broadcast %58 : vector<128x1xf32> to vector<128x32xf32>
    %60 = arith.subf %52, %59 : vector<128x32xf32>
    %61 = arith.mulf %60, %60 : vector<128x32xf32>
    %cst_35 = arith.constant dense<0.000000e+00> : vector<128xf32>
    %62 = vector.multi_reduction <add>, %61, %cst_35 [1] : vector<128x32xf32> to vector<128xf32>
    %63 = vector.shape_cast %62 : vector<128xf32> to vector<128x1xf32>
    %cst_36 = arith.constant 3.200000e+01 : f32
    %64 = vector.broadcast %cst_36 : f32 to vector<128x1xf32>
    %65 = arith.divf %63, %64 : vector<128x1xf32>
    %66 = vector.broadcast %58 : vector<128x1xf32> to vector<128x32xf32>
    %67 = arith.subf %52, %66 : vector<128x32xf32>
    %cst_37 = arith.constant 9.99999974E-6 : f32
    %68 = vector.broadcast %cst_37 : f32 to vector<128x1xf32>
    %69 = arith.addf %65, %68 : vector<128x1xf32>
    %70 = math.rsqrt %69 : vector<128x1xf32>
    %71 = vector.broadcast %70 : vector<128x1xf32> to vector<128x32xf32>
    %72 = arith.mulf %67, %71 : vector<128x32xf32>
    %73 = vector.broadcast %53 : vector<1x32xf32> to vector<128x32xf32>
    %74 = arith.mulf %72, %73 : vector<128x32xf32>
    %75 = vector.broadcast %54 : vector<1x32xf32> to vector<128x32xf32>
    %76 = arith.addf %74, %75 : vector<128x32xf32>
    %77 = arith.truncf %76 : vector<128x32xf32> to vector<128x32xbf16>
    %c0_38 = arith.constant 0 : index
    %c0_39 = arith.constant 0 : index
    %78 = vector.load %arg9[%c0_38, %c0_39] : memref<32x2048xbf16, #tpu.memory_space<vmem>>, vector<32x2048xbf16>
    %cst_40 = arith.constant dense<0.000000e+00> : vector<128x2048xf32>
    %79 = tpu.matmul %77, %78, %cst_40 {dimension_numbers = #tpu.dot_dimension_numbers<[1], [0], [0], [1], [0, 0, 1, 1], [], []>} : vector<128x32xbf16>, vector<32x2048xbf16>, vector<128x2048xf32> -> vector<128x2048xf32>
    %c0_41 = arith.constant 0 : index
    %c0_42 = arith.constant 0 : index
    %80 = vector.load %arg10[%c0_41, %c0_42] : memref<1x2048xf32, #tpu.memory_space<vmem>>, vector<1x2048xf32>
    %81 = vector.broadcast %80 : vector<1x2048xf32> to vector<128x2048xf32>
    %82 = arith.addf %79, %81 : vector<128x2048xf32>
    %cst_43 = arith.constant 0.000000e+00 : f32
    %83 = vector.broadcast %cst_43 : f32 to vector<128x2048xf32>
    %84 = arith.maximumf %82, %83 : vector<128x2048xf32>
    %85 = arith.truncf %84 : vector<128x2048xf32> to vector<128x2048xbf16>
    %c0_44 = arith.constant 0 : index
    %c0_45 = arith.constant 0 : index
    %86 = vector.load %arg11[%c0_44, %c0_45] : memref<2048x32xbf16, #tpu.memory_space<vmem>>, vector<2048x32xbf16>
    %cst_46 = arith.constant dense<0.000000e+00> : vector<128x32xf32>
    %87 = tpu.matmul %85, %86, %cst_46 {dimension_numbers = #tpu.dot_dimension_numbers<[1], [0], [0], [1], [0, 0, 1, 1], [], []>} : vector<128x2048xbf16>, vector<2048x32xbf16>, vector<128x32xf32> -> vector<128x32xf32>
    %c0_47 = arith.constant 0 : index
    %c0_48 = arith.constant 0 : index
    %88 = vector.load %arg12[%c0_47, %c0_48] : memref<1x32xf32, #tpu.memory_space<vmem>>, vector<1x32xf32>
    %89 = vector.broadcast %88 : vector<1x32xf32> to vector<128x32xf32>
    %90 = arith.addf %87, %89 : vector<128x32xf32>
    %91 = arith.addf %76, %90 : vector<128x32xf32>
    %c0_49 = arith.constant 0 : index
    %c0_50 = arith.constant 0 : index
    %92 = vector.load %arg13[%c0_49, %c0_50] : memref<1x32xf32, #tpu.memory_space<vmem>>, vector<1x32xf32>
    %c0_51 = arith.constant 0 : index
    %c0_52 = arith.constant 0 : index
    %93 = vector.load %arg14[%c0_51, %c0_52] : memref<1x32xf32, #tpu.memory_space<vmem>>, vector<1x32xf32>
    %cst_53 = arith.constant dense<0.000000e+00> : vector<128xf32>
    %94 = vector.multi_reduction <add>, %91, %cst_53 [1] : vector<128x32xf32> to vector<128xf32>
    %95 = vector.shape_cast %94 : vector<128xf32> to vector<128x1xf32>
    %cst_54 = arith.constant 3.200000e+01 : f32
    %96 = vector.broadcast %cst_54 : f32 to vector<128x1xf32>
    %97 = arith.divf %95, %96 : vector<128x1xf32>
    %98 = vector.broadcast %97 : vector<128x1xf32> to vector<128x32xf32>
    %99 = arith.subf %91, %98 : vector<128x32xf32>
    %100 = arith.mulf %99, %99 : vector<128x32xf32>
    %cst_55 = arith.constant dense<0.000000e+00> : vector<128xf32>
    %101 = vector.multi_reduction <add>, %100, %cst_55 [1] : vector<128x32xf32> to vector<128xf32>
    %102 = vector.shape_cast %101 : vector<128xf32> to vector<128x1xf32>
    %cst_56 = arith.constant 3.200000e+01 : f32
    %103 = vector.broadcast %cst_56 : f32 to vector<128x1xf32>
    %104 = arith.divf %102, %103 : vector<128x1xf32>
    %105 = vector.broadcast %97 : vector<128x1xf32> to vector<128x32xf32>
    %106 = arith.subf %91, %105 : vector<128x32xf32>
    %cst_57 = arith.constant 9.99999974E-6 : f32
    %107 = vector.broadcast %cst_57 : f32 to vector<128x1xf32>
    %108 = arith.addf %104, %107 : vector<128x1xf32>
    %109 = math.rsqrt %108 : vector<128x1xf32>
    %110 = vector.broadcast %109 : vector<128x1xf32> to vector<128x32xf32>
    %111 = arith.mulf %106, %110 : vector<128x32xf32>
    %112 = vector.broadcast %92 : vector<1x32xf32> to vector<128x32xf32>
    %113 = arith.mulf %111, %112 : vector<128x32xf32>
    %114 = vector.broadcast %93 : vector<1x32xf32> to vector<128x32xf32>
    %115 = arith.addf %113, %114 : vector<128x32xf32>
    %116 = arith.mulf %115, %115 : vector<128x32xf32>
    %cst_58 = arith.constant dense<0.000000e+00> : vector<128xf32>
    %117 = vector.multi_reduction <add>, %116, %cst_58 [1] : vector<128x32xf32> to vector<128xf32>
    %118 = vector.shape_cast %117 : vector<128xf32> to vector<128x1xf32>
    %cst_59 = arith.constant 1.000000e-24 : f32
    %119 = vector.broadcast %cst_59 : f32 to vector<128x1xf32>
    %120 = arith.maximumf %118, %119 : vector<128x1xf32>
    %121 = math.rsqrt %120 : vector<128x1xf32>
    %122 = vector.broadcast %121 : vector<128x1xf32> to vector<128x32xf32>
    %123 = arith.mulf %115, %122 : vector<128x32xf32>
    %c0_60 = arith.constant 0 : index
    %c0_61 = arith.constant 0 : index
    %c0_62 = arith.constant 0 : index
    %124 = vector.load %arg15[%c0_60, %c0_61, %c0_62] : memref<1x128x32xf32, #tpu.memory_space<vmem>>, vector<1x128x32xf32>
    %125 = vector.shape_cast %124 : vector<1x128x32xf32> to vector<128x32xf32>
    %126 = vector.shape_cast %123 : vector<128x32xf32> to vector<1x128x32xf32>
    tpu.vector_store %arg15[%c0_60, %c0_61, %c0_62], %126 {strides = array<i32>} : memref<1x128x32xf32, #tpu.memory_space<vmem>>, vector<1x128x32xf32>,
    return
  }
  func.func @transform_0(%arg0: i32, %arg1: i32) -> (i32, i32, i32) {
    %c0_i32 = arith.constant 0 : i32
    %c0_i32_0 = arith.constant 0 : i32
    return %arg0, %arg1, %c0_i32 : i32, i32, i32
  }
  func.func @transform_1(%arg0: i32, %arg1: i32) -> (i32, i32, i32, i32) {
    %c0_i32 = arith.constant 0 : i32
    %c0_i32_0 = arith.constant 0 : i32
    %c0_i32_1 = arith.constant 0 : i32
    %c0_i32_2 = arith.constant 0 : i32
    return %arg0, %c0_i32, %c0_i32_0, %c0_i32_1 : i32, i32, i32, i32
  }
  func.func @transform_2(%arg0: i32, %arg1: i32) -> (i32, i32, i32, i32) {
    %c0_i32 = arith.constant 0 : i32
    %c0_i32_0 = arith.constant 0 : i32
    %c0_i32_1 = arith.constant 0 : i32
    %c0_i32_2 = arith.constant 0 : i32
    return %arg0, %c0_i32, %c0_i32_0, %c0_i32_1 : i32, i32, i32, i32
  }
  func.func @transform_3(%arg0: i32, %arg1: i32) -> (i32, i32) {
    %c0_i32 = arith.constant 0 : i32
    %c0_i32_0 = arith.constant 0 : i32
    %c0_i32_1 = arith.constant 0 : i32
    return %c0_i32, %c0_i32_0 : i32, i32
  }
  func.func @transform_4(%arg0: i32, %arg1: i32) -> (i32, i32) {
    %c0_i32 = arith.constant 0 : i32
    %c0_i32_0 = arith.constant 0 : i32
    %c0_i32_1 = arith.constant 0 : i32
    return %c0_i32, %c0_i32_0 : i32, i32
  }
  func.func @transform_5(%arg0: i32, %arg1: i32) -> (i32, i32) {
    %c0_i32 = arith.constant 0 : i32
    %c0_i32_0 = arith.constant 0 : i32
    %c0_i32_1 = arith.constant 0 : i32
    return %c0_i32, %c0_i32_0 : i32, i32
  }
  func.func @transform_6(%arg0: i32, %arg1: i32) -> (i32, i32) {
    %c0_i32 = arith.constant 0 : i32
    %c0_i32_0 = arith.constant 0 : i32
    %c0_i32_1 = arith.constant 0 : i32
    return %c0_i32, %c0_i32_0 : i32, i32
  }
  func.func @transform_7(%arg0: i32, %arg1: i32) -> (i32, i32) {
    %c0_i32 = arith.constant 0 : i32
    %c0_i32_0 = arith.constant 0 : i32
    %c0_i32_1 = arith.constant 0 : i32
    return %c0_i32, %c0_i32_0 : i32, i32
  }
  func.func @transform_8(%arg0: i32, %arg1: i32) -> (i32, i32) {
    %c0_i32 = arith.constant 0 : i32
    %c0_i32_0 = arith.constant 0 : i32
    %c0_i32_1 = arith.constant 0 : i32
    return %c0_i32, %c0_i32_0 : i32, i32
  }
  func.func @transform_9(%arg0: i32, %arg1: i32) -> (i32, i32) {
    %c0_i32 = arith.constant 0 : i32
    %c0_i32_0 = arith.constant 0 : i32
    %c0_i32_1 = arith.constant 0 : i32
    return %c0_i32, %c0_i32_0 : i32, i32
  }
  func.func @transform_10(%arg0: i32, %arg1: i32) -> (i32, i32) {
    %c0_i32 = arith.constant 0 : i32
    %c0_i32_0 = arith.constant 0 : i32
    %c0_i32_1 = arith.constant 0 : i32
    return %c0_i32, %c0_i32_0 : i32, i32
  }
  func.func @transform_11(%arg0: i32, %arg1: i32) -> (i32, i32) {
    %c0_i32 = arith.constant 0 : i32
    %c0_i32_0 = arith.constant 0 : i32
    %c0_i32_1 = arith.constant 0 : i32
    return %c0_i32, %c0_i32_0 : i32, i32
  }
  func.func @transform_12(%arg0: i32, %arg1: i32) -> (i32, i32) {
    %c0_i32 = arith.constant 0 : i32
    %c0_i32_0 = arith.constant 0 : i32
    %c0_i32_1 = arith.constant 0 : i32
    return %c0_i32, %c0_i32_0 : i32, i32
  }
  func.func @transform_13(%arg0: i32, %arg1: i32) -> (i32, i32, i32) {
    %c0_i32 = arith.constant 0 : i32
    %c0_i32_0 = arith.constant 0 : i32
    return %arg0, %arg1, %c0_i32 : i32, i32, i32
  }
}

module attributes {stable_mosaic.version = 11 : i64} {
  func.func @_xw_kernel(%arg0: i32, %arg1: memref<128x30xbf16, #tpu.memory_space<vmem>>, %arg2: memref<30x32xbf16, #tpu.memory_space<vmem>>, %arg3: memref<128x32xbf16, #tpu.memory_space<vmem>>) attributes {dimension_semantics = [#tpu.dimension_semantics<parallel>], iteration_bounds = array<i64: 1>, scalar_prefetch = 0 : i64, scratch_operands = 0 : i64, tpu.core_type = #tpu.core_type<tc>, window_params = [{transform_indices = @transform_0, window_bounds = array<i64: 128, 30>}, {pipeline_mode = #tpu.pipeline_mode<synchronous>, transform_indices = @transform_1, window_bounds = array<i64: 30, 32>}, {transform_indices = @transform_2, window_bounds = array<i64: 128, 32>}]} {
    %c0 = arith.constant 0 : index
    %c0_0 = arith.constant 0 : index
    %0 = vector.load %arg1[%c0, %c0_0] : memref<128x30xbf16, #tpu.memory_space<vmem>>, vector<128x30xbf16>
    %c0_1 = arith.constant 0 : index
    %c0_2 = arith.constant 0 : index
    %1 = vector.load %arg2[%c0_1, %c0_2] : memref<30x32xbf16, #tpu.memory_space<vmem>>, vector<30x32xbf16>
    %cst = arith.constant dense<0.000000e+00> : vector<128x32xf32>
    %2 = tpu.matmul %0, %1, %cst {dimension_numbers = #tpu.dot_dimension_numbers<[1], [0], [0], [1], [0, 0, 1, 1], [], []>} : vector<128x30xbf16>, vector<30x32xbf16>, vector<128x32xf32> -> vector<128x32xf32>
    %3 = arith.truncf %2 : vector<128x32xf32> to vector<128x32xbf16>
    %c0_3 = arith.constant 0 : index
    %c0_4 = arith.constant 0 : index
    %4 = vector.load %arg3[%c0_3, %c0_4] : memref<128x32xbf16, #tpu.memory_space<vmem>>, vector<128x32xbf16>
    tpu.vector_store %arg3[%c0_3, %c0_4], %3 {strides = array<i32>} : memref<128x32xbf16, #tpu.memory_space<vmem>>, vector<128x32xbf16>,
    return
  }
  func.func @transform_0(%arg0: i32) -> (i32, i32) {
    %c0_i32 = arith.constant 0 : i32
    %c0_i32_0 = arith.constant 0 : i32
    return %arg0, %c0_i32 : i32, i32
  }
  func.func @transform_1(%arg0: i32) -> (i32, i32) {
    %c0_i32 = arith.constant 0 : i32
    %c0_i32_0 = arith.constant 0 : i32
    %c0_i32_1 = arith.constant 0 : i32
    return %c0_i32, %c0_i32_0 : i32, i32
  }
  func.func @transform_2(%arg0: i32) -> (i32, i32) {
    %c0_i32 = arith.constant 0 : i32
    %c0_i32_0 = arith.constant 0 : i32
    return %arg0, %c0_i32 : i32, i32
  }
}

module attributes {stable_mosaic.version = 11 : i64} {
  func.func @_matmul_nn_kernel(%arg0: i32, %arg1: i32, %arg2: memref<128x32xbf16, #tpu.memory_space<vmem>>, %arg3: memref<32x128xbf16, #tpu.memory_space<vmem>>, %arg4: memref<128x128xf32, #tpu.memory_space<vmem>>) attributes {dimension_semantics = [#tpu.dimension_semantics<parallel>, #tpu.dimension_semantics<parallel>], iteration_bounds = array<i64: 1, 1>, scalar_prefetch = 0 : i64, scratch_operands = 0 : i64, tpu.core_type = #tpu.core_type<tc>, window_params = [{transform_indices = @transform_0, window_bounds = array<i64: 128, 32>}, {transform_indices = @transform_1, window_bounds = array<i64: 32, 128>}, {transform_indices = @transform_2, window_bounds = array<i64: 128, 128>}]} {
    %c0 = arith.constant 0 : index
    %c0_0 = arith.constant 0 : index
    %0 = vector.load %arg2[%c0, %c0_0] : memref<128x32xbf16, #tpu.memory_space<vmem>>, vector<128x32xbf16>
    %c0_1 = arith.constant 0 : index
    %c0_2 = arith.constant 0 : index
    %1 = vector.load %arg3[%c0_1, %c0_2] : memref<32x128xbf16, #tpu.memory_space<vmem>>, vector<32x128xbf16>
    %cst = arith.constant dense<0.000000e+00> : vector<128x128xf32>
    %2 = tpu.matmul %0, %1, %cst {dimension_numbers = #tpu.dot_dimension_numbers<[1], [0], [0], [1], [0, 0, 1, 1], [], []>} : vector<128x32xbf16>, vector<32x128xbf16>, vector<128x128xf32> -> vector<128x128xf32>
    %c0_3 = arith.constant 0 : index
    %c0_4 = arith.constant 0 : index
    %3 = vector.load %arg4[%c0_3, %c0_4] : memref<128x128xf32, #tpu.memory_space<vmem>>, vector<128x128xf32>
    tpu.vector_store %arg4[%c0_3, %c0_4], %2 {strides = array<i32>} : memref<128x128xf32, #tpu.memory_space<vmem>>, vector<128x128xf32>,
    return
  }
  func.func @transform_0(%arg0: i32, %arg1: i32) -> (i32, i32) {
    %c0_i32 = arith.constant 0 : i32
    %c0_i32_0 = arith.constant 0 : i32
    return %arg0, %c0_i32 : i32, i32
  }
  func.func @transform_1(%arg0: i32, %arg1: i32) -> (i32, i32) {
    %c0_i32 = arith.constant 0 : i32
    %c0_i32_0 = arith.constant 0 : i32
    return %c0_i32, %arg1 : i32, i32
  }
  func.func @transform_2(%arg0: i32, %arg1: i32) -> (i32, i32) {
    %c0_i32 = arith.constant 0 : i32
    return %arg0, %arg1 : i32, i32
  }
}

</mosaic_0001>

<llo_original>
// kernel: scnet_forward.12
$region0: #{scnet_forward.12}
  #allocation0 [shape = 'u32[]', space=smem, size = 0x4, offset = 0x4, fixed_abs, tag = 'smem constant byte address 0x4 - core index']
  #allocation1 [shape = 'u32[72,128]{1,0:T(1,128)}', space=vmem, size = 0x9000, scoped, tag = 'internal scratch']
  %s0 = inlined_call_operand.vmem [shape: f32[128,50], index: 0, kind: input, shape index: {}]
  %s1 = inlined_call_operand.vmem [shape: f32[50,128], index: 1, kind: input, shape index: {}]
  %s2 = inlined_call_operand.vmem [shape: f32[128,128], index: 2, kind: output, shape index: {}]
  %s3 = sld [smem:[#allocation0]]
  $region18: #{scnet_forward.12} parent=0
    _
  %s5 = ssub.s32 1, %s3
  %s6 = scalar_select 0, %s5, %s3
  // Predicated region
  $region2: #{scnet_forward.12} parent=0 // pred_check
    _
  $region3: #{scnet_forward.12} parent=0 // pred_check_branch
    %8 = sbr.rel (0) target = $region5
  $region4: #{scnet_forward.12} parent=0 // pred_region
    _
  $region5: #{scnet_forward.12} parent=0 // pred_fallthru
    _
  // Predicated region
  $region6: #{scnet_forward.12} parent=0 // pred_check
    _
  $region7: #{scnet_forward.12} parent=0 // pred_check_branch
    %10 = sbr.rel (0) target = $region9
  $region8: #{scnet_forward.12} parent=0 // pred_region
    _
  $region9: #{scnet_forward.12} parent=0 // pred_fallthru
    _
  %v11 = vld [vmem:[%s0] sm:$0xff]
  %v12 = vld [vmem:[%s0 + $0x8] sm:$0xff]
  %v13 = vld [vmem:[%s0 + $0x10] sm:$0xff]
  %v14 = vld [vmem:[%s0 + $0x18] sm:$0xff]
  %v15 = vld [vmem:[%s0 + $0x20] sm:$0xff]
  %v16 = vld [vmem:[%s0 + $0x28] sm:$0xff]
  %v17 = vld [vmem:[%s0 + $0x30] sm:$0xff]
  %v18 = vld [vmem:[%s0 + $0x38] sm:$0xff]
  %v19 = vld [vmem:[%s0 + $0x40] sm:$0xff]
  %v20 = vld [vmem:[%s0 + $0x48] sm:$0xff]
  %v21 = vld [vmem:[%s0 + $0x50] sm:$0xff]
  %v22 = vld [vmem:[%s0 + $0x58] sm:$0xff]
  %v23 = vld [vmem:[%s0 + $0x60] sm:$0xff]
  %v24 = vld [vmem:[%s0 + $0x68] sm:$0xff]
  %v25 = vld [vmem:[%s0 + $0x70] sm:$0xff]
  %v26 = vld [vmem:[%s0 + $0x78] sm:$0xff]
  %v27 = vld [vmem:[%s1] sm:$0xff]
  %v28 = vld [vmem:[%s1 + $0x8] sm:$0xff]
  %v29 = vld [vmem:[%s1 + $0x10] sm:$0xff]
  %v30 = vld [vmem:[%s1 + $0x18] sm:$0xff]
  %v31 = vld [vmem:[%s1 + $0x20] sm:$0xff]
  %v32 = vld [vmem:[%s1 + $0x28] sm:$0xff]
  %v33 = vld [vmem:[%s1 + $0x30] sm:$0x3]
  %vm34 = vcmask 408576
  %v36 = vsel %vm34, %v11, 0
  %v39 = vsel %vm34, %v12, 0
  %v42 = vsel %vm34, %v13, 0
  %v45 = vsel %vm34, %v14, 0
  %v48 = vsel %vm34, %v15, 0
  %v51 = vsel %vm34, %v16, 0
  %v54 = vsel %vm34, %v17, 0
  %v57 = vsel %vm34, %v18, 0
  %v60 = vsel %vm34, %v19, 0
  %v63 = vsel %vm34, %v20, 0
  %v66 = vsel %vm34, %v21, 0
  %v69 = vsel %vm34, %v22, 0
  %v72 = vsel %vm34, %v23, 0
  %v75 = vsel %vm34, %v24, 0
  %v78 = vsel %vm34, %v25, 0
  %v81 = vsel %vm34, %v26, 0
  %vm83 = vcmask 1041408
  %v85 = vsel %vm83, %v33, 0
  %87 = vmatpush.msra.mxu0 0.0
  %88 = vmatpush.msra.mxu0 0.0
  %89 = vmatpush.msra.mxu0 0.0
  %90 = vmatpush.msra.mxu0 0.0
  %91 = vmatpush.msra.mxu0 0.0
  %92 = vmatpush.msra.mxu0 0.0
  %93 = vmatpush.msra.mxu0 0.0
  %94 = vmatpush.msra.mxu0 0.0
  %95 = vmatpush.msra.mxu0 0.0
  %96 = vmatpush.msra.mxu0 %v85
  %97 = vmatpush.msra.mxu0 %v32
  %98 = vmatpush.msra.mxu0 %v31
  %99 = vmatpush.msra.mxu0 %v30
  %100 = vmatpush.msra.mxu0 %v29
  %101 = vmatpush.msra.mxu0 %v28
  %102 = vmatpush.msra.mxu0 %v27
  %103 = vmatmul.f32.gmra.mxu0 %v36
  %v104 = vpop.f32.mrf.mxu0
  %v105 = vadd.f32 0.0, %v104
  %106 = vmatmul.f32.gmra.mxu0 %v39
  %v107 = vpop.f32.mrf.mxu0
  %v108 = vadd.f32 0.0, %v107
  %109 = vmatmul.f32.gmra.mxu0 %v42
  %v110 = vpop.f32.mrf.mxu0
  %v111 = vadd.f32 0.0, %v110
  %112 = vmatmul.f32.gmra.mxu0 %v45
  %v113 = vpop.f32.mrf.mxu0
  %v114 = vadd.f32 0.0, %v113
  %115 = vmatmul.f32.gmra.mxu0 %v48
  %v116 = vpop.f32.mrf.mxu0
  %v117 = vadd.f32 0.0, %v116
  %118 = vmatmul.f32.gmra.mxu0 %v51
  %v119 = vpop.f32.mrf.mxu0
  %v120 = vadd.f32 0.0, %v119
  %121 = vmatmul.f32.gmra.mxu0 %v54
  %v122 = vpop.f32.mrf.mxu0
  %v123 = vadd.f32 0.0, %v122
  %124 = vmatmul.f32.gmra.mxu0 %v57
  %v125 = vpop.f32.mrf.mxu0
  %v126 = vadd.f32 0.0, %v125
  %127 = vmatmul.f32.gmra.mxu0 %v60
  %v128 = vpop.f32.mrf.mxu0
  %v129 = vadd.f32 0.0, %v128
  %130 = vmatmul.f32.gmra.mxu0 %v63
  %v131 = vpop.f32.mrf.mxu0
  %v132 = vadd.f32 0.0, %v131
  %133 = vmatmul.f32.gmra.mxu0 %v66
  %v134 = vpop.f32.mrf.mxu0
  %v135 = vadd.f32 0.0, %v134
  %136 = vmatmul.f32.gmra.mxu0 %v69
  %v137 = vpop.f32.mrf.mxu0
  %v138 = vadd.f32 0.0, %v137
  %139 = vmatmul.f32.gmra.mxu0 %v72
  %v140 = vpop.f32.mrf.mxu0
  %v141 = vadd.f32 0.0, %v140
  %142 = vmatmul.f32.gmra.mxu0 %v75
  %v143 = vpop.f32.mrf.mxu0
  %v144 = vadd.f32 0.0, %v143
  %145 = vmatmul.f32.gmra.mxu0 %v78
  %v146 = vpop.f32.mrf.mxu0
  %v147 = vadd.f32 0.0, %v146
  %148 = vmatmul.f32.gmra.mxu0 %v81
  %v149 = vpop.f32.mrf.mxu0
  %v150 = vadd.f32 0.0, %v149
  %151 = vdwg.mxu0
  %152 = vst [vmem:[%s2] sm:$0xff] %v105
  %153 = vst [vmem:[%s2 + $0x8] sm:$0xff] %v108
  %154 = vst [vmem:[%s2 + $0x10] sm:$0xff] %v111
  %155 = vst [vmem:[%s2 + $0x18] sm:$0xff] %v114
  %156 = vst [vmem:[%s2 + $0x20] sm:$0xff] %v117
  %157 = vst [vmem:[%s2 + $0x28] sm:$0xff] %v120
  %158 = vst [vmem:[%s2 + $0x30] sm:$0xff] %v123
  %159 = vst [vmem:[%s2 + $0x38] sm:$0xff] %v126
  %160 = vst [vmem:[%s2 + $0x40] sm:$0xff] %v129
  %161 = vst [vmem:[%s2 + $0x48] sm:$0xff] %v132
  %162 = vst [vmem:[%s2 + $0x50] sm:$0xff] %v135
  %163 = vst [vmem:[%s2 + $0x58] sm:$0xff] %v138
  %164 = vst [vmem:[%s2 + $0x60] sm:$0xff] %v141
  %165 = vst [vmem:[%s2 + $0x68] sm:$0xff] %v144
  %166 = vst [vmem:[%s2 + $0x70] sm:$0xff] %v147
  %167 = vst [vmem:[%s2 + $0x78] sm:$0xff] %v150
  // Predicated region
  $region10: #{scnet_forward.12} parent=0 // pred_check
    _
  $region11: #{scnet_forward.12} parent=0 // pred_check_branch
    %169 = sbr.rel (0) target = $region13
  $region12: #{scnet_forward.12} parent=0 // pred_region
    _
  $region13: #{scnet_forward.12} parent=0 // pred_fallthru
    _
  // Predicated region
  $region14: #{scnet_forward.12} parent=0 // pred_check
    _
  $region15: #{scnet_forward.12} parent=0 // pred_check_branch
    %171 = sbr.rel (0) target = $region17
  $region16: #{scnet_forward.12} parent=0 // pred_region
    _
  $region17: #{scnet_forward.12} parent=0 // pred_fallthru
    _

// kernel: scnet_forward.11
$region0: #{scnet_forward.11}
  #allocation0 [shape = 'u32[]', space=smem, size = 0x4, offset = 0x4, fixed_abs, tag = 'smem constant byte address 0x4 - core index']
  #allocation1 [shape = 'u32[72,128]{1,0:T(1,128)}', space=vmem, size = 0x9000, scoped, tag = 'internal scratch']
  %s0 = inlined_call_operand.vmem [shape: f32[128,30], index: 0, kind: input, shape index: {}]
  %s1 = inlined_call_operand.vmem [shape: f32[30,128], index: 1, kind: input, shape index: {}]
  %s2 = inlined_call_operand.vmem [shape: f32[128,128], index: 2, kind: output, shape index: {}]
  %s3 = sld [smem:[#allocation0]]
  $region18: #{scnet_forward.11} parent=0
    _
  %s5 = ssub.s32 1, %s3
  %s6 = scalar_select 0, %s5, %s3
  // Predicated region
  $region2: #{scnet_forward.11} parent=0 // pred_check
    _
  $region3: #{scnet_forward.11} parent=0 // pred_check_branch
    %8 = sbr.rel (0) target = $region5
  $region4: #{scnet_forward.11} parent=0 // pred_region
    _
  $region5: #{scnet_forward.11} parent=0 // pred_fallthru
    _
  // Predicated region
  $region6: #{scnet_forward.11} parent=0 // pred_check
    _
  $region7: #{scnet_forward.11} parent=0 // pred_check_branch
    %10 = sbr.rel (0) target = $region9
  $region8: #{scnet_forward.11} parent=0 // pred_region
    _
  $region9: #{scnet_forward.11} parent=0 // pred_fallthru
    _
  %v11 = vld [vmem:[%s0] sm:$0xff]
  %v12 = vld [vmem:[%s0 + $0x8] sm:$0xff]
  %v13 = vld [vmem:[%s0 + $0x10] sm:$0xff]
  %v14 = vld [vmem:[%s0 + $0x18] sm:$0xff]
  %v15 = vld [vmem:[%s0 + $0x20] sm:$0xff]
  %v16 = vld [vmem:[%s0 + $0x28] sm:$0xff]
  %v17 = vld [vmem:[%s0 + $0x30] sm:$0xff]
  %v18 = vld [vmem:[%s0 + $0x38] sm:$0xff]
  %v19 = vld [vmem:[%s0 + $0x40] sm:$0xff]
  %v20 = vld [vmem:[%s0 + $0x48] sm:$0xff]
  %v21 = vld [vmem:[%s0 + $0x50] sm:$0xff]
  %v22 = vld [vmem:[%s0 + $0x58] sm:$0xff]
  %v23 = vld [vmem:[%s0 + $0x60] sm:$0xff]
  %v24 = vld [vmem:[%s0 + $0x68] sm:$0xff]
  %v25 = vld [vmem:[%s0 + $0x70] sm:$0xff]
  %v26 = vld [vmem:[%s0 + $0x78] sm:$0xff]
  %v27 = vld [vmem:[%s1] sm:$0xff]
  %v28 = vld [vmem:[%s1 + $0x8] sm:$0xff]
  %v29 = vld [vmem:[%s1 + $0x10] sm:$0xff]
  %v30 = vld [vmem:[%s1 + $0x18] sm:$0x3f]
  %vm31 = vcmask 244736
  %v33 = vsel %vm31, %v11, 0
  %v36 = vsel %vm31, %v12, 0
  %v39 = vsel %vm31, %v13, 0
  %v42 = vsel %vm31, %v14, 0
  %v45 = vsel %vm31, %v15, 0
  %v48 = vsel %vm31, %v16, 0
  %v51 = vsel %vm31, %v17, 0
  %v54 = vsel %vm31, %v18, 0
  %v57 = vsel %vm31, %v19, 0
  %v60 = vsel %vm31, %v20, 0
  %v63 = vsel %vm31, %v21, 0
  %v66 = vsel %vm31, %v22, 0
  %v69 = vsel %vm31, %v23, 0
  %v72 = vsel %vm31, %v24, 0
  %v75 = vsel %vm31, %v25, 0
  %v78 = vsel %vm31, %v26, 0
  %vm80 = vcmask 1045504
  %v82 = vsel %vm80, %v30, 0
  %84 = vmatpush.msra.mxu0 0.0
  %85 = vmatpush.msra.mxu0 0.0
  %86 = vmatpush.msra.mxu0 0.0
  %87 = vmatpush.msra.mxu0 0.0
  %88 = vmatpush.msra.mxu0 0.0
  %89 = vmatpush.msra.mxu0 0.0
  %90 = vmatpush.msra.mxu0 0.0
  %91 = vmatpush.msra.mxu0 0.0
  %92 = vmatpush.msra.mxu0 0.0
  %93 = vmatpush.msra.mxu0 0.0
  %94 = vmatpush.msra.mxu0 0.0
  %95 = vmatpush.msra.mxu0 0.0
  %96 = vmatpush.msra.mxu0 %v82
  %97 = vmatpush.msra.mxu0 %v29
  %98 = vmatpush.msra.mxu0 %v28
  %99 = vmatpush.msra.mxu0 %v27
  %100 = vmatmul.f32.gmra.mxu0 %v33
  %v101 = vpop.f32.mrf.mxu0
  %v102 = vadd.f32 0.0, %v101
  %103 = vmatmul.f32.gmra.mxu0 %v36
  %v104 = vpop.f32.mrf.mxu0
  %v105 = vadd.f32 0.0, %v104
  %106 = vmatmul.f32.gmra.mxu0 %v39
  %v107 = vpop.f32.mrf.mxu0
  %v108 = vadd.f32 0.0, %v107
  %109 = vmatmul.f32.gmra.mxu0 %v42
  %v110 = vpop.f32.mrf.mxu0
  %v111 = vadd.f32 0.0, %v110
  %112 = vmatmul.f32.gmra.mxu0 %v45
  %v113 = vpop.f32.mrf.mxu0
  %v114 = vadd.f32 0.0, %v113
  %115 = vmatmul.f32.gmra.mxu0 %v48
  %v116 = vpop.f32.mrf.mxu0
  %v117 = vadd.f32 0.0, %v116
  %118 = vmatmul.f32.gmra.mxu0 %v51
  %v119 = vpop.f32.mrf.mxu0
  %v120 = vadd.f32 0.0, %v119
  %121 = vmatmul.f32.gmra.mxu0 %v54
  %v122 = vpop.f32.mrf.mxu0
  %v123 = vadd.f32 0.0, %v122
  %124 = vmatmul.f32.gmra.mxu0 %v57
  %v125 = vpop.f32.mrf.mxu0
  %v126 = vadd.f32 0.0, %v125
  %127 = vmatmul.f32.gmra.mxu0 %v60
  %v128 = vpop.f32.mrf.mxu0
  %v129 = vadd.f32 0.0, %v128
  %130 = vmatmul.f32.gmra.mxu0 %v63
  %v131 = vpop.f32.mrf.mxu0
  %v132 = vadd.f32 0.0, %v131
  %133 = vmatmul.f32.gmra.mxu0 %v66
  %v134 = vpop.f32.mrf.mxu0
  %v135 = vadd.f32 0.0, %v134
  %136 = vmatmul.f32.gmra.mxu0 %v69
  %v137 = vpop.f32.mrf.mxu0
  %v138 = vadd.f32 0.0, %v137
  %139 = vmatmul.f32.gmra.mxu0 %v72
  %v140 = vpop.f32.mrf.mxu0
  %v141 = vadd.f32 0.0, %v140
  %142 = vmatmul.f32.gmra.mxu0 %v75
  %v143 = vpop.f32.mrf.mxu0
  %v144 = vadd.f32 0.0, %v143
  %145 = vmatmul.f32.gmra.mxu0 %v78
  %v146 = vpop.f32.mrf.mxu0
  %v147 = vadd.f32 0.0, %v146
  %148 = vdwg.mxu0
  %149 = vst [vmem:[%s2] sm:$0xff] %v102
  %150 = vst [vmem:[%s2 + $0x8] sm:$0xff] %v105
  %151 = vst [vmem:[%s2 + $0x10] sm:$0xff] %v108
  %152 = vst [vmem:[%s2 + $0x18] sm:$0xff] %v111
  %153 = vst [vmem:[%s2 + $0x20] sm:$0xff] %v114
  %154 = vst [vmem:[%s2 + $0x28] sm:$0xff] %v117
  %155 = vst [vmem:[%s2 + $0x30] sm:$0xff] %v120
  %156 = vst [vmem:[%s2 + $0x38] sm:$0xff] %v123
  %157 = vst [vmem:[%s2 + $0x40] sm:$0xff] %v126
  %158 = vst [vmem:[%s2 + $0x48] sm:$0xff] %v129
  %159 = vst [vmem:[%s2 + $0x50] sm:$0xff] %v132
  %160 = vst [vmem:[%s2 + $0x58] sm:$0xff] %v135
  %161 = vst [vmem:[%s2 + $0x60] sm:$0xff] %v138
  %162 = vst [vmem:[%s2 + $0x68] sm:$0xff] %v141
  %163 = vst [vmem:[%s2 + $0x70] sm:$0xff] %v144
  %164 = vst [vmem:[%s2 + $0x78] sm:$0xff] %v147
  // Predicated region
  $region10: #{scnet_forward.11} parent=0 // pred_check
    _
  $region11: #{scnet_forward.11} parent=0 // pred_check_branch
    %166 = sbr.rel (0) target = $region13
  $region12: #{scnet_forward.11} parent=0 // pred_region
    _
  $region13: #{scnet_forward.11} parent=0 // pred_fallthru
    _
  // Predicated region
  $region14: #{scnet_forward.11} parent=0 // pred_check
    _
  $region15: #{scnet_forward.11} parent=0 // pred_check_branch
    %168 = sbr.rel (0) target = $region17
  $region16: #{scnet_forward.11} parent=0 // pred_region
    _
  $region17: #{scnet_forward.11} parent=0 // pred_fallthru
    _

// kernel: scnet_forward.16
$region0: #{scnet_forward.16}
  #allocation0 [shape = 'u32[]', space=smem, size = 0x4, offset = 0x4, fixed_abs, tag = 'smem constant byte address 0x4 - core index']
  #allocation1 [shape = 'u32[72,128]{1,0:T(1,128)}', space=vmem, size = 0x9000, scoped, tag = 'internal scratch']
  %s0 = inlined_call_operand.vmem [shape: bf16[128,50], index: 0, kind: input, shape index: {}]
  %s1 = inlined_call_operand.vmem [shape: bf16[50,32], index: 1, kind: input, shape index: {}]
  %s2 = inlined_call_operand.vmem [shape: bf16[128,32], index: 2, kind: output, shape index: {}]
  %s3 = sld [smem:[#allocation0]]
  $region18: #{scnet_forward.16} parent=0
    _
  %s5 = ssub.s32 1, %s3
  %s6 = scalar_select 0, %s5, %s3
  // Predicated region
  $region2: #{scnet_forward.16} parent=0 // pred_check
    _
  $region3: #{scnet_forward.16} parent=0 // pred_check_branch
    %8 = sbr.rel (0) target = $region5
  $region4: #{scnet_forward.16} parent=0 // pred_region
    _
  $region5: #{scnet_forward.16} parent=0 // pred_fallthru
    _
  // Predicated region
  $region6: #{scnet_forward.16} parent=0 // pred_check
    _
  $region7: #{scnet_forward.16} parent=0 // pred_check_branch
    %10 = sbr.rel (0) target = $region9
  $region8: #{scnet_forward.16} parent=0 // pred_region
    _
  $region9: #{scnet_forward.16} parent=0 // pred_fallthru
    _
  %v12 = vld [vmem:[%s0] sm:$0xf]
  %v13 = vld [vmem:[%s0 + $0x4] sm:$0xf]
  %v14 = vld [vmem:[%s0 + $0x8] sm:$0xf]
  %v15 = vld [vmem:[%s0 + $0xc] sm:$0xf]
  %v16 = vld [vmem:[%s0 + $0x10] sm:$0xf]
  %v17 = vld [vmem:[%s0 + $0x14] sm:$0xf]
  %v18 = vld [vmem:[%s0 + $0x18] sm:$0xf]
  %v19 = vld [vmem:[%s0 + $0x1c] sm:$0xf]
  %v20 = vld [vmem:[%s0 + $0x20] sm:$0xf]
  %v21 = vld [vmem:[%s0 + $0x24] sm:$0xf]
  %v22 = vld [vmem:[%s0 + $0x28] sm:$0xf]
  %v23 = vld [vmem:[%s0 + $0x2c] sm:$0xf]
  %v24 = vld [vmem:[%s0 + $0x30] sm:$0xf]
  %v25 = vld [vmem:[%s0 + $0x34] sm:$0xf]
  %v26 = vld [vmem:[%s0 + $0x38] sm:$0xf]
  %v27 = vld [vmem:[%s0 + $0x3c] sm:$0xf]
  %v28 = vld [vmem:[%s1] sm:$0xf]
  %v29 = vld [vmem:[%s1 + $0x4] sm:$0xf]
  %v30 = vld [vmem:[%s1 + $0x8] sm:$0xf]
  %v31 = vld [vmem:[%s1 + $0xc] sm:$0xf]
  %v32 = vld [vmem:[%s1 + $0x10] sm:$0xf]
  %v33 = vld [vmem:[%s1 + $0x14] sm:$0xf]
  %v34 = vld [vmem:[%s1 + $0x18] sm:$0x1]
  %v51 = vunpack.c.l.b16 %v12
  %v52 = vunpack.c.l.b16 %v13
  %v53 = vunpack.c.l.b16 %v14
  %v54 = vunpack.c.l.b16 %v15
  %v55 = vunpack.c.l.b16 %v16
  %v56 = vunpack.c.l.b16 %v17
  %v57 = vunpack.c.l.b16 %v18
  %v58 = vunpack.c.l.b16 %v19
  %v59 = vunpack.c.l.b16 %v20
  %v60 = vunpack.c.l.b16 %v21
  %v61 = vunpack.c.l.b16 %v22
  %v62 = vunpack.c.l.b16 %v23
  %v63 = vunpack.c.l.b16 %v24
  %v64 = vunpack.c.l.b16 %v25
  %v65 = vunpack.c.l.b16 %v26
  %v66 = vunpack.c.l.b16 %v27
  %v67 = vpack.c.b16 %v52, %v51
  %v68 = vpack.c.b16 %v54, %v53
  %v69 = vpack.c.b16 %v56, %v55
  %v70 = vpack.c.b16 %v58, %v57
  %v71 = vpack.c.b16 %v60, %v59
  %v72 = vpack.c.b16 %v62, %v61
  %v73 = vpack.c.b16 %v64, %v63
  %v74 = vpack.c.b16 %v66, %v65
  %v82 = vunpack.c.l.b16 %v28
  %v83 = vunpack.c.l.b16 %v29
  %v84 = vunpack.c.l.b16 %v30
  %v85 = vunpack.c.l.b16 %v31
  %v86 = vunpack.c.l.b16 %v32
  %v87 = vunpack.c.l.b16 %v33
  %v88 = vunpack.c.l.b16 %v34
  %v89 = vpack.c.b16 %v83, %v82
  %v90 = vpack.c.b16 %v85, %v84
  %v91 = vpack.c.b16 %v87, %v86
  %v92 = vpack.c.b16 %v88, %v88
  %vm96 = vcmask 408576
  %v98 = vsel %vm96, %v67, 0
  %v101 = vsel %vm96, %v68, 0
  %v104 = vsel %vm96, %v69, 0
  %v107 = vsel %vm96, %v70, 0
  %v110 = vsel %vm96, %v71, 0
  %v113 = vsel %vm96, %v72, 0
  %v116 = vsel %vm96, %v73, 0
  %v119 = vsel %vm96, %v74, 0
  %vm121 = vcmask 1040384
  %v123 = vsel %vm121, %v92, 0
  %125 = vmatpush.bf16.msra.mxu0 0
  %126 = vmatpush.bf16.msra.mxu0 0
  %127 = vmatpush.bf16.msra.mxu0 0
  %128 = vmatpush.bf16.msra.mxu0 0
  %129 = vmatpush.bf16.msra.mxu0 %v123
  %130 = vmatpush.bf16.msra.mxu0 %v91
  %131 = vmatpush.bf16.msra.mxu0 %v90
  %132 = vmatpush.bf16.msra.mxu0 %v89
  %133 = vmatmul.bf16.gmra.mxu0 %v98
  %v134 = vpop.f32.mrf.mxu0
  %v135 = vadd.f32 0.0, %v134
  %v136 = vpop.f32.mrf.mxu0
  %v137 = vadd.f32 0.0, %v136
  %138 = vmatmul.bf16.gmra.mxu0 %v101
  %v139 = vpop.f32.mrf.mxu0
  %v140 = vadd.f32 0.0, %v139
  %v141 = vpop.f32.mrf.mxu0
  %v142 = vadd.f32 0.0, %v141
  %143 = vmatmul.bf16.gmra.mxu0 %v104
  %v144 = vpop.f32.mrf.mxu0
  %v145 = vadd.f32 0.0, %v144
  %v146 = vpop.f32.mrf.mxu0
  %v147 = vadd.f32 0.0, %v146
  %148 = vmatmul.bf16.gmra.mxu0 %v107
  %v149 = vpop.f32.mrf.mxu0
  %v150 = vadd.f32 0.0, %v149
  %v151 = vpop.f32.mrf.mxu0
  %v152 = vadd.f32 0.0, %v151
  %153 = vmatmul.bf16.gmra.mxu0 %v110
  %v154 = vpop.f32.mrf.mxu0
  %v155 = vadd.f32 0.0, %v154
  %v156 = vpop.f32.mrf.mxu0
  %v157 = vadd.f32 0.0, %v156
  %158 = vmatmul.bf16.gmra.mxu0 %v113
  %v159 = vpop.f32.mrf.mxu0
  %v160 = vadd.f32 0.0, %v159
  %v161 = vpop.f32.mrf.mxu0
  %v162 = vadd.f32 0.0, %v161
  %163 = vmatmul.bf16.gmra.mxu0 %v116
  %v164 = vpop.f32.mrf.mxu0
  %v165 = vadd.f32 0.0, %v164
  %v166 = vpop.f32.mrf.mxu0
  %v167 = vadd.f32 0.0, %v166
  %168 = vmatmul.bf16.gmra.mxu0 %v119
  %v169 = vpop.f32.mrf.mxu0
  %v170 = vadd.f32 0.0, %v169
  %v171 = vpop.f32.mrf.mxu0
  %v172 = vadd.f32 0.0, %v171
  %173 = vdwg.mxu0
  %v174 = vpack.c.bf16 %v135, %v135
  %v175 = vpack.c.bf16 %v137, %v137
  %v176 = vpack.c.bf16 %v140, %v140
  %v177 = vpack.c.bf16 %v142, %v142
  %v178 = vpack.c.bf16 %v145, %v145
  %v179 = vpack.c.bf16 %v147, %v147
  %v180 = vpack.c.bf16 %v150, %v150
  %v181 = vpack.c.bf16 %v152, %v152
  %v182 = vpack.c.bf16 %v155, %v155
  %v183 = vpack.c.bf16 %v157, %v157
  %v184 = vpack.c.bf16 %v160, %v160
  %v185 = vpack.c.bf16 %v162, %v162
  %v186 = vpack.c.bf16 %v165, %v165
  %v187 = vpack.c.bf16 %v167, %v167
  %v188 = vpack.c.bf16 %v170, %v170
  %v189 = vpack.c.bf16 %v172, %v172
  %vm190 = vcmask 257024
  %191 = vst.msk [vmem:[%s2] sm:$0xf] %vm190, %v174
  %192 = vst.msk [vmem:[%s2 + $0x4] sm:$0xf] %vm190, %v175
  %193 = vst.msk [vmem:[%s2 + $0x8] sm:$0xf] %vm190, %v176
  %194 = vst.msk [vmem:[%s2 + $0xc] sm:$0xf] %vm190, %v177
  %195 = vst.msk [vmem:[%s2 + $0x10] sm:$0xf] %vm190, %v178
  %196 = vst.msk [vmem:[%s2 + $0x14] sm:$0xf] %vm190, %v179
  %197 = vst.msk [vmem:[%s2 + $0x18] sm:$0xf] %vm190, %v180
  %198 = vst.msk [vmem:[%s2 + $0x1c] sm:$0xf] %vm190, %v181
  %199 = vst.msk [vmem:[%s2 + $0x20] sm:$0xf] %vm190, %v182
  %200 = vst.msk [vmem:[%s2 + $0x24] sm:$0xf] %vm190, %v183
  %201 = vst.msk [vmem:[%s2 + $0x28] sm:$0xf] %vm190, %v184
  %202 = vst.msk [vmem:[%s2 + $0x2c] sm:$0xf] %vm190, %v185
  %203 = vst.msk [vmem:[%s2 + $0x30] sm:$0xf] %vm190, %v186
  %204 = vst.msk [vmem:[%s2 + $0x34] sm:$0xf] %vm190, %v187
  %205 = vst.msk [vmem:[%s2 + $0x38] sm:$0xf] %vm190, %v188
  %206 = vst.msk [vmem:[%s2 + $0x3c] sm:$0xf] %vm190, %v189
  // Predicated region
  $region10: #{scnet_forward.16} parent=0 // pred_check
    _
  $region11: #{scnet_forward.16} parent=0 // pred_check_branch
    %208 = sbr.rel (0) target = $region13
  $region12: #{scnet_forward.16} parent=0 // pred_region
    _
  $region13: #{scnet_forward.16} parent=0 // pred_fallthru
    _
  // Predicated region
  $region14: #{scnet_forward.16} parent=0 // pred_check
    _
  $region15: #{scnet_forward.16} parent=0 // pred_check_branch
    %210 = sbr.rel (0) target = $region17
  $region16: #{scnet_forward.16} parent=0 // pred_region
    _
  $region17: #{scnet_forward.16} parent=0 // pred_fallthru
    _

// kernel: scnet_forward.17
$region0: #{scnet_forward.17}
  #allocation0 [shape = 'u32[]', space=smem, size = 0x4, offset = 0x4, fixed_abs, tag = 'smem constant byte address 0x4 - core index']
  #allocation1 [shape = 'u32[72,128]{1,0:T(1,128)}', space=vmem, size = 0x9000, scoped, tag = 'internal scratch']
  %s0 = inlined_call_operand.vmem [shape: bf16[2,128,128], index: 0, kind: input, shape index: {}]
  %s1 = inlined_call_operand.vmem [shape: bf16[128,32], index: 1, kind: input, shape index: {}]
  %s2 = inlined_call_operand.vmem [shape: f32[1,32], index: 2, kind: input, shape index: {}]
  %s3 = inlined_call_operand.vmem [shape: bf16[32,128], index: 3, kind: input, shape index: {}]
  %s4 = inlined_call_operand.vmem [shape: f32[1,128], index: 4, kind: input, shape index: {}]
  %s5 = inlined_call_operand.vmem [shape: f32[2,128,64], index: 5, kind: output, shape index: {0}]
  %s6 = inlined_call_operand.vmem [shape: bf16[2,2,16,128], index: 6, kind: output, shape index: {1}]
  %s7 = inlined_call_operand.vmem [shape: bf16[2,2,128,32], index: 7, kind: output, shape index: {2}]
  %8 = xla_tuple %s5, %s6, %s7
  %s9 = sld [smem:[#allocation0]]
  $region69: #{scnet_forward.17} parent=0
    _
  %s11 = ssub.s32 1, %s9
  %s12 = scalar_select 0, %s11, %s9
  loop: start=0, step=1, limit=4
  $region2: #{scnet_forward.17} parent=0 // loop_pre_header
    _
  $region3: #{scnet_forward.17} parent=0 // loop_header
    %s14 = sphi 0, %s18
    %p15 = scmp.ge.s32.totalorder %s14, 4
    %s21 = sphi 0, %s33
    %s22 = sphi 0, %s29
    %s23 = sphi 0, %s21
    %s24 = sphi 0, %s22
    %s25 = sphi 0, %s23
    %s26 = sphi 0, %s24
    %s38 = sphi 0, %s40
    %s41 = sphi 0, %s38
    %s42 = sphi 0, %s41
    %s58 = sphi 0, %s42
    %s62 = sphi 0, %s62
    %s64 = sphi 0, %s62
    %s65 = sphi 0, %s64
    %s79 = sphi 0, %s65
    %s83 = sphi 0, %s83
    %s85 = sphi 0, %s83
    %s86 = sphi 0, %s85
    %s100 = sphi 0, %s86
    %s104 = sphi 0, %s104
    %s106 = sphi 0, %s104
    %s107 = sphi 0, %s106
    %s121 = sphi 0, %s107
    %s125 = sphi 0, %s125
    %s127 = sphi 0, %s125
    %s128 = sphi 0, %s127
    %s142 = sphi 0, %s128
    %s150 = sphi 0, %s152
    %s153 = sphi 0, %s150
    %s154 = sphi 0, %s153
    %s170 = sphi 0, %s154
    %s178 = sphi 0, %s180
    %s181 = sphi 0, %s178
    %s182 = sphi 0, %s181
    %s198 = sphi 0, %s182
    %s206 = sphi 0, %s208
    %s209 = sphi 0, %s206
    %s210 = sphi 0, %s209
    %s226 = sphi 0, %s210
  $region4: #{scnet_forward.17} parent=0 // loop_header_branch
    %17 = sbr.rel (%p15) target = $region8
  $region5: #{scnet_forward.17} parent=0 // loop_body
    %s19 = ssub.s32 %s14, 1
    %s20 = ssub.s32 %s14, 2
    %s27 = sadd.s32 1, %s22
    %p28 = scmp.ge.s32.totalorder %s27, 1
    %s29 = scalar_select %p28, 0, %s27
    %s30 = sadd.s32 1, %s21
    %s31 = scalar_select %p28, %s30, %s21
    %p32 = scmp.ge.s32.totalorder %s31, 2
    %s33 = scalar_select %p32, 0, %s31
    %s34 = ssub.s32 %s21, %s33
    %s35 = ssub.s32 %s22, %s29
    %s36 = sor.u32 %s34, %s35
    %p37 = scmp.eq.s32.totalorder %s36, 0
    %s39 = sadd.s32 %s38, 1
    %s40 = scalar_select %p37, %s38, %s39
    %p43 = pneg %p37
    %p44 = scmp.eq.s32.totalorder %s14, 1
    %p45 = por %p43, %p44
    %p46 = scmp.ne.s32.totalorder %s38, %s41
    %p47 = scmp.eq.s32.totalorder %s14, 0
    %p48 = por %p46, %p47
    %p49 = scmp.ne.s32.totalorder %s38, %s41
    %p50 = scmp.eq.s32.totalorder %s19, 1
    %p51 = por %p49, %p50
    %p52 = scmp.ne.s32.totalorder %s41, %s42
    %p53 = scmp.eq.s32.totalorder %s19, 0
    %p54 = por %p52, %p53
    %p55 = scmp.ne.s32.totalorder %s41, %s42
    %p56 = scmp.eq.s32.totalorder %s20, 1
    %p57 = por %p55, %p56
    %p59 = scmp.ne.s32.totalorder %s42, %s58
    %p60 = scmp.eq.s32.totalorder %s20, 0
    %p61 = por %p59, %p60
    %s63 = sadd.s32 %s62, 1
    %p66 = scmp.eq.s32.totalorder %s14, 1
    %p67 = scmp.ne.s32.totalorder %s62, %s64
    %p68 = scmp.eq.s32.totalorder %s14, 0
    %p69 = por %p67, %p68
    %p70 = scmp.ne.s32.totalorder %s62, %s64
    %p71 = scmp.eq.s32.totalorder %s19, 1
    %p72 = por %p70, %p71
    %p73 = scmp.ne.s32.totalorder %s64, %s65
    %p74 = scmp.eq.s32.totalorder %s19, 0
    %p75 = por %p73, %p74
    %p76 = scmp.ne.s32.totalorder %s64, %s65
    %p77 = scmp.eq.s32.totalorder %s20, 1
    %p78 = por %p76, %p77
    %p80 = scmp.ne.s32.totalorder %s65, %s79
    %p81 = scmp.eq.s32.totalorder %s20, 0
    %p82 = por %p80, %p81
    %s84 = sadd.s32 %s83, 1
    %p87 = scmp.eq.s32.totalorder %s14, 1
    %p88 = scmp.ne.s32.totalorder %s83, %s85
    %p89 = scmp.eq.s32.totalorder %s14, 0
    %p90 = por %p88, %p89
    %p91 = scmp.ne.s32.totalorder %s83, %s85
    %p92 = scmp.eq.s32.totalorder %s19, 1
    %p93 = por %p91, %p92
    %p94 = scmp.ne.s32.totalorder %s85, %s86
    %p95 = scmp.eq.s32.totalorder %s19, 0
    %p96 = por %p94, %p95
    %p97 = scmp.ne.s32.totalorder %s85, %s86
    %p98 = scmp.eq.s32.totalorder %s20, 1
    %p99 = por %p97, %p98
    %p101 = scmp.ne.s32.totalorder %s86, %s100
    %p102 = scmp.eq.s32.totalorder %s20, 0
    %p103 = por %p101, %p102
    %s105 = sadd.s32 %s104, 1
    %p108 = scmp.eq.s32.totalorder %s14, 1
    %p109 = scmp.ne.s32.totalorder %s104, %s106
    %p110 = scmp.eq.s32.totalorder %s14, 0
    %p111 = por %p109, %p110
    %p112 = scmp.ne.s32.totalorder %s104, %s106
    %p113 = scmp.eq.s32.totalorder %s19, 1
    %p114 = por %p112, %p113
    %p115 = scmp.ne.s32.totalorder %s106, %s107
    %p116 = scmp.eq.s32.totalorder %s19, 0
    %p117 = por %p115, %p116
    %p118 = scmp.ne.s32.totalorder %s106, %s107
    %p119 = scmp.eq.s32.totalorder %s20, 1
    %p120 = por %p118, %p119
    %p122 = scmp.ne.s32.totalorder %s107, %s121
    %p123 = scmp.eq.s32.totalorder %s20, 0
    %p124 = por %p122, %p123
    %s126 = sadd.s32 %s125, 1
    %p129 = scmp.eq.s32.totalorder %s14, 1
    %p130 = scmp.ne.s32.totalorder %s125, %s127
    %p131 = scmp.eq.s32.totalorder %s14, 0
    %p132 = por %p130, %p131
    %p133 = scmp.ne.s32.totalorder %s125, %s127
    %p134 = scmp.eq.s32.totalorder %s19, 1
    %p135 = por %p133, %p134
    %p136 = scmp.ne.s32.totalorder %s127, %s128
    %p137 = scmp.eq.s32.totalorder %s19, 0
    %p138 = por %p136, %p137
    %p139 = scmp.ne.s32.totalorder %s127, %s128
    %p140 = scmp.eq.s32.totalorder %s20, 1
    %p141 = por %p139, %p140
    %p143 = scmp.ne.s32.totalorder %s128, %s142
    %p144 = scmp.eq.s32.totalorder %s20, 0
    %p145 = por %p143, %p144
    %s146 = ssub.s32 %s21, %s33
    %s147 = ssub.s32 %s22, %s29
    %s148 = sor.u32 %s146, %s147
    %p149 = scmp.eq.s32.totalorder %s148, 0
    %s151 = sadd.s32 %s150, 1
    %s152 = scalar_select %p149, %s150, %s151
    %p155 = pneg %p149
    %p156 = scmp.eq.s32.totalorder %s14, 1
    %p157 = por %p155, %p156
    %p158 = scmp.ne.s32.totalorder %s150, %s153
    %p159 = scmp.eq.s32.totalorder %s14, 0
    %p160 = por %p158, %p159
    %p161 = scmp.ne.s32.totalorder %s150, %s153
    %p162 = scmp.eq.s32.totalorder %s19, 1
    %p163 = por %p161, %p162
    %p164 = scmp.ne.s32.totalorder %s153, %s154
    %p165 = scmp.eq.s32.totalorder %s19, 0
    %p166 = por %p164, %p165
    %p167 = scmp.ne.s32.totalorder %s153, %s154
    %p168 = scmp.eq.s32.totalorder %s20, 1
    %p169 = por %p167, %p168
    %p171 = scmp.ne.s32.totalorder %s154, %s170
    %p172 = scmp.eq.s32.totalorder %s20, 0
    %p173 = por %p171, %p172
    %s174 = ssub.s32 %s21, %s33
    %s175 = ssub.s32 %s22, %s29
    %s176 = sor.u32 %s174, %s175
    %p177 = scmp.eq.s32.totalorder %s176, 0
    %s179 = sadd.s32 %s178, 1
    %s180 = scalar_select %p177, %s178, %s179
    %p183 = pneg %p177
    %p184 = scmp.eq.s32.totalorder %s14, 1
    %p185 = por %p183, %p184
    %p186 = scmp.ne.s32.totalorder %s178, %s181
    %p187 = scmp.eq.s32.totalorder %s14, 0
    %p188 = por %p186, %p187
    %p189 = scmp.ne.s32.totalorder %s178, %s181
    %p190 = scmp.eq.s32.totalorder %s19, 1
    %p191 = por %p189, %p190
    %p192 = scmp.ne.s32.totalorder %s181, %s182
    %p193 = scmp.eq.s32.totalorder %s19, 0
    %p194 = por %p192, %p193
    %p195 = scmp.ne.s32.totalorder %s181, %s182
    %p196 = scmp.eq.s32.totalorder %s20, 1
    %p197 = por %p195, %p196
    %p199 = scmp.ne.s32.totalorder %s182, %s198
    %p200 = scmp.eq.s32.totalorder %s20, 0
    %p201 = por %p199, %p200
    %s202 = ssub.s32 %s21, %s33
    %s203 = ssub.s32 %s22, %s29
    %s204 = sor.u32 %s202, %s203
    %p205 = scmp.eq.s32.totalorder %s204, 0
    %s207 = sadd.s32 %s206, 1
    %s208 = scalar_select %p205, %s206, %s207
    %p211 = pneg %p205
    %p212 = scmp.eq.s32.totalorder %s14, 1
    %p213 = por %p211, %p212
    %p214 = scmp.ne.s32.totalorder %s206, %s209
    %p215 = scmp.eq.s32.totalorder %s14, 0
    %p216 = por %p214, %p215
    %p217 = scmp.ne.s32.totalorder %s206, %s209
    %p218 = scmp.eq.s32.totalorder %s19, 1
    %p219 = por %p217, %p218
    %p220 = scmp.ne.s32.totalorder %s209, %s210
    %p221 = scmp.eq.s32.totalorder %s19, 0
    %p222 = por %p220, %p221
    %p223 = scmp.ne.s32.totalorder %s209, %s210
    %p224 = scmp.eq.s32.totalorder %s20, 1
    %p225 = por %p223, %p224
    %p227 = scmp.ne.s32.totalorder %s210, %s226
    %p228 = scmp.eq.s32.totalorder %s20, 0
    %p229 = por %p227, %p228
    %p230 = scmp.le.s32.totalorder 1, %s14
    %p231 = scmp.lt.s32.totalorder %s14, 3
    %p232 = pnand %p230, %p231
    %p233 = pneg %p232
    // Predicated region
    $region9: #{scnet_forward.17} parent=5 // pred_check
      _
    $region10: #{scnet_forward.17} parent=5 // pred_check_branch
      %235 = sbr.rel (%p232) target = $region12
    $region11: #{scnet_forward.17} parent=5 // pred_region
      %s236 = ssub.s32 %s14, 1
      // Predicated region
      $region13: #{scnet_forward.17} parent=11 // pred_check
        %p237 = pneg %p75
      $region14: #{scnet_forward.17} parent=11 // pred_check_branch
        %239 = sbr.rel (%p237) target = $region16
      $region15: #{scnet_forward.17} parent=11 // pred_region
        _
      $region16: #{scnet_forward.17} parent=11 // pred_fallthru
        _
      // Predicated region
      $region17: #{scnet_forward.17} parent=11 // pred_check
        %p240 = pneg %p96
      $region18: #{scnet_forward.17} parent=11 // pred_check_branch
        %242 = sbr.rel (%p240) target = $region20
      $region19: #{scnet_forward.17} parent=11 // pred_region
        _
      $region20: #{scnet_forward.17} parent=11 // pred_fallthru
        _
      // Predicated region
      $region21: #{scnet_forward.17} parent=11 // pred_check
        %p243 = pneg %p117
      $region22: #{scnet_forward.17} parent=11 // pred_check_branch
        %245 = sbr.rel (%p243) target = $region24
      $region23: #{scnet_forward.17} parent=11 // pred_region
        _
      $region24: #{scnet_forward.17} parent=11 // pred_fallthru
        _
      // Predicated region
      $region25: #{scnet_forward.17} parent=11 // pred_check
        %p246 = pneg %p138
      $region26: #{scnet_forward.17} parent=11 // pred_check_branch
        %248 = sbr.rel (%p246) target = $region28
      $region27: #{scnet_forward.17} parent=11 // pred_region
        _
      $region28: #{scnet_forward.17} parent=11 // pred_fallthru
        _
    $region12: #{scnet_forward.17} parent=5 // pred_fallthru
      _
    %p249 = scmp.lt.s32.totalorder %s14, 2
    // Predicated region
    $region29: #{scnet_forward.17} parent=5 // pred_check
      %p250 = pneg %p249
    $region30: #{scnet_forward.17} parent=5 // pred_check_branch
      %252 = sbr.rel (%p250) target = $region32
    $region31: #{scnet_forward.17} parent=5 // pred_region
      // Predicated region
      $region33: #{scnet_forward.17} parent=31 // pred_check
        %p253 = pneg %p48
      $region34: #{scnet_forward.17} parent=31 // pred_check_branch
        %255 = sbr.rel (%p253) target = $region36
      $region35: #{scnet_forward.17} parent=31 // pred_region
        %s256 = smul.u32 16, %s22
        %p257 = scmp.lt.s32.totalorder %s21, 1
        %s258 = scalar_select %p257, %s21, 1
        %p259 = scmp.lt.s32.totalorder %s256, 15
        %s260 = scalar_select %p259, %s256, 15
        %s261 = smul.addr %s258, 16
        %s262 = sadd.s32 %s260, %s261
        %s263 = smul.addr %s262, 4
        %s264 = scalar_lea.vmem %s0, %s263
        %s265 = smul.u32 16, %s22
      $region36: #{scnet_forward.17} parent=31 // pred_fallthru
        _
    $region32: #{scnet_forward.17} parent=5 // pred_fallthru
      _
    %p266 = scmp.le.s32.totalorder 1, %s14
    %p267 = scmp.lt.s32.totalorder %s14, 3
    %p268 = pnand %p266, %p267
    %p269 = pneg %p268
    // Predicated region
    $region37: #{scnet_forward.17} parent=5 // pred_check
      _
    $region38: #{scnet_forward.17} parent=5 // pred_check_branch
      %271 = sbr.rel (%p268) target = $region40
    $region39: #{scnet_forward.17} parent=5 // pred_region
      %s272 = ssub.s32 %s14, 1
      %s273 = smul.u32 16, %s24
      %p274 = scmp.lt.s32.totalorder %s23, 1
      %s275 = scalar_select %p274, %s23, 1
      %p276 = scmp.lt.s32.totalorder %s273, 15
      %s277 = scalar_select %p276, %s273, 15
      %s278 = smul.addr %s275, 16
      %s279 = sadd.s32 %s277, %s278
      %s280 = smul.addr %s279, 4
      %s281 = scalar_lea.vmem %s0, %s280
      %p282 = pneg %p54
      %p283 = pneg %p51
      %p284 = pneg %p75
      %p285 = pneg %p72
      %p286 = pneg %p96
      %p287 = pneg %p93
      %p288 = pneg %p117
      %p289 = pneg %p114
      %p290 = pneg %p138
      %p291 = pneg %p135
      %p292 = pneg %p166
      %p293 = pneg %p163
      %s294 = smul.u32 16, %s24
      %p295 = scmp.lt.s32.totalorder %s23, 1
      %s296 = scalar_select %p295, %s23, 1
      %p297 = scmp.lt.s32.totalorder %s294, 15
      %s298 = scalar_select %p297, %s294, 15
      %s299 = smul.addr %s296, 16
      %s300 = sadd.s32 %s298, %s299
      %s301 = smul.addr %s300, 8
      %s302 = scalar_lea.vmem %s5, %s301
      %p303 = pneg %p194
      %p304 = pneg %p191
      %p305 = scmp.lt.s32.totalorder %s23, 1
      %s306 = scalar_select %p305, %s23, 1
      %p307 = scmp.lt.s32.totalorder %s24, 0
      %s308 = scalar_select %p307, %s24, 0
      %s309 = smul.addr %s306, 4
      %s310 = sadd.s32 %s308, %s309
      %s311 = smul.addr %s310, 4
      %s312 = scalar_lea.vmem %s6, %s311
      %p313 = pneg %p222
      %p314 = pneg %p219
      %s315 = smul.u32 16, %s24
      %p316 = scmp.lt.s32.totalorder %s23, 1
      %s317 = scalar_select %p316, %s23, 1
      %p318 = scmp.lt.s32.totalorder %s315, 15
      %s319 = scalar_select %p318, %s315, 15
      %s320 = smul.addr %s317, 32
      %s321 = sadd.s32 %s319, %s320
      %s322 = smul.addr %s321, 4
      %s323 = scalar_lea.vmem %s7, %s322
      %s324 = smul.u32 16, %s24
      %p325 = scmp.lt.s32.totalorder %s23, 1
      %s326 = scalar_select %p325, %s23, 1
      %p327 = scmp.lt.s32.totalorder %s324, 15
      %s328 = scalar_select %p327, %s324, 15
      %s329 = smul.addr %s326, 16
      %s330 = sadd.s32 %s328, %s329
      %s331 = smul.addr %s330, 4
      %s332 = scalar_lea.vmem %s0, %s331
      %s333 = smul.u32 16, %s24
      %s334 = smul.u32 16, %s24
      %p335 = scmp.lt.s32.totalorder %s23, 1
      %s336 = scalar_select %p335, %s23, 1
      %p337 = scmp.lt.s32.totalorder %s334, 15
      %s338 = scalar_select %p337, %s334, 15
      %s339 = smul.addr %s336, 16
      %s340 = sadd.s32 %s338, %s339
      %s341 = smul.addr %s340, 8
      %s342 = scalar_lea.vmem %s5, %s341
      %s343 = smul.u32 16, %s24
      %p344 = scmp.lt.s32.totalorder %s23, 1
      %s345 = scalar_select %p344, %s23, 1
      %p346 = scmp.lt.s32.totalorder %s24, 0
      %s347 = scalar_select %p346, %s24, 0
      %s348 = smul.addr %s345, 4
      %s349 = sadd.s32 %s347, %s348
      %s350 = smul.addr %s349, 4
      %s351 = scalar_lea.vmem %s6, %s350
      %s352 = smul.u32 16, %s24
      %p353 = scmp.lt.s32.totalorder %s23, 1
      %s354 = scalar_select %p353, %s23, 1
      %p355 = scmp.lt.s32.totalorder %s352, 15
      %s356 = scalar_select %p355, %s352, 15
      %s357 = smul.addr %s354, 32
      %s358 = sadd.s32 %s356, %s357
      %s359 = smul.addr %s358, 4
      %s360 = scalar_lea.vmem %s7, %s359
      %s361 = smul.u32 16, %s24
      %v363 = vld [vmem:[%s332] sm:$0xf]
      %v364 = vld [vmem:[%s332 + $0x4] sm:$0xf]
      %v365 = vld [vmem:[%s332 + $0x8] sm:$0xf]
      %v366 = vld [vmem:[%s332 + $0xc] sm:$0xf]
      %v367 = vld [vmem:[%s332 + $0x10] sm:$0xf]
      %v368 = vld [vmem:[%s332 + $0x14] sm:$0xf]
      %v369 = vld [vmem:[%s332 + $0x18] sm:$0xf]
      %v370 = vld [vmem:[%s332 + $0x1c] sm:$0xf]
      %v371 = vld [vmem:[%s332 + $0x20] sm:$0xf]
      %v372 = vld [vmem:[%s332 + $0x24] sm:$0xf]
      %v373 = vld [vmem:[%s332 + $0x28] sm:$0xf]
      %v374 = vld [vmem:[%s332 + $0x2c] sm:$0xf]
      %v375 = vld [vmem:[%s332 + $0x30] sm:$0xf]
      %v376 = vld [vmem:[%s332 + $0x34] sm:$0xf]
      %v377 = vld [vmem:[%s332 + $0x38] sm:$0xf]
      %v378 = vld [vmem:[%s332 + $0x3c] sm:$0xf]
      %v379 = vld [vmem:[%s1] sm:$0xf]
      %v380 = vld [vmem:[%s1 + $0x4] sm:$0xf]
      %v381 = vld [vmem:[%s1 + $0x8] sm:$0xf]
      %v382 = vld [vmem:[%s1 + $0xc] sm:$0xf]
      %v383 = vld [vmem:[%s1 + $0x10] sm:$0xf]
      %v384 = vld [vmem:[%s1 + $0x14] sm:$0xf]
      %v385 = vld [vmem:[%s1 + $0x18] sm:$0xf]
      %v386 = vld [vmem:[%s1 + $0x1c] sm:$0xf]
      %v387 = vld [vmem:[%s1 + $0x20] sm:$0xf]
      %v388 = vld [vmem:[%s1 + $0x24] sm:$0xf]
      %v389 = vld [vmem:[%s1 + $0x28] sm:$0xf]
      %v390 = vld [vmem:[%s1 + $0x2c] sm:$0xf]
      %v391 = vld [vmem:[%s1 + $0x30] sm:$0xf]
      %v392 = vld [vmem:[%s1 + $0x34] sm:$0xf]
      %v393 = vld [vmem:[%s1 + $0x38] sm:$0xf]
      %v394 = vld [vmem:[%s1 + $0x3c] sm:$0xf]
      %v395 = vld [vmem:[%s2] sm:$0x1]
      %v397 = vperm.slane %v395, 0
      %v415 = vunpack.c.l.b16 %v363
      %v416 = vunpack.c.l.b16 %v364
      %v417 = vunpack.c.l.b16 %v365
      %v418 = vunpack.c.l.b16 %v366
      %v419 = vunpack.c.l.b16 %v367
      %v420 = vunpack.c.l.b16 %v368
      %v421 = vunpack.c.l.b16 %v369
      %v422 = vunpack.c.l.b16 %v370
      %v423 = vunpack.c.l.b16 %v371
      %v424 = vunpack.c.l.b16 %v372
      %v425 = vunpack.c.l.b16 %v373
      %v426 = vunpack.c.l.b16 %v374
      %v427 = vunpack.c.l.b16 %v375
      %v428 = vunpack.c.l.b16 %v376
      %v429 = vunpack.c.l.b16 %v377
      %v430 = vunpack.c.l.b16 %v378
      %v431 = vpack.c.b16 %v416, %v415
      %v432 = vpack.c.b16 %v418, %v417
      %v433 = vpack.c.b16 %v420, %v419
      %v434 = vpack.c.b16 %v422, %v421
      %v435 = vpack.c.b16 %v424, %v423
      %v436 = vpack.c.b16 %v426, %v425
      %v437 = vpack.c.b16 %v428, %v427
      %v438 = vpack.c.b16 %v430, %v429
      %v463 = vunpack.c.l.b16 %v379
      %v464 = vunpack.c.l.b16 %v380
      %v465 = vunpack.c.l.b16 %v381
      %v466 = vunpack.c.l.b16 %v382
      %v467 = vunpack.c.l.b16 %v383
      %v468 = vunpack.c.l.b16 %v384
      %v469 = vunpack.c.l.b16 %v385
      %v470 = vunpack.c.l.b16 %v386
      %v471 = vunpack.c.l.b16 %v387
      %v472 = vunpack.c.l.b16 %v388
      %v473 = vunpack.c.l.b16 %v389
      %v474 = vunpack.c.l.b16 %v390
      %v475 = vunpack.c.l.b16 %v391
      %v476 = vunpack.c.l.b16 %v392
      %v477 = vunpack.c.l.b16 %v393
      %v478 = vunpack.c.l.b16 %v394
      %v479 = vpack.c.b16 %v464, %v463
      %v480 = vpack.c.b16 %v466, %v465
      %v481 = vpack.c.b16 %v468, %v467
      %v482 = vpack.c.b16 %v470, %v469
      %v483 = vpack.c.b16 %v472, %v471
      %v484 = vpack.c.b16 %v474, %v473
      %v485 = vpack.c.b16 %v476, %v475
      %v486 = vpack.c.b16 %v478, %v477
      %495 = vmatpush.bf16.msra.mxu0 %v486
      %496 = vmatpush.bf16.msra.mxu0 %v485
      %497 = vmatpush.bf16.msra.mxu0 %v484
      %498 = vmatpush.bf16.msra.mxu0 %v483
      %499 = vmatpush.bf16.msra.mxu0 %v482
      %500 = vmatpush.bf16.msra.mxu0 %v481
      %501 = vmatpush.bf16.msra.mxu0 %v480
      %502 = vmatpush.bf16.msra.mxu0 %v479
      %503 = vmatmul.bf16.gmra.mxu0 %v431
      %v504 = vpop.f32.mrf.mxu0
      %v505 = vadd.f32 %v397, %v504
      %v506 = vpop.f32.mrf.mxu0
      %v507 = vadd.f32 %v397, %v506
      %508 = vmatmul.bf16.gmra.mxu0 %v432
      %v509 = vpop.f32.mrf.mxu0
      %v510 = vadd.f32 %v397, %v509
      %v511 = vpop.f32.mrf.mxu0
      %v512 = vadd.f32 %v397, %v511
      %513 = vmatmul.bf16.gmra.mxu0 %v433
      %v514 = vpop.f32.mrf.mxu0
      %v515 = vadd.f32 %v397, %v514
      %v516 = vpop.f32.mrf.mxu0
      %v517 = vadd.f32 %v397, %v516
      %518 = vmatmul.bf16.gmra.mxu0 %v434
      %v519 = vpop.f32.mrf.mxu0
      %v520 = vadd.f32 %v397, %v519
      %v521 = vpop.f32.mrf.mxu0
      %v522 = vadd.f32 %v397, %v521
      %523 = vmatmul.bf16.gmra.mxu0 %v435
      %v524 = vpop.f32.mrf.mxu0
      %v525 = vadd.f32 %v397, %v524
      %v526 = vpop.f32.mrf.mxu0
      %v527 = vadd.f32 %v397, %v526
      %528 = vmatmul.bf16.gmra.mxu0 %v436
      %v529 = vpop.f32.mrf.mxu0
      %v530 = vadd.f32 %v397, %v529
      %v531 = vpop.f32.mrf.mxu0
      %v532 = vadd.f32 %v397, %v531
      %533 = vmatmul.bf16.gmra.mxu0 %v437
      %v534 = vpop.f32.mrf.mxu0
      %v535 = vadd.f32 %v397, %v534
      %v536 = vpop.f32.mrf.mxu0
      %v537 = vadd.f32 %v397, %v536
      %538 = vmatmul.bf16.gmra.mxu0 %v438
      %v539 = vpop.f32.mrf.mxu0
      %v540 = vadd.f32 %v397, %v539
      %v541 = vpop.f32.mrf.mxu0
      %v542 = vadd.f32 %v397, %v541
      %543 = vdwg.mxu0
      %v544 = vmax.f32 %v505, 0.0
      %v545 = vmax.f32 %v507, 0.0
      %v546 = vmax.f32 %v510, 0.0
      %v547 = vmax.f32 %v512, 0.0
      %v548 = vmax.f32 %v515, 0.0
      %v549 = vmax.f32 %v517, 0.0
      %v550 = vmax.f32 %v520, 0.0
      %v551 = vmax.f32 %v522, 0.0
      %v552 = vmax.f32 %v525, 0.0
      %v553 = vmax.f32 %v527, 0.0
      %v554 = vmax.f32 %v530, 0.0
      %v555 = vmax.f32 %v532, 0.0
      %v556 = vmax.f32 %v535, 0.0
      %v557 = vmax.f32 %v537, 0.0
      %v558 = vmax.f32 %v540, 0.0
      %v559 = vmax.f32 %v542, 0.0
      %v560 = vpack.c.bf16 %v545, %v544
      %v561 = vpack.c.bf16 %v547, %v546
      %v562 = vpack.c.bf16 %v549, %v548
      %v563 = vpack.c.bf16 %v551, %v550
      %v564 = vpack.c.bf16 %v553, %v552
      %v565 = vpack.c.bf16 %v555, %v554
      %v566 = vpack.c.bf16 %v557, %v556
      %v567 = vpack.c.bf16 %v559, %v558
      %v568 = vld [vmem:[%s3] sm:$0xf]
      %v569 = vld [vmem:[%s3 + $0x4] sm:$0xf]
      %v570 = vld [vmem:[%s3 + $0x8] sm:$0xf]
      %v571 = vld [vmem:[%s3 + $0xc] sm:$0xf]
      %v572 = vld [vmem:[%s4] sm:$0x1]
      %v574 = vperm.slane %v572, 0
      %v580 = vunpack.c.l.b16 %v568
      %v581 = vunpack.c.l.b16 %v569
      %v582 = vunpack.c.l.b16 %v570
      %v583 = vunpack.c.l.b16 %v571
      %v584 = vpack.c.b16 %v581, %v580
      %v585 = vpack.c.b16 %v583, %v582
      %vm588 = vcmask 261120
      %v590 = vsel %vm588, %v560, 0
      %v593 = vsel %vm588, %v561, 0
      %v596 = vsel %vm588, %v562, 0
      %v599 = vsel %vm588, %v563, 0
      %v602 = vsel %vm588, %v564, 0
      %v605 = vsel %vm588, %v565, 0
      %v608 = vsel %vm588, %v566, 0
      %v611 = vsel %vm588, %v567, 0
      %613 = vmatpush.bf16.msra.mxu0 0
      %614 = vmatpush.bf16.msra.mxu0 0
      %615 = vmatpush.bf16.msra.mxu0 0
      %616 = vmatpush.bf16.msra.mxu0 0
      %617 = vmatpush.bf16.msra.mxu0 0
      %618 = vmatpush.bf16.msra.mxu0 0
      %619 = vmatpush.bf16.msra.mxu0 %v585
      %620 = vmatpush.bf16.msra.mxu0 %v584
      %621 = vmatmul.bf16.gmra.mxu0 %v590
      %v622 = vpop.f32.mrf.mxu0
      %v623 = vadd.f32 %v574, %v622
      %v624 = vpop.f32.mrf.mxu0
      %v625 = vadd.f32 %v574, %v624
      %626 = vmatmul.bf16.gmra.mxu0 %v593
      %v627 = vpop.f32.mrf.mxu0
      %v628 = vadd.f32 %v574, %v627
      %v629 = vpop.f32.mrf.mxu0
      %v630 = vadd.f32 %v574, %v629
      %631 = vmatmul.bf16.gmra.mxu0 %v596
      %v632 = vpop.f32.mrf.mxu0
      %v633 = vadd.f32 %v574, %v632
      %v634 = vpop.f32.mrf.mxu0
      %v635 = vadd.f32 %v574, %v634
      %636 = vmatmul.bf16.gmra.mxu0 %v599
      %v637 = vpop.f32.mrf.mxu0
      %v638 = vadd.f32 %v574, %v637
      %v639 = vpop.f32.mrf.mxu0
      %v640 = vadd.f32 %v574, %v639
      %641 = vmatmul.bf16.gmra.mxu0 %v602
      %v642 = vpop.f32.mrf.mxu0
      %v643 = vadd.f32 %v574, %v642
      %v644 = vpop.f32.mrf.mxu0
      %v645 = vadd.f32 %v574, %v644
      %646 = vmatmul.bf16.gmra.mxu0 %v605
      %v647 = vpop.f32.mrf.mxu0
      %v648 = vadd.f32 %v574, %v647
      %v649 = vpop.f32.mrf.mxu0
      %v650 = vadd.f32 %v574, %v649
      %651 = vmatmul.bf16.gmra.mxu0 %v608
      %v652 = vpop.f32.mrf.mxu0
      %v653 = vadd.f32 %v574, %v652
      %v654 = vpop.f32.mrf.mxu0
      %v655 = vadd.f32 %v574, %v654
      %656 = vmatmul.bf16.gmra.mxu0 %v611
      %v657 = vpop.f32.mrf.mxu0
      %v658 = vadd.f32 %v574, %v657
      %v659 = vpop.f32.mrf.mxu0
      %v660 = vadd.f32 %v574, %v659
      %661 = vdwg.mxu0
      %678 = vrot.lane.b32.xlu0 %v623, 32
      %v679 = vpop.permute.xlu0 %678
      %680 = vrot.lane.b32.xlu0 %v625, 32
      %v681 = vpop.permute.xlu0 %680
      %682 = vrot.lane.b32.xlu0 %v628, 32
      %v683 = vpop.permute.xlu0 %682
      %684 = vrot.lane.b32.xlu0 %v630, 32
      %v685 = vpop.permute.xlu0 %684
      %686 = vrot.lane.b32.xlu0 %v633, 32
      %v687 = vpop.permute.xlu0 %686
      %688 = vrot.lane.b32.xlu0 %v635, 32
      %v689 = vpop.permute.xlu0 %688
      %690 = vrot.lane.b32.xlu0 %v638, 32
      %v691 = vpop.permute.xlu0 %690
      %692 = vrot.lane.b32.xlu0 %v640, 32
      %v693 = vpop.permute.xlu0 %692
      %694 = vrot.lane.b32.xlu0 %v643, 32
      %v695 = vpop.permute.xlu0 %694
      %696 = vrot.lane.b32.xlu0 %v645, 32
      %v697 = vpop.permute.xlu0 %696
      %698 = vrot.lane.b32.xlu0 %v648, 32
      %v699 = vpop.permute.xlu0 %698
      %700 = vrot.lane.b32.xlu0 %v650, 32
      %v701 = vpop.permute.xlu0 %700
      %702 = vrot.lane.b32.xlu0 %v653, 32
      %v703 = vpop.permute.xlu0 %702
      %704 = vrot.lane.b32.xlu0 %v655, 32
      %v705 = vpop.permute.xlu0 %704
      %706 = vrot.lane.b32.xlu0 %v658, 32
      %v707 = vpop.permute.xlu0 %706
      %708 = vrot.lane.b32.xlu0 %v660, 32
      %v709 = vpop.permute.xlu0 %708
      %v726 = vsel %vm588, %v544, %v679
      %v727 = vsel %vm588, %v545, %v681
      %v728 = vsel %vm588, %v546, %v683
      %v729 = vsel %vm588, %v547, %v685
      %v730 = vsel %vm588, %v548, %v687
      %v731 = vsel %vm588, %v549, %v689
      %v732 = vsel %vm588, %v550, %v691
      %v733 = vsel %vm588, %v551, %v693
      %v734 = vsel %vm588, %v552, %v695
      %v735 = vsel %vm588, %v553, %v697
      %v736 = vsel %vm588, %v554, %v699
      %v737 = vsel %vm588, %v555, %v701
      %v738 = vsel %vm588, %v556, %v703
      %v739 = vsel %vm588, %v557, %v705
      %v740 = vsel %vm588, %v558, %v707
      %v741 = vsel %vm588, %v559, %v709
      %vm742 = vcmask 523264
      %743 = vst.msk [vmem:[%s342] sm:$0xff] %vm742, %v726
      %744 = vst.msk [vmem:[%s342 + $0x8] sm:$0xff] %vm742, %v727
      %745 = vst.msk [vmem:[%s342 + $0x10] sm:$0xff] %vm742, %v728
      %746 = vst.msk [vmem:[%s342 + $0x18] sm:$0xff] %vm742, %v729
      %747 = vst.msk [vmem:[%s342 + $0x20] sm:$0xff] %vm742, %v730
      %748 = vst.msk [vmem:[%s342 + $0x28] sm:$0xff] %vm742, %v731
      %749 = vst.msk [vmem:[%s342 + $0x30] sm:$0xff] %vm742, %v732
      %750 = vst.msk [vmem:[%s342 + $0x38] sm:$0xff] %vm742, %v733
      %751 = vst.msk [vmem:[%s342 + $0x40] sm:$0xff] %vm742, %v734
      %752 = vst.msk [vmem:[%s342 + $0x48] sm:$0xff] %vm742, %v735
      %753 = vst.msk [vmem:[%s342 + $0x50] sm:$0xff] %vm742, %v736
      %754 = vst.msk [vmem:[%s342 + $0x58] sm:$0xff] %vm742, %v737
      %755 = vst.msk [vmem:[%s342 + $0x60] sm:$0xff] %vm742, %v738
      %756 = vst.msk [vmem:[%s342 + $0x68] sm:$0xff] %vm742, %v739
      %757 = vst.msk [vmem:[%s342 + $0x70] sm:$0xff] %vm742, %v740
      %758 = vst.msk [vmem:[%s342 + $0x78] sm:$0xff] %vm742, %v741
      %759 = vrot.lane.b32.xlu0 %v623, 96
      %v760 = vpop.permute.xlu0 %759
      %761 = vrot.lane.b32.xlu0 %v625, 96
      %v762 = vpop.permute.xlu0 %761
      %763 = vrot.lane.b32.xlu0 %v628, 96
      %v764 = vpop.permute.xlu0 %763
      %765 = vrot.lane.b32.xlu0 %v630, 96
      %v766 = vpop.permute.xlu0 %765
      %767 = vrot.lane.b32.xlu0 %v633, 96
      %v768 = vpop.permute.xlu0 %767
      %769 = vrot.lane.b32.xlu0 %v635, 96
      %v770 = vpop.permute.xlu0 %769
      %771 = vrot.lane.b32.xlu0 %v638, 96
      %v772 = vpop.permute.xlu0 %771
      %773 = vrot.lane.b32.xlu0 %v640, 96
      %v774 = vpop.permute.xlu0 %773
      %775 = vrot.lane.b32.xlu0 %v643, 96
      %v776 = vpop.permute.xlu0 %775
      %777 = vrot.lane.b32.xlu0 %v645, 96
      %v778 = vpop.permute.xlu0 %777
      %779 = vrot.lane.b32.xlu0 %v648, 96
      %v780 = vpop.permute.xlu0 %779
      %781 = vrot.lane.b32.xlu0 %v650, 96
      %v782 = vpop.permute.xlu0 %781
      %783 = vrot.lane.b32.xlu0 %v653, 96
      %v784 = vpop.permute.xlu0 %783
      %785 = vrot.lane.b32.xlu0 %v655, 96
      %v786 = vpop.permute.xlu0 %785
      %787 = vrot.lane.b32.xlu0 %v658, 96
      %v788 = vpop.permute.xlu0 %787
      %789 = vrot.lane.b32.xlu0 %v660, 96
      %v790 = vpop.permute.xlu0 %789
      %807 = vxpose.xlu0.b32.start [1/16] %v760, 128
      %808 = vxpose.xlu0.b32.cont [2/16] %v762, 128
      %809 = vxpose.xlu0.b32.cont [3/16] %v764, 128
      %810 = vxpose.xlu0.b32.cont [4/16] %v766, 128
      %811 = vxpose.xlu0.b32.cont [5/16] %v768, 128
      %812 = vxpose.xlu0.b32.cont [6/16] %v770, 128
      %813 = vxpose.xlu0.b32.cont [7/16] %v772, 128
      %814 = vxpose.xlu0.b32.cont [8/16] %v774, 128
      %815 = vxpose.xlu0.b32.cont [9/16] %v776, 128
      %816 = vxpose.xlu0.b32.cont [10/16] %v778, 128
      %817 = vxpose.xlu0.b32.cont [11/16] %v780, 128
      %818 = vxpose.xlu0.b32.cont [12/16] %v782, 128
      %819 = vxpose.xlu0.b32.cont [13/16] %v784, 128
      %820 = vxpose.xlu0.b32.cont [14/16] %v786, 128
      %821 = vxpose.xlu0.b32.cont [15/16] %v788, 128
      %822 = vxpose.xlu0.b32.end [16/16] %v790, 128
      %v823 = vpop.trf.xlu0
      %v824 = vpop.trf.xlu0
      %v825 = vpop.trf.xlu0
      %v826 = vpop.trf.xlu0
      %v827 = vpop.trf.xlu0
      %v828 = vpop.trf.xlu0
      %v829 = vpop.trf.xlu0
      %v830 = vpop.trf.xlu0
      %v831 = vpop.trf.xlu0
      %v832 = vpop.trf.xlu0
      %v833 = vpop.trf.xlu0
      %v834 = vpop.trf.xlu0
      %v835 = vpop.trf.xlu0
      %v836 = vpop.trf.xlu0
      %v837 = vpop.trf.xlu0
      %v838 = vpop.trf.xlu0
      %v839 = vpack.c.bf16 %v823, %v823
      %v840 = vpack.c.bf16 %v824, %v824
      %v841 = vpack.c.bf16 %v825, %v825
      %v842 = vpack.c.bf16 %v826, %v826
      %843 = vst [vmem:[%s351] sm:$0xf] %v839
      %844 = vst [vmem:[%s351 + $0x4] sm:$0xf] %v840
      %v845 = vpack.c.bf16 %v623, %v623
      %v846 = vpack.c.bf16 %v625, %v625
      %v847 = vpack.c.bf16 %v628, %v628
      %v848 = vpack.c.bf16 %v630, %v630
      %v849 = vpack.c.bf16 %v633, %v633
      %v850 = vpack.c.bf16 %v635, %v635
      %v851 = vpack.c.bf16 %v638, %v638
      %v852 = vpack.c.bf16 %v640, %v640
      %v853 = vpack.c.bf16 %v643, %v643
      %v854 = vpack.c.bf16 %v645, %v645
      %v855 = vpack.c.bf16 %v648, %v648
      %v856 = vpack.c.bf16 %v650, %v650
      %v857 = vpack.c.bf16 %v653, %v653
      %v858 = vpack.c.bf16 %v655, %v655
      %v859 = vpack.c.bf16 %v658, %v658
      %v860 = vpack.c.bf16 %v660, %v660
      %877 = vrot.lane.b32.xlu0 %v845, 64
      %v878 = vpop.permute.xlu0 %877
      %879 = vrot.lane.b32.xlu0 %v846, 64
      %v880 = vpop.permute.xlu0 %879
      %881 = vrot.lane.b32.xlu0 %v847, 64
      %v882 = vpop.permute.xlu0 %881
      %883 = vrot.lane.b32.xlu0 %v848, 64
      %v884 = vpop.permute.xlu0 %883
      %885 = vrot.lane.b32.xlu0 %v849, 64
      %v886 = vpop.permute.xlu0 %885
      %887 = vrot.lane.b32.xlu0 %v850, 64
      %v888 = vpop.permute.xlu0 %887
      %889 = vrot.lane.b32.xlu0 %v851, 64
      %v890 = vpop.permute.xlu0 %889
      %891 = vrot.lane.b32.xlu0 %v852, 64
      %v892 = vpop.permute.xlu0 %891
      %893 = vrot.lane.b32.xlu0 %v853, 64
      %v894 = vpop.permute.xlu0 %893
      %895 = vrot.lane.b32.xlu0 %v854, 64
      %v896 = vpop.permute.xlu0 %895
      %897 = vrot.lane.b32.xlu0 %v855, 64
      %v898 = vpop.permute.xlu0 %897
      %899 = vrot.lane.b32.xlu0 %v856, 64
      %v900 = vpop.permute.xlu0 %899
      %901 = vrot.lane.b32.xlu0 %v857, 64
      %v902 = vpop.permute.xlu0 %901
      %903 = vrot.lane.b32.xlu0 %v858, 64
      %v904 = vpop.permute.xlu0 %903
      %905 = vrot.lane.b32.xlu0 %v859, 64
      %v906 = vpop.permute.xlu0 %905
      %907 = vrot.lane.b32.xlu0 %v860, 64
      %v908 = vpop.permute.xlu0 %907
      %vm925 = vcmask 257024
      %926 = vst.msk [vmem:[%s360] sm:$0xf] %vm925, %v878
      %927 = vst.msk [vmem:[%s360 + $0x4] sm:$0xf] %vm925, %v880
      %928 = vst.msk [vmem:[%s360 + $0x8] sm:$0xf] %vm925, %v882
      %929 = vst.msk [vmem:[%s360 + $0xc] sm:$0xf] %vm925, %v884
      %930 = vst.msk [vmem:[%s360 + $0x10] sm:$0xf] %vm925, %v886
      %931 = vst.msk [vmem:[%s360 + $0x14] sm:$0xf] %vm925, %v888
      %932 = vst.msk [vmem:[%s360 + $0x18] sm:$0xf] %vm925, %v890
      %933 = vst.msk [vmem:[%s360 + $0x1c] sm:$0xf] %vm925, %v892
      %934 = vst.msk [vmem:[%s360 + $0x20] sm:$0xf] %vm925, %v894
      %935 = vst.msk [vmem:[%s360 + $0x24] sm:$0xf] %vm925, %v896
      %936 = vst.msk [vmem:[%s360 + $0x28] sm:$0xf] %vm925, %v898
      %937 = vst.msk [vmem:[%s360 + $0x2c] sm:$0xf] %vm925, %v900
      %938 = vst.msk [vmem:[%s360 + $0x30] sm:$0xf] %vm925, %v902
      %939 = vst.msk [vmem:[%s360 + $0x34] sm:$0xf] %vm925, %v904
      %940 = vst.msk [vmem:[%s360 + $0x38] sm:$0xf] %vm925, %v906
      %941 = vst.msk [vmem:[%s360 + $0x3c] sm:$0xf] %vm925, %v908
      %s942 = scalar_lea.vmem %s351, 8
      %943 = vst [vmem:[%s942] sm:$0xf] %v841
      %944 = vst [vmem:[%s942 + $0x4] sm:$0xf] %v842
      %945 = vrot.lane.b32.xlu0 %v845, 32
      %v946 = vpop.permute.xlu0 %945
      %947 = vrot.lane.b32.xlu0 %v846, 32
      %v948 = vpop.permute.xlu0 %947
      %949 = vrot.lane.b32.xlu0 %v847, 32
      %v950 = vpop.permute.xlu0 %949
      %951 = vrot.lane.b32.xlu0 %v848, 32
      %v952 = vpop.permute.xlu0 %951
      %953 = vrot.lane.b32.xlu0 %v849, 32
      %v954 = vpop.permute.xlu0 %953
      %955 = vrot.lane.b32.xlu0 %v850, 32
      %v956 = vpop.permute.xlu0 %955
      %957 = vrot.lane.b32.xlu0 %v851, 32
      %v958 = vpop.permute.xlu0 %957
      %959 = vrot.lane.b32.xlu0 %v852, 32
      %v960 = vpop.permute.xlu0 %959
      %961 = vrot.lane.b32.xlu0 %v853, 32
      %v962 = vpop.permute.xlu0 %961
      %963 = vrot.lane.b32.xlu0 %v854, 32
      %v964 = vpop.permute.xlu0 %963
      %965 = vrot.lane.b32.xlu0 %v855, 32
      %v966 = vpop.permute.xlu0 %965
      %967 = vrot.lane.b32.xlu0 %v856, 32
      %v968 = vpop.permute.xlu0 %967
      %969 = vrot.lane.b32.xlu0 %v857, 32
      %v970 = vpop.permute.xlu0 %969
      %971 = vrot.lane.b32.xlu0 %v858, 32
      %v972 = vpop.permute.xlu0 %971
      %973 = vrot.lane.b32.xlu0 %v859, 32
      %v974 = vpop.permute.xlu0 %973
      %975 = vrot.lane.b32.xlu0 %v860, 32
      %v976 = vpop.permute.xlu0 %975
      %s993 = scalar_lea.vmem %s360, 64
      %994 = vst.msk [vmem:[%s993] sm:$0xf] %vm925, %v946
      %995 = vst.msk [vmem:[%s993 + $0x4] sm:$0xf] %vm925, %v948
      %996 = vst.msk [vmem:[%s993 + $0x8] sm:$0xf] %vm925, %v950
      %997 = vst.msk [vmem:[%s993 + $0xc] sm:$0xf] %vm925, %v952
      %998 = vst.msk [vmem:[%s993 + $0x10] sm:$0xf] %vm925, %v954
      %999 = vst.msk [vmem:[%s993 + $0x14] sm:$0xf] %vm925, %v956
      %1000 = vst.msk [vmem:[%s993 + $0x18] sm:$0xf] %vm925, %v958
      %1001 = vst.msk [vmem:[%s993 + $0x1c] sm:$0xf] %vm925, %v960
      %1002 = vst.msk [vmem:[%s993 + $0x20] sm:$0xf] %vm925, %v962
      %1003 = vst.msk [vmem:[%s993 + $0x24] sm:$0xf] %vm925, %v964
      %1004 = vst.msk [vmem:[%s993 + $0x28] sm:$0xf] %vm925, %v966
      %1005 = vst.msk [vmem:[%s993 + $0x2c] sm:$0xf] %vm925, %v968
      %1006 = vst.msk [vmem:[%s993 + $0x30] sm:$0xf] %vm925, %v970
      %1007 = vst.msk [vmem:[%s993 + $0x34] sm:$0xf] %vm925, %v972
      %1008 = vst.msk [vmem:[%s993 + $0x38] sm:$0xf] %vm925, %v974
      %1009 = vst.msk [vmem:[%s993 + $0x3c] sm:$0xf] %vm925, %v976
      %s1010 = smul.u32 16, %s24
      %p1011 = scmp.lt.s32.totalorder %s23, 1
      %s1012 = scalar_select %p1011, %s23, 1
      %p1013 = scmp.lt.s32.totalorder %s1010, 15
      %s1014 = scalar_select %p1013, %s1010, 15
      %s1015 = smul.addr %s1012, 16
      %s1016 = sadd.s32 %s1014, %s1015
      %s1017 = smul.addr %s1016, 8
      %s1018 = scalar_lea.vmem %s5, %s1017
      %p1019 = scmp.lt.s32.totalorder %s23, 1
      %s1020 = scalar_select %p1019, %s23, 1
      %p1021 = scmp.lt.s32.totalorder %s24, 0
      %s1022 = scalar_select %p1021, %s24, 0
      %s1023 = smul.addr %s1020, 4
      %s1024 = sadd.s32 %s1022, %s1023
      %s1025 = smul.addr %s1024, 4
      %s1026 = scalar_lea.vmem %s6, %s1025
      %s1027 = smul.u32 16, %s24
      %p1028 = scmp.lt.s32.totalorder %s23, 1
      %s1029 = scalar_select %p1028, %s23, 1
      %p1030 = scmp.lt.s32.totalorder %s1027, 15
      %s1031 = scalar_select %p1030, %s1027, 15
      %s1032 = smul.addr %s1029, 32
      %s1033 = sadd.s32 %s1031, %s1032
      %s1034 = smul.addr %s1033, 4
      %s1035 = scalar_lea.vmem %s7, %s1034
      // Predicated region
      $region41: #{scnet_forward.17} parent=39 // pred_check
        %p1036 = pneg %p163
      $region42: #{scnet_forward.17} parent=39 // pred_check_branch
        %1038 = sbr.rel (%p1036) target = $region44
      $region43: #{scnet_forward.17} parent=39 // pred_region
        %s1039 = smul.u32 16, %s24
      $region44: #{scnet_forward.17} parent=39 // pred_fallthru
        _
      // Predicated region
      $region45: #{scnet_forward.17} parent=39 // pred_check
        %p1040 = pneg %p191
      $region46: #{scnet_forward.17} parent=39 // pred_check_branch
        %1042 = sbr.rel (%p1040) target = $region48
      $region47: #{scnet_forward.17} parent=39 // pred_region
        _
      $region48: #{scnet_forward.17} parent=39 // pred_fallthru
        _
      // Predicated region
      $region49: #{scnet_forward.17} parent=39 // pred_check
        %p1043 = pneg %p219
      $region50: #{scnet_forward.17} parent=39 // pred_check_branch
        %1045 = sbr.rel (%p1043) target = $region52
      $region51: #{scnet_forward.17} parent=39 // pred_region
        %s1046 = smul.u32 16, %s24
      $region52: #{scnet_forward.17} parent=39 // pred_fallthru
        _
    $region40: #{scnet_forward.17} parent=5 // pred_fallthru
      _
    %p1047 = scmp.le.s32.totalorder 2, %s14
    // Predicated region
    $region53: #{scnet_forward.17} parent=5 // pred_check
      %p1048 = pneg %p1047
    $region54: #{scnet_forward.17} parent=5 // pred_check_branch
      %1050 = sbr.rel (%p1048) target = $region56
    $region55: #{scnet_forward.17} parent=5 // pred_region
      %s1051 = ssub.s32 %s14, 2
      // Predicated region
      $region57: #{scnet_forward.17} parent=55 // pred_check
        %p1052 = pneg %p169
      $region58: #{scnet_forward.17} parent=55 // pred_check_branch
        %1054 = sbr.rel (%p1052) target = $region60
      $region59: #{scnet_forward.17} parent=55 // pred_region
        %s1055 = smul.u32 16, %s26
        %p1056 = scmp.lt.s32.totalorder %s25, 1
        %s1057 = scalar_select %p1056, %s25, 1
        %p1058 = scmp.lt.s32.totalorder %s1055, 15
        %s1059 = scalar_select %p1058, %s1055, 15
        %s1060 = smul.addr %s1057, 16
        %s1061 = sadd.s32 %s1059, %s1060
        %s1062 = smul.addr %s1061, 8
        %s1063 = scalar_lea.vmem %s5, %s1062
      $region60: #{scnet_forward.17} parent=55 // pred_fallthru
        _
      // Predicated region
      $region61: #{scnet_forward.17} parent=55 // pred_check
        %p1064 = pneg %p197
      $region62: #{scnet_forward.17} parent=55 // pred_check_branch
        %1066 = sbr.rel (%p1064) target = $region64
      $region63: #{scnet_forward.17} parent=55 // pred_region
        %p1067 = scmp.lt.s32.totalorder %s25, 1
        %s1068 = scalar_select %p1067, %s25, 1
        %p1069 = scmp.lt.s32.totalorder %s26, 0
        %s1070 = scalar_select %p1069, %s26, 0
        %s1071 = smul.addr %s1068, 4
        %s1072 = sadd.s32 %s1070, %s1071
        %s1073 = smul.addr %s1072, 4
        %s1074 = scalar_lea.vmem %s6, %s1073
      $region64: #{scnet_forward.17} parent=55 // pred_fallthru
        _
      // Predicated region
      $region65: #{scnet_forward.17} parent=55 // pred_check
        %p1075 = pneg %p225
      $region66: #{scnet_forward.17} parent=55 // pred_check_branch
        %1077 = sbr.rel (%p1075) target = $region68
      $region67: #{scnet_forward.17} parent=55 // pred_region
        %s1078 = smul.u32 16, %s26
        %p1079 = scmp.lt.s32.totalorder %s25, 1
        %s1080 = scalar_select %p1079, %s25, 1
        %p1081 = scmp.lt.s32.totalorder %s1078, 15
        %s1082 = scalar_select %p1081, %s1078, 15
        %s1083 = smul.addr %s1080, 32
        %s1084 = sadd.s32 %s1082, %s1083
        %s1085 = smul.addr %s1084, 4
        %s1086 = scalar_lea.vmem %s7, %s1085
      $region68: #{scnet_forward.17} parent=55 // pred_fallthru
        _
    $region56: #{scnet_forward.17} parent=5 // pred_fallthru
      _
  $region6: #{scnet_forward.17} parent=0 // loop_footer
    %s18 = sadd.s32 1, %s14
  $region7: #{scnet_forward.17} parent=0 // loop_footer_branch
    %13 = sbr.rel target = $region3
  $region8: #{scnet_forward.17} parent=0 // loop_exit
    _

// kernel: scnet_forward.13
$region0: #{scnet_forward.13}
  #allocation0 [shape = 'u32[]', space=smem, size = 0x4, offset = 0x4, fixed_abs, tag = 'smem constant byte address 0x4 - core index']
  #allocation1 [shape = 'u32[72,128]{1,0:T(1,128)}', space=vmem, size = 0x9000, scoped, tag = 'internal scratch']
  %s0 = inlined_call_operand.vmem [shape: bf16[128,30], index: 0, kind: input, shape index: {}]
  %s1 = inlined_call_operand.vmem [shape: bf16[30,32], index: 1, kind: input, shape index: {}]
  %s2 = inlined_call_operand.vmem [shape: bf16[128,32], index: 2, kind: output, shape index: {}]
  %s3 = sld [smem:[#allocation0]]
  $region18: #{scnet_forward.13} parent=0
    _
  %s5 = ssub.s32 1, %s3
  %s6 = scalar_select 0, %s5, %s3
  // Predicated region
  $region2: #{scnet_forward.13} parent=0 // pred_check
    _
  $region3: #{scnet_forward.13} parent=0 // pred_check_branch
    %8 = sbr.rel (0) target = $region5
  $region4: #{scnet_forward.13} parent=0 // pred_region
    _
  $region5: #{scnet_forward.13} parent=0 // pred_fallthru
    _
  // Predicated region
  $region6: #{scnet_forward.13} parent=0 // pred_check
    _
  $region7: #{scnet_forward.13} parent=0 // pred_check_branch
    %10 = sbr.rel (0) target = $region9
  $region8: #{scnet_forward.13} parent=0 // pred_region
    _
  $region9: #{scnet_forward.13} parent=0 // pred_fallthru
    _
  %v12 = vld [vmem:[%s0] sm:$0xf]
  %v13 = vld [vmem:[%s0 + $0x4] sm:$0xf]
  %v14 = vld [vmem:[%s0 + $0x8] sm:$0xf]
  %v15 = vld [vmem:[%s0 + $0xc] sm:$0xf]
  %v16 = vld [vmem:[%s0 + $0x10] sm:$0xf]
  %v17 = vld [vmem:[%s0 + $0x14] sm:$0xf]
  %v18 = vld [vmem:[%s0 + $0x18] sm:$0xf]
  %v19 = vld [vmem:[%s0 + $0x1c] sm:$0xf]
  %v20 = vld [vmem:[%s0 + $0x20] sm:$0xf]
  %v21 = vld [vmem:[%s0 + $0x24] sm:$0xf]
  %v22 = vld [vmem:[%s0 + $0x28] sm:$0xf]
  %v23 = vld [vmem:[%s0 + $0x2c] sm:$0xf]
  %v24 = vld [vmem:[%s0 + $0x30] sm:$0xf]
  %v25 = vld [vmem:[%s0 + $0x34] sm:$0xf]
  %v26 = vld [vmem:[%s0 + $0x38] sm:$0xf]
  %v27 = vld [vmem:[%s0 + $0x3c] sm:$0xf]
  %v28 = vld [vmem:[%s1] sm:$0xf]
  %v29 = vld [vmem:[%s1 + $0x4] sm:$0xf]
  %v30 = vld [vmem:[%s1 + $0x8] sm:$0xf]
  %v31 = vld [vmem:[%s1 + $0xc] sm:$0x7]
  %v48 = vunpack.c.l.b16 %v12
  %v49 = vunpack.c.l.b16 %v13
  %v50 = vunpack.c.l.b16 %v14
  %v51 = vunpack.c.l.b16 %v15
  %v52 = vunpack.c.l.b16 %v16
  %v53 = vunpack.c.l.b16 %v17
  %v54 = vunpack.c.l.b16 %v18
  %v55 = vunpack.c.l.b16 %v19
  %v56 = vunpack.c.l.b16 %v20
  %v57 = vunpack.c.l.b16 %v21
  %v58 = vunpack.c.l.b16 %v22
  %v59 = vunpack.c.l.b16 %v23
  %v60 = vunpack.c.l.b16 %v24
  %v61 = vunpack.c.l.b16 %v25
  %v62 = vunpack.c.l.b16 %v26
  %v63 = vunpack.c.l.b16 %v27
  %v64 = vpack.c.b16 %v49, %v48
  %v65 = vpack.c.b16 %v51, %v50
  %v66 = vpack.c.b16 %v53, %v52
  %v67 = vpack.c.b16 %v55, %v54
  %v68 = vpack.c.b16 %v57, %v56
  %v69 = vpack.c.b16 %v59, %v58
  %v70 = vpack.c.b16 %v61, %v60
  %v71 = vpack.c.b16 %v63, %v62
  %v76 = vunpack.c.l.b16 %v28
  %v77 = vunpack.c.l.b16 %v29
  %v78 = vunpack.c.l.b16 %v30
  %v79 = vunpack.c.l.b16 %v31
  %v80 = vpack.c.b16 %v77, %v76
  %v81 = vpack.c.b16 %v79, %v78
  %vm83 = vcmask 244736
  %v85 = vsel %vm83, %v64, 0
  %v88 = vsel %vm83, %v65, 0
  %v91 = vsel %vm83, %v66, 0
  %v94 = vsel %vm83, %v67, 0
  %v97 = vsel %vm83, %v68, 0
  %v100 = vsel %vm83, %v69, 0
  %v103 = vsel %vm83, %v70, 0
  %v106 = vsel %vm83, %v71, 0
  %vm108 = vcmask 1046528
  %v110 = vsel %vm108, %v81, 0
  %112 = vmatpush.bf16.msra.mxu0 0
  %113 = vmatpush.bf16.msra.mxu0 0
  %114 = vmatpush.bf16.msra.mxu0 0
  %115 = vmatpush.bf16.msra.mxu0 0
  %116 = vmatpush.bf16.msra.mxu0 0
  %117 = vmatpush.bf16.msra.mxu0 0
  %118 = vmatpush.bf16.msra.mxu0 %v110
  %119 = vmatpush.bf16.msra.mxu0 %v80
  %120 = vmatmul.bf16.gmra.mxu0 %v85
  %v121 = vpop.f32.mrf.mxu0
  %v122 = vadd.f32 0.0, %v121
  %v123 = vpop.f32.mrf.mxu0
  %v124 = vadd.f32 0.0, %v123
  %125 = vmatmul.bf16.gmra.mxu0 %v88
  %v126 = vpop.f32.mrf.mxu0
  %v127 = vadd.f32 0.0, %v126
  %v128 = vpop.f32.mrf.mxu0
  %v129 = vadd.f32 0.0, %v128
  %130 = vmatmul.bf16.gmra.mxu0 %v91
  %v131 = vpop.f32.mrf.mxu0
  %v132 = vadd.f32 0.0, %v131
  %v133 = vpop.f32.mrf.mxu0
  %v134 = vadd.f32 0.0, %v133
  %135 = vmatmul.bf16.gmra.mxu0 %v94
  %v136 = vpop.f32.mrf.mxu0
  %v137 = vadd.f32 0.0, %v136
  %v138 = vpop.f32.mrf.mxu0
  %v139 = vadd.f32 0.0, %v138
  %140 = vmatmul.bf16.gmra.mxu0 %v97
  %v141 = vpop.f32.mrf.mxu0
  %v142 = vadd.f32 0.0, %v141
  %v143 = vpop.f32.mrf.mxu0
  %v144 = vadd.f32 0.0, %v143
  %145 = vmatmul.bf16.gmra.mxu0 %v100
  %v146 = vpop.f32.mrf.mxu0
  %v147 = vadd.f32 0.0, %v146
  %v148 = vpop.f32.mrf.mxu0
  %v149 = vadd.f32 0.0, %v148
  %150 = vmatmul.bf16.gmra.mxu0 %v103
  %v151 = vpop.f32.mrf.mxu0
  %v152 = vadd.f32 0.0, %v151
  %v153 = vpop.f32.mrf.mxu0
  %v154 = vadd.f32 0.0, %v153
  %155 = vmatmul.bf16.gmra.mxu0 %v106
  %v156 = vpop.f32.mrf.mxu0
  %v157 = vadd.f32 0.0, %v156
  %v158 = vpop.f32.mrf.mxu0
  %v159 = vadd.f32 0.0, %v158
  %160 = vdwg.mxu0
  %v161 = vpack.c.bf16 %v122, %v122
  %v162 = vpack.c.bf16 %v124, %v124
  %v163 = vpack.c.bf16 %v127, %v127
  %v164 = vpack.c.bf16 %v129, %v129
  %v165 = vpack.c.bf16 %v132, %v132
  %v166 = vpack.c.bf16 %v134, %v134
  %v167 = vpack.c.bf16 %v137, %v137
  %v168 = vpack.c.bf16 %v139, %v139
  %v169 = vpack.c.bf16 %v142, %v142
  %v170 = vpack.c.bf16 %v144, %v144
  %v171 = vpack.c.bf16 %v147, %v147
  %v172 = vpack.c.bf16 %v149, %v149
  %v173 = vpack.c.bf16 %v152, %v152
  %v174 = vpack.c.bf16 %v154, %v154
  %v175 = vpack.c.bf16 %v157, %v157
  %v176 = vpack.c.bf16 %v159, %v159
  %vm177 = vcmask 257024
  %178 = vst.msk [vmem:[%s2] sm:$0xf] %vm177, %v161
  %179 = vst.msk [vmem:[%s2 + $0x4] sm:$0xf] %vm177, %v162
  %180 = vst.msk [vmem:[%s2 + $0x8] sm:$0xf] %vm177, %v163
  %181 = vst.msk [vmem:[%s2 + $0xc] sm:$0xf] %vm177, %v164
  %182 = vst.msk [vmem:[%s2 + $0x10] sm:$0xf] %vm177, %v165
  %183 = vst.msk [vmem:[%s2 + $0x14] sm:$0xf] %vm177, %v166
  %184 = vst.msk [vmem:[%s2 + $0x18] sm:$0xf] %vm177, %v167
  %185 = vst.msk [vmem:[%s2 + $0x1c] sm:$0xf] %vm177, %v168
  %186 = vst.msk [vmem:[%s2 + $0x20] sm:$0xf] %vm177, %v169
  %187 = vst.msk [vmem:[%s2 + $0x24] sm:$0xf] %vm177, %v170
  %188 = vst.msk [vmem:[%s2 + $0x28] sm:$0xf] %vm177, %v171
  %189 = vst.msk [vmem:[%s2 + $0x2c] sm:$0xf] %vm177, %v172
  %190 = vst.msk [vmem:[%s2 + $0x30] sm:$0xf] %vm177, %v173
  %191 = vst.msk [vmem:[%s2 + $0x34] sm:$0xf] %vm177, %v174
  %192 = vst.msk [vmem:[%s2 + $0x38] sm:$0xf] %vm177, %v175
  %193 = vst.msk [vmem:[%s2 + $0x3c] sm:$0xf] %vm177, %v176
  // Predicated region
  $region10: #{scnet_forward.13} parent=0 // pred_check
    _
  $region11: #{scnet_forward.13} parent=0 // pred_check_branch
    %195 = sbr.rel (0) target = $region13
  $region12: #{scnet_forward.13} parent=0 // pred_region
    _
  $region13: #{scnet_forward.13} parent=0 // pred_fallthru
    _
  // Predicated region
  $region14: #{scnet_forward.13} parent=0 // pred_check
    _
  $region15: #{scnet_forward.13} parent=0 // pred_check_branch
    %197 = sbr.rel (0) target = $region17
  $region16: #{scnet_forward.13} parent=0 // pred_region
    _
  $region17: #{scnet_forward.13} parent=0 // pred_fallthru
    _

// kernel: scnet_forward.19
$region0: #{scnet_forward.19}
  #allocation0 [shape = 'u32[]', space=smem, size = 0x4, offset = 0x4, fixed_abs, tag = 'smem constant byte address 0x4 - core index']
  #allocation1 [shape = 'u32[72,128]{1,0:T(1,128)}', space=vmem, size = 0x9000, scoped, tag = 'internal scratch']
  %s0 = inlined_call_operand.vmem [shape: bf16[128,32], index: 0, kind: input, shape index: {}]
  %s1 = inlined_call_operand.vmem [shape: bf16[32,128], index: 1, kind: input, shape index: {}]
  %s2 = inlined_call_operand.vmem [shape: f32[128,128], index: 2, kind: output, shape index: {}]
  %s3 = sld [smem:[#allocation0]]
  $region18: #{scnet_forward.19} parent=0
    _
  %s5 = ssub.s32 1, %s3
  %s6 = scalar_select 0, %s5, %s3
  // Predicated region
  $region2: #{scnet_forward.19} parent=0 // pred_check
    _
  $region3: #{scnet_forward.19} parent=0 // pred_check_branch
    %8 = sbr.rel (0) target = $region5
  $region4: #{scnet_forward.19} parent=0 // pred_region
    _
  $region5: #{scnet_forward.19} parent=0 // pred_fallthru
    _
  // Predicated region
  $region6: #{scnet_forward.19} parent=0 // pred_check
    _
  $region7: #{scnet_forward.19} parent=0 // pred_check_branch
    %10 = sbr.rel (0) target = $region9
  $region8: #{scnet_forward.19} parent=0 // pred_region
    _
  $region9: #{scnet_forward.19} parent=0 // pred_fallthru
    _
  %v12 = vld [vmem:[%s0] sm:$0xf]
  %v13 = vld [vmem:[%s0 + $0x4] sm:$0xf]
  %v14 = vld [vmem:[%s0 + $0x8] sm:$0xf]
  %v15 = vld [vmem:[%s0 + $0xc] sm:$0xf]
  %v16 = vld [vmem:[%s0 + $0x10] sm:$0xf]
  %v17 = vld [vmem:[%s0 + $0x14] sm:$0xf]
  %v18 = vld [vmem:[%s0 + $0x18] sm:$0xf]
  %v19 = vld [vmem:[%s0 + $0x1c] sm:$0xf]
  %v20 = vld [vmem:[%s0 + $0x20] sm:$0xf]
  %v21 = vld [vmem:[%s0 + $0x24] sm:$0xf]
  %v22 = vld [vmem:[%s0 + $0x28] sm:$0xf]
  %v23 = vld [vmem:[%s0 + $0x2c] sm:$0xf]
  %v24 = vld [vmem:[%s0 + $0x30] sm:$0xf]
  %v25 = vld [vmem:[%s0 + $0x34] sm:$0xf]
  %v26 = vld [vmem:[%s0 + $0x38] sm:$0xf]
  %v27 = vld [vmem:[%s0 + $0x3c] sm:$0xf]
  %v28 = vld [vmem:[%s1] sm:$0xf]
  %v29 = vld [vmem:[%s1 + $0x4] sm:$0xf]
  %v30 = vld [vmem:[%s1 + $0x8] sm:$0xf]
  %v31 = vld [vmem:[%s1 + $0xc] sm:$0xf]
  %v48 = vunpack.c.l.b16 %v12
  %v49 = vunpack.c.l.b16 %v13
  %v50 = vunpack.c.l.b16 %v14
  %v51 = vunpack.c.l.b16 %v15
  %v52 = vunpack.c.l.b16 %v16
  %v53 = vunpack.c.l.b16 %v17
  %v54 = vunpack.c.l.b16 %v18
  %v55 = vunpack.c.l.b16 %v19
  %v56 = vunpack.c.l.b16 %v20
  %v57 = vunpack.c.l.b16 %v21
  %v58 = vunpack.c.l.b16 %v22
  %v59 = vunpack.c.l.b16 %v23
  %v60 = vunpack.c.l.b16 %v24
  %v61 = vunpack.c.l.b16 %v25
  %v62 = vunpack.c.l.b16 %v26
  %v63 = vunpack.c.l.b16 %v27
  %v64 = vpack.c.b16 %v49, %v48
  %v65 = vpack.c.b16 %v51, %v50
  %v66 = vpack.c.b16 %v53, %v52
  %v67 = vpack.c.b16 %v55, %v54
  %v68 = vpack.c.b16 %v57, %v56
  %v69 = vpack.c.b16 %v59, %v58
  %v70 = vpack.c.b16 %v61, %v60
  %v71 = vpack.c.b16 %v63, %v62
  %v76 = vunpack.c.l.b16 %v28
  %v77 = vunpack.c.l.b16 %v29
  %v78 = vunpack.c.l.b16 %v30
  %v79 = vunpack.c.l.b16 %v31
  %v80 = vpack.c.b16 %v77, %v76
  %v81 = vpack.c.b16 %v79, %v78
  %vm84 = vcmask 261120
  %v86 = vsel %vm84, %v64, 0
  %v89 = vsel %vm84, %v65, 0
  %v92 = vsel %vm84, %v66, 0
  %v95 = vsel %vm84, %v67, 0
  %v98 = vsel %vm84, %v68, 0
  %v101 = vsel %vm84, %v69, 0
  %v104 = vsel %vm84, %v70, 0
  %v107 = vsel %vm84, %v71, 0
  %109 = vmatpush.bf16.msra.mxu0 0
  %110 = vmatpush.bf16.msra.mxu0 0
  %111 = vmatpush.bf16.msra.mxu0 0
  %112 = vmatpush.bf16.msra.mxu0 0
  %113 = vmatpush.bf16.msra.mxu0 0
  %114 = vmatpush.bf16.msra.mxu0 0
  %115 = vmatpush.bf16.msra.mxu0 %v81
  %116 = vmatpush.bf16.msra.mxu0 %v80
  %117 = vmatmul.bf16.gmra.mxu0 %v86
  %v118 = vpop.f32.mrf.mxu0
  %v119 = vadd.f32 0.0, %v118
  %v120 = vpop.f32.mrf.mxu0
  %v121 = vadd.f32 0.0, %v120
  %122 = vmatmul.bf16.gmra.mxu0 %v89
  %v123 = vpop.f32.mrf.mxu0
  %v124 = vadd.f32 0.0, %v123
  %v125 = vpop.f32.mrf.mxu0
  %v126 = vadd.f32 0.0, %v125
  %127 = vmatmul.bf16.gmra.mxu0 %v92
  %v128 = vpop.f32.mrf.mxu0
  %v129 = vadd.f32 0.0, %v128
  %v130 = vpop.f32.mrf.mxu0
  %v131 = vadd.f32 0.0, %v130
  %132 = vmatmul.bf16.gmra.mxu0 %v95
  %v133 = vpop.f32.mrf.mxu0
  %v134 = vadd.f32 0.0, %v133
  %v135 = vpop.f32.mrf.mxu0
  %v136 = vadd.f32 0.0, %v135
  %137 = vmatmul.bf16.gmra.mxu0 %v98
  %v138 = vpop.f32.mrf.mxu0
  %v139 = vadd.f32 0.0, %v138
  %v140 = vpop.f32.mrf.mxu0
  %v141 = vadd.f32 0.0, %v140
  %142 = vmatmul.bf16.gmra.mxu0 %v101
  %v143 = vpop.f32.mrf.mxu0
  %v144 = vadd.f32 0.0, %v143
  %v145 = vpop.f32.mrf.mxu0
  %v146 = vadd.f32 0.0, %v145
  %147 = vmatmul.bf16.gmra.mxu0 %v104
  %v148 = vpop.f32.mrf.mxu0
  %v149 = vadd.f32 0.0, %v148
  %v150 = vpop.f32.mrf.mxu0
  %v151 = vadd.f32 0.0, %v150
  %152 = vmatmul.bf16.gmra.mxu0 %v107
  %v153 = vpop.f32.mrf.mxu0
  %v154 = vadd.f32 0.0, %v153
  %v155 = vpop.f32.mrf.mxu0
  %v156 = vadd.f32 0.0, %v155
  %157 = vdwg.mxu0
  %158 = vst [vmem:[%s2] sm:$0xff] %v119
  %159 = vst [vmem:[%s2 + $0x8] sm:$0xff] %v121
  %160 = vst [vmem:[%s2 + $0x10] sm:$0xff] %v124
  %161 = vst [vmem:[%s2 + $0x18] sm:$0xff] %v126
  %162 = vst [vmem:[%s2 + $0x20] sm:$0xff] %v129
  %163 = vst [vmem:[%s2 + $0x28] sm:$0xff] %v131
  %164 = vst [vmem:[%s2 + $0x30] sm:$0xff] %v134
  %165 = vst [vmem:[%s2 + $0x38] sm:$0xff] %v136
  %166 = vst [vmem:[%s2 + $0x40] sm:$0xff] %v139
  %167 = vst [vmem:[%s2 + $0x48] sm:$0xff] %v141
  %168 = vst [vmem:[%s2 + $0x50] sm:$0xff] %v144
  %169 = vst [vmem:[%s2 + $0x58] sm:$0xff] %v146
  %170 = vst [vmem:[%s2 + $0x60] sm:$0xff] %v149
  %171 = vst [vmem:[%s2 + $0x68] sm:$0xff] %v151
  %172 = vst [vmem:[%s2 + $0x70] sm:$0xff] %v154
  %173 = vst [vmem:[%s2 + $0x78] sm:$0xff] %v156
  // Predicated region
  $region10: #{scnet_forward.19} parent=0 // pred_check
    _
  $region11: #{scnet_forward.19} parent=0 // pred_check_branch
    %175 = sbr.rel (0) target = $region13
  $region12: #{scnet_forward.19} parent=0 // pred_region
    _
  $region13: #{scnet_forward.19} parent=0 // pred_fallthru
    _
  // Predicated region
  $region14: #{scnet_forward.19} parent=0 // pred_check
    _
  $region15: #{scnet_forward.19} parent=0 // pred_check_branch
    %177 = sbr.rel (0) target = $region17
  $region16: #{scnet_forward.19} parent=0 // pred_region
    _
  $region17: #{scnet_forward.19} parent=0 // pred_fallthru
    _

// kernel: scnet_forward.18
$region0: #{scnet_forward.18}
  #allocation0 [shape = 'u32[]', space=smem, size = 0x4, offset = 0x4, fixed_abs, tag = 'smem constant byte address 0x4 - core index']
  #allocation1 [shape = 'u32[72,128]{1,0:T(1,128)}', space=vmem, size = 0x9000, scoped, tag = 'internal scratch']
  %s0 = inlined_call_operand.vmem [shape: f32[2,128,64], index: 0, kind: input, shape index: {}]
  %s1 = inlined_call_operand.vmem [shape: bf16[2,2,16,128], index: 1, kind: input, shape index: {}]
  %s2 = inlined_call_operand.vmem [shape: bf16[2,2,128,32], index: 2, kind: input, shape index: {}]
  %s3 = inlined_call_operand.vmem [shape: f32[1,128], index: 3, kind: input, shape index: {}]
  %s4 = inlined_call_operand.vmem [shape: f32[1,32], index: 4, kind: input, shape index: {}]
  %s5 = inlined_call_operand.vmem [shape: f32[1,32], index: 5, kind: input, shape index: {}]
  %s6 = inlined_call_operand.vmem [shape: f32[1,32], index: 6, kind: input, shape index: {}]
  %s7 = inlined_call_operand.vmem [shape: bf16[32,2048], index: 7, kind: input, shape index: {}]
  %s8 = inlined_call_operand.vmem [shape: f32[1,2048], index: 8, kind: input, shape index: {}]
  %s9 = inlined_call_operand.vmem [shape: bf16[2048,32], index: 9, kind: input, shape index: {}]
  %s10 = inlined_call_operand.vmem [shape: f32[1,32], index: 10, kind: input, shape index: {}]
  %s11 = inlined_call_operand.vmem [shape: f32[1,32], index: 11, kind: input, shape index: {}]
  %s12 = inlined_call_operand.vmem [shape: f32[1,32], index: 12, kind: input, shape index: {}]
  %s13 = inlined_call_operand.vmem [shape: f32[2,128,32], index: 13, kind: output, shape index: {}]
  %s14 = sld [smem:[#allocation0]]
  $region85: #{scnet_forward.18} parent=0
    _
  %s16 = ssub.s32 1, %s14
  %s17 = scalar_select 0, %s16, %s14
  loop: start=0, step=1, limit=4
  $region2: #{scnet_forward.18} parent=0 // loop_pre_header
    _
  $region3: #{scnet_forward.18} parent=0 // loop_header
    %s19 = sphi 0, %s23
    %p20 = scmp.ge.s32.totalorder %s19, 4
    %s26 = sphi 0, %s38
    %s27 = sphi 0, %s34
    %s28 = sphi 0, %s26
    %s29 = sphi 0, %s27
    %s30 = sphi 0, %s28
    %s31 = sphi 0, %s29
    %s43 = sphi 0, %s45
    %s46 = sphi 0, %s43
    %s47 = sphi 0, %s46
    %s63 = sphi 0, %s47
    %s69 = sphi 0, %s71
    %s72 = sphi 0, %s69
    %s73 = sphi 0, %s72
    %s89 = sphi 0, %s73
    %s95 = sphi 0, %s97
    %s98 = sphi 0, %s95
    %s99 = sphi 0, %s98
    %s115 = sphi 0, %s99
    %s119 = sphi 0, %s119
    %s121 = sphi 0, %s119
    %s122 = sphi 0, %s121
    %s136 = sphi 0, %s122
    %s140 = sphi 0, %s140
    %s142 = sphi 0, %s140
    %s143 = sphi 0, %s142
    %s157 = sphi 0, %s143
    %s161 = sphi 0, %s161
    %s163 = sphi 0, %s161
    %s164 = sphi 0, %s163
    %s178 = sphi 0, %s164
    %s182 = sphi 0, %s182
    %s184 = sphi 0, %s182
    %s185 = sphi 0, %s184
    %s199 = sphi 0, %s185
    %s203 = sphi 0, %s203
    %s205 = sphi 0, %s203
    %s206 = sphi 0, %s205
    %s220 = sphi 0, %s206
    %s224 = sphi 0, %s224
    %s226 = sphi 0, %s224
    %s227 = sphi 0, %s226
    %s241 = sphi 0, %s227
    %s245 = sphi 0, %s245
    %s247 = sphi 0, %s245
    %s248 = sphi 0, %s247
    %s262 = sphi 0, %s248
    %s266 = sphi 0, %s266
    %s268 = sphi 0, %s266
    %s269 = sphi 0, %s268
    %s283 = sphi 0, %s269
    %s287 = sphi 0, %s287
    %s289 = sphi 0, %s287
    %s290 = sphi 0, %s289
    %s304 = sphi 0, %s290
    %s308 = sphi 0, %s308
    %s310 = sphi 0, %s308
    %s311 = sphi 0, %s310
    %s325 = sphi 0, %s311
    %s333 = sphi 0, %s335
    %s336 = sphi 0, %s333
    %s337 = sphi 0, %s336
    %s353 = sphi 0, %s337
  $region4: #{scnet_forward.18} parent=0 // loop_header_branch
    %22 = sbr.rel (%p20) target = $region8
  $region5: #{scnet_forward.18} parent=0 // loop_body
    %s24 = ssub.s32 %s19, 1
    %s25 = ssub.s32 %s19, 2
    %s32 = sadd.s32 1, %s27
    %p33 = scmp.ge.s32.totalorder %s32, 1
    %s34 = scalar_select %p33, 0, %s32
    %s35 = sadd.s32 1, %s26
    %s36 = scalar_select %p33, %s35, %s26
    %p37 = scmp.ge.s32.totalorder %s36, 2
    %s38 = scalar_select %p37, 0, %s36
    %s39 = ssub.s32 %s26, %s38
    %s40 = ssub.s32 %s27, %s34
    %s41 = sor.u32 %s39, %s40
    %p42 = scmp.eq.s32.totalorder %s41, 0
    %s44 = sadd.s32 %s43, 1
    %s45 = scalar_select %p42, %s43, %s44
    %p48 = pneg %p42
    %p49 = scmp.eq.s32.totalorder %s19, 1
    %p50 = por %p48, %p49
    %p51 = scmp.ne.s32.totalorder %s43, %s46
    %p52 = scmp.eq.s32.totalorder %s19, 0
    %p53 = por %p51, %p52
    %p54 = scmp.ne.s32.totalorder %s43, %s46
    %p55 = scmp.eq.s32.totalorder %s24, 1
    %p56 = por %p54, %p55
    %p57 = scmp.ne.s32.totalorder %s46, %s47
    %p58 = scmp.eq.s32.totalorder %s24, 0
    %p59 = por %p57, %p58
    %p60 = scmp.ne.s32.totalorder %s46, %s47
    %p61 = scmp.eq.s32.totalorder %s25, 1
    %p62 = por %p60, %p61
    %p64 = scmp.ne.s32.totalorder %s47, %s63
    %p65 = scmp.eq.s32.totalorder %s25, 0
    %p66 = por %p64, %p65
    %s67 = ssub.s32 %s26, %s38
    %p68 = scmp.eq.s32.totalorder %s67, 0
    %s70 = sadd.s32 %s69, 1
    %s71 = scalar_select %p68, %s69, %s70
    %p74 = pneg %p68
    %p75 = scmp.eq.s32.totalorder %s19, 1
    %p76 = por %p74, %p75
    %p77 = scmp.ne.s32.totalorder %s69, %s72
    %p78 = scmp.eq.s32.totalorder %s19, 0
    %p79 = por %p77, %p78
    %p80 = scmp.ne.s32.totalorder %s69, %s72
    %p81 = scmp.eq.s32.totalorder %s24, 1
    %p82 = por %p80, %p81
    %p83 = scmp.ne.s32.totalorder %s72, %s73
    %p84 = scmp.eq.s32.totalorder %s24, 0
    %p85 = por %p83, %p84
    %p86 = scmp.ne.s32.totalorder %s72, %s73
    %p87 = scmp.eq.s32.totalorder %s25, 1
    %p88 = por %p86, %p87
    %p90 = scmp.ne.s32.totalorder %s73, %s89
    %p91 = scmp.eq.s32.totalorder %s25, 0
    %p92 = por %p90, %p91
    %s93 = ssub.s32 %s26, %s38
    %p94 = scmp.eq.s32.totalorder %s93, 0
    %s96 = sadd.s32 %s95, 1
    %s97 = scalar_select %p94, %s95, %s96
    %p100 = pneg %p94
    %p101 = scmp.eq.s32.totalorder %s19, 1
    %p102 = por %p100, %p101
    %p103 = scmp.ne.s32.totalorder %s95, %s98
    %p104 = scmp.eq.s32.totalorder %s19, 0
    %p105 = por %p103, %p104
    %p106 = scmp.ne.s32.totalorder %s95, %s98
    %p107 = scmp.eq.s32.totalorder %s24, 1
    %p108 = por %p106, %p107
    %p109 = scmp.ne.s32.totalorder %s98, %s99
    %p110 = scmp.eq.s32.totalorder %s24, 0
    %p111 = por %p109, %p110
    %p112 = scmp.ne.s32.totalorder %s98, %s99
    %p113 = scmp.eq.s32.totalorder %s25, 1
    %p114 = por %p112, %p113
    %p116 = scmp.ne.s32.totalorder %s99, %s115
    %p117 = scmp.eq.s32.totalorder %s25, 0
    %p118 = por %p116, %p117
    %s120 = sadd.s32 %s119, 1
    %p123 = scmp.eq.s32.totalorder %s19, 1
    %p124 = scmp.ne.s32.totalorder %s119, %s121
    %p125 = scmp.eq.s32.totalorder %s19, 0
    %p126 = por %p124, %p125
    %p127 = scmp.ne.s32.totalorder %s119, %s121
    %p128 = scmp.eq.s32.totalorder %s24, 1
    %p129 = por %p127, %p128
    %p130 = scmp.ne.s32.totalorder %s121, %s122
    %p131 = scmp.eq.s32.totalorder %s24, 0
    %p132 = por %p130, %p131
    %p133 = scmp.ne.s32.totalorder %s121, %s122
    %p134 = scmp.eq.s32.totalorder %s25, 1
    %p135 = por %p133, %p134
    %p137 = scmp.ne.s32.totalorder %s122, %s136
    %p138 = scmp.eq.s32.totalorder %s25, 0
    %p139 = por %p137, %p138
    %s141 = sadd.s32 %s140, 1
    %p144 = scmp.eq.s32.totalorder %s19, 1
    %p145 = scmp.ne.s32.totalorder %s140, %s142
    %p146 = scmp.eq.s32.totalorder %s19, 0
    %p147 = por %p145, %p146
    %p148 = scmp.ne.s32.totalorder %s140, %s142
    %p149 = scmp.eq.s32.totalorder %s24, 1
    %p150 = por %p148, %p149
    %p151 = scmp.ne.s32.totalorder %s142, %s143
    %p152 = scmp.eq.s32.totalorder %s24, 0
    %p153 = por %p151, %p152
    %p154 = scmp.ne.s32.totalorder %s142, %s143
    %p155 = scmp.eq.s32.totalorder %s25, 1
    %p156 = por %p154, %p155
    %p158 = scmp.ne.s32.totalorder %s143, %s157
    %p159 = scmp.eq.s32.totalorder %s25, 0
    %p160 = por %p158, %p159
    %s162 = sadd.s32 %s161, 1
    %p165 = scmp.eq.s32.totalorder %s19, 1
    %p166 = scmp.ne.s32.totalorder %s161, %s163
    %p167 = scmp.eq.s32.totalorder %s19, 0
    %p168 = por %p166, %p167
    %p169 = scmp.ne.s32.totalorder %s161, %s163
    %p170 = scmp.eq.s32.totalorder %s24, 1
    %p171 = por %p169, %p170
    %p172 = scmp.ne.s32.totalorder %s163, %s164
    %p173 = scmp.eq.s32.totalorder %s24, 0
    %p174 = por %p172, %p173
    %p175 = scmp.ne.s32.totalorder %s163, %s164
    %p176 = scmp.eq.s32.totalorder %s25, 1
    %p177 = por %p175, %p176
    %p179 = scmp.ne.s32.totalorder %s164, %s178
    %p180 = scmp.eq.s32.totalorder %s25, 0
    %p181 = por %p179, %p180
    %s183 = sadd.s32 %s182, 1
    %p186 = scmp.eq.s32.totalorder %s19, 1
    %p187 = scmp.ne.s32.totalorder %s182, %s184
    %p188 = scmp.eq.s32.totalorder %s19, 0
    %p189 = por %p187, %p188
    %p190 = scmp.ne.s32.totalorder %s182, %s184
    %p191 = scmp.eq.s32.totalorder %s24, 1
    %p192 = por %p190, %p191
    %p193 = scmp.ne.s32.totalorder %s184, %s185
    %p194 = scmp.eq.s32.totalorder %s24, 0
    %p195 = por %p193, %p194
    %p196 = scmp.ne.s32.totalorder %s184, %s185
    %p197 = scmp.eq.s32.totalorder %s25, 1
    %p198 = por %p196, %p197
    %p200 = scmp.ne.s32.totalorder %s185, %s199
    %p201 = scmp.eq.s32.totalorder %s25, 0
    %p202 = por %p200, %p201
    %s204 = sadd.s32 %s203, 1
    %p207 = scmp.eq.s32.totalorder %s19, 1
    %p208 = scmp.ne.s32.totalorder %s203, %s205
    %p209 = scmp.eq.s32.totalorder %s19, 0
    %p210 = por %p208, %p209
    %p211 = scmp.ne.s32.totalorder %s203, %s205
    %p212 = scmp.eq.s32.totalorder %s24, 1
    %p213 = por %p211, %p212
    %p214 = scmp.ne.s32.totalorder %s205, %s206
    %p215 = scmp.eq.s32.totalorder %s24, 0
    %p216 = por %p214, %p215
    %p217 = scmp.ne.s32.totalorder %s205, %s206
    %p218 = scmp.eq.s32.totalorder %s25, 1
    %p219 = por %p217, %p218
    %p221 = scmp.ne.s32.totalorder %s206, %s220
    %p222 = scmp.eq.s32.totalorder %s25, 0
    %p223 = por %p221, %p222
    %s225 = sadd.s32 %s224, 1
    %p228 = scmp.eq.s32.totalorder %s19, 1
    %p229 = scmp.ne.s32.totalorder %s224, %s226
    %p230 = scmp.eq.s32.totalorder %s19, 0
    %p231 = por %p229, %p230
    %p232 = scmp.ne.s32.totalorder %s224, %s226
    %p233 = scmp.eq.s32.totalorder %s24, 1
    %p234 = por %p232, %p233
    %p235 = scmp.ne.s32.totalorder %s226, %s227
    %p236 = scmp.eq.s32.totalorder %s24, 0
    %p237 = por %p235, %p236
    %p238 = scmp.ne.s32.totalorder %s226, %s227
    %p239 = scmp.eq.s32.totalorder %s25, 1
    %p240 = por %p238, %p239
    %p242 = scmp.ne.s32.totalorder %s227, %s241
    %p243 = scmp.eq.s32.totalorder %s25, 0
    %p244 = por %p242, %p243
    %s246 = sadd.s32 %s245, 1
    %p249 = scmp.eq.s32.totalorder %s19, 1
    %p250 = scmp.ne.s32.totalorder %s245, %s247
    %p251 = scmp.eq.s32.totalorder %s19, 0
    %p252 = por %p250, %p251
    %p253 = scmp.ne.s32.totalorder %s245, %s247
    %p254 = scmp.eq.s32.totalorder %s24, 1
    %p255 = por %p253, %p254
    %p256 = scmp.ne.s32.totalorder %s247, %s248
    %p257 = scmp.eq.s32.totalorder %s24, 0
    %p258 = por %p256, %p257
    %p259 = scmp.ne.s32.totalorder %s247, %s248
    %p260 = scmp.eq.s32.totalorder %s25, 1
    %p261 = por %p259, %p260
    %p263 = scmp.ne.s32.totalorder %s248, %s262
    %p264 = scmp.eq.s32.totalorder %s25, 0
    %p265 = por %p263, %p264
    %s267 = sadd.s32 %s266, 1
    %p270 = scmp.eq.s32.totalorder %s19, 1
    %p271 = scmp.ne.s32.totalorder %s266, %s268
    %p272 = scmp.eq.s32.totalorder %s19, 0
    %p273 = por %p271, %p272
    %p274 = scmp.ne.s32.totalorder %s266, %s268
    %p275 = scmp.eq.s32.totalorder %s24, 1
    %p276 = por %p274, %p275
    %p277 = scmp.ne.s32.totalorder %s268, %s269
    %p278 = scmp.eq.s32.totalorder %s24, 0
    %p279 = por %p277, %p278
    %p280 = scmp.ne.s32.totalorder %s268, %s269
    %p281 = scmp.eq.s32.totalorder %s25, 1
    %p282 = por %p280, %p281
    %p284 = scmp.ne.s32.totalorder %s269, %s283
    %p285 = scmp.eq.s32.totalorder %s25, 0
    %p286 = por %p284, %p285
    %s288 = sadd.s32 %s287, 1
    %p291 = scmp.eq.s32.totalorder %s19, 1
    %p292 = scmp.ne.s32.totalorder %s287, %s289
    %p293 = scmp.eq.s32.totalorder %s19, 0
    %p294 = por %p292, %p293
    %p295 = scmp.ne.s32.totalorder %s287, %s289
    %p296 = scmp.eq.s32.totalorder %s24, 1
    %p297 = por %p295, %p296
    %p298 = scmp.ne.s32.totalorder %s289, %s290
    %p299 = scmp.eq.s32.totalorder %s24, 0
    %p300 = por %p298, %p299
    %p301 = scmp.ne.s32.totalorder %s289, %s290
    %p302 = scmp.eq.s32.totalorder %s25, 1
    %p303 = por %p301, %p302
    %p305 = scmp.ne.s32.totalorder %s290, %s304
    %p306 = scmp.eq.s32.totalorder %s25, 0
    %p307 = por %p305, %p306
    %s309 = sadd.s32 %s308, 1
    %p312 = scmp.eq.s32.totalorder %s19, 1
    %p313 = scmp.ne.s32.totalorder %s308, %s310
    %p314 = scmp.eq.s32.totalorder %s19, 0
    %p315 = por %p313, %p314
    %p316 = scmp.ne.s32.totalorder %s308, %s310
    %p317 = scmp.eq.s32.totalorder %s24, 1
    %p318 = por %p316, %p317
    %p319 = scmp.ne.s32.totalorder %s310, %s311
    %p320 = scmp.eq.s32.totalorder %s24, 0
    %p321 = por %p319, %p320
    %p322 = scmp.ne.s32.totalorder %s310, %s311
    %p323 = scmp.eq.s32.totalorder %s25, 1
    %p324 = por %p322, %p323
    %p326 = scmp.ne.s32.totalorder %s311, %s325
    %p327 = scmp.eq.s32.totalorder %s25, 0
    %p328 = por %p326, %p327
    %s329 = ssub.s32 %s26, %s38
    %s330 = ssub.s32 %s27, %s34
    %s331 = sor.u32 %s329, %s330
    %p332 = scmp.eq.s32.totalorder %s331, 0
    %s334 = sadd.s32 %s333, 1
    %s335 = scalar_select %p332, %s333, %s334
    %p338 = pneg %p332
    %p339 = scmp.eq.s32.totalorder %s19, 1
    %p340 = por %p338, %p339
    %p341 = scmp.ne.s32.totalorder %s333, %s336
    %p342 = scmp.eq.s32.totalorder %s19, 0
    %p343 = por %p341, %p342
    %p344 = scmp.ne.s32.totalorder %s333, %s336
    %p345 = scmp.eq.s32.totalorder %s24, 1
    %p346 = por %p344, %p345
    %p347 = scmp.ne.s32.totalorder %s336, %s337
    %p348 = scmp.eq.s32.totalorder %s24, 0
    %p349 = por %p347, %p348
    %p350 = scmp.ne.s32.totalorder %s336, %s337
    %p351 = scmp.eq.s32.totalorder %s25, 1
    %p352 = por %p350, %p351
    %p354 = scmp.ne.s32.totalorder %s337, %s353
    %p355 = scmp.eq.s32.totalorder %s25, 0
    %p356 = por %p354, %p355
    %p357 = scmp.le.s32.totalorder 1, %s19
    %p358 = scmp.lt.s32.totalorder %s19, 3
    %p359 = pnand %p357, %p358
    %p360 = pneg %p359
    // Predicated region
    $region9: #{scnet_forward.18} parent=5 // pred_check
      _
    $region10: #{scnet_forward.18} parent=5 // pred_check_branch
      %362 = sbr.rel (%p359) target = $region12
    $region11: #{scnet_forward.18} parent=5 // pred_region
      %s363 = ssub.s32 %s19, 1
      // Predicated region
      $region13: #{scnet_forward.18} parent=11 // pred_check
        %p364 = pneg %p132
      $region14: #{scnet_forward.18} parent=11 // pred_check_branch
        %366 = sbr.rel (%p364) target = $region16
      $region15: #{scnet_forward.18} parent=11 // pred_region
        _
      $region16: #{scnet_forward.18} parent=11 // pred_fallthru
        _
      // Predicated region
      $region17: #{scnet_forward.18} parent=11 // pred_check
        %p367 = pneg %p153
      $region18: #{scnet_forward.18} parent=11 // pred_check_branch
        %369 = sbr.rel (%p367) target = $region20
      $region19: #{scnet_forward.18} parent=11 // pred_region
        _
      $region20: #{scnet_forward.18} parent=11 // pred_fallthru
        _
      // Predicated region
      $region21: #{scnet_forward.18} parent=11 // pred_check
        %p370 = pneg %p174
      $region22: #{scnet_forward.18} parent=11 // pred_check_branch
        %372 = sbr.rel (%p370) target = $region24
      $region23: #{scnet_forward.18} parent=11 // pred_region
        _
      $region24: #{scnet_forward.18} parent=11 // pred_fallthru
        _
      // Predicated region
      $region25: #{scnet_forward.18} parent=11 // pred_check
        %p373 = pneg %p195
      $region26: #{scnet_forward.18} parent=11 // pred_check_branch
        %375 = sbr.rel (%p373) target = $region28
      $region27: #{scnet_forward.18} parent=11 // pred_region
        _
      $region28: #{scnet_forward.18} parent=11 // pred_fallthru
        _
      // Predicated region
      $region29: #{scnet_forward.18} parent=11 // pred_check
        %p376 = pneg %p216
      $region30: #{scnet_forward.18} parent=11 // pred_check_branch
        %378 = sbr.rel (%p376) target = $region32
      $region31: #{scnet_forward.18} parent=11 // pred_region
        _
      $region32: #{scnet_forward.18} parent=11 // pred_fallthru
        _
      // Predicated region
      $region33: #{scnet_forward.18} parent=11 // pred_check
        %p379 = pneg %p237
      $region34: #{scnet_forward.18} parent=11 // pred_check_branch
        %381 = sbr.rel (%p379) target = $region36
      $region35: #{scnet_forward.18} parent=11 // pred_region
        _
      $region36: #{scnet_forward.18} parent=11 // pred_fallthru
        _
      // Predicated region
      $region37: #{scnet_forward.18} parent=11 // pred_check
        %p382 = pneg %p258
      $region38: #{scnet_forward.18} parent=11 // pred_check_branch
        %384 = sbr.rel (%p382) target = $region40
      $region39: #{scnet_forward.18} parent=11 // pred_region
        _
      $region40: #{scnet_forward.18} parent=11 // pred_fallthru
        _
      // Predicated region
      $region41: #{scnet_forward.18} parent=11 // pred_check
        %p385 = pneg %p279
      $region42: #{scnet_forward.18} parent=11 // pred_check_branch
        %387 = sbr.rel (%p385) target = $region44
      $region43: #{scnet_forward.18} parent=11 // pred_region
        _
      $region44: #{scnet_forward.18} parent=11 // pred_fallthru
        _
      // Predicated region
      $region45: #{scnet_forward.18} parent=11 // pred_check
        %p388 = pneg %p300
      $region46: #{scnet_forward.18} parent=11 // pred_check_branch
        %390 = sbr.rel (%p388) target = $region48
      $region47: #{scnet_forward.18} parent=11 // pred_region
        _
      $region48: #{scnet_forward.18} parent=11 // pred_fallthru
        _
      // Predicated region
      $region49: #{scnet_forward.18} parent=11 // pred_check
        %p391 = pneg %p321
      $region50: #{scnet_forward.18} parent=11 // pred_check_branch
        %393 = sbr.rel (%p391) target = $region52
      $region51: #{scnet_forward.18} parent=11 // pred_region
        _
      $region52: #{scnet_forward.18} parent=11 // pred_fallthru
        _
    $region12: #{scnet_forward.18} parent=5 // pred_fallthru
      _
    %p394 = scmp.lt.s32.totalorder %s19, 2
    // Predicated region
    $region53: #{scnet_forward.18} parent=5 // pred_check
      %p395 = pneg %p394
    $region54: #{scnet_forward.18} parent=5 // pred_check_branch
      %397 = sbr.rel (%p395) target = $region56
    $region55: #{scnet_forward.18} parent=5 // pred_region
      // Predicated region
      $region57: #{scnet_forward.18} parent=55 // pred_check
        %p398 = pneg %p53
      $region58: #{scnet_forward.18} parent=55 // pred_check_branch
        %400 = sbr.rel (%p398) target = $region60
      $region59: #{scnet_forward.18} parent=55 // pred_region
        %s401 = smul.u32 16, %s27
        %p402 = scmp.lt.s32.totalorder %s26, 1
        %s403 = scalar_select %p402, %s26, 1
        %p404 = scmp.lt.s32.totalorder %s401, 15
        %s405 = scalar_select %p404, %s401, 15
        %s406 = smul.addr %s403, 16
        %s407 = sadd.s32 %s405, %s406
        %s408 = smul.addr %s407, 8
        %s409 = scalar_lea.vmem %s0, %s408
        %s410 = smul.u32 16, %s27
      $region60: #{scnet_forward.18} parent=55 // pred_fallthru
        _
      // Predicated region
      $region61: #{scnet_forward.18} parent=55 // pred_check
        %p411 = pneg %p79
      $region62: #{scnet_forward.18} parent=55 // pred_check_branch
        %413 = sbr.rel (%p411) target = $region64
      $region63: #{scnet_forward.18} parent=55 // pred_region
        %p414 = scmp.lt.s32.totalorder %s26, 1
        %s415 = scalar_select %p414, %s26, 1
        %s416 = smul.addr %s415, 4
        %s417 = smul.addr %s416, 4
        %s418 = scalar_lea.vmem %s1, %s417
      $region64: #{scnet_forward.18} parent=55 // pred_fallthru
        _
      // Predicated region
      $region65: #{scnet_forward.18} parent=55 // pred_check
        %p419 = pneg %p105
      $region66: #{scnet_forward.18} parent=55 // pred_check_branch
        %421 = sbr.rel (%p419) target = $region68
      $region67: #{scnet_forward.18} parent=55 // pred_region
        %p422 = scmp.lt.s32.totalorder %s26, 1
        %s423 = scalar_select %p422, %s26, 1
        %s424 = smul.addr %s423, 32
        %s425 = smul.addr %s424, 4
        %s426 = scalar_lea.vmem %s2, %s425
      $region68: #{scnet_forward.18} parent=55 // pred_fallthru
        _
    $region56: #{scnet_forward.18} parent=5 // pred_fallthru
      _
    %p427 = scmp.le.s32.totalorder 1, %s19
    %p428 = scmp.lt.s32.totalorder %s19, 3
    %p429 = pnand %p427, %p428
    %p430 = pneg %p429
    // Predicated region
    $region69: #{scnet_forward.18} parent=5 // pred_check
      _
    $region70: #{scnet_forward.18} parent=5 // pred_check_branch
      %432 = sbr.rel (%p429) target = $region72
    $region71: #{scnet_forward.18} parent=5 // pred_region
      %s433 = ssub.s32 %s19, 1
      %s434 = smul.u32 16, %s29
      %p435 = scmp.lt.s32.totalorder %s28, 1
      %s436 = scalar_select %p435, %s28, 1
      %p437 = scmp.lt.s32.totalorder %s434, 15
      %s438 = scalar_select %p437, %s434, 15
      %s439 = smul.addr %s436, 16
      %s440 = sadd.s32 %s438, %s439
      %s441 = smul.addr %s440, 8
      %s442 = scalar_lea.vmem %s0, %s441
      %p443 = pneg %p59
      %p444 = pneg %p56
      %p445 = scmp.lt.s32.totalorder %s28, 1
      %s446 = scalar_select %p445, %s28, 1
      %s447 = smul.addr %s446, 4
      %s448 = smul.addr %s447, 4
      %s449 = scalar_lea.vmem %s1, %s448
      %p450 = pneg %p85
      %p451 = pneg %p82
      %p452 = scmp.lt.s32.totalorder %s28, 1
      %s453 = scalar_select %p452, %s28, 1
      %s454 = smul.addr %s453, 32
      %s455 = smul.addr %s454, 4
      %s456 = scalar_lea.vmem %s2, %s455
      %p457 = pneg %p111
      %p458 = pneg %p108
      %p459 = pneg %p132
      %p460 = pneg %p129
      %p461 = pneg %p153
      %p462 = pneg %p150
      %p463 = pneg %p174
      %p464 = pneg %p171
      %p465 = pneg %p195
      %p466 = pneg %p192
      %p467 = pneg %p216
      %p468 = pneg %p213
      %p469 = pneg %p237
      %p470 = pneg %p234
      %p471 = pneg %p258
      %p472 = pneg %p255
      %p473 = pneg %p279
      %p474 = pneg %p276
      %p475 = pneg %p300
      %p476 = pneg %p297
      %p477 = pneg %p321
      %p478 = pneg %p318
      %p479 = pneg %p349
      %p480 = pneg %p346
      %s481 = smul.u32 16, %s29
      %p482 = scmp.lt.s32.totalorder %s28, 1
      %s483 = scalar_select %p482, %s28, 1
      %p484 = scmp.lt.s32.totalorder %s481, 15
      %s485 = scalar_select %p484, %s481, 15
      %s486 = smul.addr %s483, 16
      %s487 = sadd.s32 %s485, %s486
      %s488 = smul.addr %s487, 8
      %s489 = scalar_lea.vmem %s13, %s488
      %s490 = smul.u32 16, %s29
      %p491 = scmp.lt.s32.totalorder %s28, 1
      %s492 = scalar_select %p491, %s28, 1
      %p493 = scmp.lt.s32.totalorder %s490, 15
      %s494 = scalar_select %p493, %s490, 15
      %s495 = smul.addr %s492, 16
      %s496 = sadd.s32 %s494, %s495
      %s497 = smul.addr %s496, 8
      %s498 = scalar_lea.vmem %s0, %s497
      %s499 = smul.u32 16, %s29
      %p500 = scmp.lt.s32.totalorder %s28, 1
      %s501 = scalar_select %p500, %s28, 1
      %s502 = smul.addr %s501, 4
      %s503 = smul.addr %s502, 4
      %s504 = scalar_lea.vmem %s1, %s503
      %p505 = scmp.lt.s32.totalorder %s28, 1
      %s506 = scalar_select %p505, %s28, 1
      %s507 = smul.addr %s506, 32
      %s508 = smul.addr %s507, 4
      %s509 = scalar_lea.vmem %s2, %s508
      %s510 = smul.u32 16, %s29
      %p511 = scmp.lt.s32.totalorder %s28, 1
      %s512 = scalar_select %p511, %s28, 1
      %p513 = scmp.lt.s32.totalorder %s510, 15
      %s514 = scalar_select %p513, %s510, 15
      %s515 = smul.addr %s512, 16
      %s516 = sadd.s32 %s514, %s515
      %s517 = smul.addr %s516, 8
      %s518 = scalar_lea.vmem %s13, %s517
      %s519 = smul.u32 16, %s29
      %v521 = vld [vmem:[%s498] sm:$0xff]
      %v522 = vld [vmem:[%s498 + $0x8] sm:$0xff]
      %v523 = vld [vmem:[%s498 + $0x10] sm:$0xff]
      %v524 = vld [vmem:[%s498 + $0x18] sm:$0xff]
      %v525 = vld [vmem:[%s498 + $0x20] sm:$0xff]
      %v526 = vld [vmem:[%s498 + $0x28] sm:$0xff]
      %v527 = vld [vmem:[%s498 + $0x30] sm:$0xff]
      %v528 = vld [vmem:[%s498 + $0x38] sm:$0xff]
      %v529 = vld [vmem:[%s498 + $0x40] sm:$0xff]
      %v530 = vld [vmem:[%s498 + $0x48] sm:$0xff]
      %v531 = vld [vmem:[%s498 + $0x50] sm:$0xff]
      %v532 = vld [vmem:[%s498 + $0x58] sm:$0xff]
      %v533 = vld [vmem:[%s498 + $0x60] sm:$0xff]
      %v534 = vld [vmem:[%s498 + $0x68] sm:$0xff]
      %v535 = vld [vmem:[%s498 + $0x70] sm:$0xff]
      %v536 = vld [vmem:[%s498 + $0x78] sm:$0xff]
      %v537 = vpack.c.bf16 %v521, %v521
      %v538 = vpack.c.bf16 %v522, %v522
      %v539 = vpack.c.bf16 %v523, %v523
      %v540 = vpack.c.bf16 %v524, %v524
      %v541 = vpack.c.bf16 %v525, %v525
      %v542 = vpack.c.bf16 %v526, %v526
      %v543 = vpack.c.bf16 %v527, %v527
      %v544 = vpack.c.bf16 %v528, %v528
      %v545 = vpack.c.bf16 %v529, %v529
      %v546 = vpack.c.bf16 %v530, %v530
      %v547 = vpack.c.bf16 %v531, %v531
      %v548 = vpack.c.bf16 %v532, %v532
      %v549 = vpack.c.bf16 %v533, %v533
      %v550 = vpack.c.bf16 %v534, %v534
      %v551 = vpack.c.bf16 %v535, %v535
      %v552 = vpack.c.bf16 %v536, %v536
      %v553 = vld [vmem:[%s3] sm:$0x1]
      %v554 = vld [vmem:[%s504] sm:$0xf]
      %v555 = vld [vmem:[%s504 + $0x4] sm:$0xf]
      %v572 = vunpack.c.l.b16 %v537
      %v573 = vunpack.c.l.b16 %v538
      %v574 = vunpack.c.l.b16 %v539
      %v575 = vunpack.c.l.b16 %v540
      %v576 = vunpack.c.l.b16 %v541
      %v577 = vunpack.c.l.b16 %v542
      %v578 = vunpack.c.l.b16 %v543
      %v579 = vunpack.c.l.b16 %v544
      %v580 = vunpack.c.l.b16 %v545
      %v581 = vunpack.c.l.b16 %v546
      %v582 = vunpack.c.l.b16 %v547
      %v583 = vunpack.c.l.b16 %v548
      %v584 = vunpack.c.l.b16 %v549
      %v585 = vunpack.c.l.b16 %v550
      %v586 = vunpack.c.l.b16 %v551
      %v587 = vunpack.c.l.b16 %v552
      %v588 = vpack.c.b16 %v573, %v572
      %v589 = vpack.c.b16 %v575, %v574
      %v590 = vpack.c.b16 %v577, %v576
      %v591 = vpack.c.b16 %v579, %v578
      %v592 = vpack.c.b16 %v581, %v580
      %v593 = vpack.c.b16 %v583, %v582
      %v594 = vpack.c.b16 %v585, %v584
      %v595 = vpack.c.b16 %v587, %v586
      %596 = vrot.lane.b32.xlu0 %v588, 96
      %v597 = vpop.permute.xlu0 %596
      %598 = vrot.lane.b32.xlu0 %v589, 96
      %v599 = vpop.permute.xlu0 %598
      %600 = vrot.lane.b32.xlu0 %v590, 96
      %v601 = vpop.permute.xlu0 %600
      %602 = vrot.lane.b32.xlu0 %v591, 96
      %v603 = vpop.permute.xlu0 %602
      %604 = vrot.lane.b32.xlu0 %v592, 96
      %v605 = vpop.permute.xlu0 %604
      %606 = vrot.lane.b32.xlu0 %v593, 96
      %v607 = vpop.permute.xlu0 %606
      %608 = vrot.lane.b32.xlu0 %v594, 96
      %v609 = vpop.permute.xlu0 %608
      %610 = vrot.lane.b32.xlu0 %v595, 96
      %v611 = vpop.permute.xlu0 %610
      %v614 = vunpack.c.l.b16 %v554
      %v615 = vunpack.c.l.b16 %v555
      %v616 = vpack.c.b16 %v615, %v614
      %vm618 = vcmask 130048
      %v620 = vsel %vm618, %v597, 0
      %v623 = vsel %vm618, %v599, 0
      %v626 = vsel %vm618, %v601, 0
      %v629 = vsel %vm618, %v603, 0
      %v632 = vsel %vm618, %v605, 0
      %v635 = vsel %vm618, %v607, 0
      %v638 = vsel %vm618, %v609, 0
      %v641 = vsel %vm618, %v611, 0
      %643 = vmatpush.bf16.msra.mxu0 0
      %644 = vmatpush.bf16.msra.mxu0 0
      %645 = vmatpush.bf16.msra.mxu0 0
      %646 = vmatpush.bf16.msra.mxu0 0
      %647 = vmatpush.bf16.msra.mxu0 0
      %648 = vmatpush.bf16.msra.mxu0 0
      %649 = vmatpush.bf16.msra.mxu0 0
      %650 = vmatpush.bf16.msra.mxu0 %v616
      %651 = vmatmul.bf16.gmra.mxu0 %v620
      %v652 = vpop.f32.mrf.mxu0
      %v653 = vadd.f32 0.0, %v652
      %v654 = vpop.f32.mrf.mxu0
      %v655 = vadd.f32 0.0, %v654
      %656 = vmatmul.bf16.gmra.mxu0 %v623
      %v657 = vpop.f32.mrf.mxu0
      %v658 = vadd.f32 0.0, %v657
      %v659 = vpop.f32.mrf.mxu0
      %v660 = vadd.f32 0.0, %v659
      %661 = vmatmul.bf16.gmra.mxu0 %v626
      %v662 = vpop.f32.mrf.mxu0
      %v663 = vadd.f32 0.0, %v662
      %v664 = vpop.f32.mrf.mxu0
      %v665 = vadd.f32 0.0, %v664
      %666 = vmatmul.bf16.gmra.mxu0 %v629
      %v667 = vpop.f32.mrf.mxu0
      %v668 = vadd.f32 0.0, %v667
      %v669 = vpop.f32.mrf.mxu0
      %v670 = vadd.f32 0.0, %v669
      %671 = vmatmul.bf16.gmra.mxu0 %v632
      %v672 = vpop.f32.mrf.mxu0
      %v673 = vadd.f32 0.0, %v672
      %v674 = vpop.f32.mrf.mxu0
      %v675 = vadd.f32 0.0, %v674
      %676 = vmatmul.bf16.gmra.mxu0 %v635
      %v677 = vpop.f32.mrf.mxu0
      %v678 = vadd.f32 0.0, %v677
      %v679 = vpop.f32.mrf.mxu0
      %v680 = vadd.f32 0.0, %v679
      %681 = vmatmul.bf16.gmra.mxu0 %v638
      %v682 = vpop.f32.mrf.mxu0
      %v683 = vadd.f32 0.0, %v682
      %v684 = vpop.f32.mrf.mxu0
      %v685 = vadd.f32 0.0, %v684
      %686 = vmatmul.bf16.gmra.mxu0 %v641
      %v687 = vpop.f32.mrf.mxu0
      %v688 = vadd.f32 0.0, %v687
      %v689 = vpop.f32.mrf.mxu0
      %v690 = vadd.f32 0.0, %v689
      %691 = vdwg.mxu0
      %692 = vmax.xlane.f32.xlu0 %v653
      %v693 = vpop.xlane.xlu0 %692
      %694 = vmax.xlane.f32.xlu0 %v655
      %v695 = vpop.xlane.xlu0 %694
      %696 = vmax.xlane.f32.xlu0 %v658
      %v697 = vpop.xlane.xlu0 %696
      %698 = vmax.xlane.f32.xlu0 %v660
      %v699 = vpop.xlane.xlu0 %698
      %700 = vmax.xlane.f32.xlu0 %v663
      %v701 = vpop.xlane.xlu0 %700
      %702 = vmax.xlane.f32.xlu0 %v665
      %v703 = vpop.xlane.xlu0 %702
      %704 = vmax.xlane.f32.xlu0 %v668
      %v705 = vpop.xlane.xlu0 %704
      %706 = vmax.xlane.f32.xlu0 %v670
      %v707 = vpop.xlane.xlu0 %706
      %708 = vmax.xlane.f32.xlu0 %v673
      %v709 = vpop.xlane.xlu0 %708
      %710 = vmax.xlane.f32.xlu0 %v675
      %v711 = vpop.xlane.xlu0 %710
      %712 = vmax.xlane.f32.xlu0 %v678
      %v713 = vpop.xlane.xlu0 %712
      %714 = vmax.xlane.f32.xlu0 %v680
      %v715 = vpop.xlane.xlu0 %714
      %716 = vmax.xlane.f32.xlu0 %v683
      %v717 = vpop.xlane.xlu0 %716
      %718 = vmax.xlane.f32.xlu0 %v685
      %v719 = vpop.xlane.xlu0 %718
      %720 = vmax.xlane.f32.xlu0 %v688
      %v721 = vpop.xlane.xlu0 %720
      %722 = vmax.xlane.f32.xlu0 %v690
      %v723 = vpop.xlane.xlu0 %722
      %v724 = vsub.f32 %v653, %v693
      %v725 = vsub.f32 %v655, %v695
      %v726 = vsub.f32 %v658, %v697
      %v727 = vsub.f32 %v660, %v699
      %v728 = vsub.f32 %v663, %v701
      %v729 = vsub.f32 %v665, %v703
      %v730 = vsub.f32 %v668, %v705
      %v731 = vsub.f32 %v670, %v707
      %v732 = vsub.f32 %v673, %v709
      %v733 = vsub.f32 %v675, %v711
      %v734 = vsub.f32 %v678, %v713
      %v735 = vsub.f32 %v680, %v715
      %v736 = vsub.f32 %v683, %v717
      %v737 = vsub.f32 %v685, %v719
      %v738 = vsub.f32 %v688, %v721
      %v739 = vsub.f32 %v690, %v723
      %v740 = vmul.f32 %v724, 1.442695
      %v741 = vpow.pop %v740
      %v742 = vmul.f32 %v725, 1.442695
      %v743 = vpow.pop %v742
      %v744 = vmul.f32 %v726, 1.442695
      %v745 = vpow.pop %v744
      %v746 = vmul.f32 %v727, 1.442695
      %v747 = vpow.pop %v746
      %v748 = vmul.f32 %v728, 1.442695
      %v749 = vpow.pop %v748
      %v750 = vmul.f32 %v729, 1.442695
      %v751 = vpow.pop %v750
      %v752 = vmul.f32 %v730, 1.442695
      %v753 = vpow.pop %v752
      %v754 = vmul.f32 %v731, 1.442695
      %v755 = vpow.pop %v754
      %v756 = vmul.f32 %v732, 1.442695
      %v757 = vpow.pop %v756
      %v758 = vmul.f32 %v733, 1.442695
      %v759 = vpow.pop %v758
      %v760 = vmul.f32 %v734, 1.442695
      %v761 = vpow.pop %v760
      %v762 = vmul.f32 %v735, 1.442695
      %v763 = vpow.pop %v762
      %v764 = vmul.f32 %v736, 1.442695
      %v765 = vpow.pop %v764
      %v766 = vmul.f32 %v737, 1.442695
      %v767 = vpow.pop %v766
      %v768 = vmul.f32 %v738, 1.442695
      %v769 = vpow.pop %v768
      %v770 = vmul.f32 %v739, 1.442695
      %v771 = vpow.pop %v770
      %v773 = vperm.slane %v553, 0
      %v775 = vmul.f32 %v741, %v773
      %v776 = vmul.f32 %v743, %v773
      %v777 = vmul.f32 %v745, %v773
      %v778 = vmul.f32 %v747, %v773
      %v779 = vmul.f32 %v749, %v773
      %v780 = vmul.f32 %v751, %v773
      %v781 = vmul.f32 %v753, %v773
      %v782 = vmul.f32 %v755, %v773
      %v783 = vmul.f32 %v757, %v773
      %v784 = vmul.f32 %v759, %v773
      %v785 = vmul.f32 %v761, %v773
      %v786 = vmul.f32 %v763, %v773
      %v787 = vmul.f32 %v765, %v773
      %v788 = vmul.f32 %v767, %v773
      %v789 = vmul.f32 %v769, %v773
      %v790 = vmul.f32 %v771, %v773
      %791 = vadd.xlane.f32.xlu0 %v775
      %v792 = vpop.xlane.xlu0 %791
      %793 = vadd.xlane.f32.xlu0 %v776
      %v794 = vpop.xlane.xlu0 %793
      %795 = vadd.xlane.f32.xlu0 %v777
      %v796 = vpop.xlane.xlu0 %795
      %797 = vadd.xlane.f32.xlu0 %v778
      %v798 = vpop.xlane.xlu0 %797
      %799 = vadd.xlane.f32.xlu0 %v779
      %v800 = vpop.xlane.xlu0 %799
      %801 = vadd.xlane.f32.xlu0 %v780
      %v802 = vpop.xlane.xlu0 %801
      %803 = vadd.xlane.f32.xlu0 %v781
      %v804 = vpop.xlane.xlu0 %803
      %805 = vadd.xlane.f32.xlu0 %v782
      %v806 = vpop.xlane.xlu0 %805
      %807 = vadd.xlane.f32.xlu0 %v783
      %v808 = vpop.xlane.xlu0 %807
      %809 = vadd.xlane.f32.xlu0 %v784
      %v810 = vpop.xlane.xlu0 %809
      %811 = vadd.xlane.f32.xlu0 %v785
      %v812 = vpop.xlane.xlu0 %811
      %813 = vadd.xlane.f32.xlu0 %v786
      %v814 = vpop.xlane.xlu0 %813
      %815 = vadd.xlane.f32.xlu0 %v787
      %v816 = vpop.xlane.xlu0 %815
      %817 = vadd.xlane.f32.xlu0 %v788
      %v818 = vpop.xlane.xlu0 %817
      %819 = vadd.xlane.f32.xlu0 %v789
      %v820 = vpop.xlane.xlu0 %819
      %821 = vadd.xlane.f32.xlu0 %v790
      %v822 = vpop.xlane.xlu0 %821
      %v823 = vpack.c.bf16 %v776, %v775
      %v824 = vpack.c.bf16 %v778, %v777
      %v825 = vpack.c.bf16 %v780, %v779
      %v826 = vpack.c.bf16 %v782, %v781
      %v827 = vpack.c.bf16 %v784, %v783
      %v828 = vpack.c.bf16 %v786, %v785
      %v829 = vpack.c.bf16 %v788, %v787
      %v830 = vpack.c.bf16 %v790, %v789
      %v831 = vld [vmem:[%s509] sm:$0xf]
      %v832 = vld [vmem:[%s509 + $0x4] sm:$0xf]
      %v833 = vld [vmem:[%s509 + $0x8] sm:$0xf]
      %v834 = vld [vmem:[%s509 + $0xc] sm:$0xf]
      %v835 = vld [vmem:[%s509 + $0x10] sm:$0xf]
      %v836 = vld [vmem:[%s509 + $0x14] sm:$0xf]
      %v837 = vld [vmem:[%s509 + $0x18] sm:$0xf]
      %v838 = vld [vmem:[%s509 + $0x1c] sm:$0xf]
      %v839 = vld [vmem:[%s509 + $0x20] sm:$0xf]
      %v840 = vld [vmem:[%s509 + $0x24] sm:$0xf]
      %v841 = vld [vmem:[%s509 + $0x28] sm:$0xf]
      %v842 = vld [vmem:[%s509 + $0x2c] sm:$0xf]
      %v843 = vld [vmem:[%s509 + $0x30] sm:$0xf]
      %v844 = vld [vmem:[%s509 + $0x34] sm:$0xf]
      %v845 = vld [vmem:[%s509 + $0x38] sm:$0xf]
      %v846 = vld [vmem:[%s509 + $0x3c] sm:$0xf]
      %v863 = vunpack.c.l.b16 %v831
      %v864 = vunpack.c.l.b16 %v832
      %v865 = vunpack.c.l.b16 %v833
      %v866 = vunpack.c.l.b16 %v834
      %v867 = vunpack.c.l.b16 %v835
      %v868 = vunpack.c.l.b16 %v836
      %v869 = vunpack.c.l.b16 %v837
      %v870 = vunpack.c.l.b16 %v838
      %v871 = vunpack.c.l.b16 %v839
      %v872 = vunpack.c.l.b16 %v840
      %v873 = vunpack.c.l.b16 %v841
      %v874 = vunpack.c.l.b16 %v842
      %v875 = vunpack.c.l.b16 %v843
      %v876 = vunpack.c.l.b16 %v844
      %v877 = vunpack.c.l.b16 %v845
      %v878 = vunpack.c.l.b16 %v846
      %v879 = vpack.c.b16 %v864, %v863
      %v880 = vpack.c.b16 %v866, %v865
      %v881 = vpack.c.b16 %v868, %v867
      %v882 = vpack.c.b16 %v870, %v869
      %v883 = vpack.c.b16 %v872, %v871
      %v884 = vpack.c.b16 %v874, %v873
      %v885 = vpack.c.b16 %v876, %v875
      %v886 = vpack.c.b16 %v878, %v877
      %895 = vmatpush.bf16.msra.mxu0 %v886
      %896 = vmatpush.bf16.msra.mxu0 %v885
      %897 = vmatpush.bf16.msra.mxu0 %v884
      %898 = vmatpush.bf16.msra.mxu0 %v883
      %899 = vmatpush.bf16.msra.mxu0 %v882
      %900 = vmatpush.bf16.msra.mxu0 %v881
      %901 = vmatpush.bf16.msra.mxu0 %v880
      %902 = vmatpush.bf16.msra.mxu0 %v879
      %903 = vmatmul.bf16.gmra.mxu0 %v823
      %v904 = vpop.f32.mrf.mxu0
      %v905 = vadd.f32 0.0, %v904
      %v906 = vpop.f32.mrf.mxu0
      %v907 = vadd.f32 0.0, %v906
      %908 = vmatmul.bf16.gmra.mxu0 %v824
      %v909 = vpop.f32.mrf.mxu0
      %v910 = vadd.f32 0.0, %v909
      %v911 = vpop.f32.mrf.mxu0
      %v912 = vadd.f32 0.0, %v911
      %913 = vmatmul.bf16.gmra.mxu0 %v825
      %v914 = vpop.f32.mrf.mxu0
      %v915 = vadd.f32 0.0, %v914
      %v916 = vpop.f32.mrf.mxu0
      %v917 = vadd.f32 0.0, %v916
      %918 = vmatmul.bf16.gmra.mxu0 %v826
      %v919 = vpop.f32.mrf.mxu0
      %v920 = vadd.f32 0.0, %v919
      %v921 = vpop.f32.mrf.mxu0
      %v922 = vadd.f32 0.0, %v921
      %923 = vmatmul.bf16.gmra.mxu0 %v827
      %v924 = vpop.f32.mrf.mxu0
      %v925 = vadd.f32 0.0, %v924
      %v926 = vpop.f32.mrf.mxu0
      %v927 = vadd.f32 0.0, %v926
      %928 = vmatmul.bf16.gmra.mxu0 %v828
      %v929 = vpop.f32.mrf.mxu0
      %v930 = vadd.f32 0.0, %v929
      %v931 = vpop.f32.mrf.mxu0
      %v932 = vadd.f32 0.0, %v931
      %933 = vmatmul.bf16.gmra.mxu0 %v829
      %v934 = vpop.f32.mrf.mxu0
      %v935 = vadd.f32 0.0, %v934
      %v936 = vpop.f32.mrf.mxu0
      %v937 = vadd.f32 0.0, %v936
      %938 = vmatmul.bf16.gmra.mxu0 %v830
      %v939 = vpop.f32.mrf.mxu0
      %v940 = vadd.f32 0.0, %v939
      %v941 = vpop.f32.mrf.mxu0
      %v942 = vadd.f32 0.0, %v941
      %943 = vdwg.mxu0
      %v944 = vrcp.pop %v792
      %v945 = vrcp.pop %v794
      %v946 = vrcp.pop %v796
      %v947 = vrcp.pop %v798
      %v948 = vrcp.pop %v800
      %v949 = vrcp.pop %v802
      %v950 = vrcp.pop %v804
      %v951 = vrcp.pop %v806
      %v952 = vrcp.pop %v808
      %v953 = vrcp.pop %v810
      %v954 = vrcp.pop %v812
      %v955 = vrcp.pop %v814
      %v956 = vrcp.pop %v816
      %v957 = vrcp.pop %v818
      %v958 = vrcp.pop %v820
      %v959 = vrcp.pop %v822
      %v960 = vmul.f32 %v905, %v944
      %v961 = vmul.f32 %v907, %v945
      %v962 = vmul.f32 %v910, %v946
      %v963 = vmul.f32 %v912, %v947
      %v964 = vmul.f32 %v915, %v948
      %v965 = vmul.f32 %v917, %v949
      %v966 = vmul.f32 %v920, %v950
      %v967 = vmul.f32 %v922, %v951
      %v968 = vmul.f32 %v925, %v952
      %v969 = vmul.f32 %v927, %v953
      %v970 = vmul.f32 %v930, %v954
      %v971 = vmul.f32 %v932, %v955
      %v972 = vmul.f32 %v935, %v956
      %v973 = vmul.f32 %v937, %v957
      %v974 = vmul.f32 %v940, %v958
      %v975 = vmul.f32 %v942, %v959
      %v976 = vadd.f32 %v960, 0.0
      %v977 = vadd.f32 %v961, 0.0
      %v978 = vadd.f32 %v962, 0.0
      %v979 = vadd.f32 %v963, 0.0
      %v980 = vadd.f32 %v964, 0.0
      %v981 = vadd.f32 %v965, 0.0
      %v982 = vadd.f32 %v966, 0.0
      %v983 = vadd.f32 %v967, 0.0
      %v984 = vadd.f32 %v968, 0.0
      %v985 = vadd.f32 %v969, 0.0
      %v986 = vadd.f32 %v970, 0.0
      %v987 = vadd.f32 %v971, 0.0
      %v988 = vadd.f32 %v972, 0.0
      %v989 = vadd.f32 %v973, 0.0
      %v990 = vadd.f32 %v974, 0.0
      %v991 = vadd.f32 %v975, 0.0
      %s992 = scalar_lea.vmem %s504, 8
      %v993 = vld [vmem:[%s992] sm:$0xf]
      %v994 = vld [vmem:[%s992 + $0x4] sm:$0xf]
      %995 = vrot.lane.b32.xlu0 %v588, 80
      %v996 = vpop.permute.xlu0 %995
      %997 = vrot.lane.b32.xlu0 %v589, 80
      %v998 = vpop.permute.xlu0 %997
      %999 = vrot.lane.b32.xlu0 %v590, 80
      %v1000 = vpop.permute.xlu0 %999
      %1001 = vrot.lane.b32.xlu0 %v591, 80
      %v1002 = vpop.permute.xlu0 %1001
      %1003 = vrot.lane.b32.xlu0 %v592, 80
      %v1004 = vpop.permute.xlu0 %1003
      %1005 = vrot.lane.b32.xlu0 %v593, 80
      %v1006 = vpop.permute.xlu0 %1005
      %1007 = vrot.lane.b32.xlu0 %v594, 80
      %v1008 = vpop.permute.xlu0 %1007
      %1009 = vrot.lane.b32.xlu0 %v595, 80
      %v1010 = vpop.permute.xlu0 %1009
      %v1013 = vunpack.c.l.b16 %v993
      %v1014 = vunpack.c.l.b16 %v994
      %v1015 = vpack.c.b16 %v1014, %v1013
      %v1018 = vsel %vm618, %v996, 0
      %v1021 = vsel %vm618, %v998, 0
      %v1024 = vsel %vm618, %v1000, 0
      %v1027 = vsel %vm618, %v1002, 0
      %v1030 = vsel %vm618, %v1004, 0
      %v1033 = vsel %vm618, %v1006, 0
      %v1036 = vsel %vm618, %v1008, 0
      %v1039 = vsel %vm618, %v1010, 0
      %1041 = vmatpush.bf16.msra.mxu0 0
      %1042 = vmatpush.bf16.msra.mxu0 0
      %1043 = vmatpush.bf16.msra.mxu0 0
      %1044 = vmatpush.bf16.msra.mxu0 0
      %1045 = vmatpush.bf16.msra.mxu0 0
      %1046 = vmatpush.bf16.msra.mxu0 0
      %1047 = vmatpush.bf16.msra.mxu0 0
      %1048 = vmatpush.bf16.msra.mxu0 %v1015
      %1049 = vmatmul.bf16.gmra.mxu0 %v1018
      %v1050 = vpop.f32.mrf.mxu0
      %v1051 = vadd.f32 0.0, %v1050
      %v1052 = vpop.f32.mrf.mxu0
      %v1053 = vadd.f32 0.0, %v1052
      %1054 = vmatmul.bf16.gmra.mxu0 %v1021
      %v1055 = vpop.f32.mrf.mxu0
      %v1056 = vadd.f32 0.0, %v1055
      %v1057 = vpop.f32.mrf.mxu0
      %v1058 = vadd.f32 0.0, %v1057
      %1059 = vmatmul.bf16.gmra.mxu0 %v1024
      %v1060 = vpop.f32.mrf.mxu0
      %v1061 = vadd.f32 0.0, %v1060
      %v1062 = vpop.f32.mrf.mxu0
      %v1063 = vadd.f32 0.0, %v1062
      %1064 = vmatmul.bf16.gmra.mxu0 %v1027
      %v1065 = vpop.f32.mrf.mxu0
      %v1066 = vadd.f32 0.0, %v1065
      %v1067 = vpop.f32.mrf.mxu0
      %v1068 = vadd.f32 0.0, %v1067
      %1069 = vmatmul.bf16.gmra.mxu0 %v1030
      %v1070 = vpop.f32.mrf.mxu0
      %v1071 = vadd.f32 0.0, %v1070
      %v1072 = vpop.f32.mrf.mxu0
      %v1073 = vadd.f32 0.0, %v1072
      %1074 = vmatmul.bf16.gmra.mxu0 %v1033
      %v1075 = vpop.f32.mrf.mxu0
      %v1076 = vadd.f32 0.0, %v1075
      %v1077 = vpop.f32.mrf.mxu0
      %v1078 = vadd.f32 0.0, %v1077
      %1079 = vmatmul.bf16.gmra.mxu0 %v1036
      %v1080 = vpop.f32.mrf.mxu0
      %v1081 = vadd.f32 0.0, %v1080
      %v1082 = vpop.f32.mrf.mxu0
      %v1083 = vadd.f32 0.0, %v1082
      %1084 = vmatmul.bf16.gmra.mxu0 %v1039
      %v1085 = vpop.f32.mrf.mxu0
      %v1086 = vadd.f32 0.0, %v1085
      %v1087 = vpop.f32.mrf.mxu0
      %v1088 = vadd.f32 0.0, %v1087
      %1089 = vdwg.mxu0
      %1090 = vmax.xlane.f32.xlu0 %v1051
      %v1091 = vpop.xlane.xlu0 %1090
      %1092 = vmax.xlane.f32.xlu0 %v1053
      %v1093 = vpop.xlane.xlu0 %1092
      %1094 = vmax.xlane.f32.xlu0 %v1056
      %v1095 = vpop.xlane.xlu0 %1094
      %1096 = vmax.xlane.f32.xlu0 %v1058
      %v1097 = vpop.xlane.xlu0 %1096
      %1098 = vmax.xlane.f32.xlu0 %v1061
      %v1099 = vpop.xlane.xlu0 %1098
      %1100 = vmax.xlane.f32.xlu0 %v1063
      %v1101 = vpop.xlane.xlu0 %1100
      %1102 = vmax.xlane.f32.xlu0 %v1066
      %v1103 = vpop.xlane.xlu0 %1102
      %1104 = vmax.xlane.f32.xlu0 %v1068
      %v1105 = vpop.xlane.xlu0 %1104
      %1106 = vmax.xlane.f32.xlu0 %v1071
      %v1107 = vpop.xlane.xlu0 %1106
      %1108 = vmax.xlane.f32.xlu0 %v1073
      %v1109 = vpop.xlane.xlu0 %1108
      %1110 = vmax.xlane.f32.xlu0 %v1076
      %v1111 = vpop.xlane.xlu0 %1110
      %1112 = vmax.xlane.f32.xlu0 %v1078
      %v1113 = vpop.xlane.xlu0 %1112
      %1114 = vmax.xlane.f32.xlu0 %v1081
      %v1115 = vpop.xlane.xlu0 %1114
      %1116 = vmax.xlane.f32.xlu0 %v1083
      %v1117 = vpop.xlane.xlu0 %1116
      %1118 = vmax.xlane.f32.xlu0 %v1086
      %v1119 = vpop.xlane.xlu0 %1118
      %1120 = vmax.xlane.f32.xlu0 %v1088
      %v1121 = vpop.xlane.xlu0 %1120
      %v1122 = vsub.f32 %v1051, %v1091
      %v1123 = vsub.f32 %v1053, %v1093
      %v1124 = vsub.f32 %v1056, %v1095
      %v1125 = vsub.f32 %v1058, %v1097
      %v1126 = vsub.f32 %v1061, %v1099
      %v1127 = vsub.f32 %v1063, %v1101
      %v1128 = vsub.f32 %v1066, %v1103
      %v1129 = vsub.f32 %v1068, %v1105
      %v1130 = vsub.f32 %v1071, %v1107
      %v1131 = vsub.f32 %v1073, %v1109
      %v1132 = vsub.f32 %v1076, %v1111
      %v1133 = vsub.f32 %v1078, %v1113
      %v1134 = vsub.f32 %v1081, %v1115
      %v1135 = vsub.f32 %v1083, %v1117
      %v1136 = vsub.f32 %v1086, %v1119
      %v1137 = vsub.f32 %v1088, %v1121
      %v1138 = vmul.f32 %v1122, 1.442695
      %v1139 = vpow.pop %v1138
      %v1140 = vmul.f32 %v1123, 1.442695
      %v1141 = vpow.pop %v1140
      %v1142 = vmul.f32 %v1124, 1.442695
      %v1143 = vpow.pop %v1142
      %v1144 = vmul.f32 %v1125, 1.442695
      %v1145 = vpow.pop %v1144
      %v1146 = vmul.f32 %v1126, 1.442695
      %v1147 = vpow.pop %v1146
      %v1148 = vmul.f32 %v1127, 1.442695
      %v1149 = vpow.pop %v1148
      %v1150 = vmul.f32 %v1128, 1.442695
      %v1151 = vpow.pop %v1150
      %v1152 = vmul.f32 %v1129, 1.442695
      %v1153 = vpow.pop %v1152
      %v1154 = vmul.f32 %v1130, 1.442695
      %v1155 = vpow.pop %v1154
      %v1156 = vmul.f32 %v1131, 1.442695
      %v1157 = vpow.pop %v1156
      %v1158 = vmul.f32 %v1132, 1.442695
      %v1159 = vpow.pop %v1158
      %v1160 = vmul.f32 %v1133, 1.442695
      %v1161 = vpow.pop %v1160
      %v1162 = vmul.f32 %v1134, 1.442695
      %v1163 = vpow.pop %v1162
      %v1164 = vmul.f32 %v1135, 1.442695
      %v1165 = vpow.pop %v1164
      %v1166 = vmul.f32 %v1136, 1.442695
      %v1167 = vpow.pop %v1166
      %v1168 = vmul.f32 %v1137, 1.442695
      %v1169 = vpow.pop %v1168
      %v1170 = vmul.f32 %v1139, %v773
      %v1171 = vmul.f32 %v1141, %v773
      %v1172 = vmul.f32 %v1143, %v773
      %v1173 = vmul.f32 %v1145, %v773
      %v1174 = vmul.f32 %v1147, %v773
      %v1175 = vmul.f32 %v1149, %v773
      %v1176 = vmul.f32 %v1151, %v773
      %v1177 = vmul.f32 %v1153, %v773
      %v1178 = vmul.f32 %v1155, %v773
      %v1179 = vmul.f32 %v1157, %v773
      %v1180 = vmul.f32 %v1159, %v773
      %v1181 = vmul.f32 %v1161, %v773
      %v1182 = vmul.f32 %v1163, %v773
      %v1183 = vmul.f32 %v1165, %v773
      %v1184 = vmul.f32 %v1167, %v773
      %v1185 = vmul.f32 %v1169, %v773
      %1186 = vadd.xlane.f32.xlu0 %v1170
      %v1187 = vpop.xlane.xlu0 %1186
      %1188 = vadd.xlane.f32.xlu0 %v1171
      %v1189 = vpop.xlane.xlu0 %1188
      %1190 = vadd.xlane.f32.xlu0 %v1172
      %v1191 = vpop.xlane.xlu0 %1190
      %1192 = vadd.xlane.f32.xlu0 %v1173
      %v1193 = vpop.xlane.xlu0 %1192
      %1194 = vadd.xlane.f32.xlu0 %v1174
      %v1195 = vpop.xlane.xlu0 %1194
      %1196 = vadd.xlane.f32.xlu0 %v1175
      %v1197 = vpop.xlane.xlu0 %1196
      %1198 = vadd.xlane.f32.xlu0 %v1176
      %v1199 = vpop.xlane.xlu0 %1198
      %1200 = vadd.xlane.f32.xlu0 %v1177
      %v1201 = vpop.xlane.xlu0 %1200
      %1202 = vadd.xlane.f32.xlu0 %v1178
      %v1203 = vpop.xlane.xlu0 %1202
      %1204 = vadd.xlane.f32.xlu0 %v1179
      %v1205 = vpop.xlane.xlu0 %1204
      %1206 = vadd.xlane.f32.xlu0 %v1180
      %v1207 = vpop.xlane.xlu0 %1206
      %1208 = vadd.xlane.f32.xlu0 %v1181
      %v1209 = vpop.xlane.xlu0 %1208
      %1210 = vadd.xlane.f32.xlu0 %v1182
      %v1211 = vpop.xlane.xlu0 %1210
      %1212 = vadd.xlane.f32.xlu0 %v1183
      %v1213 = vpop.xlane.xlu0 %1212
      %1214 = vadd.xlane.f32.xlu0 %v1184
      %v1215 = vpop.xlane.xlu0 %1214
      %1216 = vadd.xlane.f32.xlu0 %v1185
      %v1217 = vpop.xlane.xlu0 %1216
      %v1218 = vpack.c.bf16 %v1171, %v1170
      %v1219 = vpack.c.bf16 %v1173, %v1172
      %v1220 = vpack.c.bf16 %v1175, %v1174
      %v1221 = vpack.c.bf16 %v1177, %v1176
      %v1222 = vpack.c.bf16 %v1179, %v1178
      %v1223 = vpack.c.bf16 %v1181, %v1180
      %v1224 = vpack.c.bf16 %v1183, %v1182
      %v1225 = vpack.c.bf16 %v1185, %v1184
      %s1226 = scalar_lea.vmem %s509, 64
      %v1227 = vld [vmem:[%s1226] sm:$0xf]
      %v1228 = vld [vmem:[%s1226 + $0x4] sm:$0xf]
      %v1229 = vld [vmem:[%s1226 + $0x8] sm:$0xf]
      %v1230 = vld [vmem:[%s1226 + $0xc] sm:$0xf]
      %v1231 = vld [vmem:[%s1226 + $0x10] sm:$0xf]
      %v1232 = vld [vmem:[%s1226 + $0x14] sm:$0xf]
      %v1233 = vld [vmem:[%s1226 + $0x18] sm:$0xf]
      %v1234 = vld [vmem:[%s1226 + $0x1c] sm:$0xf]
      %v1235 = vld [vmem:[%s1226 + $0x20] sm:$0xf]
      %v1236 = vld [vmem:[%s1226 + $0x24] sm:$0xf]
      %v1237 = vld [vmem:[%s1226 + $0x28] sm:$0xf]
      %v1238 = vld [vmem:[%s1226 + $0x2c] sm:$0xf]
      %v1239 = vld [vmem:[%s1226 + $0x30] sm:$0xf]
      %v1240 = vld [vmem:[%s1226 + $0x34] sm:$0xf]
      %v1241 = vld [vmem:[%s1226 + $0x38] sm:$0xf]
      %v1242 = vld [vmem:[%s1226 + $0x3c] sm:$0xf]
      %v1259 = vunpack.c.l.b16 %v1227
      %v1260 = vunpack.c.l.b16 %v1228
      %v1261 = vunpack.c.l.b16 %v1229
      %v1262 = vunpack.c.l.b16 %v1230
      %v1263 = vunpack.c.l.b16 %v1231
      %v1264 = vunpack.c.l.b16 %v1232
      %v1265 = vunpack.c.l.b16 %v1233
      %v1266 = vunpack.c.l.b16 %v1234
      %v1267 = vunpack.c.l.b16 %v1235
      %v1268 = vunpack.c.l.b16 %v1236
      %v1269 = vunpack.c.l.b16 %v1237
      %v1270 = vunpack.c.l.b16 %v1238
      %v1271 = vunpack.c.l.b16 %v1239
      %v1272 = vunpack.c.l.b16 %v1240
      %v1273 = vunpack.c.l.b16 %v1241
      %v1274 = vunpack.c.l.b16 %v1242
      %v1275 = vpack.c.b16 %v1260, %v1259
      %v1276 = vpack.c.b16 %v1262, %v1261
      %v1277 = vpack.c.b16 %v1264, %v1263
      %v1278 = vpack.c.b16 %v1266, %v1265
      %v1279 = vpack.c.b16 %v1268, %v1267
      %v1280 = vpack.c.b16 %v1270, %v1269
      %v1281 = vpack.c.b16 %v1272, %v1271
      %v1282 = vpack.c.b16 %v1274, %v1273
      %1291 = vmatpush.bf16.msra.mxu0 %v1282
      %1292 = vmatpush.bf16.msra.mxu0 %v1281
      %1293 = vmatpush.bf16.msra.mxu0 %v1280
      %1294 = vmatpush.bf16.msra.mxu0 %v1279
      %1295 = vmatpush.bf16.msra.mxu0 %v1278
      %1296 = vmatpush.bf16.msra.mxu0 %v1277
      %1297 = vmatpush.bf16.msra.mxu0 %v1276
      %1298 = vmatpush.bf16.msra.mxu0 %v1275
      %1299 = vmatmul.bf16.gmra.mxu0 %v1218
      %v1300 = vpop.f32.mrf.mxu0
      %v1301 = vadd.f32 0.0, %v1300
      %v1302 = vpop.f32.mrf.mxu0
      %v1303 = vadd.f32 0.0, %v1302
      %1304 = vmatmul.bf16.gmra.mxu0 %v1219
      %v1305 = vpop.f32.mrf.mxu0
      %v1306 = vadd.f32 0.0, %v1305
      %v1307 = vpop.f32.mrf.mxu0
      %v1308 = vadd.f32 0.0, %v1307
      %1309 = vmatmul.bf16.gmra.mxu0 %v1220
      %v1310 = vpop.f32.mrf.mxu0
      %v1311 = vadd.f32 0.0, %v1310
      %v1312 = vpop.f32.mrf.mxu0
      %v1313 = vadd.f32 0.0, %v1312
      %1314 = vmatmul.bf16.gmra.mxu0 %v1221
      %v1315 = vpop.f32.mrf.mxu0
      %v1316 = vadd.f32 0.0, %v1315
      %v1317 = vpop.f32.mrf.mxu0
      %v1318 = vadd.f32 0.0, %v1317
      %1319 = vmatmul.bf16.gmra.mxu0 %v1222
      %v1320 = vpop.f32.mrf.mxu0
      %v1321 = vadd.f32 0.0, %v1320
      %v1322 = vpop.f32.mrf.mxu0
      %v1323 = vadd.f32 0.0, %v1322
      %1324 = vmatmul.bf16.gmra.mxu0 %v1223
      %v1325 = vpop.f32.mrf.mxu0
      %v1326 = vadd.f32 0.0, %v1325
      %v1327 = vpop.f32.mrf.mxu0
      %v1328 = vadd.f32 0.0, %v1327
      %1329 = vmatmul.bf16.gmra.mxu0 %v1224
      %v1330 = vpop.f32.mrf.mxu0
      %v1331 = vadd.f32 0.0, %v1330
      %v1332 = vpop.f32.mrf.mxu0
      %v1333 = vadd.f32 0.0, %v1332
      %1334 = vmatmul.bf16.gmra.mxu0 %v1225
      %v1335 = vpop.f32.mrf.mxu0
      %v1336 = vadd.f32 0.0, %v1335
      %v1337 = vpop.f32.mrf.mxu0
      %v1338 = vadd.f32 0.0, %v1337
      %1339 = vdwg.mxu0
      %v1340 = vrcp.pop %v1187
      %v1341 = vrcp.pop %v1189
      %v1342 = vrcp.pop %v1191
      %v1343 = vrcp.pop %v1193
      %v1344 = vrcp.pop %v1195
      %v1345 = vrcp.pop %v1197
      %v1346 = vrcp.pop %v1199
      %v1347 = vrcp.pop %v1201
      %v1348 = vrcp.pop %v1203
      %v1349 = vrcp.pop %v1205
      %v1350 = vrcp.pop %v1207
      %v1351 = vrcp.pop %v1209
      %v1352 = vrcp.pop %v1211
      %v1353 = vrcp.pop %v1213
      %v1354 = vrcp.pop %v1215
      %v1355 = vrcp.pop %v1217
      %v1356 = vmul.f32 %v1301, %v1340
      %v1357 = vmul.f32 %v1303, %v1341
      %v1358 = vmul.f32 %v1306, %v1342
      %v1359 = vmul.f32 %v1308, %v1343
      %v1360 = vmul.f32 %v1311, %v1344
      %v1361 = vmul.f32 %v1313, %v1345
      %v1362 = vmul.f32 %v1316, %v1346
      %v1363 = vmul.f32 %v1318, %v1347
      %v1364 = vmul.f32 %v1321, %v1348
      %v1365 = vmul.f32 %v1323, %v1349
      %v1366 = vmul.f32 %v1326, %v1350
      %v1367 = vmul.f32 %v1328, %v1351
      %v1368 = vmul.f32 %v1331, %v1352
      %v1369 = vmul.f32 %v1333, %v1353
      %v1370 = vmul.f32 %v1336, %v1354
      %v1371 = vmul.f32 %v1338, %v1355
      %v1372 = vadd.f32 %v976, %v1356
      %v1373 = vadd.f32 %v977, %v1357
      %v1374 = vadd.f32 %v978, %v1358
      %v1375 = vadd.f32 %v979, %v1359
      %v1376 = vadd.f32 %v980, %v1360
      %v1377 = vadd.f32 %v981, %v1361
      %v1378 = vadd.f32 %v982, %v1362
      %v1379 = vadd.f32 %v983, %v1363
      %v1380 = vadd.f32 %v984, %v1364
      %v1381 = vadd.f32 %v985, %v1365
      %v1382 = vadd.f32 %v986, %v1366
      %v1383 = vadd.f32 %v987, %v1367
      %v1384 = vadd.f32 %v988, %v1368
      %v1385 = vadd.f32 %v989, %v1369
      %v1386 = vadd.f32 %v990, %v1370
      %v1387 = vadd.f32 %v991, %v1371
      %v1388 = vld [vmem:[%s4] sm:$0x1]
      %v1390 = vperm.slane %v1388, 0
      %v1392 = vadd.f32 %v1372, %v1390
      %v1393 = vadd.f32 %v1373, %v1390
      %v1394 = vadd.f32 %v1374, %v1390
      %v1395 = vadd.f32 %v1375, %v1390
      %v1396 = vadd.f32 %v1376, %v1390
      %v1397 = vadd.f32 %v1377, %v1390
      %v1398 = vadd.f32 %v1378, %v1390
      %v1399 = vadd.f32 %v1379, %v1390
      %v1400 = vadd.f32 %v1380, %v1390
      %v1401 = vadd.f32 %v1381, %v1390
      %v1402 = vadd.f32 %v1382, %v1390
      %v1403 = vadd.f32 %v1383, %v1390
      %v1404 = vadd.f32 %v1384, %v1390
      %v1405 = vadd.f32 %v1385, %v1390
      %v1406 = vadd.f32 %v1386, %v1390
      %v1407 = vadd.f32 %v1387, %v1390
      %v1408 = vadd.f32 %v521, %v1392
      %v1409 = vadd.f32 %v522, %v1393
      %v1410 = vadd.f32 %v523, %v1394
      %v1411 = vadd.f32 %v524, %v1395
      %v1412 = vadd.f32 %v525, %v1396
      %v1413 = vadd.f32 %v526, %v1397
      %v1414 = vadd.f32 %v527, %v1398
      %v1415 = vadd.f32 %v528, %v1399
      %v1416 = vadd.f32 %v529, %v1400
      %v1417 = vadd.f32 %v530, %v1401
      %v1418 = vadd.f32 %v531, %v1402
      %v1419 = vadd.f32 %v532, %v1403
      %v1420 = vadd.f32 %v533, %v1404
      %v1421 = vadd.f32 %v534, %v1405
      %v1422 = vadd.f32 %v535, %v1406
      %v1423 = vadd.f32 %v536, %v1407
      %v1424 = vld [vmem:[%s5] sm:$0x1]
      %v1425 = vld [vmem:[%s6] sm:$0x1]
      %vm1426 = vcmask 261120
      %v1427 = vsel %vm1426, %v1408, 0.0
      %1428 = vadd.xlane.f32.xlu0 %v1427
      %v1429 = vpop.xlane.xlu0 %1428
      %v1430 = vsel %vm1426, %v1409, 0.0
      %1431 = vadd.xlane.f32.xlu0 %v1430
      %v1432 = vpop.xlane.xlu0 %1431
      %v1433 = vsel %vm1426, %v1410, 0.0
      %1434 = vadd.xlane.f32.xlu0 %v1433
      %v1435 = vpop.xlane.xlu0 %1434
      %v1436 = vsel %vm1426, %v1411, 0.0
      %1437 = vadd.xlane.f32.xlu0 %v1436
      %v1438 = vpop.xlane.xlu0 %1437
      %v1439 = vsel %vm1426, %v1412, 0.0
      %1440 = vadd.xlane.f32.xlu0 %v1439
      %v1441 = vpop.xlane.xlu0 %1440
      %v1442 = vsel %vm1426, %v1413, 0.0
      %1443 = vadd.xlane.f32.xlu0 %v1442
      %v1444 = vpop.xlane.xlu0 %1443
      %v1445 = vsel %vm1426, %v1414, 0.0
      %1446 = vadd.xlane.f32.xlu0 %v1445
      %v1447 = vpop.xlane.xlu0 %1446
      %v1448 = vsel %vm1426, %v1415, 0.0
      %1449 = vadd.xlane.f32.xlu0 %v1448
      %v1450 = vpop.xlane.xlu0 %1449
      %v1451 = vsel %vm1426, %v1416, 0.0
      %1452 = vadd.xlane.f32.xlu0 %v1451
      %v1453 = vpop.xlane.xlu0 %1452
      %v1454 = vsel %vm1426, %v1417, 0.0
      %1455 = vadd.xlane.f32.xlu0 %v1454
      %v1456 = vpop.xlane.xlu0 %1455
      %v1457 = vsel %vm1426, %v1418, 0.0
      %1458 = vadd.xlane.f32.xlu0 %v1457
      %v1459 = vpop.xlane.xlu0 %1458
      %v1460 = vsel %vm1426, %v1419, 0.0
      %1461 = vadd.xlane.f32.xlu0 %v1460
      %v1462 = vpop.xlane.xlu0 %1461
      %v1463 = vsel %vm1426, %v1420, 0.0
      %1464 = vadd.xlane.f32.xlu0 %v1463
      %v1465 = vpop.xlane.xlu0 %1464
      %v1466 = vsel %vm1426, %v1421, 0.0
      %1467 = vadd.xlane.f32.xlu0 %v1466
      %v1468 = vpop.xlane.xlu0 %1467
      %v1469 = vsel %vm1426, %v1422, 0.0
      %1470 = vadd.xlane.f32.xlu0 %v1469
      %v1471 = vpop.xlane.xlu0 %1470
      %v1472 = vsel %vm1426, %v1423, 0.0
      %1473 = vadd.xlane.f32.xlu0 %v1472
      %v1474 = vpop.xlane.xlu0 %1473
      %v1475 = vrcp.pop 32.0
      %v1476 = vmul.f32 32.0, %v1475
      %v1477 = vsub.f32 1.0, %v1476
      %v1478 = vmul.f32 %v1475, %v1477
      %v1479 = vadd.f32 %v1475, %v1478
      %vm1480 = vweird.f32 %v1475
      %v1481 = vsel %vm1480, %v1475, %v1479
      %v1482 = vmul.f32 %v1429, %v1481
      %v1483 = vmul.f32 %v1432, %v1481
      %v1484 = vmul.f32 %v1435, %v1481
      %v1485 = vmul.f32 %v1438, %v1481
      %v1486 = vmul.f32 %v1441, %v1481
      %v1487 = vmul.f32 %v1444, %v1481
      %v1488 = vmul.f32 %v1447, %v1481
      %v1489 = vmul.f32 %v1450, %v1481
      %v1490 = vmul.f32 %v1453, %v1481
      %v1491 = vmul.f32 %v1456, %v1481
      %v1492 = vmul.f32 %v1459, %v1481
      %v1493 = vmul.f32 %v1462, %v1481
      %v1494 = vmul.f32 %v1465, %v1481
      %v1495 = vmul.f32 %v1468, %v1481
      %v1496 = vmul.f32 %v1471, %v1481
      %v1497 = vmul.f32 %v1474, %v1481
      %v1498 = vsub.f32 %v1408, %v1482
      %v1499 = vsub.f32 %v1409, %v1483
      %v1500 = vsub.f32 %v1410, %v1484
      %v1501 = vsub.f32 %v1411, %v1485
      %v1502 = vsub.f32 %v1412, %v1486
      %v1503 = vsub.f32 %v1413, %v1487
      %v1504 = vsub.f32 %v1414, %v1488
      %v1505 = vsub.f32 %v1415, %v1489
      %v1506 = vsub.f32 %v1416, %v1490
      %v1507 = vsub.f32 %v1417, %v1491
      %v1508 = vsub.f32 %v1418, %v1492
      %v1509 = vsub.f32 %v1419, %v1493
      %v1510 = vsub.f32 %v1420, %v1494
      %v1511 = vsub.f32 %v1421, %v1495
      %v1512 = vsub.f32 %v1422, %v1496
      %v1513 = vsub.f32 %v1423, %v1497
      %v1514 = vmul.f32 %v1498, %v1498
      %v1515 = vmul.f32 %v1499, %v1499
      %v1516 = vmul.f32 %v1500, %v1500
      %v1517 = vmul.f32 %v1501, %v1501
      %v1518 = vmul.f32 %v1502, %v1502
      %v1519 = vmul.f32 %v1503, %v1503
      %v1520 = vmul.f32 %v1504, %v1504
      %v1521 = vmul.f32 %v1505, %v1505
      %v1522 = vmul.f32 %v1506, %v1506
      %v1523 = vmul.f32 %v1507, %v1507
      %v1524 = vmul.f32 %v1508, %v1508
      %v1525 = vmul.f32 %v1509, %v1509
      %v1526 = vmul.f32 %v1510, %v1510
      %v1527 = vmul.f32 %v1511, %v1511
      %v1528 = vmul.f32 %v1512, %v1512
      %v1529 = vmul.f32 %v1513, %v1513
      %v1530 = vsel %vm1426, %v1514, 0.0
      %1531 = vadd.xlane.f32.xlu0 %v1530
      %v1532 = vpop.xlane.xlu0 %1531
      %v1533 = vsel %vm1426, %v1515, 0.0
      %1534 = vadd.xlane.f32.xlu0 %v1533
      %v1535 = vpop.xlane.xlu0 %1534
      %v1536 = vsel %vm1426, %v1516, 0.0
      %1537 = vadd.xlane.f32.xlu0 %v1536
      %v1538 = vpop.xlane.xlu0 %1537
      %v1539 = vsel %vm1426, %v1517, 0.0
      %1540 = vadd.xlane.f32.xlu0 %v1539
      %v1541 = vpop.xlane.xlu0 %1540
      %v1542 = vsel %vm1426, %v1518, 0.0
      %1543 = vadd.xlane.f32.xlu0 %v1542
      %v1544 = vpop.xlane.xlu0 %1543
      %v1545 = vsel %vm1426, %v1519, 0.0
      %1546 = vadd.xlane.f32.xlu0 %v1545
      %v1547 = vpop.xlane.xlu0 %1546
      %v1548 = vsel %vm1426, %v1520, 0.0
      %1549 = vadd.xlane.f32.xlu0 %v1548
      %v1550 = vpop.xlane.xlu0 %1549
      %v1551 = vsel %vm1426, %v1521, 0.0
      %1552 = vadd.xlane.f32.xlu0 %v1551
      %v1553 = vpop.xlane.xlu0 %1552
      %v1554 = vsel %vm1426, %v1522, 0.0
      %1555 = vadd.xlane.f32.xlu0 %v1554
      %v1556 = vpop.xlane.xlu0 %1555
      %v1557 = vsel %vm1426, %v1523, 0.0
      %1558 = vadd.xlane.f32.xlu0 %v1557
      %v1559 = vpop.xlane.xlu0 %1558
      %v1560 = vsel %vm1426, %v1524, 0.0
      %1561 = vadd.xlane.f32.xlu0 %v1560
      %v1562 = vpop.xlane.xlu0 %1561
      %v1563 = vsel %vm1426, %v1525, 0.0
      %1564 = vadd.xlane.f32.xlu0 %v1563
      %v1565 = vpop.xlane.xlu0 %1564
      %v1566 = vsel %vm1426, %v1526, 0.0
      %1567 = vadd.xlane.f32.xlu0 %v1566
      %v1568 = vpop.xlane.xlu0 %1567
      %v1569 = vsel %vm1426, %v1527, 0.0
      %1570 = vadd.xlane.f32.xlu0 %v1569
      %v1571 = vpop.xlane.xlu0 %1570
      %v1572 = vsel %vm1426, %v1528, 0.0
      %1573 = vadd.xlane.f32.xlu0 %v1572
      %v1574 = vpop.xlane.xlu0 %1573
      %v1575 = vsel %vm1426, %v1529, 0.0
      %1576 = vadd.xlane.f32.xlu0 %v1575
      %v1577 = vpop.xlane.xlu0 %1576
      %v1578 = vmul.f32 %v1532, %v1481
      %v1579 = vmul.f32 %v1535, %v1481
      %v1580 = vmul.f32 %v1538, %v1481
      %v1581 = vmul.f32 %v1541, %v1481
      %v1582 = vmul.f32 %v1544, %v1481
      %v1583 = vmul.f32 %v1547, %v1481
      %v1584 = vmul.f32 %v1550, %v1481
      %v1585 = vmul.f32 %v1553, %v1481
      %v1586 = vmul.f32 %v1556, %v1481
      %v1587 = vmul.f32 %v1559, %v1481
      %v1588 = vmul.f32 %v1562, %v1481
      %v1589 = vmul.f32 %v1565, %v1481
      %v1590 = vmul.f32 %v1568, %v1481
      %v1591 = vmul.f32 %v1571, %v1481
      %v1592 = vmul.f32 %v1574, %v1481
      %v1593 = vmul.f32 %v1577, %v1481
      %v1594 = vadd.f32 %v1578, 1e-05
      %v1595 = vadd.f32 %v1579, 1e-05
      %v1596 = vadd.f32 %v1580, 1e-05
      %v1597 = vadd.f32 %v1581, 1e-05
      %v1598 = vadd.f32 %v1582, 1e-05
      %v1599 = vadd.f32 %v1583, 1e-05
      %v1600 = vadd.f32 %v1584, 1e-05
      %v1601 = vadd.f32 %v1585, 1e-05
      %v1602 = vadd.f32 %v1586, 1e-05
      %v1603 = vadd.f32 %v1587, 1e-05
      %v1604 = vadd.f32 %v1588, 1e-05
      %v1605 = vadd.f32 %v1589, 1e-05
      %v1606 = vadd.f32 %v1590, 1e-05
      %v1607 = vadd.f32 %v1591, 1e-05
      %v1608 = vadd.f32 %v1592, 1e-05
      %v1609 = vadd.f32 %v1593, 1e-05
      %v1610 = vrsqrt.pop %v1594
      %v1611 = vmul.f32 %v1610, %v1594
      %v1612 = vmul.f32 %v1611, %v1610
      %v1613 = vmul.f32 0.5, %v1612
      %v1614 = vsub.f32 1.5, %v1613
      %v1615 = vmul.f32 %v1610, %v1614
      %vm1616 = vweird.f32 %v1594
      %vm1617 = vweird.f32 %v1610
      %vm1618 = vmor %vm1616, %vm1617
      %v1619 = vsel %vm1618, %v1610, %v1615
      %v1620 = vrsqrt.pop %v1595
      %v1621 = vmul.f32 %v1620, %v1595
      %v1622 = vmul.f32 %v1621, %v1620
      %v1623 = vmul.f32 0.5, %v1622
      %v1624 = vsub.f32 1.5, %v1623
      %v1625 = vmul.f32 %v1620, %v1624
      %vm1626 = vweird.f32 %v1595
      %vm1627 = vweird.f32 %v1620
      %vm1628 = vmor %vm1626, %vm1627
      %v1629 = vsel %vm1628, %v1620, %v1625
      %v1630 = vrsqrt.pop %v1596
      %v1631 = vmul.f32 %v1630, %v1596
      %v1632 = vmul.f32 %v1631, %v1630
      %v1633 = vmul.f32 0.5, %v1632
      %v1634 = vsub.f32 1.5, %v1633
      %v1635 = vmul.f32 %v1630, %v1634
      %vm1636 = vweird.f32 %v1596
      %vm1637 = vweird.f32 %v1630
      %vm1638 = vmor %vm1636, %vm1637
      %v1639 = vsel %vm1638, %v1630, %v1635
      %v1640 = vrsqrt.pop %v1597
      %v1641 = vmul.f32 %v1640, %v1597
      %v1642 = vmul.f32 %v1641, %v1640
      %v1643 = vmul.f32 0.5, %v1642
      %v1644 = vsub.f32 1.5, %v1643
      %v1645 = vmul.f32 %v1640, %v1644
      %vm1646 = vweird.f32 %v1597
      %vm1647 = vweird.f32 %v1640
      %vm1648 = vmor %vm1646, %vm1647
      %v1649 = vsel %vm1648, %v1640, %v1645
      %v1650 = vrsqrt.pop %v1598
      %v1651 = vmul.f32 %v1650, %v1598
      %v1652 = vmul.f32 %v1651, %v1650
      %v1653 = vmul.f32 0.5, %v1652
      %v1654 = vsub.f32 1.5, %v1653
      %v1655 = vmul.f32 %v1650, %v1654
      %vm1656 = vweird.f32 %v1598
      %vm1657 = vweird.f32 %v1650
      %vm1658 = vmor %vm1656, %vm1657
      %v1659 = vsel %vm1658, %v1650, %v1655
      %v1660 = vrsqrt.pop %v1599
      %v1661 = vmul.f32 %v1660, %v1599
      %v1662 = vmul.f32 %v1661, %v1660
      %v1663 = vmul.f32 0.5, %v1662
      %v1664 = vsub.f32 1.5, %v1663
      %v1665 = vmul.f32 %v1660, %v1664
      %vm1666 = vweird.f32 %v1599
      %vm1667 = vweird.f32 %v1660
      %vm1668 = vmor %vm1666, %vm1667
      %v1669 = vsel %vm1668, %v1660, %v1665
      %v1670 = vrsqrt.pop %v1600
      %v1671 = vmul.f32 %v1670, %v1600
      %v1672 = vmul.f32 %v1671, %v1670
      %v1673 = vmul.f32 0.5, %v1672
      %v1674 = vsub.f32 1.5, %v1673
      %v1675 = vmul.f32 %v1670, %v1674
      %vm1676 = vweird.f32 %v1600
      %vm1677 = vweird.f32 %v1670
      %vm1678 = vmor %vm1676, %vm1677
      %v1679 = vsel %vm1678, %v1670, %v1675
      %v1680 = vrsqrt.pop %v1601
      %v1681 = vmul.f32 %v1680, %v1601
      %v1682 = vmul.f32 %v1681, %v1680
      %v1683 = vmul.f32 0.5, %v1682
      %v1684 = vsub.f32 1.5, %v1683
      %v1685 = vmul.f32 %v1680, %v1684
      %vm1686 = vweird.f32 %v1601
      %vm1687 = vweird.f32 %v1680
      %vm1688 = vmor %vm1686, %vm1687
      %v1689 = vsel %vm1688, %v1680, %v1685
      %v1690 = vrsqrt.pop %v1602
      %v1691 = vmul.f32 %v1690, %v1602
      %v1692 = vmul.f32 %v1691, %v1690
      %v1693 = vmul.f32 0.5, %v1692
      %v1694 = vsub.f32 1.5, %v1693
      %v1695 = vmul.f32 %v1690, %v1694
      %vm1696 = vweird.f32 %v1602
      %vm1697 = vweird.f32 %v1690
      %vm1698 = vmor %vm1696, %vm1697
      %v1699 = vsel %vm1698, %v1690, %v1695
      %v1700 = vrsqrt.pop %v1603
      %v1701 = vmul.f32 %v1700, %v1603
      %v1702 = vmul.f32 %v1701, %v1700
      %v1703 = vmul.f32 0.5, %v1702
      %v1704 = vsub.f32 1.5, %v1703
      %v1705 = vmul.f32 %v1700, %v1704
      %vm1706 = vweird.f32 %v1603
      %vm1707 = vweird.f32 %v1700
      %vm1708 = vmor %vm1706, %vm1707
      %v1709 = vsel %vm1708, %v1700, %v1705
      %v1710 = vrsqrt.pop %v1604
      %v1711 = vmul.f32 %v1710, %v1604
      %v1712 = vmul.f32 %v1711, %v1710
      %v1713 = vmul.f32 0.5, %v1712
      %v1714 = vsub.f32 1.5, %v1713
      %v1715 = vmul.f32 %v1710, %v1714
      %vm1716 = vweird.f32 %v1604
      %vm1717 = vweird.f32 %v1710
      %vm1718 = vmor %vm1716, %vm1717
      %v1719 = vsel %vm1718, %v1710, %v1715
      %v1720 = vrsqrt.pop %v1605
      %v1721 = vmul.f32 %v1720, %v1605
      %v1722 = vmul.f32 %v1721, %v1720
      %v1723 = vmul.f32 0.5, %v1722
      %v1724 = vsub.f32 1.5, %v1723
      %v1725 = vmul.f32 %v1720, %v1724
      %vm1726 = vweird.f32 %v1605
      %vm1727 = vweird.f32 %v1720
      %vm1728 = vmor %vm1726, %vm1727
      %v1729 = vsel %vm1728, %v1720, %v1725
      %v1730 = vrsqrt.pop %v1606
      %v1731 = vmul.f32 %v1730, %v1606
      %v1732 = vmul.f32 %v1731, %v1730
      %v1733 = vmul.f32 0.5, %v1732
      %v1734 = vsub.f32 1.5, %v1733
      %v1735 = vmul.f32 %v1730, %v1734
      %vm1736 = vweird.f32 %v1606
      %vm1737 = vweird.f32 %v1730
      %vm1738 = vmor %vm1736, %vm1737
      %v1739 = vsel %vm1738, %v1730, %v1735
      %v1740 = vrsqrt.pop %v1607
      %v1741 = vmul.f32 %v1740, %v1607
      %v1742 = vmul.f32 %v1741, %v1740
      %v1743 = vmul.f32 0.5, %v1742
      %v1744 = vsub.f32 1.5, %v1743
      %v1745 = vmul.f32 %v1740, %v1744
      %vm1746 = vweird.f32 %v1607
      %vm1747 = vweird.f32 %v1740
      %vm1748 = vmor %vm1746, %vm1747
      %v1749 = vsel %vm1748, %v1740, %v1745
      %v1750 = vrsqrt.pop %v1608
      %v1751 = vmul.f32 %v1750, %v1608
      %v1752 = vmul.f32 %v1751, %v1750
      %v1753 = vmul.f32 0.5, %v1752
      %v1754 = vsub.f32 1.5, %v1753
      %v1755 = vmul.f32 %v1750, %v1754
      %vm1756 = vweird.f32 %v1608
      %vm1757 = vweird.f32 %v1750
      %vm1758 = vmor %vm1756, %vm1757
      %v1759 = vsel %vm1758, %v1750, %v1755
      %v1760 = vrsqrt.pop %v1609
      %v1761 = vmul.f32 %v1760, %v1609
      %v1762 = vmul.f32 %v1761, %v1760
      %v1763 = vmul.f32 0.5, %v1762
      %v1764 = vsub.f32 1.5, %v1763
      %v1765 = vmul.f32 %v1760, %v1764
      %vm1766 = vweird.f32 %v1609
      %vm1767 = vweird.f32 %v1760
      %vm1768 = vmor %vm1766, %vm1767
      %v1769 = vsel %vm1768, %v1760, %v1765
      %v1770 = vmul.f32 %v1498, %v1619
      %v1771 = vmul.f32 %v1499, %v1629
      %v1772 = vmul.f32 %v1500, %v1639
      %v1773 = vmul.f32 %v1501, %v1649
      %v1774 = vmul.f32 %v1502, %v1659
      %v1775 = vmul.f32 %v1503, %v1669
      %v1776 = vmul.f32 %v1504, %v1679
      %v1777 = vmul.f32 %v1505, %v1689
      %v1778 = vmul.f32 %v1506, %v1699
      %v1779 = vmul.f32 %v1507, %v1709
      %v1780 = vmul.f32 %v1508, %v1719
      %v1781 = vmul.f32 %v1509, %v1729
      %v1782 = vmul.f32 %v1510, %v1739
      %v1783 = vmul.f32 %v1511, %v1749
      %v1784 = vmul.f32 %v1512, %v1759
      %v1785 = vmul.f32 %v1513, %v1769
      %v1787 = vperm.slane %v1424, 0
      %v1789 = vmul.f32 %v1770, %v1787
      %v1790 = vmul.f32 %v1771, %v1787
      %v1791 = vmul.f32 %v1772, %v1787
      %v1792 = vmul.f32 %v1773, %v1787
      %v1793 = vmul.f32 %v1774, %v1787
      %v1794 = vmul.f32 %v1775, %v1787
      %v1795 = vmul.f32 %v1776, %v1787
      %v1796 = vmul.f32 %v1777, %v1787
      %v1797 = vmul.f32 %v1778, %v1787
      %v1798 = vmul.f32 %v1779, %v1787
      %v1799 = vmul.f32 %v1780, %v1787
      %v1800 = vmul.f32 %v1781, %v1787
      %v1801 = vmul.f32 %v1782, %v1787
      %v1802 = vmul.f32 %v1783, %v1787
      %v1803 = vmul.f32 %v1784, %v1787
      %v1804 = vmul.f32 %v1785, %v1787
      %v1806 = vperm.slane %v1425, 0
      %v1808 = vadd.f32 %v1789, %v1806
      %v1809 = vadd.f32 %v1790, %v1806
      %v1810 = vadd.f32 %v1791, %v1806
      %v1811 = vadd.f32 %v1792, %v1806
      %v1812 = vadd.f32 %v1793, %v1806
      %v1813 = vadd.f32 %v1794, %v1806
      %v1814 = vadd.f32 %v1795, %v1806
      %v1815 = vadd.f32 %v1796, %v1806
      %v1816 = vadd.f32 %v1797, %v1806
      %v1817 = vadd.f32 %v1798, %v1806
      %v1818 = vadd.f32 %v1799, %v1806
      %v1819 = vadd.f32 %v1800, %v1806
      %v1820 = vadd.f32 %v1801, %v1806
      %v1821 = vadd.f32 %v1802, %v1806
      %v1822 = vadd.f32 %v1803, %v1806
      %v1823 = vadd.f32 %v1804, %v1806
      %v1824 = vpack.c.bf16 %v1809, %v1808
      %v1825 = vpack.c.bf16 %v1811, %v1810
      %v1826 = vpack.c.bf16 %v1813, %v1812
      %v1827 = vpack.c.bf16 %v1815, %v1814
      %v1828 = vpack.c.bf16 %v1817, %v1816
      %v1829 = vpack.c.bf16 %v1819, %v1818
      %v1830 = vpack.c.bf16 %v1821, %v1820
      %v1831 = vpack.c.bf16 %v1823, %v1822
      %v1832 = vld [vmem:[%s7] sm:$0xff]
      %v1833 = vld [vmem:[%s7 + $0x8] sm:$0xff]
      %v1834 = vld [vmem:[%s7 + $0x10] sm:$0xff]
      %v1835 = vld [vmem:[%s7 + $0x18] sm:$0xff]
      %v1836 = vld [vmem:[%s7 + $0x20] sm:$0xff]
      %v1837 = vld [vmem:[%s7 + $0x28] sm:$0xff]
      %v1838 = vld [vmem:[%s7 + $0x30] sm:$0xff]
      %v1839 = vld [vmem:[%s7 + $0x38] sm:$0xff]
      %v1840 = vld [vmem:[%s7 + $0x40] sm:$0xff]
      %v1841 = vld [vmem:[%s7 + $0x48] sm:$0xff]
      %v1842 = vld [vmem:[%s7 + $0x50] sm:$0xff]
      %v1843 = vld [vmem:[%s7 + $0x58] sm:$0xff]
      %v1844 = vld [vmem:[%s7 + $0x60] sm:$0xff]
      %v1845 = vld [vmem:[%s7 + $0x68] sm:$0xff]
      %v1846 = vld [vmem:[%s7 + $0x70] sm:$0xff]
      %v1847 = vld [vmem:[%s7 + $0x78] sm:$0xff]
      %v1848 = vld [vmem:[%s7 + $0x80] sm:$0xff]
      %v1849 = vld [vmem:[%s7 + $0x88] sm:$0xff]
      %v1850 = vld [vmem:[%s7 + $0x90] sm:$0xff]
      %v1851 = vld [vmem:[%s7 + $0x98] sm:$0xff]
      %v1852 = vld [vmem:[%s7 + $0xa0] sm:$0xff]
      %v1853 = vld [vmem:[%s7 + $0xa8] sm:$0xff]
      %v1854 = vld [vmem:[%s7 + $0xb0] sm:$0xff]
      %v1855 = vld [vmem:[%s7 + $0xb8] sm:$0xff]
      %v1856 = vld [vmem:[%s7 + $0xc0] sm:$0xff]
      %v1857 = vld [vmem:[%s7 + $0xc8] sm:$0xff]
      %v1858 = vld [vmem:[%s7 + $0xd0] sm:$0xff]
      %v1859 = vld [vmem:[%s7 + $0xd8] sm:$0xff]
      %v1860 = vld [vmem:[%s7 + $0xe0] sm:$0xff]
      %v1861 = vld [vmem:[%s7 + $0xe8] sm:$0xff]
      %v1862 = vld [vmem:[%s7 + $0xf0] sm:$0xff]
      %v1863 = vld [vmem:[%s7 + $0xf8] sm:$0xff]
      %v1864 = vld [vmem:[%s8] sm:$0xff]
      %v1865 = vld [vmem:[%s8 + $0x8] sm:$0xff]
      %v1868 = vperm.slane %v1864, 0
      %v1869 = vperm.slane %v1864, 1
      %v1870 = vperm.slane %v1864, 2
      %v1871 = vperm.slane %v1864, 3
      %v1872 = vperm.slane %v1864, 4
      %v1873 = vperm.slane %v1864, 5
      %v1874 = vperm.slane %v1864, 6
      %v1875 = vperm.slane %v1864, 7
      %v1876 = vperm.slane %v1865, 0
      %v1877 = vperm.slane %v1865, 1
      %v1878 = vperm.slane %v1865, 2
      %v1879 = vperm.slane %v1865, 3
      %v1880 = vperm.slane %v1865, 4
      %v1881 = vperm.slane %v1865, 5
      %v1882 = vperm.slane %v1865, 6
      %v1883 = vperm.slane %v1865, 7
      %v1932 = vunpack.c.l.b16 %v1832
      %v1933 = vunpack.c.h.b16 %v1832
      %v1934 = vunpack.c.l.b16 %v1833
      %v1935 = vunpack.c.h.b16 %v1833
      %v1936 = vunpack.c.l.b16 %v1834
      %v1937 = vunpack.c.h.b16 %v1834
      %v1938 = vunpack.c.l.b16 %v1835
      %v1939 = vunpack.c.h.b16 %v1835
      %v1940 = vunpack.c.l.b16 %v1836
      %v1941 = vunpack.c.h.b16 %v1836
      %v1942 = vunpack.c.l.b16 %v1837
      %v1943 = vunpack.c.h.b16 %v1837
      %v1944 = vunpack.c.l.b16 %v1838
      %v1945 = vunpack.c.h.b16 %v1838
      %v1946 = vunpack.c.l.b16 %v1839
      %v1947 = vunpack.c.h.b16 %v1839
      %v1948 = vunpack.c.l.b16 %v1840
      %v1949 = vunpack.c.h.b16 %v1840
      %v1950 = vunpack.c.l.b16 %v1841
      %v1951 = vunpack.c.h.b16 %v1841
      %v1952 = vunpack.c.l.b16 %v1842
      %v1953 = vunpack.c.h.b16 %v1842
      %v1954 = vunpack.c.l.b16 %v1843
      %v1955 = vunpack.c.h.b16 %v1843
      %v1956 = vunpack.c.l.b16 %v1844
      %v1957 = vunpack.c.h.b16 %v1844
      %v1958 = vunpack.c.l.b16 %v1845
      %v1959 = vunpack.c.h.b16 %v1845
      %v1960 = vunpack.c.l.b16 %v1846
      %v1961 = vunpack.c.h.b16 %v1846
      %v1962 = vunpack.c.l.b16 %v1847
      %v1963 = vunpack.c.h.b16 %v1847
      %v1964 = vunpack.c.l.b16 %v1848
      %v1965 = vunpack.c.h.b16 %v1848
      %v1966 = vunpack.c.l.b16 %v1849
      %v1967 = vunpack.c.h.b16 %v1849
      %v1968 = vunpack.c.l.b16 %v1850
      %v1969 = vunpack.c.h.b16 %v1850
      %v1970 = vunpack.c.l.b16 %v1851
      %v1971 = vunpack.c.h.b16 %v1851
      %v1972 = vunpack.c.l.b16 %v1852
      %v1973 = vunpack.c.h.b16 %v1852
      %v1974 = vunpack.c.l.b16 %v1853
      %v1975 = vunpack.c.h.b16 %v1853
      %v1976 = vunpack.c.l.b16 %v1854
      %v1977 = vunpack.c.h.b16 %v1854
      %v1978 = vunpack.c.l.b16 %v1855
      %v1979 = vunpack.c.h.b16 %v1855
      %v1980 = vunpack.c.l.b16 %v1856
      %v1981 = vunpack.c.h.b16 %v1856
      %v1982 = vunpack.c.l.b16 %v1857
      %v1983 = vunpack.c.h.b16 %v1857
      %v1984 = vunpack.c.l.b16 %v1858
      %v1985 = vunpack.c.h.b16 %v1858
      %v1986 = vunpack.c.l.b16 %v1859
      %v1987 = vunpack.c.h.b16 %v1859
      %v1988 = vunpack.c.l.b16 %v1860
      %v1989 = vunpack.c.h.b16 %v1860
      %v1990 = vunpack.c.l.b16 %v1861
      %v1991 = vunpack.c.h.b16 %v1861
      %v1992 = vunpack.c.l.b16 %v1862
      %v1993 = vunpack.c.h.b16 %v1862
      %v1994 = vunpack.c.l.b16 %v1863
      %v1995 = vunpack.c.h.b16 %v1863
      %v1996 = vpack.c.b16 %v1948, %v1932
      %v1997 = vpack.c.b16 %v1949, %v1933
      %v1998 = vpack.c.b16 %v1950, %v1934
      %v1999 = vpack.c.b16 %v1951, %v1935
      %v2000 = vpack.c.b16 %v1952, %v1936
      %v2001 = vpack.c.b16 %v1953, %v1937
      %v2002 = vpack.c.b16 %v1954, %v1938
      %v2003 = vpack.c.b16 %v1955, %v1939
      %v2004 = vpack.c.b16 %v1956, %v1940
      %v2005 = vpack.c.b16 %v1957, %v1941
      %v2006 = vpack.c.b16 %v1958, %v1942
      %v2007 = vpack.c.b16 %v1959, %v1943
      %v2008 = vpack.c.b16 %v1960, %v1944
      %v2009 = vpack.c.b16 %v1961, %v1945
      %v2010 = vpack.c.b16 %v1962, %v1946
      %v2011 = vpack.c.b16 %v1963, %v1947
      %v2012 = vpack.c.b16 %v1980, %v1964
      %v2013 = vpack.c.b16 %v1981, %v1965
      %v2014 = vpack.c.b16 %v1982, %v1966
      %v2015 = vpack.c.b16 %v1983, %v1967
      %v2016 = vpack.c.b16 %v1984, %v1968
      %v2017 = vpack.c.b16 %v1985, %v1969
      %v2018 = vpack.c.b16 %v1986, %v1970
      %v2019 = vpack.c.b16 %v1987, %v1971
      %v2020 = vpack.c.b16 %v1988, %v1972
      %v2021 = vpack.c.b16 %v1989, %v1973
      %v2022 = vpack.c.b16 %v1990, %v1974
      %v2023 = vpack.c.b16 %v1991, %v1975
      %v2024 = vpack.c.b16 %v1992, %v1976
      %v2025 = vpack.c.b16 %v1993, %v1977
      %v2026 = vpack.c.b16 %v1994, %v1978
      %v2027 = vpack.c.b16 %v1995, %v1979
      %v2061 = vsel %vm1426, %v1824, 0
      %v2064 = vsel %vm1426, %v1825, 0
      %v2067 = vsel %vm1426, %v1826, 0
      %v2070 = vsel %vm1426, %v1827, 0
      %v2073 = vsel %vm1426, %v1828, 0
      %v2076 = vsel %vm1426, %v1829, 0
      %v2079 = vsel %vm1426, %v1830, 0
      %v2082 = vsel %vm1426, %v1831, 0
      %2084 = vmatpush.bf16.msra.mxu0 0
      %2085 = vmatpush.bf16.msra.mxu0 0
      %2086 = vmatpush.bf16.msra.mxu0 0
      %2087 = vmatpush.bf16.msra.mxu0 0
      %2088 = vmatpush.bf16.msra.mxu0 0
      %2089 = vmatpush.bf16.msra.mxu0 0
      %2090 = vmatpush.bf16.msra.mxu0 %v2012
      %2091 = vmatpush.bf16.msra.mxu0 %v1996
      %2092 = vmatmul.bf16.gmra.mxu0 %v2061
      %v2093 = vpop.f32.mrf.mxu0
      %v2094 = vadd.f32 %v1868, %v2093
      %v2095 = vpop.f32.mrf.mxu0
      %v2096 = vadd.f32 %v1868, %v2095
      %2097 = vmatmul.bf16.gmra.mxu0 %v2064
      %v2098 = vpop.f32.mrf.mxu0
      %v2099 = vadd.f32 %v1868, %v2098
      %v2100 = vpop.f32.mrf.mxu0
      %v2101 = vadd.f32 %v1868, %v2100
      %2102 = vmatmul.bf16.gmra.mxu0 %v2067
      %v2103 = vpop.f32.mrf.mxu0
      %v2104 = vadd.f32 %v1868, %v2103
      %v2105 = vpop.f32.mrf.mxu0
      %v2106 = vadd.f32 %v1868, %v2105
      %2107 = vmatmul.bf16.gmra.mxu0 %v2070
      %v2108 = vpop.f32.mrf.mxu0
      %v2109 = vadd.f32 %v1868, %v2108
      %v2110 = vpop.f32.mrf.mxu0
      %v2111 = vadd.f32 %v1868, %v2110
      %2112 = vmatmul.bf16.gmra.mxu0 %v2073
      %v2113 = vpop.f32.mrf.mxu0
      %v2114 = vadd.f32 %v1868, %v2113
      %v2115 = vpop.f32.mrf.mxu0
      %v2116 = vadd.f32 %v1868, %v2115
      %2117 = vmatmul.bf16.gmra.mxu0 %v2076
      %v2118 = vpop.f32.mrf.mxu0
      %v2119 = vadd.f32 %v1868, %v2118
      %v2120 = vpop.f32.mrf.mxu0
      %v2121 = vadd.f32 %v1868, %v2120
      %2122 = vmatmul.bf16.gmra.mxu0 %v2079
      %v2123 = vpop.f32.mrf.mxu0
      %v2124 = vadd.f32 %v1868, %v2123
      %v2125 = vpop.f32.mrf.mxu0
      %v2126 = vadd.f32 %v1868, %v2125
      %2127 = vmatmul.bf16.gmra.mxu0 %v2082
      %v2128 = vpop.f32.mrf.mxu0
      %v2129 = vadd.f32 %v1868, %v2128
      %v2130 = vpop.f32.mrf.mxu0
      %v2131 = vadd.f32 %v1868, %v2130
      %2132 = vdwg.mxu0
      %2133 = vmatpush.bf16.msra.mxu0 0
      %2134 = vmatpush.bf16.msra.mxu0 0
      %2135 = vmatpush.bf16.msra.mxu0 0
      %2136 = vmatpush.bf16.msra.mxu0 0
      %2137 = vmatpush.bf16.msra.mxu0 0
      %2138 = vmatpush.bf16.msra.mxu0 0
      %2139 = vmatpush.bf16.msra.mxu0 %v2013
      %2140 = vmatpush.bf16.msra.mxu0 %v1997
      %2141 = vmatmul.bf16.gmra.mxu0 %v2061
      %v2142 = vpop.f32.mrf.mxu0
      %v2143 = vadd.f32 %v1869, %v2142
      %v2144 = vpop.f32.mrf.mxu0
      %v2145 = vadd.f32 %v1869, %v2144
      %2146 = vmatmul.bf16.gmra.mxu0 %v2064
      %v2147 = vpop.f32.mrf.mxu0
      %v2148 = vadd.f32 %v1869, %v2147
      %v2149 = vpop.f32.mrf.mxu0
      %v2150 = vadd.f32 %v1869, %v2149
      %2151 = vmatmul.bf16.gmra.mxu0 %v2067
      %v2152 = vpop.f32.mrf.mxu0
      %v2153 = vadd.f32 %v1869, %v2152
      %v2154 = vpop.f32.mrf.mxu0
      %v2155 = vadd.f32 %v1869, %v2154
      %2156 = vmatmul.bf16.gmra.mxu0 %v2070
      %v2157 = vpop.f32.mrf.mxu0
      %v2158 = vadd.f32 %v1869, %v2157
      %v2159 = vpop.f32.mrf.mxu0
      %v2160 = vadd.f32 %v1869, %v2159
      %2161 = vmatmul.bf16.gmra.mxu0 %v2073
      %v2162 = vpop.f32.mrf.mxu0
      %v2163 = vadd.f32 %v1869, %v2162
      %v2164 = vpop.f32.mrf.mxu0
      %v2165 = vadd.f32 %v1869, %v2164
      %2166 = vmatmul.bf16.gmra.mxu0 %v2076
      %v2167 = vpop.f32.mrf.mxu0
      %v2168 = vadd.f32 %v1869, %v2167
      %v2169 = vpop.f32.mrf.mxu0
      %v2170 = vadd.f32 %v1869, %v2169
      %2171 = vmatmul.bf16.gmra.mxu0 %v2079
      %v2172 = vpop.f32.mrf.mxu0
      %v2173 = vadd.f32 %v1869, %v2172
      %v2174 = vpop.f32.mrf.mxu0
      %v2175 = vadd.f32 %v1869, %v2174
      %2176 = vmatmul.bf16.gmra.mxu0 %v2082
      %v2177 = vpop.f32.mrf.mxu0
      %v2178 = vadd.f32 %v1869, %v2177
      %v2179 = vpop.f32.mrf.mxu0
      %v2180 = vadd.f32 %v1869, %v2179
      %2181 = vdwg.mxu0
      %2182 = vmatpush.bf16.msra.mxu0 0
      %2183 = vmatpush.bf16.msra.mxu0 0
      %2184 = vmatpush.bf16.msra.mxu0 0
      %2185 = vmatpush.bf16.msra.mxu0 0
      %2186 = vmatpush.bf16.msra.mxu0 0
      %2187 = vmatpush.bf16.msra.mxu0 0
      %2188 = vmatpush.bf16.msra.mxu0 %v2014
      %2189 = vmatpush.bf16.msra.mxu0 %v1998
      %2190 = vmatmul.bf16.gmra.mxu0 %v2061
      %v2191 = vpop.f32.mrf.mxu0
      %v2192 = vadd.f32 %v1870, %v2191
      %v2193 = vpop.f32.mrf.mxu0
      %v2194 = vadd.f32 %v1870, %v2193
      %2195 = vmatmul.bf16.gmra.mxu0 %v2064
      %v2196 = vpop.f32.mrf.mxu0
      %v2197 = vadd.f32 %v1870, %v2196
      %v2198 = vpop.f32.mrf.mxu0
      %v2199 = vadd.f32 %v1870, %v2198
      %2200 = vmatmul.bf16.gmra.mxu0 %v2067
      %v2201 = vpop.f32.mrf.mxu0
      %v2202 = vadd.f32 %v1870, %v2201
      %v2203 = vpop.f32.mrf.mxu0
      %v2204 = vadd.f32 %v1870, %v2203
      %2205 = vmatmul.bf16.gmra.mxu0 %v2070
      %v2206 = vpop.f32.mrf.mxu0
      %v2207 = vadd.f32 %v1870, %v2206
      %v2208 = vpop.f32.mrf.mxu0
      %v2209 = vadd.f32 %v1870, %v2208
      %2210 = vmatmul.bf16.gmra.mxu0 %v2073
      %v2211 = vpop.f32.mrf.mxu0
      %v2212 = vadd.f32 %v1870, %v2211
      %v2213 = vpop.f32.mrf.mxu0
      %v2214 = vadd.f32 %v1870, %v2213
      %2215 = vmatmul.bf16.gmra.mxu0 %v2076
      %v2216 = vpop.f32.mrf.mxu0
      %v2217 = vadd.f32 %v1870, %v2216
      %v2218 = vpop.f32.mrf.mxu0
      %v2219 = vadd.f32 %v1870, %v2218
      %2220 = vmatmul.bf16.gmra.mxu0 %v2079
      %v2221 = vpop.f32.mrf.mxu0
      %v2222 = vadd.f32 %v1870, %v2221
      %v2223 = vpop.f32.mrf.mxu0
      %v2224 = vadd.f32 %v1870, %v2223
      %2225 = vmatmul.bf16.gmra.mxu0 %v2082
      %v2226 = vpop.f32.mrf.mxu0
      %v2227 = vadd.f32 %v1870, %v2226
      %v2228 = vpop.f32.mrf.mxu0
      %v2229 = vadd.f32 %v1870, %v2228
      %2230 = vdwg.mxu0
      %2231 = vmatpush.bf16.msra.mxu0 0
      %2232 = vmatpush.bf16.msra.mxu0 0
      %2233 = vmatpush.bf16.msra.mxu0 0
      %2234 = vmatpush.bf16.msra.mxu0 0
      %2235 = vmatpush.bf16.msra.mxu0 0
      %2236 = vmatpush.bf16.msra.mxu0 0
      %2237 = vmatpush.bf16.msra.mxu0 %v2015
      %2238 = vmatpush.bf16.msra.mxu0 %v1999
      %2239 = vmatmul.bf16.gmra.mxu0 %v2061
      %v2240 = vpop.f32.mrf.mxu0
      %v2241 = vadd.f32 %v1871, %v2240
      %v2242 = vpop.f32.mrf.mxu0
      %v2243 = vadd.f32 %v1871, %v2242
      %2244 = vmatmul.bf16.gmra.mxu0 %v2064
      %v2245 = vpop.f32.mrf.mxu0
      %v2246 = vadd.f32 %v1871, %v2245
      %v2247 = vpop.f32.mrf.mxu0
      %v2248 = vadd.f32 %v1871, %v2247
      %2249 = vmatmul.bf16.gmra.mxu0 %v2067
      %v2250 = vpop.f32.mrf.mxu0
      %v2251 = vadd.f32 %v1871, %v2250
      %v2252 = vpop.f32.mrf.mxu0
      %v2253 = vadd.f32 %v1871, %v2252
      %2254 = vmatmul.bf16.gmra.mxu0 %v2070
      %v2255 = vpop.f32.mrf.mxu0
      %v2256 = vadd.f32 %v1871, %v2255
      %v2257 = vpop.f32.mrf.mxu0
      %v2258 = vadd.f32 %v1871, %v2257
      %2259 = vmatmul.bf16.gmra.mxu0 %v2073
      %v2260 = vpop.f32.mrf.mxu0
      %v2261 = vadd.f32 %v1871, %v2260
      %v2262 = vpop.f32.mrf.mxu0
      %v2263 = vadd.f32 %v1871, %v2262
      %2264 = vmatmul.bf16.gmra.mxu0 %v2076
      %v2265 = vpop.f32.mrf.mxu0
      %v2266 = vadd.f32 %v1871, %v2265
      %v2267 = vpop.f32.mrf.mxu0
      %v2268 = vadd.f32 %v1871, %v2267
      %2269 = vmatmul.bf16.gmra.mxu0 %v2079
      %v2270 = vpop.f32.mrf.mxu0
      %v2271 = vadd.f32 %v1871, %v2270
      %v2272 = vpop.f32.mrf.mxu0
      %v2273 = vadd.f32 %v1871, %v2272
      %2274 = vmatmul.bf16.gmra.mxu0 %v2082
      %v2275 = vpop.f32.mrf.mxu0
      %v2276 = vadd.f32 %v1871, %v2275
      %v2277 = vpop.f32.mrf.mxu0
      %v2278 = vadd.f32 %v1871, %v2277
      %2279 = vdwg.mxu0
      %2280 = vmatpush.bf16.msra.mxu0 0
      %2281 = vmatpush.bf16.msra.mxu0 0
      %2282 = vmatpush.bf16.msra.mxu0 0
      %2283 = vmatpush.bf16.msra.mxu0 0
      %2284 = vmatpush.bf16.msra.mxu0 0
      %2285 = vmatpush.bf16.msra.mxu0 0
      %2286 = vmatpush.bf16.msra.mxu0 %v2016
      %2287 = vmatpush.bf16.msra.mxu0 %v2000
      %2288 = vmatmul.bf16.gmra.mxu0 %v2061
      %v2289 = vpop.f32.mrf.mxu0
      %v2290 = vadd.f32 %v1872, %v2289
      %v2291 = vpop.f32.mrf.mxu0
      %v2292 = vadd.f32 %v1872, %v2291
      %2293 = vmatmul.bf16.gmra.mxu0 %v2064
      %v2294 = vpop.f32.mrf.mxu0
      %v2295 = vadd.f32 %v1872, %v2294
      %v2296 = vpop.f32.mrf.mxu0
      %v2297 = vadd.f32 %v1872, %v2296
      %2298 = vmatmul.bf16.gmra.mxu0 %v2067
      %v2299 = vpop.f32.mrf.mxu0
      %v2300 = vadd.f32 %v1872, %v2299
      %v2301 = vpop.f32.mrf.mxu0
      %v2302 = vadd.f32 %v1872, %v2301
      %2303 = vmatmul.bf16.gmra.mxu0 %v2070
      %v2304 = vpop.f32.mrf.mxu0
      %v2305 = vadd.f32 %v1872, %v2304
      %v2306 = vpop.f32.mrf.mxu0
      %v2307 = vadd.f32 %v1872, %v2306
      %2308 = vmatmul.bf16.gmra.mxu0 %v2073
      %v2309 = vpop.f32.mrf.mxu0
      %v2310 = vadd.f32 %v1872, %v2309
      %v2311 = vpop.f32.mrf.mxu0
      %v2312 = vadd.f32 %v1872, %v2311
      %2313 = vmatmul.bf16.gmra.mxu0 %v2076
      %v2314 = vpop.f32.mrf.mxu0
      %v2315 = vadd.f32 %v1872, %v2314
      %v2316 = vpop.f32.mrf.mxu0
      %v2317 = vadd.f32 %v1872, %v2316
      %2318 = vmatmul.bf16.gmra.mxu0 %v2079
      %v2319 = vpop.f32.mrf.mxu0
      %v2320 = vadd.f32 %v1872, %v2319
      %v2321 = vpop.f32.mrf.mxu0
      %v2322 = vadd.f32 %v1872, %v2321
      %2323 = vmatmul.bf16.gmra.mxu0 %v2082
      %v2324 = vpop.f32.mrf.mxu0
      %v2325 = vadd.f32 %v1872, %v2324
      %v2326 = vpop.f32.mrf.mxu0
      %v2327 = vadd.f32 %v1872, %v2326
      %2328 = vdwg.mxu0
      %2329 = vmatpush.bf16.msra.mxu0 0
      %2330 = vmatpush.bf16.msra.mxu0 0
      %2331 = vmatpush.bf16.msra.mxu0 0
      %2332 = vmatpush.bf16.msra.mxu0 0
      %2333 = vmatpush.bf16.msra.mxu0 0
      %2334 = vmatpush.bf16.msra.mxu0 0
      %2335 = vmatpush.bf16.msra.mxu0 %v2017
      %2336 = vmatpush.bf16.msra.mxu0 %v2001
      %2337 = vmatmul.bf16.gmra.mxu0 %v2061
      %v2338 = vpop.f32.mrf.mxu0
      %v2339 = vadd.f32 %v1873, %v2338
      %v2340 = vpop.f32.mrf.mxu0
      %v2341 = vadd.f32 %v1873, %v2340
      %2342 = vmatmul.bf16.gmra.mxu0 %v2064
      %v2343 = vpop.f32.mrf.mxu0
      %v2344 = vadd.f32 %v1873, %v2343
      %v2345 = vpop.f32.mrf.mxu0
      %v2346 = vadd.f32 %v1873, %v2345
      %2347 = vmatmul.bf16.gmra.mxu0 %v2067
      %v2348 = vpop.f32.mrf.mxu0
      %v2349 = vadd.f32 %v1873, %v2348
      %v2350 = vpop.f32.mrf.mxu0
      %v2351 = vadd.f32 %v1873, %v2350
      %2352 = vmatmul.bf16.gmra.mxu0 %v2070
      %v2353 = vpop.f32.mrf.mxu0
      %v2354 = vadd.f32 %v1873, %v2353
      %v2355 = vpop.f32.mrf.mxu0
      %v2356 = vadd.f32 %v1873, %v2355
      %2357 = vmatmul.bf16.gmra.mxu0 %v2073
      %v2358 = vpop.f32.mrf.mxu0
      %v2359 = vadd.f32 %v1873, %v2358
      %v2360 = vpop.f32.mrf.mxu0
      %v2361 = vadd.f32 %v1873, %v2360
      %2362 = vmatmul.bf16.gmra.mxu0 %v2076
      %v2363 = vpop.f32.mrf.mxu0
      %v2364 = vadd.f32 %v1873, %v2363
      %v2365 = vpop.f32.mrf.mxu0
      %v2366 = vadd.f32 %v1873, %v2365
      %2367 = vmatmul.bf16.gmra.mxu0 %v2079
      %v2368 = vpop.f32.mrf.mxu0
      %v2369 = vadd.f32 %v1873, %v2368
      %v2370 = vpop.f32.mrf.mxu0
      %v2371 = vadd.f32 %v1873, %v2370
      %2372 = vmatmul.bf16.gmra.mxu0 %v2082
      %v2373 = vpop.f32.mrf.mxu0
      %v2374 = vadd.f32 %v1873, %v2373
      %v2375 = vpop.f32.mrf.mxu0
      %v2376 = vadd.f32 %v1873, %v2375
      %2377 = vdwg.mxu0
      %2378 = vmatpush.bf16.msra.mxu0 0
      %2379 = vmatpush.bf16.msra.mxu0 0
      %2380 = vmatpush.bf16.msra.mxu0 0
      %2381 = vmatpush.bf16.msra.mxu0 0
      %2382 = vmatpush.bf16.msra.mxu0 0
      %2383 = vmatpush.bf16.msra.mxu0 0
      %2384 = vmatpush.bf16.msra.mxu0 %v2018
      %2385 = vmatpush.bf16.msra.mxu0 %v2002
      %2386 = vmatmul.bf16.gmra.mxu0 %v2061
      %v2387 = vpop.f32.mrf.mxu0
      %v2388 = vadd.f32 %v1874, %v2387
      %v2389 = vpop.f32.mrf.mxu0
      %v2390 = vadd.f32 %v1874, %v2389
      %2391 = vmatmul.bf16.gmra.mxu0 %v2064
      %v2392 = vpop.f32.mrf.mxu0
      %v2393 = vadd.f32 %v1874, %v2392
      %v2394 = vpop.f32.mrf.mxu0
      %v2395 = vadd.f32 %v1874, %v2394
      %2396 = vmatmul.bf16.gmra.mxu0 %v2067
      %v2397 = vpop.f32.mrf.mxu0
      %v2398 = vadd.f32 %v1874, %v2397
      %v2399 = vpop.f32.mrf.mxu0
      %v2400 = vadd.f32 %v1874, %v2399
      %2401 = vmatmul.bf16.gmra.mxu0 %v2070
      %v2402 = vpop.f32.mrf.mxu0
      %v2403 = vadd.f32 %v1874, %v2402
      %v2404 = vpop.f32.mrf.mxu0
      %v2405 = vadd.f32 %v1874, %v2404
      %2406 = vmatmul.bf16.gmra.mxu0 %v2073
      %v2407 = vpop.f32.mrf.mxu0
      %v2408 = vadd.f32 %v1874, %v2407
      %v2409 = vpop.f32.mrf.mxu0
      %v2410 = vadd.f32 %v1874, %v2409
      %2411 = vmatmul.bf16.gmra.mxu0 %v2076
      %v2412 = vpop.f32.mrf.mxu0
      %v2413 = vadd.f32 %v1874, %v2412
      %v2414 = vpop.f32.mrf.mxu0
      %v2415 = vadd.f32 %v1874, %v2414
      %2416 = vmatmul.bf16.gmra.mxu0 %v2079
      %v2417 = vpop.f32.mrf.mxu0
      %v2418 = vadd.f32 %v1874, %v2417
      %v2419 = vpop.f32.mrf.mxu0
      %v2420 = vadd.f32 %v1874, %v2419
      %2421 = vmatmul.bf16.gmra.mxu0 %v2082
      %v2422 = vpop.f32.mrf.mxu0
      %v2423 = vadd.f32 %v1874, %v2422
      %v2424 = vpop.f32.mrf.mxu0
      %v2425 = vadd.f32 %v1874, %v2424
      %2426 = vdwg.mxu0
      %2427 = vmatpush.bf16.msra.mxu0 0
      %2428 = vmatpush.bf16.msra.mxu0 0
      %2429 = vmatpush.bf16.msra.mxu0 0
      %2430 = vmatpush.bf16.msra.mxu0 0
      %2431 = vmatpush.bf16.msra.mxu0 0
      %2432 = vmatpush.bf16.msra.mxu0 0
      %2433 = vmatpush.bf16.msra.mxu0 %v2019
      %2434 = vmatpush.bf16.msra.mxu0 %v2003
      %2435 = vmatmul.bf16.gmra.mxu0 %v2061
      %v2436 = vpop.f32.mrf.mxu0
      %v2437 = vadd.f32 %v1875, %v2436
      %v2438 = vpop.f32.mrf.mxu0
      %v2439 = vadd.f32 %v1875, %v2438
      %2440 = vmatmul.bf16.gmra.mxu0 %v2064
      %v2441 = vpop.f32.mrf.mxu0
      %v2442 = vadd.f32 %v1875, %v2441
      %v2443 = vpop.f32.mrf.mxu0
      %v2444 = vadd.f32 %v1875, %v2443
      %2445 = vmatmul.bf16.gmra.mxu0 %v2067
      %v2446 = vpop.f32.mrf.mxu0
      %v2447 = vadd.f32 %v1875, %v2446
      %v2448 = vpop.f32.mrf.mxu0
      %v2449 = vadd.f32 %v1875, %v2448
      %2450 = vmatmul.bf16.gmra.mxu0 %v2070
      %v2451 = vpop.f32.mrf.mxu0
      %v2452 = vadd.f32 %v1875, %v2451
      %v2453 = vpop.f32.mrf.mxu0
      %v2454 = vadd.f32 %v1875, %v2453
      %2455 = vmatmul.bf16.gmra.mxu0 %v2073
      %v2456 = vpop.f32.mrf.mxu0
      %v2457 = vadd.f32 %v1875, %v2456
      %v2458 = vpop.f32.mrf.mxu0
      %v2459 = vadd.f32 %v1875, %v2458
      %2460 = vmatmul.bf16.gmra.mxu0 %v2076
      %v2461 = vpop.f32.mrf.mxu0
      %v2462 = vadd.f32 %v1875, %v2461
      %v2463 = vpop.f32.mrf.mxu0
      %v2464 = vadd.f32 %v1875, %v2463
      %2465 = vmatmul.bf16.gmra.mxu0 %v2079
      %v2466 = vpop.f32.mrf.mxu0
      %v2467 = vadd.f32 %v1875, %v2466
      %v2468 = vpop.f32.mrf.mxu0
      %v2469 = vadd.f32 %v1875, %v2468
      %2470 = vmatmul.bf16.gmra.mxu0 %v2082
      %v2471 = vpop.f32.mrf.mxu0
      %v2472 = vadd.f32 %v1875, %v2471
      %v2473 = vpop.f32.mrf.mxu0
      %v2474 = vadd.f32 %v1875, %v2473
      %2475 = vdwg.mxu0
      %2476 = vmatpush.bf16.msra.mxu0 0
      %2477 = vmatpush.bf16.msra.mxu0 0
      %2478 = vmatpush.bf16.msra.mxu0 0
      %2479 = vmatpush.bf16.msra.mxu0 0
      %2480 = vmatpush.bf16.msra.mxu0 0
      %2481 = vmatpush.bf16.msra.mxu0 0
      %2482 = vmatpush.bf16.msra.mxu0 %v2020
      %2483 = vmatpush.bf16.msra.mxu0 %v2004
      %2484 = vmatmul.bf16.gmra.mxu0 %v2061
      %v2485 = vpop.f32.mrf.mxu0
      %v2486 = vadd.f32 %v1876, %v2485
      %v2487 = vpop.f32.mrf.mxu0
      %v2488 = vadd.f32 %v1876, %v2487
      %2489 = vmatmul.bf16.gmra.mxu0 %v2064
      %v2490 = vpop.f32.mrf.mxu0
      %v2491 = vadd.f32 %v1876, %v2490
      %v2492 = vpop.f32.mrf.mxu0
      %v2493 = vadd.f32 %v1876, %v2492
      %2494 = vmatmul.bf16.gmra.mxu0 %v2067
      %v2495 = vpop.f32.mrf.mxu0
      %v2496 = vadd.f32 %v1876, %v2495
      %v2497 = vpop.f32.mrf.mxu0
      %v2498 = vadd.f32 %v1876, %v2497
      %2499 = vmatmul.bf16.gmra.mxu0 %v2070
      %v2500 = vpop.f32.mrf.mxu0
      %v2501 = vadd.f32 %v1876, %v2500
      %v2502 = vpop.f32.mrf.mxu0
      %v2503 = vadd.f32 %v1876, %v2502
      %2504 = vmatmul.bf16.gmra.mxu0 %v2073
      %v2505 = vpop.f32.mrf.mxu0
      %v2506 = vadd.f32 %v1876, %v2505
      %v2507 = vpop.f32.mrf.mxu0
      %v2508 = vadd.f32 %v1876, %v2507
      %2509 = vmatmul.bf16.gmra.mxu0 %v2076
      %v2510 = vpop.f32.mrf.mxu0
      %v2511 = vadd.f32 %v1876, %v2510
      %v2512 = vpop.f32.mrf.mxu0
      %v2513 = vadd.f32 %v1876, %v2512
      %2514 = vmatmul.bf16.gmra.mxu0 %v2079
      %v2515 = vpop.f32.mrf.mxu0
      %v2516 = vadd.f32 %v1876, %v2515
      %v2517 = vpop.f32.mrf.mxu0
      %v2518 = vadd.f32 %v1876, %v2517
      %2519 = vmatmul.bf16.gmra.mxu0 %v2082
      %v2520 = vpop.f32.mrf.mxu0
      %v2521 = vadd.f32 %v1876, %v2520
      %v2522 = vpop.f32.mrf.mxu0
      %v2523 = vadd.f32 %v1876, %v2522
      %2524 = vdwg.mxu0
      %2525 = vmatpush.bf16.msra.mxu0 0
      %2526 = vmatpush.bf16.msra.mxu0 0
      %2527 = vmatpush.bf16.msra.mxu0 0
      %2528 = vmatpush.bf16.msra.mxu0 0
      %2529 = vmatpush.bf16.msra.mxu0 0
      %2530 = vmatpush.bf16.msra.mxu0 0
      %2531 = vmatpush.bf16.msra.mxu0 %v2021
      %2532 = vmatpush.bf16.msra.mxu0 %v2005
      %2533 = vmatmul.bf16.gmra.mxu0 %v2061
      %v2534 = vpop.f32.mrf.mxu0
      %v2535 = vadd.f32 %v1877, %v2534
      %v2536 = vpop.f32.mrf.mxu0
      %v2537 = vadd.f32 %v1877, %v2536
      %2538 = vmatmul.bf16.gmra.mxu0 %v2064
      %v2539 = vpop.f32.mrf.mxu0
      %v2540 = vadd.f32 %v1877, %v2539
      %v2541 = vpop.f32.mrf.mxu0
      %v2542 = vadd.f32 %v1877, %v2541
      %2543 = vmatmul.bf16.gmra.mxu0 %v2067
      %v2544 = vpop.f32.mrf.mxu0
      %v2545 = vadd.f32 %v1877, %v2544
      %v2546 = vpop.f32.mrf.mxu0
      %v2547 = vadd.f32 %v1877, %v2546
      %2548 = vmatmul.bf16.gmra.mxu0 %v2070
      %v2549 = vpop.f32.mrf.mxu0
      %v2550 = vadd.f32 %v1877, %v2549
      %v2551 = vpop.f32.mrf.mxu0
      %v2552 = vadd.f32 %v1877, %v2551
      %2553 = vmatmul.bf16.gmra.mxu0 %v2073
      %v2554 = vpop.f32.mrf.mxu0
      %v2555 = vadd.f32 %v1877, %v2554
      %v2556 = vpop.f32.mrf.mxu0
      %v2557 = vadd.f32 %v1877, %v2556
      %2558 = vmatmul.bf16.gmra.mxu0 %v2076
      %v2559 = vpop.f32.mrf.mxu0
      %v2560 = vadd.f32 %v1877, %v2559
      %v2561 = vpop.f32.mrf.mxu0
      %v2562 = vadd.f32 %v1877, %v2561
      %2563 = vmatmul.bf16.gmra.mxu0 %v2079
      %v2564 = vpop.f32.mrf.mxu0
      %v2565 = vadd.f32 %v1877, %v2564
      %v2566 = vpop.f32.mrf.mxu0
      %v2567 = vadd.f32 %v1877, %v2566
      %2568 = vmatmul.bf16.gmra.mxu0 %v2082
      %v2569 = vpop.f32.mrf.mxu0
      %v2570 = vadd.f32 %v1877, %v2569
      %v2571 = vpop.f32.mrf.mxu0
      %v2572 = vadd.f32 %v1877, %v2571
      %2573 = vdwg.mxu0
      %2574 = vmatpush.bf16.msra.mxu0 0
      %2575 = vmatpush.bf16.msra.mxu0 0
      %2576 = vmatpush.bf16.msra.mxu0 0
      %2577 = vmatpush.bf16.msra.mxu0 0
      %2578 = vmatpush.bf16.msra.mxu0 0
      %2579 = vmatpush.bf16.msra.mxu0 0
      %2580 = vmatpush.bf16.msra.mxu0 %v2022
      %2581 = vmatpush.bf16.msra.mxu0 %v2006
      %2582 = vmatmul.bf16.gmra.mxu0 %v2061
      %v2583 = vpop.f32.mrf.mxu0
      %v2584 = vadd.f32 %v1878, %v2583
      %v2585 = vpop.f32.mrf.mxu0
      %v2586 = vadd.f32 %v1878, %v2585
      %2587 = vmatmul.bf16.gmra.mxu0 %v2064
      %v2588 = vpop.f32.mrf.mxu0
      %v2589 = vadd.f32 %v1878, %v2588
      %v2590 = vpop.f32.mrf.mxu0
      %v2591 = vadd.f32 %v1878, %v2590
      %2592 = vmatmul.bf16.gmra.mxu0 %v2067
      %v2593 = vpop.f32.mrf.mxu0
      %v2594 = vadd.f32 %v1878, %v2593
      %v2595 = vpop.f32.mrf.mxu0
      %v2596 = vadd.f32 %v1878, %v2595
      %2597 = vmatmul.bf16.gmra.mxu0 %v2070
      %v2598 = vpop.f32.mrf.mxu0
      %v2599 = vadd.f32 %v1878, %v2598
      %v2600 = vpop.f32.mrf.mxu0
      %v2601 = vadd.f32 %v1878, %v2600
      %2602 = vmatmul.bf16.gmra.mxu0 %v2073
      %v2603 = vpop.f32.mrf.mxu0
      %v2604 = vadd.f32 %v1878, %v2603
      %v2605 = vpop.f32.mrf.mxu0
      %v2606 = vadd.f32 %v1878, %v2605
      %2607 = vmatmul.bf16.gmra.mxu0 %v2076
      %v2608 = vpop.f32.mrf.mxu0
      %v2609 = vadd.f32 %v1878, %v2608
      %v2610 = vpop.f32.mrf.mxu0
      %v2611 = vadd.f32 %v1878, %v2610
      %2612 = vmatmul.bf16.gmra.mxu0 %v2079
      %v2613 = vpop.f32.mrf.mxu0
      %v2614 = vadd.f32 %v1878, %v2613
      %v2615 = vpop.f32.mrf.mxu0
      %v2616 = vadd.f32 %v1878, %v2615
      %2617 = vmatmul.bf16.gmra.mxu0 %v2082
      %v2618 = vpop.f32.mrf.mxu0
      %v2619 = vadd.f32 %v1878, %v2618
      %v2620 = vpop.f32.mrf.mxu0
      %v2621 = vadd.f32 %v1878, %v2620
      %2622 = vdwg.mxu0
      %2623 = vmatpush.bf16.msra.mxu0 0
      %2624 = vmatpush.bf16.msra.mxu0 0
      %2625 = vmatpush.bf16.msra.mxu0 0
      %2626 = vmatpush.bf16.msra.mxu0 0
      %2627 = vmatpush.bf16.msra.mxu0 0
      %2628 = vmatpush.bf16.msra.mxu0 0
      %2629 = vmatpush.bf16.msra.mxu0 %v2023
      %2630 = vmatpush.bf16.msra.mxu0 %v2007
      %2631 = vmatmul.bf16.gmra.mxu0 %v2061
      %v2632 = vpop.f32.mrf.mxu0
      %v2633 = vadd.f32 %v1879, %v2632
      %v2634 = vpop.f32.mrf.mxu0
      %v2635 = vadd.f32 %v1879, %v2634
      %2636 = vmatmul.bf16.gmra.mxu0 %v2064
      %v2637 = vpop.f32.mrf.mxu0
      %v2638 = vadd.f32 %v1879, %v2637
      %v2639 = vpop.f32.mrf.mxu0
      %v2640 = vadd.f32 %v1879, %v2639
      %2641 = vmatmul.bf16.gmra.mxu0 %v2067
      %v2642 = vpop.f32.mrf.mxu0
      %v2643 = vadd.f32 %v1879, %v2642
      %v2644 = vpop.f32.mrf.mxu0
      %v2645 = vadd.f32 %v1879, %v2644
      %2646 = vmatmul.bf16.gmra.mxu0 %v2070
      %v2647 = vpop.f32.mrf.mxu0
      %v2648 = vadd.f32 %v1879, %v2647
      %v2649 = vpop.f32.mrf.mxu0
      %v2650 = vadd.f32 %v1879, %v2649
      %2651 = vmatmul.bf16.gmra.mxu0 %v2073
      %v2652 = vpop.f32.mrf.mxu0
      %v2653 = vadd.f32 %v1879, %v2652
      %v2654 = vpop.f32.mrf.mxu0
      %v2655 = vadd.f32 %v1879, %v2654
      %2656 = vmatmul.bf16.gmra.mxu0 %v2076
      %v2657 = vpop.f32.mrf.mxu0
      %v2658 = vadd.f32 %v1879, %v2657
      %v2659 = vpop.f32.mrf.mxu0
      %v2660 = vadd.f32 %v1879, %v2659
      %2661 = vmatmul.bf16.gmra.mxu0 %v2079
      %v2662 = vpop.f32.mrf.mxu0
      %v2663 = vadd.f32 %v1879, %v2662
      %v2664 = vpop.f32.mrf.mxu0
      %v2665 = vadd.f32 %v1879, %v2664
      %2666 = vmatmul.bf16.gmra.mxu0 %v2082
      %v2667 = vpop.f32.mrf.mxu0
      %v2668 = vadd.f32 %v1879, %v2667
      %v2669 = vpop.f32.mrf.mxu0
      %v2670 = vadd.f32 %v1879, %v2669
      %2671 = vdwg.mxu0
      %2672 = vmatpush.bf16.msra.mxu0 0
      %2673 = vmatpush.bf16.msra.mxu0 0
      %2674 = vmatpush.bf16.msra.mxu0 0
      %2675 = vmatpush.bf16.msra.mxu0 0
      %2676 = vmatpush.bf16.msra.mxu0 0
      %2677 = vmatpush.bf16.msra.mxu0 0
      %2678 = vmatpush.bf16.msra.mxu0 %v2024
      %2679 = vmatpush.bf16.msra.mxu0 %v2008
      %2680 = vmatmul.bf16.gmra.mxu0 %v2061
      %v2681 = vpop.f32.mrf.mxu0
      %v2682 = vadd.f32 %v1880, %v2681
      %v2683 = vpop.f32.mrf.mxu0
      %v2684 = vadd.f32 %v1880, %v2683
      %2685 = vmatmul.bf16.gmra.mxu0 %v2064
      %v2686 = vpop.f32.mrf.mxu0
      %v2687 = vadd.f32 %v1880, %v2686
      %v2688 = vpop.f32.mrf.mxu0
      %v2689 = vadd.f32 %v1880, %v2688
      %2690 = vmatmul.bf16.gmra.mxu0 %v2067
      %v2691 = vpop.f32.mrf.mxu0
      %v2692 = vadd.f32 %v1880, %v2691
      %v2693 = vpop.f32.mrf.mxu0
      %v2694 = vadd.f32 %v1880, %v2693
      %2695 = vmatmul.bf16.gmra.mxu0 %v2070
      %v2696 = vpop.f32.mrf.mxu0
      %v2697 = vadd.f32 %v1880, %v2696
      %v2698 = vpop.f32.mrf.mxu0
      %v2699 = vadd.f32 %v1880, %v2698
      %2700 = vmatmul.bf16.gmra.mxu0 %v2073
      %v2701 = vpop.f32.mrf.mxu0
      %v2702 = vadd.f32 %v1880, %v2701
      %v2703 = vpop.f32.mrf.mxu0
      %v2704 = vadd.f32 %v1880, %v2703
      %2705 = vmatmul.bf16.gmra.mxu0 %v2076
      %v2706 = vpop.f32.mrf.mxu0
      %v2707 = vadd.f32 %v1880, %v2706
      %v2708 = vpop.f32.mrf.mxu0
      %v2709 = vadd.f32 %v1880, %v2708
      %2710 = vmatmul.bf16.gmra.mxu0 %v2079
      %v2711 = vpop.f32.mrf.mxu0
      %v2712 = vadd.f32 %v1880, %v2711
      %v2713 = vpop.f32.mrf.mxu0
      %v2714 = vadd.f32 %v1880, %v2713
      %2715 = vmatmul.bf16.gmra.mxu0 %v2082
      %v2716 = vpop.f32.mrf.mxu0
      %v2717 = vadd.f32 %v1880, %v2716
      %v2718 = vpop.f32.mrf.mxu0
      %v2719 = vadd.f32 %v1880, %v2718
      %2720 = vdwg.mxu0
      %2721 = vmatpush.bf16.msra.mxu0 0
      %2722 = vmatpush.bf16.msra.mxu0 0
      %2723 = vmatpush.bf16.msra.mxu0 0
      %2724 = vmatpush.bf16.msra.mxu0 0
      %2725 = vmatpush.bf16.msra.mxu0 0
      %2726 = vmatpush.bf16.msra.mxu0 0
      %2727 = vmatpush.bf16.msra.mxu0 %v2025
      %2728 = vmatpush.bf16.msra.mxu0 %v2009
      %2729 = vmatmul.bf16.gmra.mxu0 %v2061
      %v2730 = vpop.f32.mrf.mxu0
      %v2731 = vadd.f32 %v1881, %v2730
      %v2732 = vpop.f32.mrf.mxu0
      %v2733 = vadd.f32 %v1881, %v2732
      %2734 = vmatmul.bf16.gmra.mxu0 %v2064
      %v2735 = vpop.f32.mrf.mxu0
      %v2736 = vadd.f32 %v1881, %v2735
      %v2737 = vpop.f32.mrf.mxu0
      %v2738 = vadd.f32 %v1881, %v2737
      %2739 = vmatmul.bf16.gmra.mxu0 %v2067
      %v2740 = vpop.f32.mrf.mxu0
      %v2741 = vadd.f32 %v1881, %v2740
      %v2742 = vpop.f32.mrf.mxu0
      %v2743 = vadd.f32 %v1881, %v2742
      %2744 = vmatmul.bf16.gmra.mxu0 %v2070
      %v2745 = vpop.f32.mrf.mxu0
      %v2746 = vadd.f32 %v1881, %v2745
      %v2747 = vpop.f32.mrf.mxu0
      %v2748 = vadd.f32 %v1881, %v2747
      %2749 = vmatmul.bf16.gmra.mxu0 %v2073
      %v2750 = vpop.f32.mrf.mxu0
      %v2751 = vadd.f32 %v1881, %v2750
      %v2752 = vpop.f32.mrf.mxu0
      %v2753 = vadd.f32 %v1881, %v2752
      %2754 = vmatmul.bf16.gmra.mxu0 %v2076
      %v2755 = vpop.f32.mrf.mxu0
      %v2756 = vadd.f32 %v1881, %v2755
      %v2757 = vpop.f32.mrf.mxu0
      %v2758 = vadd.f32 %v1881, %v2757
      %2759 = vmatmul.bf16.gmra.mxu0 %v2079
      %v2760 = vpop.f32.mrf.mxu0
      %v2761 = vadd.f32 %v1881, %v2760
      %v2762 = vpop.f32.mrf.mxu0
      %v2763 = vadd.f32 %v1881, %v2762
      %2764 = vmatmul.bf16.gmra.mxu0 %v2082
      %v2765 = vpop.f32.mrf.mxu0
      %v2766 = vadd.f32 %v1881, %v2765
      %v2767 = vpop.f32.mrf.mxu0
      %v2768 = vadd.f32 %v1881, %v2767
      %2769 = vdwg.mxu0
      %2770 = vmatpush.bf16.msra.mxu0 0
      %2771 = vmatpush.bf16.msra.mxu0 0
      %2772 = vmatpush.bf16.msra.mxu0 0
      %2773 = vmatpush.bf16.msra.mxu0 0
      %2774 = vmatpush.bf16.msra.mxu0 0
      %2775 = vmatpush.bf16.msra.mxu0 0
      %2776 = vmatpush.bf16.msra.mxu0 %v2026
      %2777 = vmatpush.bf16.msra.mxu0 %v2010
      %2778 = vmatmul.bf16.gmra.mxu0 %v2061
      %v2779 = vpop.f32.mrf.mxu0
      %v2780 = vadd.f32 %v1882, %v2779
      %v2781 = vpop.f32.mrf.mxu0
      %v2782 = vadd.f32 %v1882, %v2781
      %2783 = vmatmul.bf16.gmra.mxu0 %v2064
      %v2784 = vpop.f32.mrf.mxu0
      %v2785 = vadd.f32 %v1882, %v2784
      %v2786 = vpop.f32.mrf.mxu0
      %v2787 = vadd.f32 %v1882, %v2786
      %2788 = vmatmul.bf16.gmra.mxu0 %v2067
      %v2789 = vpop.f32.mrf.mxu0
      %v2790 = vadd.f32 %v1882, %v2789
      %v2791 = vpop.f32.mrf.mxu0
      %v2792 = vadd.f32 %v1882, %v2791
      %2793 = vmatmul.bf16.gmra.mxu0 %v2070
      %v2794 = vpop.f32.mrf.mxu0
      %v2795 = vadd.f32 %v1882, %v2794
      %v2796 = vpop.f32.mrf.mxu0
      %v2797 = vadd.f32 %v1882, %v2796
      %2798 = vmatmul.bf16.gmra.mxu0 %v2073
      %v2799 = vpop.f32.mrf.mxu0
      %v2800 = vadd.f32 %v1882, %v2799
      %v2801 = vpop.f32.mrf.mxu0
      %v2802 = vadd.f32 %v1882, %v2801
      %2803 = vmatmul.bf16.gmra.mxu0 %v2076
      %v2804 = vpop.f32.mrf.mxu0
      %v2805 = vadd.f32 %v1882, %v2804
      %v2806 = vpop.f32.mrf.mxu0
      %v2807 = vadd.f32 %v1882, %v2806
      %2808 = vmatmul.bf16.gmra.mxu0 %v2079
      %v2809 = vpop.f32.mrf.mxu0
      %v2810 = vadd.f32 %v1882, %v2809
      %v2811 = vpop.f32.mrf.mxu0
      %v2812 = vadd.f32 %v1882, %v2811
      %2813 = vmatmul.bf16.gmra.mxu0 %v2082
      %v2814 = vpop.f32.mrf.mxu0
      %v2815 = vadd.f32 %v1882, %v2814
      %v2816 = vpop.f32.mrf.mxu0
      %v2817 = vadd.f32 %v1882, %v2816
      %2818 = vdwg.mxu0
      %2819 = vmatpush.bf16.msra.mxu0 0
      %2820 = vmatpush.bf16.msra.mxu0 0
      %2821 = vmatpush.bf16.msra.mxu0 0
      %2822 = vmatpush.bf16.msra.mxu0 0
      %2823 = vmatpush.bf16.msra.mxu0 0
      %2824 = vmatpush.bf16.msra.mxu0 0
      %2825 = vmatpush.bf16.msra.mxu0 %v2027
      %2826 = vmatpush.bf16.msra.mxu0 %v2011
      %2827 = vmatmul.bf16.gmra.mxu0 %v2061
      %v2828 = vpop.f32.mrf.mxu0
      %v2829 = vadd.f32 %v1883, %v2828
      %v2830 = vpop.f32.mrf.mxu0
      %v2831 = vadd.f32 %v1883, %v2830
      %2832 = vmatmul.bf16.gmra.mxu0 %v2064
      %v2833 = vpop.f32.mrf.mxu0
      %v2834 = vadd.f32 %v1883, %v2833
      %v2835 = vpop.f32.mrf.mxu0
      %v2836 = vadd.f32 %v1883, %v2835
      %2837 = vmatmul.bf16.gmra.mxu0 %v2067
      %v2838 = vpop.f32.mrf.mxu0
      %v2839 = vadd.f32 %v1883, %v2838
      %v2840 = vpop.f32.mrf.mxu0
      %v2841 = vadd.f32 %v1883, %v2840
      %2842 = vmatmul.bf16.gmra.mxu0 %v2070
      %v2843 = vpop.f32.mrf.mxu0
      %v2844 = vadd.f32 %v1883, %v2843
      %v2845 = vpop.f32.mrf.mxu0
      %v2846 = vadd.f32 %v1883, %v2845
      %2847 = vmatmul.bf16.gmra.mxu0 %v2073
      %v2848 = vpop.f32.mrf.mxu0
      %v2849 = vadd.f32 %v1883, %v2848
      %v2850 = vpop.f32.mrf.mxu0
      %v2851 = vadd.f32 %v1883, %v2850
      %2852 = vmatmul.bf16.gmra.mxu0 %v2076
      %v2853 = vpop.f32.mrf.mxu0
      %v2854 = vadd.f32 %v1883, %v2853
      %v2855 = vpop.f32.mrf.mxu0
      %v2856 = vadd.f32 %v1883, %v2855
      %2857 = vmatmul.bf16.gmra.mxu0 %v2079
      %v2858 = vpop.f32.mrf.mxu0
      %v2859 = vadd.f32 %v1883, %v2858
      %v2860 = vpop.f32.mrf.mxu0
      %v2861 = vadd.f32 %v1883, %v2860
      %2862 = vmatmul.bf16.gmra.mxu0 %v2082
      %v2863 = vpop.f32.mrf.mxu0
      %v2864 = vadd.f32 %v1883, %v2863
      %v2865 = vpop.f32.mrf.mxu0
      %v2866 = vadd.f32 %v1883, %v2865
      %2867 = vdwg.mxu0
      %v2868 = vmax.f32 %v2094, 0.0
      %v2869 = vmax.f32 %v2143, 0.0
      %v2870 = vmax.f32 %v2192, 0.0
      %v2871 = vmax.f32 %v2241, 0.0
      %v2872 = vmax.f32 %v2290, 0.0
      %v2873 = vmax.f32 %v2339, 0.0
      %v2874 = vmax.f32 %v2388, 0.0
      %v2875 = vmax.f32 %v2437, 0.0
      %v2876 = vmax.f32 %v2486, 0.0
      %v2877 = vmax.f32 %v2535, 0.0
      %v2878 = vmax.f32 %v2584, 0.0
      %v2879 = vmax.f32 %v2633, 0.0
      %v2880 = vmax.f32 %v2682, 0.0
      %v2881 = vmax.f32 %v2731, 0.0
      %v2882 = vmax.f32 %v2780, 0.0
      %v2883 = vmax.f32 %v2829, 0.0
      %v2884 = vmax.f32 %v2096, 0.0
      %v2885 = vmax.f32 %v2145, 0.0
      %v2886 = vmax.f32 %v2194, 0.0
      %v2887 = vmax.f32 %v2243, 0.0
      %v2888 = vmax.f32 %v2292, 0.0
      %v2889 = vmax.f32 %v2341, 0.0
      %v2890 = vmax.f32 %v2390, 0.0
      %v2891 = vmax.f32 %v2439, 0.0
      %v2892 = vmax.f32 %v2488, 0.0
      %v2893 = vmax.f32 %v2537, 0.0
      %v2894 = vmax.f32 %v2586, 0.0
      %v2895 = vmax.f32 %v2635, 0.0
      %v2896 = vmax.f32 %v2684, 0.0
      %v2897 = vmax.f32 %v2733, 0.0
      %v2898 = vmax.f32 %v2782, 0.0
      %v2899 = vmax.f32 %v2831, 0.0
      %v2900 = vmax.f32 %v2099, 0.0
      %v2901 = vmax.f32 %v2148, 0.0
      %v2902 = vmax.f32 %v2197, 0.0
      %v2903 = vmax.f32 %v2246, 0.0
      %v2904 = vmax.f32 %v2295, 0.0
      %v2905 = vmax.f32 %v2344, 0.0
      %v2906 = vmax.f32 %v2393, 0.0
      %v2907 = vmax.f32 %v2442, 0.0
      %v2908 = vmax.f32 %v2491, 0.0
      %v2909 = vmax.f32 %v2540, 0.0
      %v2910 = vmax.f32 %v2589, 0.0
      %v2911 = vmax.f32 %v2638, 0.0
      %v2912 = vmax.f32 %v2687, 0.0
      %v2913 = vmax.f32 %v2736, 0.0
      %v2914 = vmax.f32 %v2785, 0.0
      %v2915 = vmax.f32 %v2834, 0.0
      %v2916 = vmax.f32 %v2101, 0.0
      %v2917 = vmax.f32 %v2150, 0.0
      %v2918 = vmax.f32 %v2199, 0.0
      %v2919 = vmax.f32 %v2248, 0.0
      %v2920 = vmax.f32 %v2297, 0.0
      %v2921 = vmax.f32 %v2346, 0.0
      %v2922 = vmax.f32 %v2395, 0.0
      %v2923 = vmax.f32 %v2444, 0.0
      %v2924 = vmax.f32 %v2493, 0.0
      %v2925 = vmax.f32 %v2542, 0.0
      %v2926 = vmax.f32 %v2591, 0.0
      %v2927 = vmax.f32 %v2640, 0.0
      %v2928 = vmax.f32 %v2689, 0.0
      %v2929 = vmax.f32 %v2738, 0.0
      %v2930 = vmax.f32 %v2787, 0.0
      %v2931 = vmax.f32 %v2836, 0.0
      %v2932 = vmax.f32 %v2104, 0.0
      %v2933 = vmax.f32 %v2153, 0.0
      %v2934 = vmax.f32 %v2202, 0.0
      %v2935 = vmax.f32 %v2251, 0.0
      %v2936 = vmax.f32 %v2300, 0.0
      %v2937 = vmax.f32 %v2349, 0.0
      %v2938 = vmax.f32 %v2398, 0.0
      %v2939 = vmax.f32 %v2447, 0.0
      %v2940 = vmax.f32 %v2496, 0.0
      %v2941 = vmax.f32 %v2545, 0.0
      %v2942 = vmax.f32 %v2594, 0.0
      %v2943 = vmax.f32 %v2643, 0.0
      %v2944 = vmax.f32 %v2692, 0.0
      %v2945 = vmax.f32 %v2741, 0.0
      %v2946 = vmax.f32 %v2790, 0.0
      %v2947 = vmax.f32 %v2839, 0.0
      %v2948 = vmax.f32 %v2106, 0.0
      %v2949 = vmax.f32 %v2155, 0.0
      %v2950 = vmax.f32 %v2204, 0.0
      %v2951 = vmax.f32 %v2253, 0.0
      %v2952 = vmax.f32 %v2302, 0.0
      %v2953 = vmax.f32 %v2351, 0.0
      %v2954 = vmax.f32 %v2400, 0.0
      %v2955 = vmax.f32 %v2449, 0.0
      %v2956 = vmax.f32 %v2498, 0.0
      %v2957 = vmax.f32 %v2547, 0.0
      %v2958 = vmax.f32 %v2596, 0.0
      %v2959 = vmax.f32 %v2645, 0.0
      %v2960 = vmax.f32 %v2694, 0.0
      %v2961 = vmax.f32 %v2743, 0.0
      %v2962 = vmax.f32 %v2792, 0.0
      %v2963 = vmax.f32 %v2841, 0.0
      %v2964 = vmax.f32 %v2109, 0.0
      %v2965 = vmax.f32 %v2158, 0.0
      %v2966 = vmax.f32 %v2207, 0.0
      %v2967 = vmax.f32 %v2256, 0.0
      %v2968 = vmax.f32 %v2305, 0.0
      %v2969 = vmax.f32 %v2354, 0.0
      %v2970 = vmax.f32 %v2403, 0.0
      %v2971 = vmax.f32 %v2452, 0.0
      %v2972 = vmax.f32 %v2501, 0.0
      %v2973 = vmax.f32 %v2550, 0.0
      %v2974 = vmax.f32 %v2599, 0.0
      %v2975 = vmax.f32 %v2648, 0.0
      %v2976 = vmax.f32 %v2697, 0.0
      %v2977 = vmax.f32 %v2746, 0.0
      %v2978 = vmax.f32 %v2795, 0.0
      %v2979 = vmax.f32 %v2844, 0.0
      %v2980 = vmax.f32 %v2111, 0.0
      %v2981 = vmax.f32 %v2160, 0.0
      %v2982 = vmax.f32 %v2209, 0.0
      %v2983 = vmax.f32 %v2258, 0.0
      %v2984 = vmax.f32 %v2307, 0.0
      %v2985 = vmax.f32 %v2356, 0.0
      %v2986 = vmax.f32 %v2405, 0.0
      %v2987 = vmax.f32 %v2454, 0.0
      %v2988 = vmax.f32 %v2503, 0.0
      %v2989 = vmax.f32 %v2552, 0.0
      %v2990 = vmax.f32 %v2601, 0.0
      %v2991 = vmax.f32 %v2650, 0.0
      %v2992 = vmax.f32 %v2699, 0.0
      %v2993 = vmax.f32 %v2748, 0.0
      %v2994 = vmax.f32 %v2797, 0.0
      %v2995 = vmax.f32 %v2846, 0.0
      %v2996 = vmax.f32 %v2114, 0.0
      %v2997 = vmax.f32 %v2163, 0.0
      %v2998 = vmax.f32 %v2212, 0.0
      %v2999 = vmax.f32 %v2261, 0.0
      %v3000 = vmax.f32 %v2310, 0.0
      %v3001 = vmax.f32 %v2359, 0.0
      %v3002 = vmax.f32 %v2408, 0.0
      %v3003 = vmax.f32 %v2457, 0.0
      %v3004 = vmax.f32 %v2506, 0.0
      %v3005 = vmax.f32 %v2555, 0.0
      %v3006 = vmax.f32 %v2604, 0.0
      %v3007 = vmax.f32 %v2653, 0.0
      %v3008 = vmax.f32 %v2702, 0.0
      %v3009 = vmax.f32 %v2751, 0.0
      %v3010 = vmax.f32 %v2800, 0.0
      %v3011 = vmax.f32 %v2849, 0.0
      %v3012 = vmax.f32 %v2116, 0.0
      %v3013 = vmax.f32 %v2165, 0.0
      %v3014 = vmax.f32 %v2214, 0.0
      %v3015 = vmax.f32 %v2263, 0.0
      %v3016 = vmax.f32 %v2312, 0.0
      %v3017 = vmax.f32 %v2361, 0.0
      %v3018 = vmax.f32 %v2410, 0.0
      %v3019 = vmax.f32 %v2459, 0.0
      %v3020 = vmax.f32 %v2508, 0.0
      %v3021 = vmax.f32 %v2557, 0.0
      %v3022 = vmax.f32 %v2606, 0.0
      %v3023 = vmax.f32 %v2655, 0.0
      %v3024 = vmax.f32 %v2704, 0.0
      %v3025 = vmax.f32 %v2753, 0.0
      %v3026 = vmax.f32 %v2802, 0.0
      %v3027 = vmax.f32 %v2851, 0.0
      %v3028 = vmax.f32 %v2119, 0.0
      %v3029 = vmax.f32 %v2168, 0.0
      %v3030 = vmax.f32 %v2217, 0.0
      %v3031 = vmax.f32 %v2266, 0.0
      %v3032 = vmax.f32 %v2315, 0.0
      %v3033 = vmax.f32 %v2364, 0.0
      %v3034 = vmax.f32 %v2413, 0.0
      %v3035 = vmax.f32 %v2462, 0.0
      %v3036 = vmax.f32 %v2511, 0.0
      %v3037 = vmax.f32 %v2560, 0.0
      %v3038 = vmax.f32 %v2609, 0.0
      %v3039 = vmax.f32 %v2658, 0.0
      %v3040 = vmax.f32 %v2707, 0.0
      %v3041 = vmax.f32 %v2756, 0.0
      %v3042 = vmax.f32 %v2805, 0.0
      %v3043 = vmax.f32 %v2854, 0.0
      %v3044 = vmax.f32 %v2121, 0.0
      %v3045 = vmax.f32 %v2170, 0.0
      %v3046 = vmax.f32 %v2219, 0.0
      %v3047 = vmax.f32 %v2268, 0.0
      %v3048 = vmax.f32 %v2317, 0.0
      %v3049 = vmax.f32 %v2366, 0.0
      %v3050 = vmax.f32 %v2415, 0.0
      %v3051 = vmax.f32 %v2464, 0.0
      %v3052 = vmax.f32 %v2513, 0.0
      %v3053 = vmax.f32 %v2562, 0.0
      %v3054 = vmax.f32 %v2611, 0.0
      %v3055 = vmax.f32 %v2660, 0.0
      %v3056 = vmax.f32 %v2709, 0.0
      %v3057 = vmax.f32 %v2758, 0.0
      %v3058 = vmax.f32 %v2807, 0.0
      %v3059 = vmax.f32 %v2856, 0.0
      %v3060 = vmax.f32 %v2124, 0.0
      %v3061 = vmax.f32 %v2173, 0.0
      %v3062 = vmax.f32 %v2222, 0.0
      %v3063 = vmax.f32 %v2271, 0.0
      %v3064 = vmax.f32 %v2320, 0.0
      %v3065 = vmax.f32 %v2369, 0.0
      %v3066 = vmax.f32 %v2418, 0.0
      %v3067 = vmax.f32 %v2467, 0.0
      %v3068 = vmax.f32 %v2516, 0.0
      %v3069 = vmax.f32 %v2565, 0.0
      %v3070 = vmax.f32 %v2614, 0.0
      %v3071 = vmax.f32 %v2663, 0.0
      %v3072 = vmax.f32 %v2712, 0.0
      %v3073 = vmax.f32 %v2761, 0.0
      %v3074 = vmax.f32 %v2810, 0.0
      %v3075 = vmax.f32 %v2859, 0.0
      %v3076 = vmax.f32 %v2126, 0.0
      %v3077 = vmax.f32 %v2175, 0.0
      %v3078 = vmax.f32 %v2224, 0.0
      %v3079 = vmax.f32 %v2273, 0.0
      %v3080 = vmax.f32 %v2322, 0.0
      %v3081 = vmax.f32 %v2371, 0.0
      %v3082 = vmax.f32 %v2420, 0.0
      %v3083 = vmax.f32 %v2469, 0.0
      %v3084 = vmax.f32 %v2518, 0.0
      %v3085 = vmax.f32 %v2567, 0.0
      %v3086 = vmax.f32 %v2616, 0.0
      %v3087 = vmax.f32 %v2665, 0.0
      %v3088 = vmax.f32 %v2714, 0.0
      %v3089 = vmax.f32 %v2763, 0.0
      %v3090 = vmax.f32 %v2812, 0.0
      %v3091 = vmax.f32 %v2861, 0.0
      %v3092 = vmax.f32 %v2129, 0.0
      %v3093 = vmax.f32 %v2178, 0.0
      %v3094 = vmax.f32 %v2227, 0.0
      %v3095 = vmax.f32 %v2276, 0.0
      %v3096 = vmax.f32 %v2325, 0.0
      %v3097 = vmax.f32 %v2374, 0.0
      %v3098 = vmax.f32 %v2423, 0.0
      %v3099 = vmax.f32 %v2472, 0.0
      %v3100 = vmax.f32 %v2521, 0.0
      %v3101 = vmax.f32 %v2570, 0.0
      %v3102 = vmax.f32 %v2619, 0.0
      %v3103 = vmax.f32 %v2668, 0.0
      %v3104 = vmax.f32 %v2717, 0.0
      %v3105 = vmax.f32 %v2766, 0.0
      %v3106 = vmax.f32 %v2815, 0.0
      %v3107 = vmax.f32 %v2864, 0.0
      %v3108 = vmax.f32 %v2131, 0.0
      %v3109 = vmax.f32 %v2180, 0.0
      %v3110 = vmax.f32 %v2229, 0.0
      %v3111 = vmax.f32 %v2278, 0.0
      %v3112 = vmax.f32 %v2327, 0.0
      %v3113 = vmax.f32 %v2376, 0.0
      %v3114 = vmax.f32 %v2425, 0.0
      %v3115 = vmax.f32 %v2474, 0.0
      %v3116 = vmax.f32 %v2523, 0.0
      %v3117 = vmax.f32 %v2572, 0.0
      %v3118 = vmax.f32 %v2621, 0.0
      %v3119 = vmax.f32 %v2670, 0.0
      %v3120 = vmax.f32 %v2719, 0.0
      %v3121 = vmax.f32 %v2768, 0.0
      %v3122 = vmax.f32 %v2817, 0.0
      %v3123 = vmax.f32 %v2866, 0.0
      %v3124 = vpack.c.bf16 %v2884, %v2868
      %v3125 = vpack.c.bf16 %v2885, %v2869
      %v3126 = vpack.c.bf16 %v2886, %v2870
      %v3127 = vpack.c.bf16 %v2887, %v2871
      %v3128 = vpack.c.bf16 %v2888, %v2872
      %v3129 = vpack.c.bf16 %v2889, %v2873
      %v3130 = vpack.c.bf16 %v2890, %v2874
      %v3131 = vpack.c.bf16 %v2891, %v2875
      %v3132 = vpack.c.bf16 %v2892, %v2876
      %v3133 = vpack.c.bf16 %v2893, %v2877
      %v3134 = vpack.c.bf16 %v2894, %v2878
      %v3135 = vpack.c.bf16 %v2895, %v2879
      %v3136 = vpack.c.bf16 %v2896, %v2880
      %v3137 = vpack.c.bf16 %v2897, %v2881
      %v3138 = vpack.c.bf16 %v2898, %v2882
      %v3139 = vpack.c.bf16 %v2899, %v2883
      %v3140 = vpack.c.bf16 %v2916, %v2900
      %v3141 = vpack.c.bf16 %v2917, %v2901
      %v3142 = vpack.c.bf16 %v2918, %v2902
      %v3143 = vpack.c.bf16 %v2919, %v2903
      %v3144 = vpack.c.bf16 %v2920, %v2904
      %v3145 = vpack.c.bf16 %v2921, %v2905
      %v3146 = vpack.c.bf16 %v2922, %v2906
      %v3147 = vpack.c.bf16 %v2923, %v2907
      %v3148 = vpack.c.bf16 %v2924, %v2908
      %v3149 = vpack.c.bf16 %v2925, %v2909
      %v3150 = vpack.c.bf16 %v2926, %v2910
      %v3151 = vpack.c.bf16 %v2927, %v2911
      %v3152 = vpack.c.bf16 %v2928, %v2912
      %v3153 = vpack.c.bf16 %v2929, %v2913
      %v3154 = vpack.c.bf16 %v2930, %v2914
      %v3155 = vpack.c.bf16 %v2931, %v2915
      %v3156 = vpack.c.bf16 %v2948, %v2932
      %v3157 = vpack.c.bf16 %v2949, %v2933
      %v3158 = vpack.c.bf16 %v2950, %v2934
      %v3159 = vpack.c.bf16 %v2951, %v2935
      %v3160 = vpack.c.bf16 %v2952, %v2936
      %v3161 = vpack.c.bf16 %v2953, %v2937
      %v3162 = vpack.c.bf16 %v2954, %v2938
      %v3163 = vpack.c.bf16 %v2955, %v2939
      %v3164 = vpack.c.bf16 %v2956, %v2940
      %v3165 = vpack.c.bf16 %v2957, %v2941
      %v3166 = vpack.c.bf16 %v2958, %v2942
      %v3167 = vpack.c.bf16 %v2959, %v2943
      %v3168 = vpack.c.bf16 %v2960, %v2944
      %v3169 = vpack.c.bf16 %v2961, %v2945
      %v3170 = vpack.c.bf16 %v2962, %v2946
      %v3171 = vpack.c.bf16 %v2963, %v2947
      %v3172 = vpack.c.bf16 %v2980, %v2964
      %v3173 = vpack.c.bf16 %v2981, %v2965
      %v3174 = vpack.c.bf16 %v2982, %v2966
      %v3175 = vpack.c.bf16 %v2983, %v2967
      %v3176 = vpack.c.bf16 %v2984, %v2968
      %v3177 = vpack.c.bf16 %v2985, %v2969
      %v3178 = vpack.c.bf16 %v2986, %v2970
      %v3179 = vpack.c.bf16 %v2987, %v2971
      %v3180 = vpack.c.bf16 %v2988, %v2972
      %v3181 = vpack.c.bf16 %v2989, %v2973
      %v3182 = vpack.c.bf16 %v2990, %v2974
      %v3183 = vpack.c.bf16 %v2991, %v2975
      %v3184 = vpack.c.bf16 %v2992, %v2976
      %v3185 = vpack.c.bf16 %v2993, %v2977
      %v3186 = vpack.c.bf16 %v2994, %v2978
      %v3187 = vpack.c.bf16 %v2995, %v2979
      %v3188 = vpack.c.bf16 %v3012, %v2996
      %v3189 = vpack.c.bf16 %v3013, %v2997
      %v3190 = vpack.c.bf16 %v3014, %v2998
      %v3191 = vpack.c.bf16 %v3015, %v2999
      %v3192 = vpack.c.bf16 %v3016, %v3000
      %v3193 = vpack.c.bf16 %v3017, %v3001
      %v3194 = vpack.c.bf16 %v3018, %v3002
      %v3195 = vpack.c.bf16 %v3019, %v3003
      %v3196 = vpack.c.bf16 %v3020, %v3004
      %v3197 = vpack.c.bf16 %v3021, %v3005
      %v3198 = vpack.c.bf16 %v3022, %v3006
      %v3199 = vpack.c.bf16 %v3023, %v3007
      %v3200 = vpack.c.bf16 %v3024, %v3008
      %v3201 = vpack.c.bf16 %v3025, %v3009
      %v3202 = vpack.c.bf16 %v3026, %v3010
      %v3203 = vpack.c.bf16 %v3027, %v3011
      %v3204 = vpack.c.bf16 %v3044, %v3028
      %v3205 = vpack.c.bf16 %v3045, %v3029
      %v3206 = vpack.c.bf16 %v3046, %v3030
      %v3207 = vpack.c.bf16 %v3047, %v3031
      %v3208 = vpack.c.bf16 %v3048, %v3032
      %v3209 = vpack.c.bf16 %v3049, %v3033
      %v3210 = vpack.c.bf16 %v3050, %v3034
      %v3211 = vpack.c.bf16 %v3051, %v3035
      %v3212 = vpack.c.bf16 %v3052, %v3036
      %v3213 = vpack.c.bf16 %v3053, %v3037
      %v3214 = vpack.c.bf16 %v3054, %v3038
      %v3215 = vpack.c.bf16 %v3055, %v3039
      %v3216 = vpack.c.bf16 %v3056, %v3040
      %v3217 = vpack.c.bf16 %v3057, %v3041
      %v3218 = vpack.c.bf16 %v3058, %v3042
      %v3219 = vpack.c.bf16 %v3059, %v3043
      %v3220 = vpack.c.bf16 %v3076, %v3060
      %v3221 = vpack.c.bf16 %v3077, %v3061
      %v3222 = vpack.c.bf16 %v3078, %v3062
      %v3223 = vpack.c.bf16 %v3079, %v3063
      %v3224 = vpack.c.bf16 %v3080, %v3064
      %v3225 = vpack.c.bf16 %v3081, %v3065
      %v3226 = vpack.c.bf16 %v3082, %v3066
      %v3227 = vpack.c.bf16 %v3083, %v3067
      %v3228 = vpack.c.bf16 %v3084, %v3068
      %v3229 = vpack.c.bf16 %v3085, %v3069
      %v3230 = vpack.c.bf16 %v3086, %v3070
      %v3231 = vpack.c.bf16 %v3087, %v3071
      %v3232 = vpack.c.bf16 %v3088, %v3072
      %v3233 = vpack.c.bf16 %v3089, %v3073
      %v3234 = vpack.c.bf16 %v3090, %v3074
      %v3235 = vpack.c.bf16 %v3091, %v3075
      %v3236 = vpack.c.bf16 %v3108, %v3092
      %v3237 = vpack.c.bf16 %v3109, %v3093
      %v3238 = vpack.c.bf16 %v3110, %v3094
      %v3239 = vpack.c.bf16 %v3111, %v3095
      %v3240 = vpack.c.bf16 %v3112, %v3096
      %v3241 = vpack.c.bf16 %v3113, %v3097
      %v3242 = vpack.c.bf16 %v3114, %v3098
      %v3243 = vpack.c.bf16 %v3115, %v3099
      %v3244 = vpack.c.bf16 %v3116, %v3100
      %v3245 = vpack.c.bf16 %v3117, %v3101
      %v3246 = vpack.c.bf16 %v3118, %v3102
      %v3247 = vpack.c.bf16 %v3119, %v3103
      %v3248 = vpack.c.bf16 %v3120, %v3104
      %v3249 = vpack.c.bf16 %v3121, %v3105
      %v3250 = vpack.c.bf16 %v3122, %v3106
      %v3251 = vpack.c.bf16 %v3123, %v3107
      %v3252 = vld [vmem:[%s9] sm:$0xf]
      %v3253 = vld [vmem:[%s9 + $0x4] sm:$0xf]
      %v3254 = vld [vmem:[%s9 + $0x8] sm:$0xf]
      %v3255 = vld [vmem:[%s9 + $0xc] sm:$0xf]
      %v3256 = vld [vmem:[%s9 + $0x10] sm:$0xf]
      %v3257 = vld [vmem:[%s9 + $0x14] sm:$0xf]
      %v3258 = vld [vmem:[%s9 + $0x18] sm:$0xf]
      %v3259 = vld [vmem:[%s9 + $0x1c] sm:$0xf]
      %v3260 = vld [vmem:[%s9 + $0x20] sm:$0xf]
      %v3261 = vld [vmem:[%s9 + $0x24] sm:$0xf]
      %v3262 = vld [vmem:[%s9 + $0x28] sm:$0xf]
      %v3263 = vld [vmem:[%s9 + $0x2c] sm:$0xf]
      %v3264 = vld [vmem:[%s9 + $0x30] sm:$0xf]
      %v3265 = vld [vmem:[%s9 + $0x34] sm:$0xf]
      %v3266 = vld [vmem:[%s9 + $0x38] sm:$0xf]
      %v3267 = vld [vmem:[%s9 + $0x3c] sm:$0xf]
      %v3268 = vld [vmem:[%s9 + $0x40] sm:$0xf]
      %v3269 = vld [vmem:[%s9 + $0x44] sm:$0xf]
      %v3270 = vld [vmem:[%s9 + $0x48] sm:$0xf]
      %v3271 = vld [vmem:[%s9 + $0x4c] sm:$0xf]
      %v3272 = vld [vmem:[%s9 + $0x50] sm:$0xf]
      %v3273 = vld [vmem:[%s9 + $0x54] sm:$0xf]
      %v3274 = vld [vmem:[%s9 + $0x58] sm:$0xf]
      %v3275 = vld [vmem:[%s9 + $0x5c] sm:$0xf]
      %v3276 = vld [vmem:[%s9 + $0x60] sm:$0xf]
      %v3277 = vld [vmem:[%s9 + $0x64] sm:$0xf]
      %v3278 = vld [vmem:[%s9 + $0x68] sm:$0xf]
      %v3279 = vld [vmem:[%s9 + $0x6c] sm:$0xf]
      %v3280 = vld [vmem:[%s9 + $0x70] sm:$0xf]
      %v3281 = vld [vmem:[%s9 + $0x74] sm:$0xf]
      %v3282 = vld [vmem:[%s9 + $0x78] sm:$0xf]
      %v3283 = vld [vmem:[%s9 + $0x7c] sm:$0xf]
      %v3284 = vld [vmem:[%s9 + $0x80] sm:$0xf]
      %v3285 = vld [vmem:[%s9 + $0x84] sm:$0xf]
      %v3286 = vld [vmem:[%s9 + $0x88] sm:$0xf]
      %v3287 = vld [vmem:[%s9 + $0x8c] sm:$0xf]
      %v3288 = vld [vmem:[%s9 + $0x90] sm:$0xf]
      %v3289 = vld [vmem:[%s9 + $0x94] sm:$0xf]
      %v3290 = vld [vmem:[%s9 + $0x98] sm:$0xf]
      %v3291 = vld [vmem:[%s9 + $0x9c] sm:$0xf]
      %v3292 = vld [vmem:[%s9 + $0xa0] sm:$0xf]
      %v3293 = vld [vmem:[%s9 + $0xa4] sm:$0xf]
      %v3294 = vld [vmem:[%s9 + $0xa8] sm:$0xf]
      %v3295 = vld [vmem:[%s9 + $0xac] sm:$0xf]
      %v3296 = vld [vmem:[%s9 + $0xb0] sm:$0xf]
      %v3297 = vld [vmem:[%s9 + $0xb4] sm:$0xf]
      %v3298 = vld [vmem:[%s9 + $0xb8] sm:$0xf]
      %v3299 = vld [vmem:[%s9 + $0xbc] sm:$0xf]
      %v3300 = vld [vmem:[%s9 + $0xc0] sm:$0xf]
      %v3301 = vld [vmem:[%s9 + $0xc4] sm:$0xf]
      %v3302 = vld [vmem:[%s9 + $0xc8] sm:$0xf]
      %v3303 = vld [vmem:[%s9 + $0xcc] sm:$0xf]
      %v3304 = vld [vmem:[%s9 + $0xd0] sm:$0xf]
      %v3305 = vld [vmem:[%s9 + $0xd4] sm:$0xf]
      %v3306 = vld [vmem:[%s9 + $0xd8] sm:$0xf]
      %v3307 = vld [vmem:[%s9 + $0xdc] sm:$0xf]
      %v3308 = vld [vmem:[%s9 + $0xe0] sm:$0xf]
      %v3309 = vld [vmem:[%s9 + $0xe4] sm:$0xf]
      %v3310 = vld [vmem:[%s9 + $0xe8] sm:$0xf]
      %v3311 = vld [vmem:[%s9 + $0xec] sm:$0xf]
      %v3312 = vld [vmem:[%s9 + $0xf0] sm:$0xf]
      %v3313 = vld [vmem:[%s9 + $0xf4] sm:$0xf]
      %v3314 = vld [vmem:[%s9 + $0xf8] sm:$0xf]
      %v3315 = vld [vmem:[%s9 + $0xfc] sm:$0xf]
      %v3316 = vld [vmem:[%s9 + $0x100] sm:$0xf]
      %v3317 = vld [vmem:[%s9 + $0x104] sm:$0xf]
      %v3318 = vld [vmem:[%s9 + $0x108] sm:$0xf]
      %v3319 = vld [vmem:[%s9 + $0x10c] sm:$0xf]
      %v3320 = vld [vmem:[%s9 + $0x110] sm:$0xf]
      %v3321 = vld [vmem:[%s9 + $0x114] sm:$0xf]
      %v3322 = vld [vmem:[%s9 + $0x118] sm:$0xf]
      %v3323 = vld [vmem:[%s9 + $0x11c] sm:$0xf]
      %v3324 = vld [vmem:[%s9 + $0x120] sm:$0xf]
      %v3325 = vld [vmem:[%s9 + $0x124] sm:$0xf]
      %v3326 = vld [vmem:[%s9 + $0x128] sm:$0xf]
      %v3327 = vld [vmem:[%s9 + $0x12c] sm:$0xf]
      %v3328 = vld [vmem:[%s9 + $0x130] sm:$0xf]
      %v3329 = vld [vmem:[%s9 + $0x134] sm:$0xf]
      %v3330 = vld [vmem:[%s9 + $0x138] sm:$0xf]
      %v3331 = vld [vmem:[%s9 + $0x13c] sm:$0xf]
      %v3332 = vld [vmem:[%s9 + $0x140] sm:$0xf]
      %v3333 = vld [vmem:[%s9 + $0x144] sm:$0xf]
      %v3334 = vld [vmem:[%s9 + $0x148] sm:$0xf]
      %v3335 = vld [vmem:[%s9 + $0x14c] sm:$0xf]
      %v3336 = vld [vmem:[%s9 + $0x150] sm:$0xf]
      %v3337 = vld [vmem:[%s9 + $0x154] sm:$0xf]
      %v3338 = vld [vmem:[%s9 + $0x158] sm:$0xf]
      %v3339 = vld [vmem:[%s9 + $0x15c] sm:$0xf]
      %v3340 = vld [vmem:[%s9 + $0x160] sm:$0xf]
      %v3341 = vld [vmem:[%s9 + $0x164] sm:$0xf]
      %v3342 = vld [vmem:[%s9 + $0x168] sm:$0xf]
      %v3343 = vld [vmem:[%s9 + $0x16c] sm:$0xf]
      %v3344 = vld [vmem:[%s9 + $0x170] sm:$0xf]
      %v3345 = vld [vmem:[%s9 + $0x174] sm:$0xf]
      %v3346 = vld [vmem:[%s9 + $0x178] sm:$0xf]
      %v3347 = vld [vmem:[%s9 + $0x17c] sm:$0xf]
      %v3348 = vld [vmem:[%s9 + $0x180] sm:$0xf]
      %v3349 = vld [vmem:[%s9 + $0x184] sm:$0xf]
      %v3350 = vld [vmem:[%s9 + $0x188] sm:$0xf]
      %v3351 = vld [vmem:[%s9 + $0x18c] sm:$0xf]
      %v3352 = vld [vmem:[%s9 + $0x190] sm:$0xf]
      %v3353 = vld [vmem:[%s9 + $0x194] sm:$0xf]
      %v3354 = vld [vmem:[%s9 + $0x198] sm:$0xf]
      %v3355 = vld [vmem:[%s9 + $0x19c] sm:$0xf]
      %v3356 = vld [vmem:[%s9 + $0x1a0] sm:$0xf]
      %v3357 = vld [vmem:[%s9 + $0x1a4] sm:$0xf]
      %v3358 = vld [vmem:[%s9 + $0x1a8] sm:$0xf]
      %v3359 = vld [vmem:[%s9 + $0x1ac] sm:$0xf]
      %v3360 = vld [vmem:[%s9 + $0x1b0] sm:$0xf]
      %v3361 = vld [vmem:[%s9 + $0x1b4] sm:$0xf]
      %v3362 = vld [vmem:[%s9 + $0x1b8] sm:$0xf]
      %v3363 = vld [vmem:[%s9 + $0x1bc] sm:$0xf]
      %v3364 = vld [vmem:[%s9 + $0x1c0] sm:$0xf]
      %v3365 = vld [vmem:[%s9 + $0x1c4] sm:$0xf]
      %v3366 = vld [vmem:[%s9 + $0x1c8] sm:$0xf]
      %v3367 = vld [vmem:[%s9 + $0x1cc] sm:$0xf]
      %v3368 = vld [vmem:[%s9 + $0x1d0] sm:$0xf]
      %v3369 = vld [vmem:[%s9 + $0x1d4] sm:$0xf]
      %v3370 = vld [vmem:[%s9 + $0x1d8] sm:$0xf]
      %v3371 = vld [vmem:[%s9 + $0x1dc] sm:$0xf]
      %v3372 = vld [vmem:[%s9 + $0x1e0] sm:$0xf]
      %v3373 = vld [vmem:[%s9 + $0x1e4] sm:$0xf]
      %v3374 = vld [vmem:[%s9 + $0x1e8] sm:$0xf]
      %v3375 = vld [vmem:[%s9 + $0x1ec] sm:$0xf]
      %v3376 = vld [vmem:[%s9 + $0x1f0] sm:$0xf]
      %v3377 = vld [vmem:[%s9 + $0x1f4] sm:$0xf]
      %v3378 = vld [vmem:[%s9 + $0x1f8] sm:$0xf]
      %v3379 = vld [vmem:[%s9 + $0x1fc] sm:$0xf]
      %v3380 = vld [vmem:[%s9 + $0x200] sm:$0xf]
      %v3381 = vld [vmem:[%s9 + $0x204] sm:$0xf]
      %v3382 = vld [vmem:[%s9 + $0x208] sm:$0xf]
      %v3383 = vld [vmem:[%s9 + $0x20c] sm:$0xf]
      %v3384 = vld [vmem:[%s9 + $0x210] sm:$0xf]
      %v3385 = vld [vmem:[%s9 + $0x214] sm:$0xf]
      %v3386 = vld [vmem:[%s9 + $0x218] sm:$0xf]
      %v3387 = vld [vmem:[%s9 + $0x21c] sm:$0xf]
      %v3388 = vld [vmem:[%s9 + $0x220] sm:$0xf]
      %v3389 = vld [vmem:[%s9 + $0x224] sm:$0xf]
      %v3390 = vld [vmem:[%s9 + $0x228] sm:$0xf]
      %v3391 = vld [vmem:[%s9 + $0x22c] sm:$0xf]
      %v3392 = vld [vmem:[%s9 + $0x230] sm:$0xf]
      %v3393 = vld [vmem:[%s9 + $0x234] sm:$0xf]
      %v3394 = vld [vmem:[%s9 + $0x238] sm:$0xf]
      %v3395 = vld [vmem:[%s9 + $0x23c] sm:$0xf]
      %v3396 = vld [vmem:[%s9 + $0x240] sm:$0xf]
      %v3397 = vld [vmem:[%s9 + $0x244] sm:$0xf]
      %v3398 = vld [vmem:[%s9 + $0x248] sm:$0xf]
      %v3399 = vld [vmem:[%s9 + $0x24c] sm:$0xf]
      %v3400 = vld [vmem:[%s9 + $0x250] sm:$0xf]
      %v3401 = vld [vmem:[%s9 + $0x254] sm:$0xf]
      %v3402 = vld [vmem:[%s9 + $0x258] sm:$0xf]
      %v3403 = vld [vmem:[%s9 + $0x25c] sm:$0xf]
      %v3404 = vld [vmem:[%s9 + $0x260] sm:$0xf]
      %v3405 = vld [vmem:[%s9 + $0x264] sm:$0xf]
      %v3406 = vld [vmem:[%s9 + $0x268] sm:$0xf]
      %v3407 = vld [vmem:[%s9 + $0x26c] sm:$0xf]
      %v3408 = vld [vmem:[%s9 + $0x270] sm:$0xf]
      %v3409 = vld [vmem:[%s9 + $0x274] sm:$0xf]
      %v3410 = vld [vmem:[%s9 + $0x278] sm:$0xf]
      %v3411 = vld [vmem:[%s9 + $0x27c] sm:$0xf]
      %v3412 = vld [vmem:[%s9 + $0x280] sm:$0xf]
      %v3413 = vld [vmem:[%s9 + $0x284] sm:$0xf]
      %v3414 = vld [vmem:[%s9 + $0x288] sm:$0xf]
      %v3415 = vld [vmem:[%s9 + $0x28c] sm:$0xf]
      %v3416 = vld [vmem:[%s9 + $0x290] sm:$0xf]
      %v3417 = vld [vmem:[%s9 + $0x294] sm:$0xf]
      %v3418 = vld [vmem:[%s9 + $0x298] sm:$0xf]
      %v3419 = vld [vmem:[%s9 + $0x29c] sm:$0xf]
      %v3420 = vld [vmem:[%s9 + $0x2a0] sm:$0xf]
      %v3421 = vld [vmem:[%s9 + $0x2a4] sm:$0xf]
      %v3422 = vld [vmem:[%s9 + $0x2a8] sm:$0xf]
      %v3423 = vld [vmem:[%s9 + $0x2ac] sm:$0xf]
      %v3424 = vld [vmem:[%s9 + $0x2b0] sm:$0xf]
      %v3425 = vld [vmem:[%s9 + $0x2b4] sm:$0xf]
      %v3426 = vld [vmem:[%s9 + $0x2b8] sm:$0xf]
      %v3427 = vld [vmem:[%s9 + $0x2bc] sm:$0xf]
      %v3428 = vld [vmem:[%s9 + $0x2c0] sm:$0xf]
      %v3429 = vld [vmem:[%s9 + $0x2c4] sm:$0xf]
      %v3430 = vld [vmem:[%s9 + $0x2c8] sm:$0xf]
      %v3431 = vld [vmem:[%s9 + $0x2cc] sm:$0xf]
      %v3432 = vld [vmem:[%s9 + $0x2d0] sm:$0xf]
      %v3433 = vld [vmem:[%s9 + $0x2d4] sm:$0xf]
      %v3434 = vld [vmem:[%s9 + $0x2d8] sm:$0xf]
      %v3435 = vld [vmem:[%s9 + $0x2dc] sm:$0xf]
      %v3436 = vld [vmem:[%s9 + $0x2e0] sm:$0xf]
      %v3437 = vld [vmem:[%s9 + $0x2e4] sm:$0xf]
      %v3438 = vld [vmem:[%s9 + $0x2e8] sm:$0xf]
      %v3439 = vld [vmem:[%s9 + $0x2ec] sm:$0xf]
      %v3440 = vld [vmem:[%s9 + $0x2f0] sm:$0xf]
      %v3441 = vld [vmem:[%s9 + $0x2f4] sm:$0xf]
      %v3442 = vld [vmem:[%s9 + $0x2f8] sm:$0xf]
      %v3443 = vld [vmem:[%s9 + $0x2fc] sm:$0xf]
      %v3444 = vld [vmem:[%s9 + $0x300] sm:$0xf]
      %v3445 = vld [vmem:[%s9 + $0x304] sm:$0xf]
      %v3446 = vld [vmem:[%s9 + $0x308] sm:$0xf]
      %v3447 = vld [vmem:[%s9 + $0x30c] sm:$0xf]
      %v3448 = vld [vmem:[%s9 + $0x310] sm:$0xf]
      %v3449 = vld [vmem:[%s9 + $0x314] sm:$0xf]
      %v3450 = vld [vmem:[%s9 + $0x318] sm:$0xf]
      %v3451 = vld [vmem:[%s9 + $0x31c] sm:$0xf]
      %v3452 = vld [vmem:[%s9 + $0x320] sm:$0xf]
      %v3453 = vld [vmem:[%s9 + $0x324] sm:$0xf]
      %v3454 = vld [vmem:[%s9 + $0x328] sm:$0xf]
      %v3455 = vld [vmem:[%s9 + $0x32c] sm:$0xf]
      %v3456 = vld [vmem:[%s9 + $0x330] sm:$0xf]
      %v3457 = vld [vmem:[%s9 + $0x334] sm:$0xf]
      %v3458 = vld [vmem:[%s9 + $0x338] sm:$0xf]
      %v3459 = vld [vmem:[%s9 + $0x33c] sm:$0xf]
      %v3460 = vld [vmem:[%s9 + $0x340] sm:$0xf]
      %v3461 = vld [vmem:[%s9 + $0x344] sm:$0xf]
      %v3462 = vld [vmem:[%s9 + $0x348] sm:$0xf]
      %v3463 = vld [vmem:[%s9 + $0x34c] sm:$0xf]
      %v3464 = vld [vmem:[%s9 + $0x350] sm:$0xf]
      %v3465 = vld [vmem:[%s9 + $0x354] sm:$0xf]
      %v3466 = vld [vmem:[%s9 + $0x358] sm:$0xf]
      %v3467 = vld [vmem:[%s9 + $0x35c] sm:$0xf]
      %v3468 = vld [vmem:[%s9 + $0x360] sm:$0xf]
      %v3469 = vld [vmem:[%s9 + $0x364] sm:$0xf]
      %v3470 = vld [vmem:[%s9 + $0x368] sm:$0xf]
      %v3471 = vld [vmem:[%s9 + $0x36c] sm:$0xf]
      %v3472 = vld [vmem:[%s9 + $0x370] sm:$0xf]
      %v3473 = vld [vmem:[%s9 + $0x374] sm:$0xf]
      %v3474 = vld [vmem:[%s9 + $0x378] sm:$0xf]
      %v3475 = vld [vmem:[%s9 + $0x37c] sm:$0xf]
      %v3476 = vld [vmem:[%s9 + $0x380] sm:$0xf]
      %v3477 = vld [vmem:[%s9 + $0x384] sm:$0xf]
      %v3478 = vld [vmem:[%s9 + $0x388] sm:$0xf]
      %v3479 = vld [vmem:[%s9 + $0x38c] sm:$0xf]
      %v3480 = vld [vmem:[%s9 + $0x390] sm:$0xf]
      %v3481 = vld [vmem:[%s9 + $0x394] sm:$0xf]
      %v3482 = vld [vmem:[%s9 + $0x398] sm:$0xf]
      %v3483 = vld [vmem:[%s9 + $0x39c] sm:$0xf]
      %v3484 = vld [vmem:[%s9 + $0x3a0] sm:$0xf]
      %v3485 = vld [vmem:[%s9 + $0x3a4] sm:$0xf]
      %v3486 = vld [vmem:[%s9 + $0x3a8] sm:$0xf]
      %v3487 = vld [vmem:[%s9 + $0x3ac] sm:$0xf]
      %v3488 = vld [vmem:[%s9 + $0x3b0] sm:$0xf]
      %v3489 = vld [vmem:[%s9 + $0x3b4] sm:$0xf]
      %v3490 = vld [vmem:[%s9 + $0x3b8] sm:$0xf]
      %v3491 = vld [vmem:[%s9 + $0x3bc] sm:$0xf]
      %v3492 = vld [vmem:[%s9 + $0x3c0] sm:$0xf]
      %v3493 = vld [vmem:[%s9 + $0x3c4] sm:$0xf]
      %v3494 = vld [vmem:[%s9 + $0x3c8] sm:$0xf]
      %v3495 = vld [vmem:[%s9 + $0x3cc] sm:$0xf]
      %v3496 = vld [vmem:[%s9 + $0x3d0] sm:$0xf]
      %v3497 = vld [vmem:[%s9 + $0x3d4] sm:$0xf]
      %v3498 = vld [vmem:[%s9 + $0x3d8] sm:$0xf]
      %v3499 = vld [vmem:[%s9 + $0x3dc] sm:$0xf]
      %v3500 = vld [vmem:[%s9 + $0x3e0] sm:$0xf]
      %v3501 = vld [vmem:[%s9 + $0x3e4] sm:$0xf]
      %v3502 = vld [vmem:[%s9 + $0x3e8] sm:$0xf]
      %v3503 = vld [vmem:[%s9 + $0x3ec] sm:$0xf]
      %v3504 = vld [vmem:[%s9 + $0x3f0] sm:$0xf]
      %v3505 = vld [vmem:[%s9 + $0x3f4] sm:$0xf]
      %v3506 = vld [vmem:[%s9 + $0x3f8] sm:$0xf]
      %v3507 = vld [vmem:[%s9 + $0x3fc] sm:$0xf]
      %v3508 = vld [vmem:[%s10] sm:$0x1]
      %v3510 = vperm.slane %v3508, 0
      %v3768 = vunpack.c.l.b16 %v3252
      %v3769 = vunpack.c.l.b16 %v3253
      %v3770 = vunpack.c.l.b16 %v3254
      %v3771 = vunpack.c.l.b16 %v3255
      %v3772 = vunpack.c.l.b16 %v3256
      %v3773 = vunpack.c.l.b16 %v3257
      %v3774 = vunpack.c.l.b16 %v3258
      %v3775 = vunpack.c.l.b16 %v3259
      %v3776 = vunpack.c.l.b16 %v3260
      %v3777 = vunpack.c.l.b16 %v3261
      %v3778 = vunpack.c.l.b16 %v3262
      %v3779 = vunpack.c.l.b16 %v3263
      %v3780 = vunpack.c.l.b16 %v3264
      %v3781 = vunpack.c.l.b16 %v3265
      %v3782 = vunpack.c.l.b16 %v3266
      %v3783 = vunpack.c.l.b16 %v3267
      %v3784 = vunpack.c.l.b16 %v3268
      %v3785 = vunpack.c.l.b16 %v3269
      %v3786 = vunpack.c.l.b16 %v3270
      %v3787 = vunpack.c.l.b16 %v3271
      %v3788 = vunpack.c.l.b16 %v3272
      %v3789 = vunpack.c.l.b16 %v3273
      %v3790 = vunpack.c.l.b16 %v3274
      %v3791 = vunpack.c.l.b16 %v3275
      %v3792 = vunpack.c.l.b16 %v3276
      %v3793 = vunpack.c.l.b16 %v3277
      %v3794 = vunpack.c.l.b16 %v3278
      %v3795 = vunpack.c.l.b16 %v3279
      %v3796 = vunpack.c.l.b16 %v3280
      %v3797 = vunpack.c.l.b16 %v3281
      %v3798 = vunpack.c.l.b16 %v3282
      %v3799 = vunpack.c.l.b16 %v3283
      %v3800 = vunpack.c.l.b16 %v3284
      %v3801 = vunpack.c.l.b16 %v3285
      %v3802 = vunpack.c.l.b16 %v3286
      %v3803 = vunpack.c.l.b16 %v3287
      %v3804 = vunpack.c.l.b16 %v3288
      %v3805 = vunpack.c.l.b16 %v3289
      %v3806 = vunpack.c.l.b16 %v3290
      %v3807 = vunpack.c.l.b16 %v3291
      %v3808 = vunpack.c.l.b16 %v3292
      %v3809 = vunpack.c.l.b16 %v3293
      %v3810 = vunpack.c.l.b16 %v3294
      %v3811 = vunpack.c.l.b16 %v3295
      %v3812 = vunpack.c.l.b16 %v3296
      %v3813 = vunpack.c.l.b16 %v3297
      %v3814 = vunpack.c.l.b16 %v3298
      %v3815 = vunpack.c.l.b16 %v3299
      %v3816 = vunpack.c.l.b16 %v3300
      %v3817 = vunpack.c.l.b16 %v3301
      %v3818 = vunpack.c.l.b16 %v3302
      %v3819 = vunpack.c.l.b16 %v3303
      %v3820 = vunpack.c.l.b16 %v3304
      %v3821 = vunpack.c.l.b16 %v3305
      %v3822 = vunpack.c.l.b16 %v3306
      %v3823 = vunpack.c.l.b16 %v3307
      %v3824 = vunpack.c.l.b16 %v3308
      %v3825 = vunpack.c.l.b16 %v3309
      %v3826 = vunpack.c.l.b16 %v3310
      %v3827 = vunpack.c.l.b16 %v3311
      %v3828 = vunpack.c.l.b16 %v3312
      %v3829 = vunpack.c.l.b16 %v3313
      %v3830 = vunpack.c.l.b16 %v3314
      %v3831 = vunpack.c.l.b16 %v3315
      %v3832 = vunpack.c.l.b16 %v3316
      %v3833 = vunpack.c.l.b16 %v3317
      %v3834 = vunpack.c.l.b16 %v3318
      %v3835 = vunpack.c.l.b16 %v3319
      %v3836 = vunpack.c.l.b16 %v3320
      %v3837 = vunpack.c.l.b16 %v3321
      %v3838 = vunpack.c.l.b16 %v3322
      %v3839 = vunpack.c.l.b16 %v3323
      %v3840 = vunpack.c.l.b16 %v3324
      %v3841 = vunpack.c.l.b16 %v3325
      %v3842 = vunpack.c.l.b16 %v3326
      %v3843 = vunpack.c.l.b16 %v3327
      %v3844 = vunpack.c.l.b16 %v3328
      %v3845 = vunpack.c.l.b16 %v3329
      %v3846 = vunpack.c.l.b16 %v3330
      %v3847 = vunpack.c.l.b16 %v3331
      %v3848 = vunpack.c.l.b16 %v3332
      %v3849 = vunpack.c.l.b16 %v3333
      %v3850 = vunpack.c.l.b16 %v3334
      %v3851 = vunpack.c.l.b16 %v3335
      %v3852 = vunpack.c.l.b16 %v3336
      %v3853 = vunpack.c.l.b16 %v3337
      %v3854 = vunpack.c.l.b16 %v3338
      %v3855 = vunpack.c.l.b16 %v3339
      %v3856 = vunpack.c.l.b16 %v3340
      %v3857 = vunpack.c.l.b16 %v3341
      %v3858 = vunpack.c.l.b16 %v3342
      %v3859 = vunpack.c.l.b16 %v3343
      %v3860 = vunpack.c.l.b16 %v3344
      %v3861 = vunpack.c.l.b16 %v3345
      %v3862 = vunpack.c.l.b16 %v3346
      %v3863 = vunpack.c.l.b16 %v3347
      %v3864 = vunpack.c.l.b16 %v3348
      %v3865 = vunpack.c.l.b16 %v3349
      %v3866 = vunpack.c.l.b16 %v3350
      %v3867 = vunpack.c.l.b16 %v3351
      %v3868 = vunpack.c.l.b16 %v3352
      %v3869 = vunpack.c.l.b16 %v3353
      %v3870 = vunpack.c.l.b16 %v3354
      %v3871 = vunpack.c.l.b16 %v3355
      %v3872 = vunpack.c.l.b16 %v3356
      %v3873 = vunpack.c.l.b16 %v3357
      %v3874 = vunpack.c.l.b16 %v3358
      %v3875 = vunpack.c.l.b16 %v3359
      %v3876 = vunpack.c.l.b16 %v3360
      %v3877 = vunpack.c.l.b16 %v3361
      %v3878 = vunpack.c.l.b16 %v3362
      %v3879 = vunpack.c.l.b16 %v3363
      %v3880 = vunpack.c.l.b16 %v3364
      %v3881 = vunpack.c.l.b16 %v3365
      %v3882 = vunpack.c.l.b16 %v3366
      %v3883 = vunpack.c.l.b16 %v3367
      %v3884 = vunpack.c.l.b16 %v3368
      %v3885 = vunpack.c.l.b16 %v3369
      %v3886 = vunpack.c.l.b16 %v3370
      %v3887 = vunpack.c.l.b16 %v3371
      %v3888 = vunpack.c.l.b16 %v3372
      %v3889 = vunpack.c.l.b16 %v3373
      %v3890 = vunpack.c.l.b16 %v3374
      %v3891 = vunpack.c.l.b16 %v3375
      %v3892 = vunpack.c.l.b16 %v3376
      %v3893 = vunpack.c.l.b16 %v3377
      %v3894 = vunpack.c.l.b16 %v3378
      %v3895 = vunpack.c.l.b16 %v3379
      %v3896 = vunpack.c.l.b16 %v3380
      %v3897 = vunpack.c.l.b16 %v3381
      %v3898 = vunpack.c.l.b16 %v3382
      %v3899 = vunpack.c.l.b16 %v3383
      %v3900 = vunpack.c.l.b16 %v3384
      %v3901 = vunpack.c.l.b16 %v3385
      %v3902 = vunpack.c.l.b16 %v3386
      %v3903 = vunpack.c.l.b16 %v3387
      %v3904 = vunpack.c.l.b16 %v3388
      %v3905 = vunpack.c.l.b16 %v3389
      %v3906 = vunpack.c.l.b16 %v3390
      %v3907 = vunpack.c.l.b16 %v3391
      %v3908 = vunpack.c.l.b16 %v3392
      %v3909 = vunpack.c.l.b16 %v3393
      %v3910 = vunpack.c.l.b16 %v3394
      %v3911 = vunpack.c.l.b16 %v3395
      %v3912 = vunpack.c.l.b16 %v3396
      %v3913 = vunpack.c.l.b16 %v3397
      %v3914 = vunpack.c.l.b16 %v3398
      %v3915 = vunpack.c.l.b16 %v3399
      %v3916 = vunpack.c.l.b16 %v3400
      %v3917 = vunpack.c.l.b16 %v3401
      %v3918 = vunpack.c.l.b16 %v3402
      %v3919 = vunpack.c.l.b16 %v3403
      %v3920 = vunpack.c.l.b16 %v3404
      %v3921 = vunpack.c.l.b16 %v3405
      %v3922 = vunpack.c.l.b16 %v3406
      %v3923 = vunpack.c.l.b16 %v3407
      %v3924 = vunpack.c.l.b16 %v3408
      %v3925 = vunpack.c.l.b16 %v3409
      %v3926 = vunpack.c.l.b16 %v3410
      %v3927 = vunpack.c.l.b16 %v3411
      %v3928 = vunpack.c.l.b16 %v3412
      %v3929 = vunpack.c.l.b16 %v3413
      %v3930 = vunpack.c.l.b16 %v3414
      %v3931 = vunpack.c.l.b16 %v3415
      %v3932 = vunpack.c.l.b16 %v3416
      %v3933 = vunpack.c.l.b16 %v3417
      %v3934 = vunpack.c.l.b16 %v3418
      %v3935 = vunpack.c.l.b16 %v3419
      %v3936 = vunpack.c.l.b16 %v3420
      %v3937 = vunpack.c.l.b16 %v3421
      %v3938 = vunpack.c.l.b16 %v3422
      %v3939 = vunpack.c.l.b16 %v3423
      %v3940 = vunpack.c.l.b16 %v3424
      %v3941 = vunpack.c.l.b16 %v3425
      %v3942 = vunpack.c.l.b16 %v3426
      %v3943 = vunpack.c.l.b16 %v3427
      %v3944 = vunpack.c.l.b16 %v3428
      %v3945 = vunpack.c.l.b16 %v3429
      %v3946 = vunpack.c.l.b16 %v3430
      %v3947 = vunpack.c.l.b16 %v3431
      %v3948 = vunpack.c.l.b16 %v3432
      %v3949 = vunpack.c.l.b16 %v3433
      %v3950 = vunpack.c.l.b16 %v3434
      %v3951 = vunpack.c.l.b16 %v3435
      %v3952 = vunpack.c.l.b16 %v3436
      %v3953 = vunpack.c.l.b16 %v3437
      %v3954 = vunpack.c.l.b16 %v3438
      %v3955 = vunpack.c.l.b16 %v3439
      %v3956 = vunpack.c.l.b16 %v3440
      %v3957 = vunpack.c.l.b16 %v3441
      %v3958 = vunpack.c.l.b16 %v3442
      %v3959 = vunpack.c.l.b16 %v3443
      %v3960 = vunpack.c.l.b16 %v3444
      %v3961 = vunpack.c.l.b16 %v3445
      %v3962 = vunpack.c.l.b16 %v3446
      %v3963 = vunpack.c.l.b16 %v3447
      %v3964 = vunpack.c.l.b16 %v3448
      %v3965 = vunpack.c.l.b16 %v3449
      %v3966 = vunpack.c.l.b16 %v3450
      %v3967 = vunpack.c.l.b16 %v3451
      %v3968 = vunpack.c.l.b16 %v3452
      %v3969 = vunpack.c.l.b16 %v3453
      %v3970 = vunpack.c.l.b16 %v3454
      %v3971 = vunpack.c.l.b16 %v3455
      %v3972 = vunpack.c.l.b16 %v3456
      %v3973 = vunpack.c.l.b16 %v3457
      %v3974 = vunpack.c.l.b16 %v3458
      %v3975 = vunpack.c.l.b16 %v3459
      %v3976 = vunpack.c.l.b16 %v3460
      %v3977 = vunpack.c.l.b16 %v3461
      %v3978 = vunpack.c.l.b16 %v3462
      %v3979 = vunpack.c.l.b16 %v3463
      %v3980 = vunpack.c.l.b16 %v3464
      %v3981 = vunpack.c.l.b16 %v3465
      %v3982 = vunpack.c.l.b16 %v3466
      %v3983 = vunpack.c.l.b16 %v3467
      %v3984 = vunpack.c.l.b16 %v3468
      %v3985 = vunpack.c.l.b16 %v3469
      %v3986 = vunpack.c.l.b16 %v3470
      %v3987 = vunpack.c.l.b16 %v3471
      %v3988 = vunpack.c.l.b16 %v3472
      %v3989 = vunpack.c.l.b16 %v3473
      %v3990 = vunpack.c.l.b16 %v3474
      %v3991 = vunpack.c.l.b16 %v3475
      %v3992 = vunpack.c.l.b16 %v3476
      %v3993 = vunpack.c.l.b16 %v3477
      %v3994 = vunpack.c.l.b16 %v3478
      %v3995 = vunpack.c.l.b16 %v3479
      %v3996 = vunpack.c.l.b16 %v3480
      %v3997 = vunpack.c.l.b16 %v3481
      %v3998 = vunpack.c.l.b16 %v3482
      %v3999 = vunpack.c.l.b16 %v3483
      %v4000 = vunpack.c.l.b16 %v3484
      %v4001 = vunpack.c.l.b16 %v3485
      %v4002 = vunpack.c.l.b16 %v3486
      %v4003 = vunpack.c.l.b16 %v3487
      %v4004 = vunpack.c.l.b16 %v3488
      %v4005 = vunpack.c.l.b16 %v3489
      %v4006 = vunpack.c.l.b16 %v3490
      %v4007 = vunpack.c.l.b16 %v3491
      %v4008 = vunpack.c.l.b16 %v3492
      %v4009 = vunpack.c.l.b16 %v3493
      %v4010 = vunpack.c.l.b16 %v3494
      %v4011 = vunpack.c.l.b16 %v3495
      %v4012 = vunpack.c.l.b16 %v3496
      %v4013 = vunpack.c.l.b16 %v3497
      %v4014 = vunpack.c.l.b16 %v3498
      %v4015 = vunpack.c.l.b16 %v3499
      %v4016 = vunpack.c.l.b16 %v3500
      %v4017 = vunpack.c.l.b16 %v3501
      %v4018 = vunpack.c.l.b16 %v3502
      %v4019 = vunpack.c.l.b16 %v3503
      %v4020 = vunpack.c.l.b16 %v3504
      %v4021 = vunpack.c.l.b16 %v3505
      %v4022 = vunpack.c.l.b16 %v3506
      %v4023 = vunpack.c.l.b16 %v3507
      %v4024 = vpack.c.b16 %v3769, %v3768
      %v4025 = vpack.c.b16 %v3771, %v3770
      %v4026 = vpack.c.b16 %v3773, %v3772
      %v4027 = vpack.c.b16 %v3775, %v3774
      %v4028 = vpack.c.b16 %v3777, %v3776
      %v4029 = vpack.c.b16 %v3779, %v3778
      %v4030 = vpack.c.b16 %v3781, %v3780
      %v4031 = vpack.c.b16 %v3783, %v3782
      %v4032 = vpack.c.b16 %v3785, %v3784
      %v4033 = vpack.c.b16 %v3787, %v3786
      %v4034 = vpack.c.b16 %v3789, %v3788
      %v4035 = vpack.c.b16 %v3791, %v3790
      %v4036 = vpack.c.b16 %v3793, %v3792
      %v4037 = vpack.c.b16 %v3795, %v3794
      %v4038 = vpack.c.b16 %v3797, %v3796
      %v4039 = vpack.c.b16 %v3799, %v3798
      %v4040 = vpack.c.b16 %v3801, %v3800
      %v4041 = vpack.c.b16 %v3803, %v3802
      %v4042 = vpack.c.b16 %v3805, %v3804
      %v4043 = vpack.c.b16 %v3807, %v3806
      %v4044 = vpack.c.b16 %v3809, %v3808
      %v4045 = vpack.c.b16 %v3811, %v3810
      %v4046 = vpack.c.b16 %v3813, %v3812
      %v4047 = vpack.c.b16 %v3815, %v3814
      %v4048 = vpack.c.b16 %v3817, %v3816
      %v4049 = vpack.c.b16 %v3819, %v3818
      %v4050 = vpack.c.b16 %v3821, %v3820
      %v4051 = vpack.c.b16 %v3823, %v3822
      %v4052 = vpack.c.b16 %v3825, %v3824
      %v4053 = vpack.c.b16 %v3827, %v3826
      %v4054 = vpack.c.b16 %v3829, %v3828
      %v4055 = vpack.c.b16 %v3831, %v3830
      %v4056 = vpack.c.b16 %v3833, %v3832
      %v4057 = vpack.c.b16 %v3835, %v3834
      %v4058 = vpack.c.b16 %v3837, %v3836
      %v4059 = vpack.c.b16 %v3839, %v3838
      %v4060 = vpack.c.b16 %v3841, %v3840
      %v4061 = vpack.c.b16 %v3843, %v3842
      %v4062 = vpack.c.b16 %v3845, %v3844
      %v4063 = vpack.c.b16 %v3847, %v3846
      %v4064 = vpack.c.b16 %v3849, %v3848
      %v4065 = vpack.c.b16 %v3851, %v3850
      %v4066 = vpack.c.b16 %v3853, %v3852
      %v4067 = vpack.c.b16 %v3855, %v3854
      %v4068 = vpack.c.b16 %v3857, %v3856
      %v4069 = vpack.c.b16 %v3859, %v3858
      %v4070 = vpack.c.b16 %v3861, %v3860
      %v4071 = vpack.c.b16 %v3863, %v3862
      %v4072 = vpack.c.b16 %v3865, %v3864
      %v4073 = vpack.c.b16 %v3867, %v3866
      %v4074 = vpack.c.b16 %v3869, %v3868
      %v4075 = vpack.c.b16 %v3871, %v3870
      %v4076 = vpack.c.b16 %v3873, %v3872
      %v4077 = vpack.c.b16 %v3875, %v3874
      %v4078 = vpack.c.b16 %v3877, %v3876
      %v4079 = vpack.c.b16 %v3879, %v3878
      %v4080 = vpack.c.b16 %v3881, %v3880
      %v4081 = vpack.c.b16 %v3883, %v3882
      %v4082 = vpack.c.b16 %v3885, %v3884
      %v4083 = vpack.c.b16 %v3887, %v3886
      %v4084 = vpack.c.b16 %v3889, %v3888
      %v4085 = vpack.c.b16 %v3891, %v3890
      %v4086 = vpack.c.b16 %v3893, %v3892
      %v4087 = vpack.c.b16 %v3895, %v3894
      %v4088 = vpack.c.b16 %v3897, %v3896
      %v4089 = vpack.c.b16 %v3899, %v3898
      %v4090 = vpack.c.b16 %v3901, %v3900
      %v4091 = vpack.c.b16 %v3903, %v3902
      %v4092 = vpack.c.b16 %v3905, %v3904
      %v4093 = vpack.c.b16 %v3907, %v3906
      %v4094 = vpack.c.b16 %v3909, %v3908
      %v4095 = vpack.c.b16 %v3911, %v3910
      %v4096 = vpack.c.b16 %v3913, %v3912
      %v4097 = vpack.c.b16 %v3915, %v3914
      %v4098 = vpack.c.b16 %v3917, %v3916
      %v4099 = vpack.c.b16 %v3919, %v3918
      %v4100 = vpack.c.b16 %v3921, %v3920
      %v4101 = vpack.c.b16 %v3923, %v3922
      %v4102 = vpack.c.b16 %v3925, %v3924
      %v4103 = vpack.c.b16 %v3927, %v3926
      %v4104 = vpack.c.b16 %v3929, %v3928
      %v4105 = vpack.c.b16 %v3931, %v3930
      %v4106 = vpack.c.b16 %v3933, %v3932
      %v4107 = vpack.c.b16 %v3935, %v3934
      %v4108 = vpack.c.b16 %v3937, %v3936
      %v4109 = vpack.c.b16 %v3939, %v3938
      %v4110 = vpack.c.b16 %v3941, %v3940
      %v4111 = vpack.c.b16 %v3943, %v3942
      %v4112 = vpack.c.b16 %v3945, %v3944
      %v4113 = vpack.c.b16 %v3947, %v3946
      %v4114 = vpack.c.b16 %v3949, %v3948
      %v4115 = vpack.c.b16 %v3951, %v3950
      %v4116 = vpack.c.b16 %v3953, %v3952
      %v4117 = vpack.c.b16 %v3955, %v3954
      %v4118 = vpack.c.b16 %v3957, %v3956
      %v4119 = vpack.c.b16 %v3959, %v3958
      %v4120 = vpack.c.b16 %v3961, %v3960
      %v4121 = vpack.c.b16 %v3963, %v3962
      %v4122 = vpack.c.b16 %v3965, %v3964
      %v4123 = vpack.c.b16 %v3967, %v3966
      %v4124 = vpack.c.b16 %v3969, %v3968
      %v4125 = vpack.c.b16 %v3971, %v3970
      %v4126 = vpack.c.b16 %v3973, %v3972
      %v4127 = vpack.c.b16 %v3975, %v3974
      %v4128 = vpack.c.b16 %v3977, %v3976
      %v4129 = vpack.c.b16 %v3979, %v3978
      %v4130 = vpack.c.b16 %v3981, %v3980
      %v4131 = vpack.c.b16 %v3983, %v3982
      %v4132 = vpack.c.b16 %v3985, %v3984
      %v4133 = vpack.c.b16 %v3987, %v3986
      %v4134 = vpack.c.b16 %v3989, %v3988
      %v4135 = vpack.c.b16 %v3991, %v3990
      %v4136 = vpack.c.b16 %v3993, %v3992
      %v4137 = vpack.c.b16 %v3995, %v3994
      %v4138 = vpack.c.b16 %v3997, %v3996
      %v4139 = vpack.c.b16 %v3999, %v3998
      %v4140 = vpack.c.b16 %v4001, %v4000
      %v4141 = vpack.c.b16 %v4003, %v4002
      %v4142 = vpack.c.b16 %v4005, %v4004
      %v4143 = vpack.c.b16 %v4007, %v4006
      %v4144 = vpack.c.b16 %v4009, %v4008
      %v4145 = vpack.c.b16 %v4011, %v4010
      %v4146 = vpack.c.b16 %v4013, %v4012
      %v4147 = vpack.c.b16 %v4015, %v4014
      %v4148 = vpack.c.b16 %v4017, %v4016
      %v4149 = vpack.c.b16 %v4019, %v4018
      %v4150 = vpack.c.b16 %v4021, %v4020
      %v4151 = vpack.c.b16 %v4023, %v4022
      %4280 = vmatpush.bf16.msra.mxu0 %v4031
      %4281 = vmatpush.bf16.msra.mxu0 %v4030
      %4282 = vmatpush.bf16.msra.mxu0 %v4029
      %4283 = vmatpush.bf16.msra.mxu0 %v4028
      %4284 = vmatpush.bf16.msra.mxu0 %v4027
      %4285 = vmatpush.bf16.msra.mxu0 %v4026
      %4286 = vmatpush.bf16.msra.mxu0 %v4025
      %4287 = vmatpush.bf16.msra.mxu0 %v4024
      %4288 = vmatmul.bf16.gmra.mxu0 %v3124
      %v4289 = vpop.f32.mrf.mxu0
      %v4290 = vadd.f32 %v3510, %v4289
      %v4291 = vpop.f32.mrf.mxu0
      %v4292 = vadd.f32 %v3510, %v4291
      %4293 = vmatmul.bf16.gmra.mxu0 %v3140
      %v4294 = vpop.f32.mrf.mxu0
      %v4295 = vadd.f32 %v3510, %v4294
      %v4296 = vpop.f32.mrf.mxu0
      %v4297 = vadd.f32 %v3510, %v4296
      %4298 = vmatmul.bf16.gmra.mxu0 %v3156
      %v4299 = vpop.f32.mrf.mxu0
      %v4300 = vadd.f32 %v3510, %v4299
      %v4301 = vpop.f32.mrf.mxu0
      %v4302 = vadd.f32 %v3510, %v4301
      %4303 = vmatmul.bf16.gmra.mxu0 %v3172
      %v4304 = vpop.f32.mrf.mxu0
      %v4305 = vadd.f32 %v3510, %v4304
      %v4306 = vpop.f32.mrf.mxu0
      %v4307 = vadd.f32 %v3510, %v4306
      %4308 = vmatmul.bf16.gmra.mxu0 %v3188
      %v4309 = vpop.f32.mrf.mxu0
      %v4310 = vadd.f32 %v3510, %v4309
      %v4311 = vpop.f32.mrf.mxu0
      %v4312 = vadd.f32 %v3510, %v4311
      %4313 = vmatmul.bf16.gmra.mxu0 %v3204
      %v4314 = vpop.f32.mrf.mxu0
      %v4315 = vadd.f32 %v3510, %v4314
      %v4316 = vpop.f32.mrf.mxu0
      %v4317 = vadd.f32 %v3510, %v4316
      %4318 = vmatmul.bf16.gmra.mxu0 %v3220
      %v4319 = vpop.f32.mrf.mxu0
      %v4320 = vadd.f32 %v3510, %v4319
      %v4321 = vpop.f32.mrf.mxu0
      %v4322 = vadd.f32 %v3510, %v4321
      %4323 = vmatmul.bf16.gmra.mxu0 %v3236
      %v4324 = vpop.f32.mrf.mxu0
      %v4325 = vadd.f32 %v3510, %v4324
      %v4326 = vpop.f32.mrf.mxu0
      %v4327 = vadd.f32 %v3510, %v4326
      %4328 = vdwg.mxu0
      %4329 = vmatpush.bf16.msra.mxu0 %v4039
      %4330 = vmatpush.bf16.msra.mxu0 %v4038
      %4331 = vmatpush.bf16.msra.mxu0 %v4037
      %4332 = vmatpush.bf16.msra.mxu0 %v4036
      %4333 = vmatpush.bf16.msra.mxu0 %v4035
      %4334 = vmatpush.bf16.msra.mxu0 %v4034
      %4335 = vmatpush.bf16.msra.mxu0 %v4033
      %4336 = vmatpush.bf16.msra.mxu0 %v4032
      %4337 = vmatmul.bf16.gmra.mxu0 %v3125
      %v4338 = vpop.f32.mrf.mxu0
      %v4339 = vadd.f32 %v4290, %v4338
      %v4340 = vpop.f32.mrf.mxu0
      %v4341 = vadd.f32 %v4292, %v4340
      %4342 = vmatmul.bf16.gmra.mxu0 %v3141
      %v4343 = vpop.f32.mrf.mxu0
      %v4344 = vadd.f32 %v4295, %v4343
      %v4345 = vpop.f32.mrf.mxu0
      %v4346 = vadd.f32 %v4297, %v4345
      %4347 = vmatmul.bf16.gmra.mxu0 %v3157
      %v4348 = vpop.f32.mrf.mxu0
      %v4349 = vadd.f32 %v4300, %v4348
      %v4350 = vpop.f32.mrf.mxu0
      %v4351 = vadd.f32 %v4302, %v4350
      %4352 = vmatmul.bf16.gmra.mxu0 %v3173
      %v4353 = vpop.f32.mrf.mxu0
      %v4354 = vadd.f32 %v4305, %v4353
      %v4355 = vpop.f32.mrf.mxu0
      %v4356 = vadd.f32 %v4307, %v4355
      %4357 = vmatmul.bf16.gmra.mxu0 %v3189
      %v4358 = vpop.f32.mrf.mxu0
      %v4359 = vadd.f32 %v4310, %v4358
      %v4360 = vpop.f32.mrf.mxu0
      %v4361 = vadd.f32 %v4312, %v4360
      %4362 = vmatmul.bf16.gmra.mxu0 %v3205
      %v4363 = vpop.f32.mrf.mxu0
      %v4364 = vadd.f32 %v4315, %v4363
      %v4365 = vpop.f32.mrf.mxu0
      %v4366 = vadd.f32 %v4317, %v4365
      %4367 = vmatmul.bf16.gmra.mxu0 %v3221
      %v4368 = vpop.f32.mrf.mxu0
      %v4369 = vadd.f32 %v4320, %v4368
      %v4370 = vpop.f32.mrf.mxu0
      %v4371 = vadd.f32 %v4322, %v4370
      %4372 = vmatmul.bf16.gmra.mxu0 %v3237
      %v4373 = vpop.f32.mrf.mxu0
      %v4374 = vadd.f32 %v4325, %v4373
      %v4375 = vpop.f32.mrf.mxu0
      %v4376 = vadd.f32 %v4327, %v4375
      %4377 = vdwg.mxu0
      %4378 = vmatpush.bf16.msra.mxu0 %v4047
      %4379 = vmatpush.bf16.msra.mxu0 %v4046
      %4380 = vmatpush.bf16.msra.mxu0 %v4045
      %4381 = vmatpush.bf16.msra.mxu0 %v4044
      %4382 = vmatpush.bf16.msra.mxu0 %v4043
      %4383 = vmatpush.bf16.msra.mxu0 %v4042
      %4384 = vmatpush.bf16.msra.mxu0 %v4041
      %4385 = vmatpush.bf16.msra.mxu0 %v4040
      %4386 = vmatmul.bf16.gmra.mxu0 %v3126
      %v4387 = vpop.f32.mrf.mxu0
      %v4388 = vadd.f32 %v4339, %v4387
      %v4389 = vpop.f32.mrf.mxu0
      %v4390 = vadd.f32 %v4341, %v4389
      %4391 = vmatmul.bf16.gmra.mxu0 %v3142
      %v4392 = vpop.f32.mrf.mxu0
      %v4393 = vadd.f32 %v4344, %v4392
      %v4394 = vpop.f32.mrf.mxu0
      %v4395 = vadd.f32 %v4346, %v4394
      %4396 = vmatmul.bf16.gmra.mxu0 %v3158
      %v4397 = vpop.f32.mrf.mxu0
      %v4398 = vadd.f32 %v4349, %v4397
      %v4399 = vpop.f32.mrf.mxu0
      %v4400 = vadd.f32 %v4351, %v4399
      %4401 = vmatmul.bf16.gmra.mxu0 %v3174
      %v4402 = vpop.f32.mrf.mxu0
      %v4403 = vadd.f32 %v4354, %v4402
      %v4404 = vpop.f32.mrf.mxu0
      %v4405 = vadd.f32 %v4356, %v4404
      %4406 = vmatmul.bf16.gmra.mxu0 %v3190
      %v4407 = vpop.f32.mrf.mxu0
      %v4408 = vadd.f32 %v4359, %v4407
      %v4409 = vpop.f32.mrf.mxu0
      %v4410 = vadd.f32 %v4361, %v4409
      %4411 = vmatmul.bf16.gmra.mxu0 %v3206
      %v4412 = vpop.f32.mrf.mxu0
      %v4413 = vadd.f32 %v4364, %v4412
      %v4414 = vpop.f32.mrf.mxu0
      %v4415 = vadd.f32 %v4366, %v4414
      %4416 = vmatmul.bf16.gmra.mxu0 %v3222
      %v4417 = vpop.f32.mrf.mxu0
      %v4418 = vadd.f32 %v4369, %v4417
      %v4419 = vpop.f32.mrf.mxu0
      %v4420 = vadd.f32 %v4371, %v4419
      %4421 = vmatmul.bf16.gmra.mxu0 %v3238
      %v4422 = vpop.f32.mrf.mxu0
      %v4423 = vadd.f32 %v4374, %v4422
      %v4424 = vpop.f32.mrf.mxu0
      %v4425 = vadd.f32 %v4376, %v4424
      %4426 = vdwg.mxu0
      %4427 = vmatpush.bf16.msra.mxu0 %v4055
      %4428 = vmatpush.bf16.msra.mxu0 %v4054
      %4429 = vmatpush.bf16.msra.mxu0 %v4053
      %4430 = vmatpush.bf16.msra.mxu0 %v4052
      %4431 = vmatpush.bf16.msra.mxu0 %v4051
      %4432 = vmatpush.bf16.msra.mxu0 %v4050
      %4433 = vmatpush.bf16.msra.mxu0 %v4049
      %4434 = vmatpush.bf16.msra.mxu0 %v4048
      %4435 = vmatmul.bf16.gmra.mxu0 %v3127
      %v4436 = vpop.f32.mrf.mxu0
      %v4437 = vadd.f32 %v4388, %v4436
      %v4438 = vpop.f32.mrf.mxu0
      %v4439 = vadd.f32 %v4390, %v4438
      %4440 = vmatmul.bf16.gmra.mxu0 %v3143
      %v4441 = vpop.f32.mrf.mxu0
      %v4442 = vadd.f32 %v4393, %v4441
      %v4443 = vpop.f32.mrf.mxu0
      %v4444 = vadd.f32 %v4395, %v4443
      %4445 = vmatmul.bf16.gmra.mxu0 %v3159
      %v4446 = vpop.f32.mrf.mxu0
      %v4447 = vadd.f32 %v4398, %v4446
      %v4448 = vpop.f32.mrf.mxu0
      %v4449 = vadd.f32 %v4400, %v4448
      %4450 = vmatmul.bf16.gmra.mxu0 %v3175
      %v4451 = vpop.f32.mrf.mxu0
      %v4452 = vadd.f32 %v4403, %v4451
      %v4453 = vpop.f32.mrf.mxu0
      %v4454 = vadd.f32 %v4405, %v4453
      %4455 = vmatmul.bf16.gmra.mxu0 %v3191
      %v4456 = vpop.f32.mrf.mxu0
      %v4457 = vadd.f32 %v4408, %v4456
      %v4458 = vpop.f32.mrf.mxu0
      %v4459 = vadd.f32 %v4410, %v4458
      %4460 = vmatmul.bf16.gmra.mxu0 %v3207
      %v4461 = vpop.f32.mrf.mxu0
      %v4462 = vadd.f32 %v4413, %v4461
      %v4463 = vpop.f32.mrf.mxu0
      %v4464 = vadd.f32 %v4415, %v4463
      %4465 = vmatmul.bf16.gmra.mxu0 %v3223
      %v4466 = vpop.f32.mrf.mxu0
      %v4467 = vadd.f32 %v4418, %v4466
      %v4468 = vpop.f32.mrf.mxu0
      %v4469 = vadd.f32 %v4420, %v4468
      %4470 = vmatmul.bf16.gmra.mxu0 %v3239
      %v4471 = vpop.f32.mrf.mxu0
      %v4472 = vadd.f32 %v4423, %v4471
      %v4473 = vpop.f32.mrf.mxu0
      %v4474 = vadd.f32 %v4425, %v4473
      %4475 = vdwg.mxu0
      %4476 = vmatpush.bf16.msra.mxu0 %v4063
      %4477 = vmatpush.bf16.msra.mxu0 %v4062
      %4478 = vmatpush.bf16.msra.mxu0 %v4061
      %4479 = vmatpush.bf16.msra.mxu0 %v4060
      %4480 = vmatpush.bf16.msra.mxu0 %v4059
      %4481 = vmatpush.bf16.msra.mxu0 %v4058
      %4482 = vmatpush.bf16.msra.mxu0 %v4057
      %4483 = vmatpush.bf16.msra.mxu0 %v4056
      %4484 = vmatmul.bf16.gmra.mxu0 %v3128
      %v4485 = vpop.f32.mrf.mxu0
      %v4486 = vadd.f32 %v4437, %v4485
      %v4487 = vpop.f32.mrf.mxu0
      %v4488 = vadd.f32 %v4439, %v4487
      %4489 = vmatmul.bf16.gmra.mxu0 %v3144
      %v4490 = vpop.f32.mrf.mxu0
      %v4491 = vadd.f32 %v4442, %v4490
      %v4492 = vpop.f32.mrf.mxu0
      %v4493 = vadd.f32 %v4444, %v4492
      %4494 = vmatmul.bf16.gmra.mxu0 %v3160
      %v4495 = vpop.f32.mrf.mxu0
      %v4496 = vadd.f32 %v4447, %v4495
      %v4497 = vpop.f32.mrf.mxu0
      %v4498 = vadd.f32 %v4449, %v4497
      %4499 = vmatmul.bf16.gmra.mxu0 %v3176
      %v4500 = vpop.f32.mrf.mxu0
      %v4501 = vadd.f32 %v4452, %v4500
      %v4502 = vpop.f32.mrf.mxu0
      %v4503 = vadd.f32 %v4454, %v4502
      %4504 = vmatmul.bf16.gmra.mxu0 %v3192
      %v4505 = vpop.f32.mrf.mxu0
      %v4506 = vadd.f32 %v4457, %v4505
      %v4507 = vpop.f32.mrf.mxu0
      %v4508 = vadd.f32 %v4459, %v4507
      %4509 = vmatmul.bf16.gmra.mxu0 %v3208
      %v4510 = vpop.f32.mrf.mxu0
      %v4511 = vadd.f32 %v4462, %v4510
      %v4512 = vpop.f32.mrf.mxu0
      %v4513 = vadd.f32 %v4464, %v4512
      %4514 = vmatmul.bf16.gmra.mxu0 %v3224
      %v4515 = vpop.f32.mrf.mxu0
      %v4516 = vadd.f32 %v4467, %v4515
      %v4517 = vpop.f32.mrf.mxu0
      %v4518 = vadd.f32 %v4469, %v4517
      %4519 = vmatmul.bf16.gmra.mxu0 %v3240
      %v4520 = vpop.f32.mrf.mxu0
      %v4521 = vadd.f32 %v4472, %v4520
      %v4522 = vpop.f32.mrf.mxu0
      %v4523 = vadd.f32 %v4474, %v4522
      %4524 = vdwg.mxu0
      %4525 = vmatpush.bf16.msra.mxu0 %v4071
      %4526 = vmatpush.bf16.msra.mxu0 %v4070
      %4527 = vmatpush.bf16.msra.mxu0 %v4069
      %4528 = vmatpush.bf16.msra.mxu0 %v4068
      %4529 = vmatpush.bf16.msra.mxu0 %v4067
      %4530 = vmatpush.bf16.msra.mxu0 %v4066
      %4531 = vmatpush.bf16.msra.mxu0 %v4065
      %4532 = vmatpush.bf16.msra.mxu0 %v4064
      %4533 = vmatmul.bf16.gmra.mxu0 %v3129
      %v4534 = vpop.f32.mrf.mxu0
      %v4535 = vadd.f32 %v4486, %v4534
      %v4536 = vpop.f32.mrf.mxu0
      %v4537 = vadd.f32 %v4488, %v4536
      %4538 = vmatmul.bf16.gmra.mxu0 %v3145
      %v4539 = vpop.f32.mrf.mxu0
      %v4540 = vadd.f32 %v4491, %v4539
      %v4541 = vpop.f32.mrf.mxu0
      %v4542 = vadd.f32 %v4493, %v4541
      %4543 = vmatmul.bf16.gmra.mxu0 %v3161
      %v4544 = vpop.f32.mrf.mxu0
      %v4545 = vadd.f32 %v4496, %v4544
      %v4546 = vpop.f32.mrf.mxu0
      %v4547 = vadd.f32 %v4498, %v4546
      %4548 = vmatmul.bf16.gmra.mxu0 %v3177
      %v4549 = vpop.f32.mrf.mxu0
      %v4550 = vadd.f32 %v4501, %v4549
      %v4551 = vpop.f32.mrf.mxu0
      %v4552 = vadd.f32 %v4503, %v4551
      %4553 = vmatmul.bf16.gmra.mxu0 %v3193
      %v4554 = vpop.f32.mrf.mxu0
      %v4555 = vadd.f32 %v4506, %v4554
      %v4556 = vpop.f32.mrf.mxu0
      %v4557 = vadd.f32 %v4508, %v4556
      %4558 = vmatmul.bf16.gmra.mxu0 %v3209
      %v4559 = vpop.f32.mrf.mxu0
      %v4560 = vadd.f32 %v4511, %v4559
      %v4561 = vpop.f32.mrf.mxu0
      %v4562 = vadd.f32 %v4513, %v4561
      %4563 = vmatmul.bf16.gmra.mxu0 %v3225
      %v4564 = vpop.f32.mrf.mxu0
      %v4565 = vadd.f32 %v4516, %v4564
      %v4566 = vpop.f32.mrf.mxu0
      %v4567 = vadd.f32 %v4518, %v4566
      %4568 = vmatmul.bf16.gmra.mxu0 %v3241
      %v4569 = vpop.f32.mrf.mxu0
      %v4570 = vadd.f32 %v4521, %v4569
      %v4571 = vpop.f32.mrf.mxu0
      %v4572 = vadd.f32 %v4523, %v4571
      %4573 = vdwg.mxu0
      %4574 = vmatpush.bf16.msra.mxu0 %v4079
      %4575 = vmatpush.bf16.msra.mxu0 %v4078
      %4576 = vmatpush.bf16.msra.mxu0 %v4077
      %4577 = vmatpush.bf16.msra.mxu0 %v4076
      %4578 = vmatpush.bf16.msra.mxu0 %v4075
      %4579 = vmatpush.bf16.msra.mxu0 %v4074
      %4580 = vmatpush.bf16.msra.mxu0 %v4073
      %4581 = vmatpush.bf16.msra.mxu0 %v4072
      %4582 = vmatmul.bf16.gmra.mxu0 %v3130
      %v4583 = vpop.f32.mrf.mxu0
      %v4584 = vadd.f32 %v4535, %v4583
      %v4585 = vpop.f32.mrf.mxu0
      %v4586 = vadd.f32 %v4537, %v4585
      %4587 = vmatmul.bf16.gmra.mxu0 %v3146
      %v4588 = vpop.f32.mrf.mxu0
      %v4589 = vadd.f32 %v4540, %v4588
      %v4590 = vpop.f32.mrf.mxu0
      %v4591 = vadd.f32 %v4542, %v4590
      %4592 = vmatmul.bf16.gmra.mxu0 %v3162
      %v4593 = vpop.f32.mrf.mxu0
      %v4594 = vadd.f32 %v4545, %v4593
      %v4595 = vpop.f32.mrf.mxu0
      %v4596 = vadd.f32 %v4547, %v4595
      %4597 = vmatmul.bf16.gmra.mxu0 %v3178
      %v4598 = vpop.f32.mrf.mxu0
      %v4599 = vadd.f32 %v4550, %v4598
      %v4600 = vpop.f32.mrf.mxu0
      %v4601 = vadd.f32 %v4552, %v4600
      %4602 = vmatmul.bf16.gmra.mxu0 %v3194
      %v4603 = vpop.f32.mrf.mxu0
      %v4604 = vadd.f32 %v4555, %v4603
      %v4605 = vpop.f32.mrf.mxu0
      %v4606 = vadd.f32 %v4557, %v4605
      %4607 = vmatmul.bf16.gmra.mxu0 %v3210
      %v4608 = vpop.f32.mrf.mxu0
      %v4609 = vadd.f32 %v4560, %v4608
      %v4610 = vpop.f32.mrf.mxu0
      %v4611 = vadd.f32 %v4562, %v4610
      %4612 = vmatmul.bf16.gmra.mxu0 %v3226
      %v4613 = vpop.f32.mrf.mxu0
      %v4614 = vadd.f32 %v4565, %v4613
      %v4615 = vpop.f32.mrf.mxu0
      %v4616 = vadd.f32 %v4567, %v4615
      %4617 = vmatmul.bf16.gmra.mxu0 %v3242
      %v4618 = vpop.f32.mrf.mxu0
      %v4619 = vadd.f32 %v4570, %v4618
      %v4620 = vpop.f32.mrf.mxu0
      %v4621 = vadd.f32 %v4572, %v4620
      %4622 = vdwg.mxu0
      %4623 = vmatpush.bf16.msra.mxu0 %v4087
      %4624 = vmatpush.bf16.msra.mxu0 %v4086
      %4625 = vmatpush.bf16.msra.mxu0 %v4085
      %4626 = vmatpush.bf16.msra.mxu0 %v4084
      %4627 = vmatpush.bf16.msra.mxu0 %v4083
      %4628 = vmatpush.bf16.msra.mxu0 %v4082
      %4629 = vmatpush.bf16.msra.mxu0 %v4081
      %4630 = vmatpush.bf16.msra.mxu0 %v4080
      %4631 = vmatmul.bf16.gmra.mxu0 %v3131
      %v4632 = vpop.f32.mrf.mxu0
      %v4633 = vadd.f32 %v4584, %v4632
      %v4634 = vpop.f32.mrf.mxu0
      %v4635 = vadd.f32 %v4586, %v4634
      %4636 = vmatmul.bf16.gmra.mxu0 %v3147
      %v4637 = vpop.f32.mrf.mxu0
      %v4638 = vadd.f32 %v4589, %v4637
      %v4639 = vpop.f32.mrf.mxu0
      %v4640 = vadd.f32 %v4591, %v4639
      %4641 = vmatmul.bf16.gmra.mxu0 %v3163
      %v4642 = vpop.f32.mrf.mxu0
      %v4643 = vadd.f32 %v4594, %v4642
      %v4644 = vpop.f32.mrf.mxu0
      %v4645 = vadd.f32 %v4596, %v4644
      %4646 = vmatmul.bf16.gmra.mxu0 %v3179
      %v4647 = vpop.f32.mrf.mxu0
      %v4648 = vadd.f32 %v4599, %v4647
      %v4649 = vpop.f32.mrf.mxu0
      %v4650 = vadd.f32 %v4601, %v4649
      %4651 = vmatmul.bf16.gmra.mxu0 %v3195
      %v4652 = vpop.f32.mrf.mxu0
      %v4653 = vadd.f32 %v4604, %v4652
      %v4654 = vpop.f32.mrf.mxu0
      %v4655 = vadd.f32 %v4606, %v4654
      %4656 = vmatmul.bf16.gmra.mxu0 %v3211
      %v4657 = vpop.f32.mrf.mxu0
      %v4658 = vadd.f32 %v4609, %v4657
      %v4659 = vpop.f32.mrf.mxu0
      %v4660 = vadd.f32 %v4611, %v4659
      %4661 = vmatmul.bf16.gmra.mxu0 %v3227
      %v4662 = vpop.f32.mrf.mxu0
      %v4663 = vadd.f32 %v4614, %v4662
      %v4664 = vpop.f32.mrf.mxu0
      %v4665 = vadd.f32 %v4616, %v4664
      %4666 = vmatmul.bf16.gmra.mxu0 %v3243
      %v4667 = vpop.f32.mrf.mxu0
      %v4668 = vadd.f32 %v4619, %v4667
      %v4669 = vpop.f32.mrf.mxu0
      %v4670 = vadd.f32 %v4621, %v4669
      %4671 = vdwg.mxu0
      %4672 = vmatpush.bf16.msra.mxu0 %v4095
      %4673 = vmatpush.bf16.msra.mxu0 %v4094
      %4674 = vmatpush.bf16.msra.mxu0 %v4093
      %4675 = vmatpush.bf16.msra.mxu0 %v4092
      %4676 = vmatpush.bf16.msra.mxu0 %v4091
      %4677 = vmatpush.bf16.msra.mxu0 %v4090
      %4678 = vmatpush.bf16.msra.mxu0 %v4089
      %4679 = vmatpush.bf16.msra.mxu0 %v4088
      %4680 = vmatmul.bf16.gmra.mxu0 %v3132
      %v4681 = vpop.f32.mrf.mxu0
      %v4682 = vadd.f32 %v4633, %v4681
      %v4683 = vpop.f32.mrf.mxu0
      %v4684 = vadd.f32 %v4635, %v4683
      %4685 = vmatmul.bf16.gmra.mxu0 %v3148
      %v4686 = vpop.f32.mrf.mxu0
      %v4687 = vadd.f32 %v4638, %v4686
      %v4688 = vpop.f32.mrf.mxu0
      %v4689 = vadd.f32 %v4640, %v4688
      %4690 = vmatmul.bf16.gmra.mxu0 %v3164
      %v4691 = vpop.f32.mrf.mxu0
      %v4692 = vadd.f32 %v4643, %v4691
      %v4693 = vpop.f32.mrf.mxu0
      %v4694 = vadd.f32 %v4645, %v4693
      %4695 = vmatmul.bf16.gmra.mxu0 %v3180
      %v4696 = vpop.f32.mrf.mxu0
      %v4697 = vadd.f32 %v4648, %v4696
      %v4698 = vpop.f32.mrf.mxu0
      %v4699 = vadd.f32 %v4650, %v4698
      %4700 = vmatmul.bf16.gmra.mxu0 %v3196
      %v4701 = vpop.f32.mrf.mxu0
      %v4702 = vadd.f32 %v4653, %v4701
      %v4703 = vpop.f32.mrf.mxu0
      %v4704 = vadd.f32 %v4655, %v4703
      %4705 = vmatmul.bf16.gmra.mxu0 %v3212
      %v4706 = vpop.f32.mrf.mxu0
      %v4707 = vadd.f32 %v4658, %v4706
      %v4708 = vpop.f32.mrf.mxu0
      %v4709 = vadd.f32 %v4660, %v4708
      %4710 = vmatmul.bf16.gmra.mxu0 %v3228
      %v4711 = vpop.f32.mrf.mxu0
      %v4712 = vadd.f32 %v4663, %v4711
      %v4713 = vpop.f32.mrf.mxu0
      %v4714 = vadd.f32 %v4665, %v4713
      %4715 = vmatmul.bf16.gmra.mxu0 %v3244
      %v4716 = vpop.f32.mrf.mxu0
      %v4717 = vadd.f32 %v4668, %v4716
      %v4718 = vpop.f32.mrf.mxu0
      %v4719 = vadd.f32 %v4670, %v4718
      %4720 = vdwg.mxu0
      %4721 = vmatpush.bf16.msra.mxu0 %v4103
      %4722 = vmatpush.bf16.msra.mxu0 %v4102
      %4723 = vmatpush.bf16.msra.mxu0 %v4101
      %4724 = vmatpush.bf16.msra.mxu0 %v4100
      %4725 = vmatpush.bf16.msra.mxu0 %v4099
      %4726 = vmatpush.bf16.msra.mxu0 %v4098
      %4727 = vmatpush.bf16.msra.mxu0 %v4097
      %4728 = vmatpush.bf16.msra.mxu0 %v4096
      %4729 = vmatmul.bf16.gmra.mxu0 %v3133
      %v4730 = vpop.f32.mrf.mxu0
      %v4731 = vadd.f32 %v4682, %v4730
      %v4732 = vpop.f32.mrf.mxu0
      %v4733 = vadd.f32 %v4684, %v4732
      %4734 = vmatmul.bf16.gmra.mxu0 %v3149
      %v4735 = vpop.f32.mrf.mxu0
      %v4736 = vadd.f32 %v4687, %v4735
      %v4737 = vpop.f32.mrf.mxu0
      %v4738 = vadd.f32 %v4689, %v4737
      %4739 = vmatmul.bf16.gmra.mxu0 %v3165
      %v4740 = vpop.f32.mrf.mxu0
      %v4741 = vadd.f32 %v4692, %v4740
      %v4742 = vpop.f32.mrf.mxu0
      %v4743 = vadd.f32 %v4694, %v4742
      %4744 = vmatmul.bf16.gmra.mxu0 %v3181
      %v4745 = vpop.f32.mrf.mxu0
      %v4746 = vadd.f32 %v4697, %v4745
      %v4747 = vpop.f32.mrf.mxu0
      %v4748 = vadd.f32 %v4699, %v4747
      %4749 = vmatmul.bf16.gmra.mxu0 %v3197
      %v4750 = vpop.f32.mrf.mxu0
      %v4751 = vadd.f32 %v4702, %v4750
      %v4752 = vpop.f32.mrf.mxu0
      %v4753 = vadd.f32 %v4704, %v4752
      %4754 = vmatmul.bf16.gmra.mxu0 %v3213
      %v4755 = vpop.f32.mrf.mxu0
      %v4756 = vadd.f32 %v4707, %v4755
      %v4757 = vpop.f32.mrf.mxu0
      %v4758 = vadd.f32 %v4709, %v4757
      %4759 = vmatmul.bf16.gmra.mxu0 %v3229
      %v4760 = vpop.f32.mrf.mxu0
      %v4761 = vadd.f32 %v4712, %v4760
      %v4762 = vpop.f32.mrf.mxu0
      %v4763 = vadd.f32 %v4714, %v4762
      %4764 = vmatmul.bf16.gmra.mxu0 %v3245
      %v4765 = vpop.f32.mrf.mxu0
      %v4766 = vadd.f32 %v4717, %v4765
      %v4767 = vpop.f32.mrf.mxu0
      %v4768 = vadd.f32 %v4719, %v4767
      %4769 = vdwg.mxu0
      %4770 = vmatpush.bf16.msra.mxu0 %v4111
      %4771 = vmatpush.bf16.msra.mxu0 %v4110
      %4772 = vmatpush.bf16.msra.mxu0 %v4109
      %4773 = vmatpush.bf16.msra.mxu0 %v4108
      %4774 = vmatpush.bf16.msra.mxu0 %v4107
      %4775 = vmatpush.bf16.msra.mxu0 %v4106
      %4776 = vmatpush.bf16.msra.mxu0 %v4105
      %4777 = vmatpush.bf16.msra.mxu0 %v4104
      %4778 = vmatmul.bf16.gmra.mxu0 %v3134
      %v4779 = vpop.f32.mrf.mxu0
      %v4780 = vadd.f32 %v4731, %v4779
      %v4781 = vpop.f32.mrf.mxu0
      %v4782 = vadd.f32 %v4733, %v4781
      %4783 = vmatmul.bf16.gmra.mxu0 %v3150
      %v4784 = vpop.f32.mrf.mxu0
      %v4785 = vadd.f32 %v4736, %v4784
      %v4786 = vpop.f32.mrf.mxu0
      %v4787 = vadd.f32 %v4738, %v4786
      %4788 = vmatmul.bf16.gmra.mxu0 %v3166
      %v4789 = vpop.f32.mrf.mxu0
      %v4790 = vadd.f32 %v4741, %v4789
      %v4791 = vpop.f32.mrf.mxu0
      %v4792 = vadd.f32 %v4743, %v4791
      %4793 = vmatmul.bf16.gmra.mxu0 %v3182
      %v4794 = vpop.f32.mrf.mxu0
      %v4795 = vadd.f32 %v4746, %v4794
      %v4796 = vpop.f32.mrf.mxu0
      %v4797 = vadd.f32 %v4748, %v4796
      %4798 = vmatmul.bf16.gmra.mxu0 %v3198
      %v4799 = vpop.f32.mrf.mxu0
      %v4800 = vadd.f32 %v4751, %v4799
      %v4801 = vpop.f32.mrf.mxu0
      %v4802 = vadd.f32 %v4753, %v4801
      %4803 = vmatmul.bf16.gmra.mxu0 %v3214
      %v4804 = vpop.f32.mrf.mxu0
      %v4805 = vadd.f32 %v4756, %v4804
      %v4806 = vpop.f32.mrf.mxu0
      %v4807 = vadd.f32 %v4758, %v4806
      %4808 = vmatmul.bf16.gmra.mxu0 %v3230
      %v4809 = vpop.f32.mrf.mxu0
      %v4810 = vadd.f32 %v4761, %v4809
      %v4811 = vpop.f32.mrf.mxu0
      %v4812 = vadd.f32 %v4763, %v4811
      %4813 = vmatmul.bf16.gmra.mxu0 %v3246
      %v4814 = vpop.f32.mrf.mxu0
      %v4815 = vadd.f32 %v4766, %v4814
      %v4816 = vpop.f32.mrf.mxu0
      %v4817 = vadd.f32 %v4768, %v4816
      %4818 = vdwg.mxu0
      %4819 = vmatpush.bf16.msra.mxu0 %v4119
      %4820 = vmatpush.bf16.msra.mxu0 %v4118
      %4821 = vmatpush.bf16.msra.mxu0 %v4117
      %4822 = vmatpush.bf16.msra.mxu0 %v4116
      %4823 = vmatpush.bf16.msra.mxu0 %v4115
      %4824 = vmatpush.bf16.msra.mxu0 %v4114
      %4825 = vmatpush.bf16.msra.mxu0 %v4113
      %4826 = vmatpush.bf16.msra.mxu0 %v4112
      %4827 = vmatmul.bf16.gmra.mxu0 %v3135
      %v4828 = vpop.f32.mrf.mxu0
      %v4829 = vadd.f32 %v4780, %v4828
      %v4830 = vpop.f32.mrf.mxu0
      %v4831 = vadd.f32 %v4782, %v4830
      %4832 = vmatmul.bf16.gmra.mxu0 %v3151
      %v4833 = vpop.f32.mrf.mxu0
      %v4834 = vadd.f32 %v4785, %v4833
      %v4835 = vpop.f32.mrf.mxu0
      %v4836 = vadd.f32 %v4787, %v4835
      %4837 = vmatmul.bf16.gmra.mxu0 %v3167
      %v4838 = vpop.f32.mrf.mxu0
      %v4839 = vadd.f32 %v4790, %v4838
      %v4840 = vpop.f32.mrf.mxu0
      %v4841 = vadd.f32 %v4792, %v4840
      %4842 = vmatmul.bf16.gmra.mxu0 %v3183
      %v4843 = vpop.f32.mrf.mxu0
      %v4844 = vadd.f32 %v4795, %v4843
      %v4845 = vpop.f32.mrf.mxu0
      %v4846 = vadd.f32 %v4797, %v4845
      %4847 = vmatmul.bf16.gmra.mxu0 %v3199
      %v4848 = vpop.f32.mrf.mxu0
      %v4849 = vadd.f32 %v4800, %v4848
      %v4850 = vpop.f32.mrf.mxu0
      %v4851 = vadd.f32 %v4802, %v4850
      %4852 = vmatmul.bf16.gmra.mxu0 %v3215
      %v4853 = vpop.f32.mrf.mxu0
      %v4854 = vadd.f32 %v4805, %v4853
      %v4855 = vpop.f32.mrf.mxu0
      %v4856 = vadd.f32 %v4807, %v4855
      %4857 = vmatmul.bf16.gmra.mxu0 %v3231
      %v4858 = vpop.f32.mrf.mxu0
      %v4859 = vadd.f32 %v4810, %v4858
      %v4860 = vpop.f32.mrf.mxu0
      %v4861 = vadd.f32 %v4812, %v4860
      %4862 = vmatmul.bf16.gmra.mxu0 %v3247
      %v4863 = vpop.f32.mrf.mxu0
      %v4864 = vadd.f32 %v4815, %v4863
      %v4865 = vpop.f32.mrf.mxu0
      %v4866 = vadd.f32 %v4817, %v4865
      %4867 = vdwg.mxu0
      %4868 = vmatpush.bf16.msra.mxu0 %v4127
      %4869 = vmatpush.bf16.msra.mxu0 %v4126
      %4870 = vmatpush.bf16.msra.mxu0 %v4125
      %4871 = vmatpush.bf16.msra.mxu0 %v4124
      %4872 = vmatpush.bf16.msra.mxu0 %v4123
      %4873 = vmatpush.bf16.msra.mxu0 %v4122
      %4874 = vmatpush.bf16.msra.mxu0 %v4121
      %4875 = vmatpush.bf16.msra.mxu0 %v4120
      %4876 = vmatmul.bf16.gmra.mxu0 %v3136
      %v4877 = vpop.f32.mrf.mxu0
      %v4878 = vadd.f32 %v4829, %v4877
      %v4879 = vpop.f32.mrf.mxu0
      %v4880 = vadd.f32 %v4831, %v4879
      %4881 = vmatmul.bf16.gmra.mxu0 %v3152
      %v4882 = vpop.f32.mrf.mxu0
      %v4883 = vadd.f32 %v4834, %v4882
      %v4884 = vpop.f32.mrf.mxu0
      %v4885 = vadd.f32 %v4836, %v4884
      %4886 = vmatmul.bf16.gmra.mxu0 %v3168
      %v4887 = vpop.f32.mrf.mxu0
      %v4888 = vadd.f32 %v4839, %v4887
      %v4889 = vpop.f32.mrf.mxu0
      %v4890 = vadd.f32 %v4841, %v4889
      %4891 = vmatmul.bf16.gmra.mxu0 %v3184
      %v4892 = vpop.f32.mrf.mxu0
      %v4893 = vadd.f32 %v4844, %v4892
      %v4894 = vpop.f32.mrf.mxu0
      %v4895 = vadd.f32 %v4846, %v4894
      %4896 = vmatmul.bf16.gmra.mxu0 %v3200
      %v4897 = vpop.f32.mrf.mxu0
      %v4898 = vadd.f32 %v4849, %v4897
      %v4899 = vpop.f32.mrf.mxu0
      %v4900 = vadd.f32 %v4851, %v4899
      %4901 = vmatmul.bf16.gmra.mxu0 %v3216
      %v4902 = vpop.f32.mrf.mxu0
      %v4903 = vadd.f32 %v4854, %v4902
      %v4904 = vpop.f32.mrf.mxu0
      %v4905 = vadd.f32 %v4856, %v4904
      %4906 = vmatmul.bf16.gmra.mxu0 %v3232
      %v4907 = vpop.f32.mrf.mxu0
      %v4908 = vadd.f32 %v4859, %v4907
      %v4909 = vpop.f32.mrf.mxu0
      %v4910 = vadd.f32 %v4861, %v4909
      %4911 = vmatmul.bf16.gmra.mxu0 %v3248
      %v4912 = vpop.f32.mrf.mxu0
      %v4913 = vadd.f32 %v4864, %v4912
      %v4914 = vpop.f32.mrf.mxu0
      %v4915 = vadd.f32 %v4866, %v4914
      %4916 = vdwg.mxu0
      %4917 = vmatpush.bf16.msra.mxu0 %v4135
      %4918 = vmatpush.bf16.msra.mxu0 %v4134
      %4919 = vmatpush.bf16.msra.mxu0 %v4133
      %4920 = vmatpush.bf16.msra.mxu0 %v4132
      %4921 = vmatpush.bf16.msra.mxu0 %v4131
      %4922 = vmatpush.bf16.msra.mxu0 %v4130
      %4923 = vmatpush.bf16.msra.mxu0 %v4129
      %4924 = vmatpush.bf16.msra.mxu0 %v4128
      %4925 = vmatmul.bf16.gmra.mxu0 %v3137
      %v4926 = vpop.f32.mrf.mxu0
      %v4927 = vadd.f32 %v4878, %v4926
      %v4928 = vpop.f32.mrf.mxu0
      %v4929 = vadd.f32 %v4880, %v4928
      %4930 = vmatmul.bf16.gmra.mxu0 %v3153
      %v4931 = vpop.f32.mrf.mxu0
      %v4932 = vadd.f32 %v4883, %v4931
      %v4933 = vpop.f32.mrf.mxu0
      %v4934 = vadd.f32 %v4885, %v4933
      %4935 = vmatmul.bf16.gmra.mxu0 %v3169
      %v4936 = vpop.f32.mrf.mxu0
      %v4937 = vadd.f32 %v4888, %v4936
      %v4938 = vpop.f32.mrf.mxu0
      %v4939 = vadd.f32 %v4890, %v4938
      %4940 = vmatmul.bf16.gmra.mxu0 %v3185
      %v4941 = vpop.f32.mrf.mxu0
      %v4942 = vadd.f32 %v4893, %v4941
      %v4943 = vpop.f32.mrf.mxu0
      %v4944 = vadd.f32 %v4895, %v4943
      %4945 = vmatmul.bf16.gmra.mxu0 %v3201
      %v4946 = vpop.f32.mrf.mxu0
      %v4947 = vadd.f32 %v4898, %v4946
      %v4948 = vpop.f32.mrf.mxu0
      %v4949 = vadd.f32 %v4900, %v4948
      %4950 = vmatmul.bf16.gmra.mxu0 %v3217
      %v4951 = vpop.f32.mrf.mxu0
      %v4952 = vadd.f32 %v4903, %v4951
      %v4953 = vpop.f32.mrf.mxu0
      %v4954 = vadd.f32 %v4905, %v4953
      %4955 = vmatmul.bf16.gmra.mxu0 %v3233
      %v4956 = vpop.f32.mrf.mxu0
      %v4957 = vadd.f32 %v4908, %v4956
      %v4958 = vpop.f32.mrf.mxu0
      %v4959 = vadd.f32 %v4910, %v4958
      %4960 = vmatmul.bf16.gmra.mxu0 %v3249
      %v4961 = vpop.f32.mrf.mxu0
      %v4962 = vadd.f32 %v4913, %v4961
      %v4963 = vpop.f32.mrf.mxu0
      %v4964 = vadd.f32 %v4915, %v4963
      %4965 = vdwg.mxu0
      %4966 = vmatpush.bf16.msra.mxu0 %v4143
      %4967 = vmatpush.bf16.msra.mxu0 %v4142
      %4968 = vmatpush.bf16.msra.mxu0 %v4141
      %4969 = vmatpush.bf16.msra.mxu0 %v4140
      %4970 = vmatpush.bf16.msra.mxu0 %v4139
      %4971 = vmatpush.bf16.msra.mxu0 %v4138
      %4972 = vmatpush.bf16.msra.mxu0 %v4137
      %4973 = vmatpush.bf16.msra.mxu0 %v4136
      %4974 = vmatmul.bf16.gmra.mxu0 %v3138
      %v4975 = vpop.f32.mrf.mxu0
      %v4976 = vadd.f32 %v4927, %v4975
      %v4977 = vpop.f32.mrf.mxu0
      %v4978 = vadd.f32 %v4929, %v4977
      %4979 = vmatmul.bf16.gmra.mxu0 %v3154
      %v4980 = vpop.f32.mrf.mxu0
      %v4981 = vadd.f32 %v4932, %v4980
      %v4982 = vpop.f32.mrf.mxu0
      %v4983 = vadd.f32 %v4934, %v4982
      %4984 = vmatmul.bf16.gmra.mxu0 %v3170
      %v4985 = vpop.f32.mrf.mxu0
      %v4986 = vadd.f32 %v4937, %v4985
      %v4987 = vpop.f32.mrf.mxu0
      %v4988 = vadd.f32 %v4939, %v4987
      %4989 = vmatmul.bf16.gmra.mxu0 %v3186
      %v4990 = vpop.f32.mrf.mxu0
      %v4991 = vadd.f32 %v4942, %v4990
      %v4992 = vpop.f32.mrf.mxu0
      %v4993 = vadd.f32 %v4944, %v4992
      %4994 = vmatmul.bf16.gmra.mxu0 %v3202
      %v4995 = vpop.f32.mrf.mxu0
      %v4996 = vadd.f32 %v4947, %v4995
      %v4997 = vpop.f32.mrf.mxu0
      %v4998 = vadd.f32 %v4949, %v4997
      %4999 = vmatmul.bf16.gmra.mxu0 %v3218
      %v5000 = vpop.f32.mrf.mxu0
      %v5001 = vadd.f32 %v4952, %v5000
      %v5002 = vpop.f32.mrf.mxu0
      %v5003 = vadd.f32 %v4954, %v5002
      %5004 = vmatmul.bf16.gmra.mxu0 %v3234
      %v5005 = vpop.f32.mrf.mxu0
      %v5006 = vadd.f32 %v4957, %v5005
      %v5007 = vpop.f32.mrf.mxu0
      %v5008 = vadd.f32 %v4959, %v5007
      %5009 = vmatmul.bf16.gmra.mxu0 %v3250
      %v5010 = vpop.f32.mrf.mxu0
      %v5011 = vadd.f32 %v4962, %v5010
      %v5012 = vpop.f32.mrf.mxu0
      %v5013 = vadd.f32 %v4964, %v5012
      %5014 = vdwg.mxu0
      %5015 = vmatpush.bf16.msra.mxu0 %v4151
      %5016 = vmatpush.bf16.msra.mxu0 %v4150
      %5017 = vmatpush.bf16.msra.mxu0 %v4149
      %5018 = vmatpush.bf16.msra.mxu0 %v4148
      %5019 = vmatpush.bf16.msra.mxu0 %v4147
      %5020 = vmatpush.bf16.msra.mxu0 %v4146
      %5021 = vmatpush.bf16.msra.mxu0 %v4145
      %5022 = vmatpush.bf16.msra.mxu0 %v4144
      %5023 = vmatmul.bf16.gmra.mxu0 %v3139
      %v5024 = vpop.f32.mrf.mxu0
      %v5025 = vadd.f32 %v4976, %v5024
      %v5026 = vpop.f32.mrf.mxu0
      %v5027 = vadd.f32 %v4978, %v5026
      %5028 = vmatmul.bf16.gmra.mxu0 %v3155
      %v5029 = vpop.f32.mrf.mxu0
      %v5030 = vadd.f32 %v4981, %v5029
      %v5031 = vpop.f32.mrf.mxu0
      %v5032 = vadd.f32 %v4983, %v5031
      %5033 = vmatmul.bf16.gmra.mxu0 %v3171
      %v5034 = vpop.f32.mrf.mxu0
      %v5035 = vadd.f32 %v4986, %v5034
      %v5036 = vpop.f32.mrf.mxu0
      %v5037 = vadd.f32 %v4988, %v5036
      %5038 = vmatmul.bf16.gmra.mxu0 %v3187
      %v5039 = vpop.f32.mrf.mxu0
      %v5040 = vadd.f32 %v4991, %v5039
      %v5041 = vpop.f32.mrf.mxu0
      %v5042 = vadd.f32 %v4993, %v5041
      %5043 = vmatmul.bf16.gmra.mxu0 %v3203
      %v5044 = vpop.f32.mrf.mxu0
      %v5045 = vadd.f32 %v4996, %v5044
      %v5046 = vpop.f32.mrf.mxu0
      %v5047 = vadd.f32 %v4998, %v5046
      %5048 = vmatmul.bf16.gmra.mxu0 %v3219
      %v5049 = vpop.f32.mrf.mxu0
      %v5050 = vadd.f32 %v5001, %v5049
      %v5051 = vpop.f32.mrf.mxu0
      %v5052 = vadd.f32 %v5003, %v5051
      %5053 = vmatmul.bf16.gmra.mxu0 %v3235
      %v5054 = vpop.f32.mrf.mxu0
      %v5055 = vadd.f32 %v5006, %v5054
      %v5056 = vpop.f32.mrf.mxu0
      %v5057 = vadd.f32 %v5008, %v5056
      %5058 = vmatmul.bf16.gmra.mxu0 %v3251
      %v5059 = vpop.f32.mrf.mxu0
      %v5060 = vadd.f32 %v5011, %v5059
      %v5061 = vpop.f32.mrf.mxu0
      %v5062 = vadd.f32 %v5013, %v5061
      %5063 = vdwg.mxu0
      %v5064 = vadd.f32 %v1808, %v5025
      %v5065 = vadd.f32 %v1809, %v5027
      %v5066 = vadd.f32 %v1810, %v5030
      %v5067 = vadd.f32 %v1811, %v5032
      %v5068 = vadd.f32 %v1812, %v5035
      %v5069 = vadd.f32 %v1813, %v5037
      %v5070 = vadd.f32 %v1814, %v5040
      %v5071 = vadd.f32 %v1815, %v5042
      %v5072 = vadd.f32 %v1816, %v5045
      %v5073 = vadd.f32 %v1817, %v5047
      %v5074 = vadd.f32 %v1818, %v5050
      %v5075 = vadd.f32 %v1819, %v5052
      %v5076 = vadd.f32 %v1820, %v5055
      %v5077 = vadd.f32 %v1821, %v5057
      %v5078 = vadd.f32 %v1822, %v5060
      %v5079 = vadd.f32 %v1823, %v5062
      %v5080 = vld [vmem:[%s11] sm:$0x1]
      %v5081 = vld [vmem:[%s12] sm:$0x1]
      %v5082 = vsel %vm1426, %v5064, 0.0
      %5083 = vadd.xlane.f32.xlu0 %v5082
      %v5084 = vpop.xlane.xlu0 %5083
      %v5085 = vsel %vm1426, %v5065, 0.0
      %5086 = vadd.xlane.f32.xlu0 %v5085
      %v5087 = vpop.xlane.xlu0 %5086
      %v5088 = vsel %vm1426, %v5066, 0.0
      %5089 = vadd.xlane.f32.xlu0 %v5088
      %v5090 = vpop.xlane.xlu0 %5089
      %v5091 = vsel %vm1426, %v5067, 0.0
      %5092 = vadd.xlane.f32.xlu0 %v5091
      %v5093 = vpop.xlane.xlu0 %5092
      %v5094 = vsel %vm1426, %v5068, 0.0
      %5095 = vadd.xlane.f32.xlu0 %v5094
      %v5096 = vpop.xlane.xlu0 %5095
      %v5097 = vsel %vm1426, %v5069, 0.0
      %5098 = vadd.xlane.f32.xlu0 %v5097
      %v5099 = vpop.xlane.xlu0 %5098
      %v5100 = vsel %vm1426, %v5070, 0.0
      %5101 = vadd.xlane.f32.xlu0 %v5100
      %v5102 = vpop.xlane.xlu0 %5101
      %v5103 = vsel %vm1426, %v5071, 0.0
      %5104 = vadd.xlane.f32.xlu0 %v5103
      %v5105 = vpop.xlane.xlu0 %5104
      %v5106 = vsel %vm1426, %v5072, 0.0
      %5107 = vadd.xlane.f32.xlu0 %v5106
      %v5108 = vpop.xlane.xlu0 %5107
      %v5109 = vsel %vm1426, %v5073, 0.0
      %5110 = vadd.xlane.f32.xlu0 %v5109
      %v5111 = vpop.xlane.xlu0 %5110
      %v5112 = vsel %vm1426, %v5074, 0.0
      %5113 = vadd.xlane.f32.xlu0 %v5112
      %v5114 = vpop.xlane.xlu0 %5113
      %v5115 = vsel %vm1426, %v5075, 0.0
      %5116 = vadd.xlane.f32.xlu0 %v5115
      %v5117 = vpop.xlane.xlu0 %5116
      %v5118 = vsel %vm1426, %v5076, 0.0
      %5119 = vadd.xlane.f32.xlu0 %v5118
      %v5120 = vpop.xlane.xlu0 %5119
      %v5121 = vsel %vm1426, %v5077, 0.0
      %5122 = vadd.xlane.f32.xlu0 %v5121
      %v5123 = vpop.xlane.xlu0 %5122
      %v5124 = vsel %vm1426, %v5078, 0.0
      %5125 = vadd.xlane.f32.xlu0 %v5124
      %v5126 = vpop.xlane.xlu0 %5125
      %v5127 = vsel %vm1426, %v5079, 0.0
      %5128 = vadd.xlane.f32.xlu0 %v5127
      %v5129 = vpop.xlane.xlu0 %5128
      %v5130 = vmul.f32 %v5084, %v1481
      %v5131 = vmul.f32 %v5087, %v1481
      %v5132 = vmul.f32 %v5090, %v1481
      %v5133 = vmul.f32 %v5093, %v1481
      %v5134 = vmul.f32 %v5096, %v1481
      %v5135 = vmul.f32 %v5099, %v1481
      %v5136 = vmul.f32 %v5102, %v1481
      %v5137 = vmul.f32 %v5105, %v1481
      %v5138 = vmul.f32 %v5108, %v1481
      %v5139 = vmul.f32 %v5111, %v1481
      %v5140 = vmul.f32 %v5114, %v1481
      %v5141 = vmul.f32 %v5117, %v1481
      %v5142 = vmul.f32 %v5120, %v1481
      %v5143 = vmul.f32 %v5123, %v1481
      %v5144 = vmul.f32 %v5126, %v1481
      %v5145 = vmul.f32 %v5129, %v1481
      %v5146 = vsub.f32 %v5064, %v5130
      %v5147 = vsub.f32 %v5065, %v5131
      %v5148 = vsub.f32 %v5066, %v5132
      %v5149 = vsub.f32 %v5067, %v5133
      %v5150 = vsub.f32 %v5068, %v5134
      %v5151 = vsub.f32 %v5069, %v5135
      %v5152 = vsub.f32 %v5070, %v5136
      %v5153 = vsub.f32 %v5071, %v5137
      %v5154 = vsub.f32 %v5072, %v5138
      %v5155 = vsub.f32 %v5073, %v5139
      %v5156 = vsub.f32 %v5074, %v5140
      %v5157 = vsub.f32 %v5075, %v5141
      %v5158 = vsub.f32 %v5076, %v5142
      %v5159 = vsub.f32 %v5077, %v5143
      %v5160 = vsub.f32 %v5078, %v5144
      %v5161 = vsub.f32 %v5079, %v5145
      %v5162 = vmul.f32 %v5146, %v5146
      %v5163 = vmul.f32 %v5147, %v5147
      %v5164 = vmul.f32 %v5148, %v5148
      %v5165 = vmul.f32 %v5149, %v5149
      %v5166 = vmul.f32 %v5150, %v5150
      %v5167 = vmul.f32 %v5151, %v5151
      %v5168 = vmul.f32 %v5152, %v5152
      %v5169 = vmul.f32 %v5153, %v5153
      %v5170 = vmul.f32 %v5154, %v5154
      %v5171 = vmul.f32 %v5155, %v5155
      %v5172 = vmul.f32 %v5156, %v5156
      %v5173 = vmul.f32 %v5157, %v5157
      %v5174 = vmul.f32 %v5158, %v5158
      %v5175 = vmul.f32 %v5159, %v5159
      %v5176 = vmul.f32 %v5160, %v5160
      %v5177 = vmul.f32 %v5161, %v5161
      %v5178 = vsel %vm1426, %v5162, 0.0
      %5179 = vadd.xlane.f32.xlu0 %v5178
      %v5180 = vpop.xlane.xlu0 %5179
      %v5181 = vsel %vm1426, %v5163, 0.0
      %5182 = vadd.xlane.f32.xlu0 %v5181
      %v5183 = vpop.xlane.xlu0 %5182
      %v5184 = vsel %vm1426, %v5164, 0.0
      %5185 = vadd.xlane.f32.xlu0 %v5184
      %v5186 = vpop.xlane.xlu0 %5185
      %v5187 = vsel %vm1426, %v5165, 0.0
      %5188 = vadd.xlane.f32.xlu0 %v5187
      %v5189 = vpop.xlane.xlu0 %5188
      %v5190 = vsel %vm1426, %v5166, 0.0
      %5191 = vadd.xlane.f32.xlu0 %v5190
      %v5192 = vpop.xlane.xlu0 %5191
      %v5193 = vsel %vm1426, %v5167, 0.0
      %5194 = vadd.xlane.f32.xlu0 %v5193
      %v5195 = vpop.xlane.xlu0 %5194
      %v5196 = vsel %vm1426, %v5168, 0.0
      %5197 = vadd.xlane.f32.xlu0 %v5196
      %v5198 = vpop.xlane.xlu0 %5197
      %v5199 = vsel %vm1426, %v5169, 0.0
      %5200 = vadd.xlane.f32.xlu0 %v5199
      %v5201 = vpop.xlane.xlu0 %5200
      %v5202 = vsel %vm1426, %v5170, 0.0
      %5203 = vadd.xlane.f32.xlu0 %v5202
      %v5204 = vpop.xlane.xlu0 %5203
      %v5205 = vsel %vm1426, %v5171, 0.0
      %5206 = vadd.xlane.f32.xlu0 %v5205
      %v5207 = vpop.xlane.xlu0 %5206
      %v5208 = vsel %vm1426, %v5172, 0.0
      %5209 = vadd.xlane.f32.xlu0 %v5208
      %v5210 = vpop.xlane.xlu0 %5209
      %v5211 = vsel %vm1426, %v5173, 0.0
      %5212 = vadd.xlane.f32.xlu0 %v5211
      %v5213 = vpop.xlane.xlu0 %5212
      %v5214 = vsel %vm1426, %v5174, 0.0
      %5215 = vadd.xlane.f32.xlu0 %v5214
      %v5216 = vpop.xlane.xlu0 %5215
      %v5217 = vsel %vm1426, %v5175, 0.0
      %5218 = vadd.xlane.f32.xlu0 %v5217
      %v5219 = vpop.xlane.xlu0 %5218
      %v5220 = vsel %vm1426, %v5176, 0.0
      %5221 = vadd.xlane.f32.xlu0 %v5220
      %v5222 = vpop.xlane.xlu0 %5221
      %v5223 = vsel %vm1426, %v5177, 0.0
      %5224 = vadd.xlane.f32.xlu0 %v5223
      %v5225 = vpop.xlane.xlu0 %5224
      %v5226 = vmul.f32 %v5180, %v1481
      %v5227 = vmul.f32 %v5183, %v1481
      %v5228 = vmul.f32 %v5186, %v1481
      %v5229 = vmul.f32 %v5189, %v1481
      %v5230 = vmul.f32 %v5192, %v1481
      %v5231 = vmul.f32 %v5195, %v1481
      %v5232 = vmul.f32 %v5198, %v1481
      %v5233 = vmul.f32 %v5201, %v1481
      %v5234 = vmul.f32 %v5204, %v1481
      %v5235 = vmul.f32 %v5207, %v1481
      %v5236 = vmul.f32 %v5210, %v1481
      %v5237 = vmul.f32 %v5213, %v1481
      %v5238 = vmul.f32 %v5216, %v1481
      %v5239 = vmul.f32 %v5219, %v1481
      %v5240 = vmul.f32 %v5222, %v1481
      %v5241 = vmul.f32 %v5225, %v1481
      %v5242 = vadd.f32 %v5226, 1e-05
      %v5243 = vadd.f32 %v5227, 1e-05
      %v5244 = vadd.f32 %v5228, 1e-05
      %v5245 = vadd.f32 %v5229, 1e-05
      %v5246 = vadd.f32 %v5230, 1e-05
      %v5247 = vadd.f32 %v5231, 1e-05
      %v5248 = vadd.f32 %v5232, 1e-05
      %v5249 = vadd.f32 %v5233, 1e-05
      %v5250 = vadd.f32 %v5234, 1e-05
      %v5251 = vadd.f32 %v5235, 1e-05
      %v5252 = vadd.f32 %v5236, 1e-05
      %v5253 = vadd.f32 %v5237, 1e-05
      %v5254 = vadd.f32 %v5238, 1e-05
      %v5255 = vadd.f32 %v5239, 1e-05
      %v5256 = vadd.f32 %v5240, 1e-05
      %v5257 = vadd.f32 %v5241, 1e-05
      %v5258 = vrsqrt.pop %v5242
      %v5259 = vmul.f32 %v5258, %v5242
      %v5260 = vmul.f32 %v5259, %v5258
      %v5261 = vmul.f32 0.5, %v5260
      %v5262 = vsub.f32 1.5, %v5261
      %v5263 = vmul.f32 %v5258, %v5262
      %vm5264 = vweird.f32 %v5242
      %vm5265 = vweird.f32 %v5258
      %vm5266 = vmor %vm5264, %vm5265
      %v5267 = vsel %vm5266, %v5258, %v5263
      %v5268 = vrsqrt.pop %v5243
      %v5269 = vmul.f32 %v5268, %v5243
      %v5270 = vmul.f32 %v5269, %v5268
      %v5271 = vmul.f32 0.5, %v5270
      %v5272 = vsub.f32 1.5, %v5271
      %v5273 = vmul.f32 %v5268, %v5272
      %vm5274 = vweird.f32 %v5243
      %vm5275 = vweird.f32 %v5268
      %vm5276 = vmor %vm5274, %vm5275
      %v5277 = vsel %vm5276, %v5268, %v5273
      %v5278 = vrsqrt.pop %v5244
      %v5279 = vmul.f32 %v5278, %v5244
      %v5280 = vmul.f32 %v5279, %v5278
      %v5281 = vmul.f32 0.5, %v5280
      %v5282 = vsub.f32 1.5, %v5281
      %v5283 = vmul.f32 %v5278, %v5282
      %vm5284 = vweird.f32 %v5244
      %vm5285 = vweird.f32 %v5278
      %vm5286 = vmor %vm5284, %vm5285
      %v5287 = vsel %vm5286, %v5278, %v5283
      %v5288 = vrsqrt.pop %v5245
      %v5289 = vmul.f32 %v5288, %v5245
      %v5290 = vmul.f32 %v5289, %v5288
      %v5291 = vmul.f32 0.5, %v5290
      %v5292 = vsub.f32 1.5, %v5291
      %v5293 = vmul.f32 %v5288, %v5292
      %vm5294 = vweird.f32 %v5245
      %vm5295 = vweird.f32 %v5288
      %vm5296 = vmor %vm5294, %vm5295
      %v5297 = vsel %vm5296, %v5288, %v5293
      %v5298 = vrsqrt.pop %v5246
      %v5299 = vmul.f32 %v5298, %v5246
      %v5300 = vmul.f32 %v5299, %v5298
      %v5301 = vmul.f32 0.5, %v5300
      %v5302 = vsub.f32 1.5, %v5301
      %v5303 = vmul.f32 %v5298, %v5302
      %vm5304 = vweird.f32 %v5246
      %vm5305 = vweird.f32 %v5298
      %vm5306 = vmor %vm5304, %vm5305
      %v5307 = vsel %vm5306, %v5298, %v5303
      %v5308 = vrsqrt.pop %v5247
      %v5309 = vmul.f32 %v5308, %v5247
      %v5310 = vmul.f32 %v5309, %v5308
      %v5311 = vmul.f32 0.5, %v5310
      %v5312 = vsub.f32 1.5, %v5311
      %v5313 = vmul.f32 %v5308, %v5312
      %vm5314 = vweird.f32 %v5247
      %vm5315 = vweird.f32 %v5308
      %vm5316 = vmor %vm5314, %vm5315
      %v5317 = vsel %vm5316, %v5308, %v5313
      %v5318 = vrsqrt.pop %v5248
      %v5319 = vmul.f32 %v5318, %v5248
      %v5320 = vmul.f32 %v5319, %v5318
      %v5321 = vmul.f32 0.5, %v5320
      %v5322 = vsub.f32 1.5, %v5321
      %v5323 = vmul.f32 %v5318, %v5322
      %vm5324 = vweird.f32 %v5248
      %vm5325 = vweird.f32 %v5318
      %vm5326 = vmor %vm5324, %vm5325
      %v5327 = vsel %vm5326, %v5318, %v5323
      %v5328 = vrsqrt.pop %v5249
      %v5329 = vmul.f32 %v5328, %v5249
      %v5330 = vmul.f32 %v5329, %v5328
      %v5331 = vmul.f32 0.5, %v5330
      %v5332 = vsub.f32 1.5, %v5331
      %v5333 = vmul.f32 %v5328, %v5332
      %vm5334 = vweird.f32 %v5249
      %vm5335 = vweird.f32 %v5328
      %vm5336 = vmor %vm5334, %vm5335
      %v5337 = vsel %vm5336, %v5328, %v5333
      %v5338 = vrsqrt.pop %v5250
      %v5339 = vmul.f32 %v5338, %v5250
      %v5340 = vmul.f32 %v5339, %v5338
      %v5341 = vmul.f32 0.5, %v5340
      %v5342 = vsub.f32 1.5, %v5341
      %v5343 = vmul.f32 %v5338, %v5342
      %vm5344 = vweird.f32 %v5250
      %vm5345 = vweird.f32 %v5338
      %vm5346 = vmor %vm5344, %vm5345
      %v5347 = vsel %vm5346, %v5338, %v5343
      %v5348 = vrsqrt.pop %v5251
      %v5349 = vmul.f32 %v5348, %v5251
      %v5350 = vmul.f32 %v5349, %v5348
      %v5351 = vmul.f32 0.5, %v5350
      %v5352 = vsub.f32 1.5, %v5351
      %v5353 = vmul.f32 %v5348, %v5352
      %vm5354 = vweird.f32 %v5251
      %vm5355 = vweird.f32 %v5348
      %vm5356 = vmor %vm5354, %vm5355
      %v5357 = vsel %vm5356, %v5348, %v5353
      %v5358 = vrsqrt.pop %v5252
      %v5359 = vmul.f32 %v5358, %v5252
      %v5360 = vmul.f32 %v5359, %v5358
      %v5361 = vmul.f32 0.5, %v5360
      %v5362 = vsub.f32 1.5, %v5361
      %v5363 = vmul.f32 %v5358, %v5362
      %vm5364 = vweird.f32 %v5252
      %vm5365 = vweird.f32 %v5358
      %vm5366 = vmor %vm5364, %vm5365
      %v5367 = vsel %vm5366, %v5358, %v5363
      %v5368 = vrsqrt.pop %v5253
      %v5369 = vmul.f32 %v5368, %v5253
      %v5370 = vmul.f32 %v5369, %v5368
      %v5371 = vmul.f32 0.5, %v5370
      %v5372 = vsub.f32 1.5, %v5371
      %v5373 = vmul.f32 %v5368, %v5372
      %vm5374 = vweird.f32 %v5253
      %vm5375 = vweird.f32 %v5368
      %vm5376 = vmor %vm5374, %vm5375
      %v5377 = vsel %vm5376, %v5368, %v5373
      %v5378 = vrsqrt.pop %v5254
      %v5379 = vmul.f32 %v5378, %v5254
      %v5380 = vmul.f32 %v5379, %v5378
      %v5381 = vmul.f32 0.5, %v5380
      %v5382 = vsub.f32 1.5, %v5381
      %v5383 = vmul.f32 %v5378, %v5382
      %vm5384 = vweird.f32 %v5254
      %vm5385 = vweird.f32 %v5378
      %vm5386 = vmor %vm5384, %vm5385
      %v5387 = vsel %vm5386, %v5378, %v5383
      %v5388 = vrsqrt.pop %v5255
      %v5389 = vmul.f32 %v5388, %v5255
      %v5390 = vmul.f32 %v5389, %v5388
      %v5391 = vmul.f32 0.5, %v5390
      %v5392 = vsub.f32 1.5, %v5391
      %v5393 = vmul.f32 %v5388, %v5392
      %vm5394 = vweird.f32 %v5255
      %vm5395 = vweird.f32 %v5388
      %vm5396 = vmor %vm5394, %vm5395
      %v5397 = vsel %vm5396, %v5388, %v5393
      %v5398 = vrsqrt.pop %v5256
      %v5399 = vmul.f32 %v5398, %v5256
      %v5400 = vmul.f32 %v5399, %v5398
      %v5401 = vmul.f32 0.5, %v5400
      %v5402 = vsub.f32 1.5, %v5401
      %v5403 = vmul.f32 %v5398, %v5402
      %vm5404 = vweird.f32 %v5256
      %vm5405 = vweird.f32 %v5398
      %vm5406 = vmor %vm5404, %vm5405
      %v5407 = vsel %vm5406, %v5398, %v5403
      %v5408 = vrsqrt.pop %v5257
      %v5409 = vmul.f32 %v5408, %v5257
      %v5410 = vmul.f32 %v5409, %v5408
      %v5411 = vmul.f32 0.5, %v5410
      %v5412 = vsub.f32 1.5, %v5411
      %v5413 = vmul.f32 %v5408, %v5412
      %vm5414 = vweird.f32 %v5257
      %vm5415 = vweird.f32 %v5408
      %vm5416 = vmor %vm5414, %vm5415
      %v5417 = vsel %vm5416, %v5408, %v5413
      %v5418 = vmul.f32 %v5146, %v5267
      %v5419 = vmul.f32 %v5147, %v5277
      %v5420 = vmul.f32 %v5148, %v5287
      %v5421 = vmul.f32 %v5149, %v5297
      %v5422 = vmul.f32 %v5150, %v5307
      %v5423 = vmul.f32 %v5151, %v5317
      %v5424 = vmul.f32 %v5152, %v5327
      %v5425 = vmul.f32 %v5153, %v5337
      %v5426 = vmul.f32 %v5154, %v5347
      %v5427 = vmul.f32 %v5155, %v5357
      %v5428 = vmul.f32 %v5156, %v5367
      %v5429 = vmul.f32 %v5157, %v5377
      %v5430 = vmul.f32 %v5158, %v5387
      %v5431 = vmul.f32 %v5159, %v5397
      %v5432 = vmul.f32 %v5160, %v5407
      %v5433 = vmul.f32 %v5161, %v5417
      %v5435 = vperm.slane %v5080, 0
      %v5437 = vmul.f32 %v5418, %v5435
      %v5438 = vmul.f32 %v5419, %v5435
      %v5439 = vmul.f32 %v5420, %v5435
      %v5440 = vmul.f32 %v5421, %v5435
      %v5441 = vmul.f32 %v5422, %v5435
      %v5442 = vmul.f32 %v5423, %v5435
      %v5443 = vmul.f32 %v5424, %v5435
      %v5444 = vmul.f32 %v5425, %v5435
      %v5445 = vmul.f32 %v5426, %v5435
      %v5446 = vmul.f32 %v5427, %v5435
      %v5447 = vmul.f32 %v5428, %v5435
      %v5448 = vmul.f32 %v5429, %v5435
      %v5449 = vmul.f32 %v5430, %v5435
      %v5450 = vmul.f32 %v5431, %v5435
      %v5451 = vmul.f32 %v5432, %v5435
      %v5452 = vmul.f32 %v5433, %v5435
      %v5454 = vperm.slane %v5081, 0
      %v5456 = vadd.f32 %v5437, %v5454
      %v5457 = vadd.f32 %v5438, %v5454
      %v5458 = vadd.f32 %v5439, %v5454
      %v5459 = vadd.f32 %v5440, %v5454
      %v5460 = vadd.f32 %v5441, %v5454
      %v5461 = vadd.f32 %v5442, %v5454
      %v5462 = vadd.f32 %v5443, %v5454
      %v5463 = vadd.f32 %v5444, %v5454
      %v5464 = vadd.f32 %v5445, %v5454
      %v5465 = vadd.f32 %v5446, %v5454
      %v5466 = vadd.f32 %v5447, %v5454
      %v5467 = vadd.f32 %v5448, %v5454
      %v5468 = vadd.f32 %v5449, %v5454
      %v5469 = vadd.f32 %v5450, %v5454
      %v5470 = vadd.f32 %v5451, %v5454
      %v5471 = vadd.f32 %v5452, %v5454
      %v5472 = vmul.f32 %v5456, %v5456
      %v5473 = vmul.f32 %v5457, %v5457
      %v5474 = vmul.f32 %v5458, %v5458
      %v5475 = vmul.f32 %v5459, %v5459
      %v5476 = vmul.f32 %v5460, %v5460
      %v5477 = vmul.f32 %v5461, %v5461
      %v5478 = vmul.f32 %v5462, %v5462
      %v5479 = vmul.f32 %v5463, %v5463
      %v5480 = vmul.f32 %v5464, %v5464
      %v5481 = vmul.f32 %v5465, %v5465
      %v5482 = vmul.f32 %v5466, %v5466
      %v5483 = vmul.f32 %v5467, %v5467
      %v5484 = vmul.f32 %v5468, %v5468
      %v5485 = vmul.f32 %v5469, %v5469
      %v5486 = vmul.f32 %v5470, %v5470
      %v5487 = vmul.f32 %v5471, %v5471
      %v5488 = vsel %vm1426, %v5472, 0.0
      %5489 = vadd.xlane.f32.xlu0 %v5488
      %v5490 = vpop.xlane.xlu0 %5489
      %v5491 = vsel %vm1426, %v5473, 0.0
      %5492 = vadd.xlane.f32.xlu0 %v5491
      %v5493 = vpop.xlane.xlu0 %5492
      %v5494 = vsel %vm1426, %v5474, 0.0
      %5495 = vadd.xlane.f32.xlu0 %v5494
      %v5496 = vpop.xlane.xlu0 %5495
      %v5497 = vsel %vm1426, %v5475, 0.0
      %5498 = vadd.xlane.f32.xlu0 %v5497
      %v5499 = vpop.xlane.xlu0 %5498
      %v5500 = vsel %vm1426, %v5476, 0.0
      %5501 = vadd.xlane.f32.xlu0 %v5500
      %v5502 = vpop.xlane.xlu0 %5501
      %v5503 = vsel %vm1426, %v5477, 0.0
      %5504 = vadd.xlane.f32.xlu0 %v5503
      %v5505 = vpop.xlane.xlu0 %5504
      %v5506 = vsel %vm1426, %v5478, 0.0
      %5507 = vadd.xlane.f32.xlu0 %v5506
      %v5508 = vpop.xlane.xlu0 %5507
      %v5509 = vsel %vm1426, %v5479, 0.0
      %5510 = vadd.xlane.f32.xlu0 %v5509
      %v5511 = vpop.xlane.xlu0 %5510
      %v5512 = vsel %vm1426, %v5480, 0.0
      %5513 = vadd.xlane.f32.xlu0 %v5512
      %v5514 = vpop.xlane.xlu0 %5513
      %v5515 = vsel %vm1426, %v5481, 0.0
      %5516 = vadd.xlane.f32.xlu0 %v5515
      %v5517 = vpop.xlane.xlu0 %5516
      %v5518 = vsel %vm1426, %v5482, 0.0
      %5519 = vadd.xlane.f32.xlu0 %v5518
      %v5520 = vpop.xlane.xlu0 %5519
      %v5521 = vsel %vm1426, %v5483, 0.0
      %5522 = vadd.xlane.f32.xlu0 %v5521
      %v5523 = vpop.xlane.xlu0 %5522
      %v5524 = vsel %vm1426, %v5484, 0.0
      %5525 = vadd.xlane.f32.xlu0 %v5524
      %v5526 = vpop.xlane.xlu0 %5525
      %v5527 = vsel %vm1426, %v5485, 0.0
      %5528 = vadd.xlane.f32.xlu0 %v5527
      %v5529 = vpop.xlane.xlu0 %5528
      %v5530 = vsel %vm1426, %v5486, 0.0
      %5531 = vadd.xlane.f32.xlu0 %v5530
      %v5532 = vpop.xlane.xlu0 %5531
      %v5533 = vsel %vm1426, %v5487, 0.0
      %5534 = vadd.xlane.f32.xlu0 %v5533
      %v5535 = vpop.xlane.xlu0 %5534
      %v5536 = vmax.f32 %v5490, 1e-24
      %v5537 = vmax.f32 %v5493, 1e-24
      %v5538 = vmax.f32 %v5496, 1e-24
      %v5539 = vmax.f32 %v5499, 1e-24
      %v5540 = vmax.f32 %v5502, 1e-24
      %v5541 = vmax.f32 %v5505, 1e-24
      %v5542 = vmax.f32 %v5508, 1e-24
      %v5543 = vmax.f32 %v5511, 1e-24
      %v5544 = vmax.f32 %v5514, 1e-24
      %v5545 = vmax.f32 %v5517, 1e-24
      %v5546 = vmax.f32 %v5520, 1e-24
      %v5547 = vmax.f32 %v5523, 1e-24
      %v5548 = vmax.f32 %v5526, 1e-24
      %v5549 = vmax.f32 %v5529, 1e-24
      %v5550 = vmax.f32 %v5532, 1e-24
      %v5551 = vmax.f32 %v5535, 1e-24
      %v5552 = vrsqrt.pop %v5536
      %v5553 = vmul.f32 %v5552, %v5536
      %v5554 = vmul.f32 %v5553, %v5552
      %v5555 = vmul.f32 0.5, %v5554
      %v5556 = vsub.f32 1.5, %v5555
      %v5557 = vmul.f32 %v5552, %v5556
      %vm5558 = vweird.f32 %v5536
      %vm5559 = vweird.f32 %v5552
      %vm5560 = vmor %vm5558, %vm5559
      %v5561 = vsel %vm5560, %v5552, %v5557
      %v5562 = vrsqrt.pop %v5537
      %v5563 = vmul.f32 %v5562, %v5537
      %v5564 = vmul.f32 %v5563, %v5562
      %v5565 = vmul.f32 0.5, %v5564
      %v5566 = vsub.f32 1.5, %v5565
      %v5567 = vmul.f32 %v5562, %v5566
      %vm5568 = vweird.f32 %v5537
      %vm5569 = vweird.f32 %v5562
      %vm5570 = vmor %vm5568, %vm5569
      %v5571 = vsel %vm5570, %v5562, %v5567
      %v5572 = vrsqrt.pop %v5538
      %v5573 = vmul.f32 %v5572, %v5538
      %v5574 = vmul.f32 %v5573, %v5572
      %v5575 = vmul.f32 0.5, %v5574
      %v5576 = vsub.f32 1.5, %v5575
      %v5577 = vmul.f32 %v5572, %v5576
      %vm5578 = vweird.f32 %v5538
      %vm5579 = vweird.f32 %v5572
      %vm5580 = vmor %vm5578, %vm5579
      %v5581 = vsel %vm5580, %v5572, %v5577
      %v5582 = vrsqrt.pop %v5539
      %v5583 = vmul.f32 %v5582, %v5539
      %v5584 = vmul.f32 %v5583, %v5582
      %v5585 = vmul.f32 0.5, %v5584
      %v5586 = vsub.f32 1.5, %v5585
      %v5587 = vmul.f32 %v5582, %v5586
      %vm5588 = vweird.f32 %v5539
      %vm5589 = vweird.f32 %v5582
      %vm5590 = vmor %vm5588, %vm5589
      %v5591 = vsel %vm5590, %v5582, %v5587
      %v5592 = vrsqrt.pop %v5540
      %v5593 = vmul.f32 %v5592, %v5540
      %v5594 = vmul.f32 %v5593, %v5592
      %v5595 = vmul.f32 0.5, %v5594
      %v5596 = vsub.f32 1.5, %v5595
      %v5597 = vmul.f32 %v5592, %v5596
      %vm5598 = vweird.f32 %v5540
      %vm5599 = vweird.f32 %v5592
      %vm5600 = vmor %vm5598, %vm5599
      %v5601 = vsel %vm5600, %v5592, %v5597
      %v5602 = vrsqrt.pop %v5541
      %v5603 = vmul.f32 %v5602, %v5541
      %v5604 = vmul.f32 %v5603, %v5602
      %v5605 = vmul.f32 0.5, %v5604
      %v5606 = vsub.f32 1.5, %v5605
      %v5607 = vmul.f32 %v5602, %v5606
      %vm5608 = vweird.f32 %v5541
      %vm5609 = vweird.f32 %v5602
      %vm5610 = vmor %vm5608, %vm5609
      %v5611 = vsel %vm5610, %v5602, %v5607
      %v5612 = vrsqrt.pop %v5542
      %v5613 = vmul.f32 %v5612, %v5542
      %v5614 = vmul.f32 %v5613, %v5612
      %v5615 = vmul.f32 0.5, %v5614
      %v5616 = vsub.f32 1.5, %v5615
      %v5617 = vmul.f32 %v5612, %v5616
      %vm5618 = vweird.f32 %v5542
      %vm5619 = vweird.f32 %v5612
      %vm5620 = vmor %vm5618, %vm5619
      %v5621 = vsel %vm5620, %v5612, %v5617
      %v5622 = vrsqrt.pop %v5543
      %v5623 = vmul.f32 %v5622, %v5543
      %v5624 = vmul.f32 %v5623, %v5622
      %v5625 = vmul.f32 0.5, %v5624
      %v5626 = vsub.f32 1.5, %v5625
      %v5627 = vmul.f32 %v5622, %v5626
      %vm5628 = vweird.f32 %v5543
      %vm5629 = vweird.f32 %v5622
      %vm5630 = vmor %vm5628, %vm5629
      %v5631 = vsel %vm5630, %v5622, %v5627
      %v5632 = vrsqrt.pop %v5544
      %v5633 = vmul.f32 %v5632, %v5544
      %v5634 = vmul.f32 %v5633, %v5632
      %v5635 = vmul.f32 0.5, %v5634
      %v5636 = vsub.f32 1.5, %v5635
      %v5637 = vmul.f32 %v5632, %v5636
      %vm5638 = vweird.f32 %v5544
      %vm5639 = vweird.f32 %v5632
      %vm5640 = vmor %vm5638, %vm5639
      %v5641 = vsel %vm5640, %v5632, %v5637
      %v5642 = vrsqrt.pop %v5545
      %v5643 = vmul.f32 %v5642, %v5545
      %v5644 = vmul.f32 %v5643, %v5642
      %v5645 = vmul.f32 0.5, %v5644
      %v5646 = vsub.f32 1.5, %v5645
      %v5647 = vmul.f32 %v5642, %v5646
      %vm5648 = vweird.f32 %v5545
      %vm5649 = vweird.f32 %v5642
      %vm5650 = vmor %vm5648, %vm5649
      %v5651 = vsel %vm5650, %v5642, %v5647
      %v5652 = vrsqrt.pop %v5546
      %v5653 = vmul.f32 %v5652, %v5546
      %v5654 = vmul.f32 %v5653, %v5652
      %v5655 = vmul.f32 0.5, %v5654
      %v5656 = vsub.f32 1.5, %v5655
      %v5657 = vmul.f32 %v5652, %v5656
      %vm5658 = vweird.f32 %v5546
      %vm5659 = vweird.f32 %v5652
      %vm5660 = vmor %vm5658, %vm5659
      %v5661 = vsel %vm5660, %v5652, %v5657
      %v5662 = vrsqrt.pop %v5547
      %v5663 = vmul.f32 %v5662, %v5547
      %v5664 = vmul.f32 %v5663, %v5662
      %v5665 = vmul.f32 0.5, %v5664
      %v5666 = vsub.f32 1.5, %v5665
      %v5667 = vmul.f32 %v5662, %v5666
      %vm5668 = vweird.f32 %v5547
      %vm5669 = vweird.f32 %v5662
      %vm5670 = vmor %vm5668, %vm5669
      %v5671 = vsel %vm5670, %v5662, %v5667
      %v5672 = vrsqrt.pop %v5548
      %v5673 = vmul.f32 %v5672, %v5548
      %v5674 = vmul.f32 %v5673, %v5672
      %v5675 = vmul.f32 0.5, %v5674
      %v5676 = vsub.f32 1.5, %v5675
      %v5677 = vmul.f32 %v5672, %v5676
      %vm5678 = vweird.f32 %v5548
      %vm5679 = vweird.f32 %v5672
      %vm5680 = vmor %vm5678, %vm5679
      %v5681 = vsel %vm5680, %v5672, %v5677
      %v5682 = vrsqrt.pop %v5549
      %v5683 = vmul.f32 %v5682, %v5549
      %v5684 = vmul.f32 %v5683, %v5682
      %v5685 = vmul.f32 0.5, %v5684
      %v5686 = vsub.f32 1.5, %v5685
      %v5687 = vmul.f32 %v5682, %v5686
      %vm5688 = vweird.f32 %v5549
      %vm5689 = vweird.f32 %v5682
      %vm5690 = vmor %vm5688, %vm5689
      %v5691 = vsel %vm5690, %v5682, %v5687
      %v5692 = vrsqrt.pop %v5550
      %v5693 = vmul.f32 %v5692, %v5550
      %v5694 = vmul.f32 %v5693, %v5692
      %v5695 = vmul.f32 0.5, %v5694
      %v5696 = vsub.f32 1.5, %v5695
      %v5697 = vmul.f32 %v5692, %v5696
      %vm5698 = vweird.f32 %v5550
      %vm5699 = vweird.f32 %v5692
      %vm5700 = vmor %vm5698, %vm5699
      %v5701 = vsel %vm5700, %v5692, %v5697
      %v5702 = vrsqrt.pop %v5551
      %v5703 = vmul.f32 %v5702, %v5551
      %v5704 = vmul.f32 %v5703, %v5702
      %v5705 = vmul.f32 0.5, %v5704
      %v5706 = vsub.f32 1.5, %v5705
      %v5707 = vmul.f32 %v5702, %v5706
      %vm5708 = vweird.f32 %v5551
      %vm5709 = vweird.f32 %v5702
      %vm5710 = vmor %vm5708, %vm5709
      %v5711 = vsel %vm5710, %v5702, %v5707
      %v5712 = vmul.f32 %v5456, %v5561
      %v5713 = vmul.f32 %v5457, %v5571
      %v5714 = vmul.f32 %v5458, %v5581
      %v5715 = vmul.f32 %v5459, %v5591
      %v5716 = vmul.f32 %v5460, %v5601
      %v5717 = vmul.f32 %v5461, %v5611
      %v5718 = vmul.f32 %v5462, %v5621
      %v5719 = vmul.f32 %v5463, %v5631
      %v5720 = vmul.f32 %v5464, %v5641
      %v5721 = vmul.f32 %v5465, %v5651
      %v5722 = vmul.f32 %v5466, %v5661
      %v5723 = vmul.f32 %v5467, %v5671
      %v5724 = vmul.f32 %v5468, %v5681
      %v5725 = vmul.f32 %v5469, %v5691
      %v5726 = vmul.f32 %v5470, %v5701
      %v5727 = vmul.f32 %v5471, %v5711
      %5728 = vst.msk [vmem:[%s518] sm:$0xff] %vm1426, %v5712
      %5729 = vst.msk [vmem:[%s518 + $0x8] sm:$0xff] %vm1426, %v5713
      %5730 = vst.msk [vmem:[%s518 + $0x10] sm:$0xff] %vm1426, %v5714
      %5731 = vst.msk [vmem:[%s518 + $0x18] sm:$0xff] %vm1426, %v5715
      %5732 = vst.msk [vmem:[%s518 + $0x20] sm:$0xff] %vm1426, %v5716
      %5733 = vst.msk [vmem:[%s518 + $0x28] sm:$0xff] %vm1426, %v5717
      %5734 = vst.msk [vmem:[%s518 + $0x30] sm:$0xff] %vm1426, %v5718
      %5735 = vst.msk [vmem:[%s518 + $0x38] sm:$0xff] %vm1426, %v5719
      %5736 = vst.msk [vmem:[%s518 + $0x40] sm:$0xff] %vm1426, %v5720
      %5737 = vst.msk [vmem:[%s518 + $0x48] sm:$0xff] %vm1426, %v5721
      %5738 = vst.msk [vmem:[%s518 + $0x50] sm:$0xff] %vm1426, %v5722
      %5739 = vst.msk [vmem:[%s518 + $0x58] sm:$0xff] %vm1426, %v5723
      %5740 = vst.msk [vmem:[%s518 + $0x60] sm:$0xff] %vm1426, %v5724
      %5741 = vst.msk [vmem:[%s518 + $0x68] sm:$0xff] %vm1426, %v5725
      %5742 = vst.msk [vmem:[%s518 + $0x70] sm:$0xff] %vm1426, %v5726
      %5743 = vst.msk [vmem:[%s518 + $0x78] sm:$0xff] %vm1426, %v5727
      %s5744 = smul.u32 16, %s29
      %p5745 = scmp.lt.s32.totalorder %s28, 1
      %s5746 = scalar_select %p5745, %s28, 1
      %p5747 = scmp.lt.s32.totalorder %s5744, 15
      %s5748 = scalar_select %p5747, %s5744, 15
      %s5749 = smul.addr %s5746, 16
      %s5750 = sadd.s32 %s5748, %s5749
      %s5751 = smul.addr %s5750, 8
      %s5752 = scalar_lea.vmem %s13, %s5751
      // Predicated region
      $region73: #{scnet_forward.18} parent=71 // pred_check
        %p5753 = pneg %p346
      $region74: #{scnet_forward.18} parent=71 // pred_check_branch
        %5755 = sbr.rel (%p5753) target = $region76
      $region75: #{scnet_forward.18} parent=71 // pred_region
        %s5756 = smul.u32 16, %s29
      $region76: #{scnet_forward.18} parent=71 // pred_fallthru
        _
    $region72: #{scnet_forward.18} parent=5 // pred_fallthru
      _
    %p5757 = scmp.le.s32.totalorder 2, %s19
    // Predicated region
    $region77: #{scnet_forward.18} parent=5 // pred_check
      %p5758 = pneg %p5757
    $region78: #{scnet_forward.18} parent=5 // pred_check_branch
      %5760 = sbr.rel (%p5758) target = $region80
    $region79: #{scnet_forward.18} parent=5 // pred_region
      %s5761 = ssub.s32 %s19, 2
      // Predicated region
      $region81: #{scnet_forward.18} parent=79 // pred_check
        %p5762 = pneg %p352
      $region82: #{scnet_forward.18} parent=79 // pred_check_branch
        %5764 = sbr.rel (%p5762) target = $region84
      $region83: #{scnet_forward.18} parent=79 // pred_region
        %s5765 = smul.u32 16, %s31
        %p5766 = scmp.lt.s32.totalorder %s30, 1
        %s5767 = scalar_select %p5766, %s30, 1
        %p5768 = scmp.lt.s32.totalorder %s5765, 15
        %s5769 = scalar_select %p5768, %s5765, 15
        %s5770 = smul.addr %s5767, 16
        %s5771 = sadd.s32 %s5769, %s5770
        %s5772 = smul.addr %s5771, 8
        %s5773 = scalar_lea.vmem %s13, %s5772
      $region84: #{scnet_forward.18} parent=79 // pred_fallthru
        _
    $region80: #{scnet_forward.18} parent=5 // pred_fallthru
      _
  $region6: #{scnet_forward.18} parent=0 // loop_footer
    %s23 = sadd.s32 1, %s19
  $region7: #{scnet_forward.18} parent=0 // loop_footer_branch
    %18 = sbr.rel target = $region3
  $region8: #{scnet_forward.18} parent=0 // loop_exit
    _

</llo_original>
